<compile_context>
chip_gen: v5e
topology: v5e:2x2
jax: 0.10.0
libtpu: 0.0.40
codegen_flags: <defaults>
</compile_context>

<pallas_src>
import jax
import jax.numpy as jnp
from jax.experimental import pallas as pl
from jax.experimental.pallas import tpu as pltpu


def _ridge_kernel(ifs_ref, w_ref, o_ref):
    # ifs_ref: (S_BLK, M, N), w_ref: (S_BLK, N), o_ref: (S_BLK, M)
    ifs = ifs_ref[...]
    w = w_ref[...]
    # VPU broadcast-multiply + reduce over N; keeps compute hidden under the
    # HBM DMA stream instead of paying per-sample MXU drain latency.
    o_ref[...] = jnp.sum(ifs * w[:, None, :], axis=-1)


def ridge_forward(IFS, weights, y_in=None, *, s_blk_max=512):
    """Batched matvec: y[s] = IFS[s] @ weights[s].

    IFS:     (samples, M, N) float32
    weights: (samples, N, 1) float32
    returns: (samples, M, 1) float32
    """
    del y_in  # unused, matching RidgeTorch.forward
    samples, M, N = IFS.shape
    assert weights.shape == (samples, N, 1), weights.shape

    IFS = IFS.astype(jnp.float32)
    w2d = weights.astype(jnp.float32).reshape(samples, N)

    # Tiny inputs: pallas_call launch / pipeline prologue dominates; plain XLA
    # is simpler and faster there.
    if samples < 64:
        return jnp.einsum("smn,sn->sm", IFS, w2d)[..., None]

    # Sample block: multiple of 8 (sublane alignment of the 2-D weight/output
    # tiles), capped at s_blk_max (~4 MiB IFS tile at M=16, N=41).
    s_blk = min(s_blk_max, ((samples + 7) // 8) * 8)
    s_blk = max(8, (s_blk // 8) * 8)

    num_blocks = pl.cdiv(samples, s_blk)
    padded = num_blocks * s_blk
    if padded != samples:
        pad = padded - samples
        IFS_p = jnp.pad(IFS, ((0, pad), (0, 0), (0, 0)))
        w_p = jnp.pad(w2d, ((0, pad), (0, 0)))
    else:
        IFS_p, w_p = IFS, w2d

    out = pl.pallas_call(
        _ridge_kernel,
        out_shape=jax.ShapeDtypeStruct((padded, M), jnp.float32),
        grid=(num_blocks,),
        in_specs=[
            pl.BlockSpec((s_blk, M, N), lambda s: (s, 0, 0)),
            pl.BlockSpec((s_blk, N), lambda s: (s, 0)),
        ],
        out_specs=pl.BlockSpec((s_blk, M), lambda s: (s, 0)),
        compiler_params=pltpu.CompilerParams(
            dimension_semantics=("parallel",),
        ),
    )(IFS_p, w_p)

    return out[:samples, :, None]


class RidgeJax:
    """JAX/Pallas equivalent of RidgeTorch."""

    def __init__(self, samples, n=41, key=None):
        if key is None:
            key = jax.random.PRNGKey(0)
        # torch.rand -> uniform [0, 1)
        self.weights = jax.random.uniform(key, (samples, n, 1), dtype=jnp.float32)

    def forward(self, IFS, y_in=None):
        return ridge_forward(IFS, self.weights, y_in)

    def R(self, IFS):
        return (self.weights, None)


def _reference(IFS, weights):
    # Mathematically identical to IFS @ weights, computed elementwise in f32.
    return jnp.sum(IFS * jnp.swapaxes(weights, 1, 2), axis=-1, keepdims=True)


if __name__ == "__main__":
    key = jax.random.PRNGKey(0)
    k_ifs, k_w, k_y = jax.random.split(key, 3)

    samples, M, N = 1024, 16, 41  # n=41 as in the module; M is free
    IFS = jax.random.normal(k_ifs, (samples, M, N), dtype=jnp.float32)
    y_in = jax.random.normal(k_y, (samples, M, 1), dtype=jnp.float32)

    model = RidgeJax(samples, n=N, key=k_w)

    # Main path: samples divisible by the block size -> 2 parallel grid blocks.
    y = jax.block_until_ready(model.forward(IFS, y_in))
    y_ref = _reference(IFS, model.weights)
    assert y.shape == (samples, M, 1)
    assert jnp.allclose(y, y_ref, atol=1e-5, rtol=1e-5)

    # Remainder path: sample count not a multiple of the block size (padded).
    s2 = 1000
    y2 = jax.block_until_ready(ridge_forward(IFS[:s2], model.weights[:s2]))
    y2_ref = _reference(IFS[:s2], model.weights[:s2])
    assert y2.shape == (s2, M, 1)
    assert jnp.allclose(y2, y2_ref, atol=1e-5, rtol=1e-5)

    print("KERNEL_OK")
</pallas_src>

<mosaic_0001>
module attributes {stable_mosaic.version = 11 : i64} {
  func.func @_ridge_kernel(%arg0: i32, %arg1: memref<512x16x41xf32, #tpu.memory_space<vmem>>, %arg2: memref<512x41xf32, #tpu.memory_space<vmem>>, %arg3: memref<512x16xf32, #tpu.memory_space<vmem>>) attributes {dimension_semantics = [#tpu.dimension_semantics<parallel>], iteration_bounds = array<i64: 2>, scalar_prefetch = 0 : i64, scratch_operands = 0 : i64, tpu.core_type = #tpu.core_type<tc>, window_params = [{transform_indices = @transform_0, window_bounds = array<i64: 512, 16, 41>}, {transform_indices = @transform_1, window_bounds = array<i64: 512, 41>}, {transform_indices = @transform_2, window_bounds = array<i64: 512, 16>}]} {
    %c0 = arith.constant 0 : index
    %c0_0 = arith.constant 0 : index
    %c0_1 = arith.constant 0 : index
    %0 = vector.load %arg1[%c0, %c0_0, %c0_1] : memref<512x16x41xf32, #tpu.memory_space<vmem>>, vector<512x16x41xf32>
    %c0_2 = arith.constant 0 : index
    %c0_3 = arith.constant 0 : index
    %1 = vector.load %arg2[%c0_2, %c0_3] : memref<512x41xf32, #tpu.memory_space<vmem>>, vector<512x41xf32>
    %2 = vector.shape_cast %1 : vector<512x41xf32> to vector<512x1x41xf32>
    %3 = vector.broadcast %2 : vector<512x1x41xf32> to vector<512x16x41xf32>
    %4 = arith.mulf %0, %3 : vector<512x16x41xf32>
    %cst = arith.constant dense<0.000000e+00> : vector<512x16xf32>
    %5 = vector.multi_reduction <add>, %4, %cst [2] : vector<512x16x41xf32> to vector<512x16xf32>
    %c0_4 = arith.constant 0 : index
    %c0_5 = arith.constant 0 : index
    %6 = vector.load %arg3[%c0_4, %c0_5] : memref<512x16xf32, #tpu.memory_space<vmem>>, vector<512x16xf32>
    tpu.vector_store %arg3[%c0_4, %c0_5], %5 {strides = array<i32>} : memref<512x16xf32, #tpu.memory_space<vmem>>, vector<512x16xf32>,
    return
  }
  func.func @transform_0(%arg0: i32) -> (i32, i32, i32) {
    %c0_i32 = arith.constant 0 : i32
    %c0_i32_0 = arith.constant 0 : i32
    %c0_i32_1 = arith.constant 0 : i32
    return %arg0, %c0_i32, %c0_i32_0 : i32, i32, i32
  }
  func.func @transform_1(%arg0: i32) -> (i32, i32) {
    %c0_i32 = arith.constant 0 : i32
    %c0_i32_0 = arith.constant 0 : i32
    return %arg0, %c0_i32 : i32, i32
  }
  func.func @transform_2(%arg0: i32) -> (i32, i32) {
    %c0_i32 = arith.constant 0 : i32
    %c0_i32_0 = arith.constant 0 : i32
    return %arg0, %c0_i32 : i32, i32
  }
}

</mosaic_0001>

<llo_original>
// kernel: tpu_custom_call.1
$region0: #{tpu_custom_call.1}
  #allocation0 [shape = 'u32[]', space=smem, size = 0x4, offset = 0x4, fixed_abs, tag = 'smem constant byte address 0x4 - core index']
  #allocation1 [shape = 'u32[72,128]{1,0:T(1,128)}', space=vmem, size = 0x9000, scoped, tag = 'internal scratch']
  %s0 = inlined_call_operand.vmem [shape: f32[1024,16,41], index: 0, kind: input, shape index: {}]
  %s1 = inlined_call_operand.vmem [shape: f32[1024,41], index: 1, kind: input, shape index: {}]
  %s2 = inlined_call_operand.vmem [shape: f32[1024,16], index: 2, kind: output, shape index: {}]
  %s3 = sld [smem:[#allocation0]]
  $region41: #{tpu_custom_call.1} parent=0
    _
  %s5 = ssub.s32 1, %s3
  %s6 = scalar_select 0, %s5, %s3
  loop: start=0, step=1, limit=4
  $region2: #{tpu_custom_call.1} parent=0 // loop_pre_header
    _
  $region3: #{tpu_custom_call.1} parent=0 // loop_header
    %s8 = sphi 0, %s12
    %p9 = scmp.ge.s32.totalorder %s8, 4
    %s18 = sphi 0, %s20
    %s21 = sphi 0, %s18
    %s22 = sphi 0, %s21
    %s38 = sphi 0, %s22
    %s44 = sphi 0, %s46
    %s47 = sphi 0, %s44
    %s48 = sphi 0, %s47
    %s64 = sphi 0, %s48
    %s70 = sphi 0, %s72
    %s73 = sphi 0, %s70
    %s74 = sphi 0, %s73
    %s90 = sphi 0, %s74
  $region4: #{tpu_custom_call.1} parent=0 // loop_header_branch
    %11 = sbr.rel (%p9) target = $region8
  $region5: #{tpu_custom_call.1} parent=0 // loop_body
    %s13 = ssub.s32 %s8, 1
    %s14 = ssub.s32 %s8, 2
    %s15 = sadd.s32 %s8, 1
    %s16 = ssub.s32 %s8, %s15
    %p17 = scmp.eq.s32.totalorder %s16, 0
    %s19 = sadd.s32 %s18, 1
    %s20 = scalar_select %p17, %s18, %s19
    %p23 = pneg %p17
    %p24 = scmp.eq.s32.totalorder %s8, 1
    %p25 = por %p23, %p24
    %p26 = scmp.ne.s32.totalorder %s18, %s21
    %p27 = scmp.eq.s32.totalorder %s8, 0
    %p28 = por %p26, %p27
    %p29 = scmp.ne.s32.totalorder %s18, %s21
    %p30 = scmp.eq.s32.totalorder %s13, 1
    %p31 = por %p29, %p30
    %p32 = scmp.ne.s32.totalorder %s21, %s22
    %p33 = scmp.eq.s32.totalorder %s13, 0
    %p34 = por %p32, %p33
    %p35 = scmp.ne.s32.totalorder %s21, %s22
    %p36 = scmp.eq.s32.totalorder %s14, 1
    %p37 = por %p35, %p36
    %p39 = scmp.ne.s32.totalorder %s22, %s38
    %p40 = scmp.eq.s32.totalorder %s14, 0
    %p41 = por %p39, %p40
    %s42 = ssub.s32 %s8, %s15
    %p43 = scmp.eq.s32.totalorder %s42, 0
    %s45 = sadd.s32 %s44, 1
    %s46 = scalar_select %p43, %s44, %s45
    %p49 = pneg %p43
    %p50 = scmp.eq.s32.totalorder %s8, 1
    %p51 = por %p49, %p50
    %p52 = scmp.ne.s32.totalorder %s44, %s47
    %p53 = scmp.eq.s32.totalorder %s8, 0
    %p54 = por %p52, %p53
    %p55 = scmp.ne.s32.totalorder %s44, %s47
    %p56 = scmp.eq.s32.totalorder %s13, 1
    %p57 = por %p55, %p56
    %p58 = scmp.ne.s32.totalorder %s47, %s48
    %p59 = scmp.eq.s32.totalorder %s13, 0
    %p60 = por %p58, %p59
    %p61 = scmp.ne.s32.totalorder %s47, %s48
    %p62 = scmp.eq.s32.totalorder %s14, 1
    %p63 = por %p61, %p62
    %p65 = scmp.ne.s32.totalorder %s48, %s64
    %p66 = scmp.eq.s32.totalorder %s14, 0
    %p67 = por %p65, %p66
    %s68 = ssub.s32 %s8, %s15
    %p69 = scmp.eq.s32.totalorder %s68, 0
    %s71 = sadd.s32 %s70, 1
    %s72 = scalar_select %p69, %s70, %s71
    %p75 = pneg %p69
    %p76 = scmp.eq.s32.totalorder %s8, 1
    %p77 = por %p75, %p76
    %p78 = scmp.ne.s32.totalorder %s70, %s73
    %p79 = scmp.eq.s32.totalorder %s8, 0
    %p80 = por %p78, %p79
    %p81 = scmp.ne.s32.totalorder %s70, %s73
    %p82 = scmp.eq.s32.totalorder %s13, 1
    %p83 = por %p81, %p82
    %p84 = scmp.ne.s32.totalorder %s73, %s74
    %p85 = scmp.eq.s32.totalorder %s13, 0
    %p86 = por %p84, %p85
    %p87 = scmp.ne.s32.totalorder %s73, %s74
    %p88 = scmp.eq.s32.totalorder %s14, 1
    %p89 = por %p87, %p88
    %p91 = scmp.ne.s32.totalorder %s74, %s90
    %p92 = scmp.eq.s32.totalorder %s14, 0
    %p93 = por %p91, %p92
    %p94 = scmp.le.s32.totalorder 1, %s8
    %p95 = scmp.lt.s32.totalorder %s8, 3
    %p96 = pnand %p94, %p95
    %p97 = pneg %p96
    // Predicated region
    $region9: #{tpu_custom_call.1} parent=5 // pred_check
      _
    $region10: #{tpu_custom_call.1} parent=5 // pred_check_branch
      %99 = sbr.rel (%p96) target = $region12
    $region11: #{tpu_custom_call.1} parent=5 // pred_region
      %s100 = ssub.s32 %s8, 1
    $region12: #{tpu_custom_call.1} parent=5 // pred_fallthru
      _
    %p101 = scmp.lt.s32.totalorder %s8, 2
    // Predicated region
    $region13: #{tpu_custom_call.1} parent=5 // pred_check
      %p102 = pneg %p101
    $region14: #{tpu_custom_call.1} parent=5 // pred_check_branch
      %104 = sbr.rel (%p102) target = $region16
    $region15: #{tpu_custom_call.1} parent=5 // pred_region
      // Predicated region
      $region17: #{tpu_custom_call.1} parent=15 // pred_check
        %p105 = pneg %p28
      $region18: #{tpu_custom_call.1} parent=15 // pred_check_branch
        %107 = sbr.rel (%p105) target = $region20
      $region19: #{tpu_custom_call.1} parent=15 // pred_region
        %s108 = smul.u32 512, %s8
        %p109 = scmp.lt.s32.totalorder %s108, 1023
        %s110 = scalar_select %p109, %s108, 1023
        %s111 = smul.addr %s110, 2
        %s112 = smul.addr %s111, 8
        %s113 = scalar_lea.vmem %s0, %s112
        %s114 = smul.u32 512, %s8
      $region20: #{tpu_custom_call.1} parent=15 // pred_fallthru
        _
      // Predicated region
      $region21: #{tpu_custom_call.1} parent=15 // pred_check
        %p115 = pneg %p54
      $region22: #{tpu_custom_call.1} parent=15 // pred_check_branch
        %117 = sbr.rel (%p115) target = $region24
      $region23: #{tpu_custom_call.1} parent=15 // pred_region
        %s118 = smul.u32 64, %s8
        %p119 = scmp.lt.s32.totalorder %s118, 127
        %s120 = scalar_select %p119, %s118, 127
        %s121 = smul.addr %s120, 8
        %s122 = scalar_lea.vmem %s1, %s121
        %s123 = smul.u32 64, %s8
      $region24: #{tpu_custom_call.1} parent=15 // pred_fallthru
        _
    $region16: #{tpu_custom_call.1} parent=5 // pred_fallthru
      _
    %p124 = scmp.le.s32.totalorder 1, %s8
    %p125 = scmp.lt.s32.totalorder %s8, 3
    %p126 = pnand %p124, %p125
    %p127 = pneg %p126
    // Predicated region
    $region25: #{tpu_custom_call.1} parent=5 // pred_check
      _
    $region26: #{tpu_custom_call.1} parent=5 // pred_check_branch
      %129 = sbr.rel (%p126) target = $region28
    $region27: #{tpu_custom_call.1} parent=5 // pred_region
      %s130 = ssub.s32 %s8, 1
      %s131 = smul.u32 512, %s13
      %p132 = scmp.lt.s32.totalorder %s131, 1023
      %s133 = scalar_select %p132, %s131, 1023
      %s134 = smul.addr %s133, 2
      %s135 = smul.addr %s134, 8
      %s136 = scalar_lea.vmem %s0, %s135
      %p137 = pneg %p34
      %p138 = pneg %p31
      %s139 = smul.u32 64, %s13
      %p140 = scmp.lt.s32.totalorder %s139, 127
      %s141 = scalar_select %p140, %s139, 127
      %s142 = smul.addr %s141, 8
      %s143 = scalar_lea.vmem %s1, %s142
      %p144 = pneg %p60
      %p145 = pneg %p57
      %p146 = pneg %p86
      %p147 = pneg %p83
      %s148 = smul.u32 64, %s13
      %p149 = scmp.lt.s32.totalorder %s148, 127
      %s150 = scalar_select %p149, %s148, 127
      %s151 = smul.addr %s150, 8
      %s152 = scalar_lea.vmem %s2, %s151
      %s153 = smul.u32 512, %s13
      %p154 = scmp.lt.s32.totalorder %s153, 1023
      %s155 = scalar_select %p154, %s153, 1023
      %s156 = smul.addr %s155, 2
      %s157 = smul.addr %s156, 8
      %s158 = scalar_lea.vmem %s0, %s157
      %s159 = smul.u32 512, %s13
      %s160 = smul.u32 64, %s13
      %p161 = scmp.lt.s32.totalorder %s160, 127
      %s162 = scalar_select %p161, %s160, 127
      %s163 = smul.addr %s162, 8
      %s164 = scalar_lea.vmem %s1, %s163
      %s165 = smul.u32 64, %s13
      %s166 = smul.u32 64, %s13
      %p167 = scmp.lt.s32.totalorder %s166, 127
      %s168 = scalar_select %p167, %s166, 127
      %s169 = smul.addr %s168, 8
      %s170 = scalar_lea.vmem %s2, %s169
      %s171 = smul.u32 64, %s13
      %v172 = vld [vmem:[%s158] sm:$0xff]
      %v173 = vld [vmem:[%s158 + $0x8] sm:$0xff]
      %v174 = vld [vmem:[%s158 + $0x10] sm:$0xff]
      %v175 = vld [vmem:[%s158 + $0x18] sm:$0xff]
      %v176 = vld [vmem:[%s158 + $0x20] sm:$0xff]
      %v177 = vld [vmem:[%s158 + $0x28] sm:$0xff]
      %v178 = vld [vmem:[%s158 + $0x30] sm:$0xff]
      %v179 = vld [vmem:[%s158 + $0x38] sm:$0xff]
      %v180 = vld [vmem:[%s158 + $0x40] sm:$0xff]
      %v181 = vld [vmem:[%s158 + $0x48] sm:$0xff]
      %v182 = vld [vmem:[%s158 + $0x50] sm:$0xff]
      %v183 = vld [vmem:[%s158 + $0x58] sm:$0xff]
      %v184 = vld [vmem:[%s158 + $0x60] sm:$0xff]
      %v185 = vld [vmem:[%s158 + $0x68] sm:$0xff]
      %v186 = vld [vmem:[%s158 + $0x70] sm:$0xff]
      %v187 = vld [vmem:[%s158 + $0x78] sm:$0xff]
      %v188 = vld [vmem:[%s158 + $0x80] sm:$0xff]
      %v189 = vld [vmem:[%s158 + $0x88] sm:$0xff]
      %v190 = vld [vmem:[%s158 + $0x90] sm:$0xff]
      %v191 = vld [vmem:[%s158 + $0x98] sm:$0xff]
      %v192 = vld [vmem:[%s158 + $0xa0] sm:$0xff]
      %v193 = vld [vmem:[%s158 + $0xa8] sm:$0xff]
      %v194 = vld [vmem:[%s158 + $0xb0] sm:$0xff]
      %v195 = vld [vmem:[%s158 + $0xb8] sm:$0xff]
      %v196 = vld [vmem:[%s158 + $0xc0] sm:$0xff]
      %v197 = vld [vmem:[%s158 + $0xc8] sm:$0xff]
      %v198 = vld [vmem:[%s158 + $0xd0] sm:$0xff]
      %v199 = vld [vmem:[%s158 + $0xd8] sm:$0xff]
      %v200 = vld [vmem:[%s158 + $0xe0] sm:$0xff]
      %v201 = vld [vmem:[%s158 + $0xe8] sm:$0xff]
      %v202 = vld [vmem:[%s158 + $0xf0] sm:$0xff]
      %v203 = vld [vmem:[%s158 + $0xf8] sm:$0xff]
      %v204 = vld [vmem:[%s158 + $0x100] sm:$0xff]
      %v205 = vld [vmem:[%s158 + $0x108] sm:$0xff]
      %v206 = vld [vmem:[%s158 + $0x110] sm:$0xff]
      %v207 = vld [vmem:[%s158 + $0x118] sm:$0xff]
      %v208 = vld [vmem:[%s158 + $0x120] sm:$0xff]
      %v209 = vld [vmem:[%s158 + $0x128] sm:$0xff]
      %v210 = vld [vmem:[%s158 + $0x130] sm:$0xff]
      %v211 = vld [vmem:[%s158 + $0x138] sm:$0xff]
      %v212 = vld [vmem:[%s158 + $0x140] sm:$0xff]
      %v213 = vld [vmem:[%s158 + $0x148] sm:$0xff]
      %v214 = vld [vmem:[%s158 + $0x150] sm:$0xff]
      %v215 = vld [vmem:[%s158 + $0x158] sm:$0xff]
      %v216 = vld [vmem:[%s158 + $0x160] sm:$0xff]
      %v217 = vld [vmem:[%s158 + $0x168] sm:$0xff]
      %v218 = vld [vmem:[%s158 + $0x170] sm:$0xff]
      %v219 = vld [vmem:[%s158 + $0x178] sm:$0xff]
      %v220 = vld [vmem:[%s158 + $0x180] sm:$0xff]
      %v221 = vld [vmem:[%s158 + $0x188] sm:$0xff]
      %v222 = vld [vmem:[%s158 + $0x190] sm:$0xff]
      %v223 = vld [vmem:[%s158 + $0x198] sm:$0xff]
      %v224 = vld [vmem:[%s158 + $0x1a0] sm:$0xff]
      %v225 = vld [vmem:[%s158 + $0x1a8] sm:$0xff]
      %v226 = vld [vmem:[%s158 + $0x1b0] sm:$0xff]
      %v227 = vld [vmem:[%s158 + $0x1b8] sm:$0xff]
      %v228 = vld [vmem:[%s158 + $0x1c0] sm:$0xff]
      %v229 = vld [vmem:[%s158 + $0x1c8] sm:$0xff]
      %v230 = vld [vmem:[%s158 + $0x1d0] sm:$0xff]
      %v231 = vld [vmem:[%s158 + $0x1d8] sm:$0xff]
      %v232 = vld [vmem:[%s158 + $0x1e0] sm:$0xff]
      %v233 = vld [vmem:[%s158 + $0x1e8] sm:$0xff]
      %v234 = vld [vmem:[%s158 + $0x1f0] sm:$0xff]
      %v235 = vld [vmem:[%s158 + $0x1f8] sm:$0xff]
      %v236 = vld [vmem:[%s158 + $0x200] sm:$0xff]
      %v237 = vld [vmem:[%s158 + $0x208] sm:$0xff]
      %v238 = vld [vmem:[%s158 + $0x210] sm:$0xff]
      %v239 = vld [vmem:[%s158 + $0x218] sm:$0xff]
      %v240 = vld [vmem:[%s158 + $0x220] sm:$0xff]
      %v241 = vld [vmem:[%s158 + $0x228] sm:$0xff]
      %v242 = vld [vmem:[%s158 + $0x230] sm:$0xff]
      %v243 = vld [vmem:[%s158 + $0x238] sm:$0xff]
      %v244 = vld [vmem:[%s158 + $0x240] sm:$0xff]
      %v245 = vld [vmem:[%s158 + $0x248] sm:$0xff]
      %v246 = vld [vmem:[%s158 + $0x250] sm:$0xff]
      %v247 = vld [vmem:[%s158 + $0x258] sm:$0xff]
      %v248 = vld [vmem:[%s158 + $0x260] sm:$0xff]
      %v249 = vld [vmem:[%s158 + $0x268] sm:$0xff]
      %v250 = vld [vmem:[%s158 + $0x270] sm:$0xff]
      %v251 = vld [vmem:[%s158 + $0x278] sm:$0xff]
      %v252 = vld [vmem:[%s158 + $0x280] sm:$0xff]
      %v253 = vld [vmem:[%s158 + $0x288] sm:$0xff]
      %v254 = vld [vmem:[%s158 + $0x290] sm:$0xff]
      %v255 = vld [vmem:[%s158 + $0x298] sm:$0xff]
      %v256 = vld [vmem:[%s158 + $0x2a0] sm:$0xff]
      %v257 = vld [vmem:[%s158 + $0x2a8] sm:$0xff]
      %v258 = vld [vmem:[%s158 + $0x2b0] sm:$0xff]
      %v259 = vld [vmem:[%s158 + $0x2b8] sm:$0xff]
      %v260 = vld [vmem:[%s158 + $0x2c0] sm:$0xff]
      %v261 = vld [vmem:[%s158 + $0x2c8] sm:$0xff]
      %v262 = vld [vmem:[%s158 + $0x2d0] sm:$0xff]
      %v263 = vld [vmem:[%s158 + $0x2d8] sm:$0xff]
      %v264 = vld [vmem:[%s158 + $0x2e0] sm:$0xff]
      %v265 = vld [vmem:[%s158 + $0x2e8] sm:$0xff]
      %v266 = vld [vmem:[%s158 + $0x2f0] sm:$0xff]
      %v267 = vld [vmem:[%s158 + $0x2f8] sm:$0xff]
      %v268 = vld [vmem:[%s158 + $0x300] sm:$0xff]
      %v269 = vld [vmem:[%s158 + $0x308] sm:$0xff]
      %v270 = vld [vmem:[%s158 + $0x310] sm:$0xff]
      %v271 = vld [vmem:[%s158 + $0x318] sm:$0xff]
      %v272 = vld [vmem:[%s158 + $0x320] sm:$0xff]
      %v273 = vld [vmem:[%s158 + $0x328] sm:$0xff]
      %v274 = vld [vmem:[%s158 + $0x330] sm:$0xff]
      %v275 = vld [vmem:[%s158 + $0x338] sm:$0xff]
      %v276 = vld [vmem:[%s158 + $0x340] sm:$0xff]
      %v277 = vld [vmem:[%s158 + $0x348] sm:$0xff]
      %v278 = vld [vmem:[%s158 + $0x350] sm:$0xff]
      %v279 = vld [vmem:[%s158 + $0x358] sm:$0xff]
      %v280 = vld [vmem:[%s158 + $0x360] sm:$0xff]
      %v281 = vld [vmem:[%s158 + $0x368] sm:$0xff]
      %v282 = vld [vmem:[%s158 + $0x370] sm:$0xff]
      %v283 = vld [vmem:[%s158 + $0x378] sm:$0xff]
      %v284 = vld [vmem:[%s158 + $0x380] sm:$0xff]
      %v285 = vld [vmem:[%s158 + $0x388] sm:$0xff]
      %v286 = vld [vmem:[%s158 + $0x390] sm:$0xff]
      %v287 = vld [vmem:[%s158 + $0x398] sm:$0xff]
      %v288 = vld [vmem:[%s158 + $0x3a0] sm:$0xff]
      %v289 = vld [vmem:[%s158 + $0x3a8] sm:$0xff]
      %v290 = vld [vmem:[%s158 + $0x3b0] sm:$0xff]
      %v291 = vld [vmem:[%s158 + $0x3b8] sm:$0xff]
      %v292 = vld [vmem:[%s158 + $0x3c0] sm:$0xff]
      %v293 = vld [vmem:[%s158 + $0x3c8] sm:$0xff]
      %v294 = vld [vmem:[%s158 + $0x3d0] sm:$0xff]
      %v295 = vld [vmem:[%s158 + $0x3d8] sm:$0xff]
      %v296 = vld [vmem:[%s158 + $0x3e0] sm:$0xff]
      %v297 = vld [vmem:[%s158 + $0x3e8] sm:$0xff]
      %v298 = vld [vmem:[%s158 + $0x3f0] sm:$0xff]
      %v299 = vld [vmem:[%s158 + $0x3f8] sm:$0xff]
      %v300 = vld [vmem:[%s158 + $0x400] sm:$0xff]
      %v301 = vld [vmem:[%s158 + $0x408] sm:$0xff]
      %v302 = vld [vmem:[%s158 + $0x410] sm:$0xff]
      %v303 = vld [vmem:[%s158 + $0x418] sm:$0xff]
      %v304 = vld [vmem:[%s158 + $0x420] sm:$0xff]
      %v305 = vld [vmem:[%s158 + $0x428] sm:$0xff]
      %v306 = vld [vmem:[%s158 + $0x430] sm:$0xff]
      %v307 = vld [vmem:[%s158 + $0x438] sm:$0xff]
      %v308 = vld [vmem:[%s158 + $0x440] sm:$0xff]
      %v309 = vld [vmem:[%s158 + $0x448] sm:$0xff]
      %v310 = vld [vmem:[%s158 + $0x450] sm:$0xff]
      %v311 = vld [vmem:[%s158 + $0x458] sm:$0xff]
      %v312 = vld [vmem:[%s158 + $0x460] sm:$0xff]
      %v313 = vld [vmem:[%s158 + $0x468] sm:$0xff]
      %v314 = vld [vmem:[%s158 + $0x470] sm:$0xff]
      %v315 = vld [vmem:[%s158 + $0x478] sm:$0xff]
      %v316 = vld [vmem:[%s158 + $0x480] sm:$0xff]
      %v317 = vld [vmem:[%s158 + $0x488] sm:$0xff]
      %v318 = vld [vmem:[%s158 + $0x490] sm:$0xff]
      %v319 = vld [vmem:[%s158 + $0x498] sm:$0xff]
      %v320 = vld [vmem:[%s158 + $0x4a0] sm:$0xff]
      %v321 = vld [vmem:[%s158 + $0x4a8] sm:$0xff]
      %v322 = vld [vmem:[%s158 + $0x4b0] sm:$0xff]
      %v323 = vld [vmem:[%s158 + $0x4b8] sm:$0xff]
      %v324 = vld [vmem:[%s158 + $0x4c0] sm:$0xff]
      %v325 = vld [vmem:[%s158 + $0x4c8] sm:$0xff]
      %v326 = vld [vmem:[%s158 + $0x4d0] sm:$0xff]
      %v327 = vld [vmem:[%s158 + $0x4d8] sm:$0xff]
      %v328 = vld [vmem:[%s158 + $0x4e0] sm:$0xff]
      %v329 = vld [vmem:[%s158 + $0x4e8] sm:$0xff]
      %v330 = vld [vmem:[%s158 + $0x4f0] sm:$0xff]
      %v331 = vld [vmem:[%s158 + $0x4f8] sm:$0xff]
      %v332 = vld [vmem:[%s158 + $0x500] sm:$0xff]
      %v333 = vld [vmem:[%s158 + $0x508] sm:$0xff]
      %v334 = vld [vmem:[%s158 + $0x510] sm:$0xff]
      %v335 = vld [vmem:[%s158 + $0x518] sm:$0xff]
      %v336 = vld [vmem:[%s158 + $0x520] sm:$0xff]
      %v337 = vld [vmem:[%s158 + $0x528] sm:$0xff]
      %v338 = vld [vmem:[%s158 + $0x530] sm:$0xff]
      %v339 = vld [vmem:[%s158 + $0x538] sm:$0xff]
      %v340 = vld [vmem:[%s158 + $0x540] sm:$0xff]
      %v341 = vld [vmem:[%s158 + $0x548] sm:$0xff]
      %v342 = vld [vmem:[%s158 + $0x550] sm:$0xff]
      %v343 = vld [vmem:[%s158 + $0x558] sm:$0xff]
      %v344 = vld [vmem:[%s158 + $0x560] sm:$0xff]
      %v345 = vld [vmem:[%s158 + $0x568] sm:$0xff]
      %v346 = vld [vmem:[%s158 + $0x570] sm:$0xff]
      %v347 = vld [vmem:[%s158 + $0x578] sm:$0xff]
      %v348 = vld [vmem:[%s158 + $0x580] sm:$0xff]
      %v349 = vld [vmem:[%s158 + $0x588] sm:$0xff]
      %v350 = vld [vmem:[%s158 + $0x590] sm:$0xff]
      %v351 = vld [vmem:[%s158 + $0x598] sm:$0xff]
      %v352 = vld [vmem:[%s158 + $0x5a0] sm:$0xff]
      %v353 = vld [vmem:[%s158 + $0x5a8] sm:$0xff]
      %v354 = vld [vmem:[%s158 + $0x5b0] sm:$0xff]
      %v355 = vld [vmem:[%s158 + $0x5b8] sm:$0xff]
      %v356 = vld [vmem:[%s158 + $0x5c0] sm:$0xff]
      %v357 = vld [vmem:[%s158 + $0x5c8] sm:$0xff]
      %v358 = vld [vmem:[%s158 + $0x5d0] sm:$0xff]
      %v359 = vld [vmem:[%s158 + $0x5d8] sm:$0xff]
      %v360 = vld [vmem:[%s158 + $0x5e0] sm:$0xff]
      %v361 = vld [vmem:[%s158 + $0x5e8] sm:$0xff]
      %v362 = vld [vmem:[%s158 + $0x5f0] sm:$0xff]
      %v363 = vld [vmem:[%s158 + $0x5f8] sm:$0xff]
      %v364 = vld [vmem:[%s158 + $0x600] sm:$0xff]
      %v365 = vld [vmem:[%s158 + $0x608] sm:$0xff]
      %v366 = vld [vmem:[%s158 + $0x610] sm:$0xff]
      %v367 = vld [vmem:[%s158 + $0x618] sm:$0xff]
      %v368 = vld [vmem:[%s158 + $0x620] sm:$0xff]
      %v369 = vld [vmem:[%s158 + $0x628] sm:$0xff]
      %v370 = vld [vmem:[%s158 + $0x630] sm:$0xff]
      %v371 = vld [vmem:[%s158 + $0x638] sm:$0xff]
      %v372 = vld [vmem:[%s158 + $0x640] sm:$0xff]
      %v373 = vld [vmem:[%s158 + $0x648] sm:$0xff]
      %v374 = vld [vmem:[%s158 + $0x650] sm:$0xff]
      %v375 = vld [vmem:[%s158 + $0x658] sm:$0xff]
      %v376 = vld [vmem:[%s158 + $0x660] sm:$0xff]
      %v377 = vld [vmem:[%s158 + $0x668] sm:$0xff]
      %v378 = vld [vmem:[%s158 + $0x670] sm:$0xff]
      %v379 = vld [vmem:[%s158 + $0x678] sm:$0xff]
      %v380 = vld [vmem:[%s158 + $0x680] sm:$0xff]
      %v381 = vld [vmem:[%s158 + $0x688] sm:$0xff]
      %v382 = vld [vmem:[%s158 + $0x690] sm:$0xff]
      %v383 = vld [vmem:[%s158 + $0x698] sm:$0xff]
      %v384 = vld [vmem:[%s158 + $0x6a0] sm:$0xff]
      %v385 = vld [vmem:[%s158 + $0x6a8] sm:$0xff]
      %v386 = vld [vmem:[%s158 + $0x6b0] sm:$0xff]
      %v387 = vld [vmem:[%s158 + $0x6b8] sm:$0xff]
      %v388 = vld [vmem:[%s158 + $0x6c0] sm:$0xff]
      %v389 = vld [vmem:[%s158 + $0x6c8] sm:$0xff]
      %v390 = vld [vmem:[%s158 + $0x6d0] sm:$0xff]
      %v391 = vld [vmem:[%s158 + $0x6d8] sm:$0xff]
      %v392 = vld [vmem:[%s158 + $0x6e0] sm:$0xff]
      %v393 = vld [vmem:[%s158 + $0x6e8] sm:$0xff]
      %v394 = vld [vmem:[%s158 + $0x6f0] sm:$0xff]
      %v395 = vld [vmem:[%s158 + $0x6f8] sm:$0xff]
      %v396 = vld [vmem:[%s158 + $0x700] sm:$0xff]
      %v397 = vld [vmem:[%s158 + $0x708] sm:$0xff]
      %v398 = vld [vmem:[%s158 + $0x710] sm:$0xff]
      %v399 = vld [vmem:[%s158 + $0x718] sm:$0xff]
      %v400 = vld [vmem:[%s158 + $0x720] sm:$0xff]
      %v401 = vld [vmem:[%s158 + $0x728] sm:$0xff]
      %v402 = vld [vmem:[%s158 + $0x730] sm:$0xff]
      %v403 = vld [vmem:[%s158 + $0x738] sm:$0xff]
      %v404 = vld [vmem:[%s158 + $0x740] sm:$0xff]
      %v405 = vld [vmem:[%s158 + $0x748] sm:$0xff]
      %v406 = vld [vmem:[%s158 + $0x750] sm:$0xff]
      %v407 = vld [vmem:[%s158 + $0x758] sm:$0xff]
      %v408 = vld [vmem:[%s158 + $0x760] sm:$0xff]
      %v409 = vld [vmem:[%s158 + $0x768] sm:$0xff]
      %v410 = vld [vmem:[%s158 + $0x770] sm:$0xff]
      %v411 = vld [vmem:[%s158 + $0x778] sm:$0xff]
      %v412 = vld [vmem:[%s158 + $0x780] sm:$0xff]
      %v413 = vld [vmem:[%s158 + $0x788] sm:$0xff]
      %v414 = vld [vmem:[%s158 + $0x790] sm:$0xff]
      %v415 = vld [vmem:[%s158 + $0x798] sm:$0xff]
      %v416 = vld [vmem:[%s158 + $0x7a0] sm:$0xff]
      %v417 = vld [vmem:[%s158 + $0x7a8] sm:$0xff]
      %v418 = vld [vmem:[%s158 + $0x7b0] sm:$0xff]
      %v419 = vld [vmem:[%s158 + $0x7b8] sm:$0xff]
      %v420 = vld [vmem:[%s158 + $0x7c0] sm:$0xff]
      %v421 = vld [vmem:[%s158 + $0x7c8] sm:$0xff]
      %v422 = vld [vmem:[%s158 + $0x7d0] sm:$0xff]
      %v423 = vld [vmem:[%s158 + $0x7d8] sm:$0xff]
      %v424 = vld [vmem:[%s158 + $0x7e0] sm:$0xff]
      %v425 = vld [vmem:[%s158 + $0x7e8] sm:$0xff]
      %v426 = vld [vmem:[%s158 + $0x7f0] sm:$0xff]
      %v427 = vld [vmem:[%s158 + $0x7f8] sm:$0xff]
      %v428 = vld [vmem:[%s158 + $0x800] sm:$0xff]
      %v429 = vld [vmem:[%s158 + $0x808] sm:$0xff]
      %v430 = vld [vmem:[%s158 + $0x810] sm:$0xff]
      %v431 = vld [vmem:[%s158 + $0x818] sm:$0xff]
      %v432 = vld [vmem:[%s158 + $0x820] sm:$0xff]
      %v433 = vld [vmem:[%s158 + $0x828] sm:$0xff]
      %v434 = vld [vmem:[%s158 + $0x830] sm:$0xff]
      %v435 = vld [vmem:[%s158 + $0x838] sm:$0xff]
      %v436 = vld [vmem:[%s158 + $0x840] sm:$0xff]
      %v437 = vld [vmem:[%s158 + $0x848] sm:$0xff]
      %v438 = vld [vmem:[%s158 + $0x850] sm:$0xff]
      %v439 = vld [vmem:[%s158 + $0x858] sm:$0xff]
      %v440 = vld [vmem:[%s158 + $0x860] sm:$0xff]
      %v441 = vld [vmem:[%s158 + $0x868] sm:$0xff]
      %v442 = vld [vmem:[%s158 + $0x870] sm:$0xff]
      %v443 = vld [vmem:[%s158 + $0x878] sm:$0xff]
      %v444 = vld [vmem:[%s158 + $0x880] sm:$0xff]
      %v445 = vld [vmem:[%s158 + $0x888] sm:$0xff]
      %v446 = vld [vmem:[%s158 + $0x890] sm:$0xff]
      %v447 = vld [vmem:[%s158 + $0x898] sm:$0xff]
      %v448 = vld [vmem:[%s158 + $0x8a0] sm:$0xff]
      %v449 = vld [vmem:[%s158 + $0x8a8] sm:$0xff]
      %v450 = vld [vmem:[%s158 + $0x8b0] sm:$0xff]
      %v451 = vld [vmem:[%s158 + $0x8b8] sm:$0xff]
      %v452 = vld [vmem:[%s158 + $0x8c0] sm:$0xff]
      %v453 = vld [vmem:[%s158 + $0x8c8] sm:$0xff]
      %v454 = vld [vmem:[%s158 + $0x8d0] sm:$0xff]
      %v455 = vld [vmem:[%s158 + $0x8d8] sm:$0xff]
      %v456 = vld [vmem:[%s158 + $0x8e0] sm:$0xff]
      %v457 = vld [vmem:[%s158 + $0x8e8] sm:$0xff]
      %v458 = vld [vmem:[%s158 + $0x8f0] sm:$0xff]
      %v459 = vld [vmem:[%s158 + $0x8f8] sm:$0xff]
      %v460 = vld [vmem:[%s158 + $0x900] sm:$0xff]
      %v461 = vld [vmem:[%s158 + $0x908] sm:$0xff]
      %v462 = vld [vmem:[%s158 + $0x910] sm:$0xff]
      %v463 = vld [vmem:[%s158 + $0x918] sm:$0xff]
      %v464 = vld [vmem:[%s158 + $0x920] sm:$0xff]
      %v465 = vld [vmem:[%s158 + $0x928] sm:$0xff]
      %v466 = vld [vmem:[%s158 + $0x930] sm:$0xff]
      %v467 = vld [vmem:[%s158 + $0x938] sm:$0xff]
      %v468 = vld [vmem:[%s158 + $0x940] sm:$0xff]
      %v469 = vld [vmem:[%s158 + $0x948] sm:$0xff]
      %v470 = vld [vmem:[%s158 + $0x950] sm:$0xff]
      %v471 = vld [vmem:[%s158 + $0x958] sm:$0xff]
      %v472 = vld [vmem:[%s158 + $0x960] sm:$0xff]
      %v473 = vld [vmem:[%s158 + $0x968] sm:$0xff]
      %v474 = vld [vmem:[%s158 + $0x970] sm:$0xff]
      %v475 = vld [vmem:[%s158 + $0x978] sm:$0xff]
      %v476 = vld [vmem:[%s158 + $0x980] sm:$0xff]
      %v477 = vld [vmem:[%s158 + $0x988] sm:$0xff]
      %v478 = vld [vmem:[%s158 + $0x990] sm:$0xff]
      %v479 = vld [vmem:[%s158 + $0x998] sm:$0xff]
      %v480 = vld [vmem:[%s158 + $0x9a0] sm:$0xff]
      %v481 = vld [vmem:[%s158 + $0x9a8] sm:$0xff]
      %v482 = vld [vmem:[%s158 + $0x9b0] sm:$0xff]
      %v483 = vld [vmem:[%s158 + $0x9b8] sm:$0xff]
      %v484 = vld [vmem:[%s158 + $0x9c0] sm:$0xff]
      %v485 = vld [vmem:[%s158 + $0x9c8] sm:$0xff]
      %v486 = vld [vmem:[%s158 + $0x9d0] sm:$0xff]
      %v487 = vld [vmem:[%s158 + $0x9d8] sm:$0xff]
      %v488 = vld [vmem:[%s158 + $0x9e0] sm:$0xff]
      %v489 = vld [vmem:[%s158 + $0x9e8] sm:$0xff]
      %v490 = vld [vmem:[%s158 + $0x9f0] sm:$0xff]
      %v491 = vld [vmem:[%s158 + $0x9f8] sm:$0xff]
      %v492 = vld [vmem:[%s158 + $0xa00] sm:$0xff]
      %v493 = vld [vmem:[%s158 + $0xa08] sm:$0xff]
      %v494 = vld [vmem:[%s158 + $0xa10] sm:$0xff]
      %v495 = vld [vmem:[%s158 + $0xa18] sm:$0xff]
      %v496 = vld [vmem:[%s158 + $0xa20] sm:$0xff]
      %v497 = vld [vmem:[%s158 + $0xa28] sm:$0xff]
      %v498 = vld [vmem:[%s158 + $0xa30] sm:$0xff]
      %v499 = vld [vmem:[%s158 + $0xa38] sm:$0xff]
      %v500 = vld [vmem:[%s158 + $0xa40] sm:$0xff]
      %v501 = vld [vmem:[%s158 + $0xa48] sm:$0xff]
      %v502 = vld [vmem:[%s158 + $0xa50] sm:$0xff]
      %v503 = vld [vmem:[%s158 + $0xa58] sm:$0xff]
      %v504 = vld [vmem:[%s158 + $0xa60] sm:$0xff]
      %v505 = vld [vmem:[%s158 + $0xa68] sm:$0xff]
      %v506 = vld [vmem:[%s158 + $0xa70] sm:$0xff]
      %v507 = vld [vmem:[%s158 + $0xa78] sm:$0xff]
      %v508 = vld [vmem:[%s158 + $0xa80] sm:$0xff]
      %v509 = vld [vmem:[%s158 + $0xa88] sm:$0xff]
      %v510 = vld [vmem:[%s158 + $0xa90] sm:$0xff]
      %v511 = vld [vmem:[%s158 + $0xa98] sm:$0xff]
      %v512 = vld [vmem:[%s158 + $0xaa0] sm:$0xff]
      %v513 = vld [vmem:[%s158 + $0xaa8] sm:$0xff]
      %v514 = vld [vmem:[%s158 + $0xab0] sm:$0xff]
      %v515 = vld [vmem:[%s158 + $0xab8] sm:$0xff]
      %v516 = vld [vmem:[%s158 + $0xac0] sm:$0xff]
      %v517 = vld [vmem:[%s158 + $0xac8] sm:$0xff]
      %v518 = vld [vmem:[%s158 + $0xad0] sm:$0xff]
      %v519 = vld [vmem:[%s158 + $0xad8] sm:$0xff]
      %v520 = vld [vmem:[%s158 + $0xae0] sm:$0xff]
      %v521 = vld [vmem:[%s158 + $0xae8] sm:$0xff]
      %v522 = vld [vmem:[%s158 + $0xaf0] sm:$0xff]
      %v523 = vld [vmem:[%s158 + $0xaf8] sm:$0xff]
      %v524 = vld [vmem:[%s158 + $0xb00] sm:$0xff]
      %v525 = vld [vmem:[%s158 + $0xb08] sm:$0xff]
      %v526 = vld [vmem:[%s158 + $0xb10] sm:$0xff]
      %v527 = vld [vmem:[%s158 + $0xb18] sm:$0xff]
      %v528 = vld [vmem:[%s158 + $0xb20] sm:$0xff]
      %v529 = vld [vmem:[%s158 + $0xb28] sm:$0xff]
      %v530 = vld [vmem:[%s158 + $0xb30] sm:$0xff]
      %v531 = vld [vmem:[%s158 + $0xb38] sm:$0xff]
      %v532 = vld [vmem:[%s158 + $0xb40] sm:$0xff]
      %v533 = vld [vmem:[%s158 + $0xb48] sm:$0xff]
      %v534 = vld [vmem:[%s158 + $0xb50] sm:$0xff]
      %v535 = vld [vmem:[%s158 + $0xb58] sm:$0xff]
      %v536 = vld [vmem:[%s158 + $0xb60] sm:$0xff]
      %v537 = vld [vmem:[%s158 + $0xb68] sm:$0xff]
      %v538 = vld [vmem:[%s158 + $0xb70] sm:$0xff]
      %v539 = vld [vmem:[%s158 + $0xb78] sm:$0xff]
      %v540 = vld [vmem:[%s158 + $0xb80] sm:$0xff]
      %v541 = vld [vmem:[%s158 + $0xb88] sm:$0xff]
      %v542 = vld [vmem:[%s158 + $0xb90] sm:$0xff]
      %v543 = vld [vmem:[%s158 + $0xb98] sm:$0xff]
      %v544 = vld [vmem:[%s158 + $0xba0] sm:$0xff]
      %v545 = vld [vmem:[%s158 + $0xba8] sm:$0xff]
      %v546 = vld [vmem:[%s158 + $0xbb0] sm:$0xff]
      %v547 = vld [vmem:[%s158 + $0xbb8] sm:$0xff]
      %v548 = vld [vmem:[%s158 + $0xbc0] sm:$0xff]
      %v549 = vld [vmem:[%s158 + $0xbc8] sm:$0xff]
      %v550 = vld [vmem:[%s158 + $0xbd0] sm:$0xff]
      %v551 = vld [vmem:[%s158 + $0xbd8] sm:$0xff]
      %v552 = vld [vmem:[%s158 + $0xbe0] sm:$0xff]
      %v553 = vld [vmem:[%s158 + $0xbe8] sm:$0xff]
      %v554 = vld [vmem:[%s158 + $0xbf0] sm:$0xff]
      %v555 = vld [vmem:[%s158 + $0xbf8] sm:$0xff]
      %v556 = vld [vmem:[%s158 + $0xc00] sm:$0xff]
      %v557 = vld [vmem:[%s158 + $0xc08] sm:$0xff]
      %v558 = vld [vmem:[%s158 + $0xc10] sm:$0xff]
      %v559 = vld [vmem:[%s158 + $0xc18] sm:$0xff]
      %v560 = vld [vmem:[%s158 + $0xc20] sm:$0xff]
      %v561 = vld [vmem:[%s158 + $0xc28] sm:$0xff]
      %v562 = vld [vmem:[%s158 + $0xc30] sm:$0xff]
      %v563 = vld [vmem:[%s158 + $0xc38] sm:$0xff]
      %v564 = vld [vmem:[%s158 + $0xc40] sm:$0xff]
      %v565 = vld [vmem:[%s158 + $0xc48] sm:$0xff]
      %v566 = vld [vmem:[%s158 + $0xc50] sm:$0xff]
      %v567 = vld [vmem:[%s158 + $0xc58] sm:$0xff]
      %v568 = vld [vmem:[%s158 + $0xc60] sm:$0xff]
      %v569 = vld [vmem:[%s158 + $0xc68] sm:$0xff]
      %v570 = vld [vmem:[%s158 + $0xc70] sm:$0xff]
      %v571 = vld [vmem:[%s158 + $0xc78] sm:$0xff]
      %v572 = vld [vmem:[%s158 + $0xc80] sm:$0xff]
      %v573 = vld [vmem:[%s158 + $0xc88] sm:$0xff]
      %v574 = vld [vmem:[%s158 + $0xc90] sm:$0xff]
      %v575 = vld [vmem:[%s158 + $0xc98] sm:$0xff]
      %v576 = vld [vmem:[%s158 + $0xca0] sm:$0xff]
      %v577 = vld [vmem:[%s158 + $0xca8] sm:$0xff]
      %v578 = vld [vmem:[%s158 + $0xcb0] sm:$0xff]
      %v579 = vld [vmem:[%s158 + $0xcb8] sm:$0xff]
      %v580 = vld [vmem:[%s158 + $0xcc0] sm:$0xff]
      %v581 = vld [vmem:[%s158 + $0xcc8] sm:$0xff]
      %v582 = vld [vmem:[%s158 + $0xcd0] sm:$0xff]
      %v583 = vld [vmem:[%s158 + $0xcd8] sm:$0xff]
      %v584 = vld [vmem:[%s158 + $0xce0] sm:$0xff]
      %v585 = vld [vmem:[%s158 + $0xce8] sm:$0xff]
      %v586 = vld [vmem:[%s158 + $0xcf0] sm:$0xff]
      %v587 = vld [vmem:[%s158 + $0xcf8] sm:$0xff]
      %v588 = vld [vmem:[%s158 + $0xd00] sm:$0xff]
      %v589 = vld [vmem:[%s158 + $0xd08] sm:$0xff]
      %v590 = vld [vmem:[%s158 + $0xd10] sm:$0xff]
      %v591 = vld [vmem:[%s158 + $0xd18] sm:$0xff]
      %v592 = vld [vmem:[%s158 + $0xd20] sm:$0xff]
      %v593 = vld [vmem:[%s158 + $0xd28] sm:$0xff]
      %v594 = vld [vmem:[%s158 + $0xd30] sm:$0xff]
      %v595 = vld [vmem:[%s158 + $0xd38] sm:$0xff]
      %v596 = vld [vmem:[%s158 + $0xd40] sm:$0xff]
      %v597 = vld [vmem:[%s158 + $0xd48] sm:$0xff]
      %v598 = vld [vmem:[%s158 + $0xd50] sm:$0xff]
      %v599 = vld [vmem:[%s158 + $0xd58] sm:$0xff]
      %v600 = vld [vmem:[%s158 + $0xd60] sm:$0xff]
      %v601 = vld [vmem:[%s158 + $0xd68] sm:$0xff]
      %v602 = vld [vmem:[%s158 + $0xd70] sm:$0xff]
      %v603 = vld [vmem:[%s158 + $0xd78] sm:$0xff]
      %v604 = vld [vmem:[%s158 + $0xd80] sm:$0xff]
      %v605 = vld [vmem:[%s158 + $0xd88] sm:$0xff]
      %v606 = vld [vmem:[%s158 + $0xd90] sm:$0xff]
      %v607 = vld [vmem:[%s158 + $0xd98] sm:$0xff]
      %v608 = vld [vmem:[%s158 + $0xda0] sm:$0xff]
      %v609 = vld [vmem:[%s158 + $0xda8] sm:$0xff]
      %v610 = vld [vmem:[%s158 + $0xdb0] sm:$0xff]
      %v611 = vld [vmem:[%s158 + $0xdb8] sm:$0xff]
      %v612 = vld [vmem:[%s158 + $0xdc0] sm:$0xff]
      %v613 = vld [vmem:[%s158 + $0xdc8] sm:$0xff]
      %v614 = vld [vmem:[%s158 + $0xdd0] sm:$0xff]
      %v615 = vld [vmem:[%s158 + $0xdd8] sm:$0xff]
      %v616 = vld [vmem:[%s158 + $0xde0] sm:$0xff]
      %v617 = vld [vmem:[%s158 + $0xde8] sm:$0xff]
      %v618 = vld [vmem:[%s158 + $0xdf0] sm:$0xff]
      %v619 = vld [vmem:[%s158 + $0xdf8] sm:$0xff]
      %v620 = vld [vmem:[%s158 + $0xe00] sm:$0xff]
      %v621 = vld [vmem:[%s158 + $0xe08] sm:$0xff]
      %v622 = vld [vmem:[%s158 + $0xe10] sm:$0xff]
      %v623 = vld [vmem:[%s158 + $0xe18] sm:$0xff]
      %v624 = vld [vmem:[%s158 + $0xe20] sm:$0xff]
      %v625 = vld [vmem:[%s158 + $0xe28] sm:$0xff]
      %v626 = vld [vmem:[%s158 + $0xe30] sm:$0xff]
      %v627 = vld [vmem:[%s158 + $0xe38] sm:$0xff]
      %v628 = vld [vmem:[%s158 + $0xe40] sm:$0xff]
      %v629 = vld [vmem:[%s158 + $0xe48] sm:$0xff]
      %v630 = vld [vmem:[%s158 + $0xe50] sm:$0xff]
      %v631 = vld [vmem:[%s158 + $0xe58] sm:$0xff]
      %v632 = vld [vmem:[%s158 + $0xe60] sm:$0xff]
      %v633 = vld [vmem:[%s158 + $0xe68] sm:$0xff]
      %v634 = vld [vmem:[%s158 + $0xe70] sm:$0xff]
      %v635 = vld [vmem:[%s158 + $0xe78] sm:$0xff]
      %v636 = vld [vmem:[%s158 + $0xe80] sm:$0xff]
      %v637 = vld [vmem:[%s158 + $0xe88] sm:$0xff]
      %v638 = vld [vmem:[%s158 + $0xe90] sm:$0xff]
      %v639 = vld [vmem:[%s158 + $0xe98] sm:$0xff]
      %v640 = vld [vmem:[%s158 + $0xea0] sm:$0xff]
      %v641 = vld [vmem:[%s158 + $0xea8] sm:$0xff]
      %v642 = vld [vmem:[%s158 + $0xeb0] sm:$0xff]
      %v643 = vld [vmem:[%s158 + $0xeb8] sm:$0xff]
      %v644 = vld [vmem:[%s158 + $0xec0] sm:$0xff]
      %v645 = vld [vmem:[%s158 + $0xec8] sm:$0xff]
      %v646 = vld [vmem:[%s158 + $0xed0] sm:$0xff]
      %v647 = vld [vmem:[%s158 + $0xed8] sm:$0xff]
      %v648 = vld [vmem:[%s158 + $0xee0] sm:$0xff]
      %v649 = vld [vmem:[%s158 + $0xee8] sm:$0xff]
      %v650 = vld [vmem:[%s158 + $0xef0] sm:$0xff]
      %v651 = vld [vmem:[%s158 + $0xef8] sm:$0xff]
      %v652 = vld [vmem:[%s158 + $0xf00] sm:$0xff]
      %v653 = vld [vmem:[%s158 + $0xf08] sm:$0xff]
      %v654 = vld [vmem:[%s158 + $0xf10] sm:$0xff]
      %v655 = vld [vmem:[%s158 + $0xf18] sm:$0xff]
      %v656 = vld [vmem:[%s158 + $0xf20] sm:$0xff]
      %v657 = vld [vmem:[%s158 + $0xf28] sm:$0xff]
      %v658 = vld [vmem:[%s158 + $0xf30] sm:$0xff]
      %v659 = vld [vmem:[%s158 + $0xf38] sm:$0xff]
      %v660 = vld [vmem:[%s158 + $0xf40] sm:$0xff]
      %v661 = vld [vmem:[%s158 + $0xf48] sm:$0xff]
      %v662 = vld [vmem:[%s158 + $0xf50] sm:$0xff]
      %v663 = vld [vmem:[%s158 + $0xf58] sm:$0xff]
      %v664 = vld [vmem:[%s158 + $0xf60] sm:$0xff]
      %v665 = vld [vmem:[%s158 + $0xf68] sm:$0xff]
      %v666 = vld [vmem:[%s158 + $0xf70] sm:$0xff]
      %v667 = vld [vmem:[%s158 + $0xf78] sm:$0xff]
      %v668 = vld [vmem:[%s158 + $0xf80] sm:$0xff]
      %v669 = vld [vmem:[%s158 + $0xf88] sm:$0xff]
      %v670 = vld [vmem:[%s158 + $0xf90] sm:$0xff]
      %v671 = vld [vmem:[%s158 + $0xf98] sm:$0xff]
      %v672 = vld [vmem:[%s158 + $0xfa0] sm:$0xff]
      %v673 = vld [vmem:[%s158 + $0xfa8] sm:$0xff]
      %v674 = vld [vmem:[%s158 + $0xfb0] sm:$0xff]
      %v675 = vld [vmem:[%s158 + $0xfb8] sm:$0xff]
      %v676 = vld [vmem:[%s158 + $0xfc0] sm:$0xff]
      %v677 = vld [vmem:[%s158 + $0xfc8] sm:$0xff]
      %v678 = vld [vmem:[%s158 + $0xfd0] sm:$0xff]
      %v679 = vld [vmem:[%s158 + $0xfd8] sm:$0xff]
      %v680 = vld [vmem:[%s158 + $0xfe0] sm:$0xff]
      %v681 = vld [vmem:[%s158 + $0xfe8] sm:$0xff]
      %v682 = vld [vmem:[%s158 + $0xff0] sm:$0xff]
      %v683 = vld [vmem:[%s158 + $0xff8] sm:$0xff]
      %v684 = vld [vmem:[%s158 + $0x1000] sm:$0xff]
      %v685 = vld [vmem:[%s158 + $0x1008] sm:$0xff]
      %v686 = vld [vmem:[%s158 + $0x1010] sm:$0xff]
      %v687 = vld [vmem:[%s158 + $0x1018] sm:$0xff]
      %v688 = vld [vmem:[%s158 + $0x1020] sm:$0xff]
      %v689 = vld [vmem:[%s158 + $0x1028] sm:$0xff]
      %v690 = vld [vmem:[%s158 + $0x1030] sm:$0xff]
      %v691 = vld [vmem:[%s158 + $0x1038] sm:$0xff]
      %v692 = vld [vmem:[%s158 + $0x1040] sm:$0xff]
      %v693 = vld [vmem:[%s158 + $0x1048] sm:$0xff]
      %v694 = vld [vmem:[%s158 + $0x1050] sm:$0xff]
      %v695 = vld [vmem:[%s158 + $0x1058] sm:$0xff]
      %v696 = vld [vmem:[%s158 + $0x1060] sm:$0xff]
      %v697 = vld [vmem:[%s158 + $0x1068] sm:$0xff]
      %v698 = vld [vmem:[%s158 + $0x1070] sm:$0xff]
      %v699 = vld [vmem:[%s158 + $0x1078] sm:$0xff]
      %v700 = vld [vmem:[%s158 + $0x1080] sm:$0xff]
      %v701 = vld [vmem:[%s158 + $0x1088] sm:$0xff]
      %v702 = vld [vmem:[%s158 + $0x1090] sm:$0xff]
      %v703 = vld [vmem:[%s158 + $0x1098] sm:$0xff]
      %v704 = vld [vmem:[%s158 + $0x10a0] sm:$0xff]
      %v705 = vld [vmem:[%s158 + $0x10a8] sm:$0xff]
      %v706 = vld [vmem:[%s158 + $0x10b0] sm:$0xff]
      %v707 = vld [vmem:[%s158 + $0x10b8] sm:$0xff]
      %v708 = vld [vmem:[%s158 + $0x10c0] sm:$0xff]
      %v709 = vld [vmem:[%s158 + $0x10c8] sm:$0xff]
      %v710 = vld [vmem:[%s158 + $0x10d0] sm:$0xff]
      %v711 = vld [vmem:[%s158 + $0x10d8] sm:$0xff]
      %v712 = vld [vmem:[%s158 + $0x10e0] sm:$0xff]
      %v713 = vld [vmem:[%s158 + $0x10e8] sm:$0xff]
      %v714 = vld [vmem:[%s158 + $0x10f0] sm:$0xff]
      %v715 = vld [vmem:[%s158 + $0x10f8] sm:$0xff]
      %v716 = vld [vmem:[%s158 + $0x1100] sm:$0xff]
      %v717 = vld [vmem:[%s158 + $0x1108] sm:$0xff]
      %v718 = vld [vmem:[%s158 + $0x1110] sm:$0xff]
      %v719 = vld [vmem:[%s158 + $0x1118] sm:$0xff]
      %v720 = vld [vmem:[%s158 + $0x1120] sm:$0xff]
      %v721 = vld [vmem:[%s158 + $0x1128] sm:$0xff]
      %v722 = vld [vmem:[%s158 + $0x1130] sm:$0xff]
      %v723 = vld [vmem:[%s158 + $0x1138] sm:$0xff]
      %v724 = vld [vmem:[%s158 + $0x1140] sm:$0xff]
      %v725 = vld [vmem:[%s158 + $0x1148] sm:$0xff]
      %v726 = vld [vmem:[%s158 + $0x1150] sm:$0xff]
      %v727 = vld [vmem:[%s158 + $0x1158] sm:$0xff]
      %v728 = vld [vmem:[%s158 + $0x1160] sm:$0xff]
      %v729 = vld [vmem:[%s158 + $0x1168] sm:$0xff]
      %v730 = vld [vmem:[%s158 + $0x1170] sm:$0xff]
      %v731 = vld [vmem:[%s158 + $0x1178] sm:$0xff]
      %v732 = vld [vmem:[%s158 + $0x1180] sm:$0xff]
      %v733 = vld [vmem:[%s158 + $0x1188] sm:$0xff]
      %v734 = vld [vmem:[%s158 + $0x1190] sm:$0xff]
      %v735 = vld [vmem:[%s158 + $0x1198] sm:$0xff]
      %v736 = vld [vmem:[%s158 + $0x11a0] sm:$0xff]
      %v737 = vld [vmem:[%s158 + $0x11a8] sm:$0xff]
      %v738 = vld [vmem:[%s158 + $0x11b0] sm:$0xff]
      %v739 = vld [vmem:[%s158 + $0x11b8] sm:$0xff]
      %v740 = vld [vmem:[%s158 + $0x11c0] sm:$0xff]
      %v741 = vld [vmem:[%s158 + $0x11c8] sm:$0xff]
      %v742 = vld [vmem:[%s158 + $0x11d0] sm:$0xff]
      %v743 = vld [vmem:[%s158 + $0x11d8] sm:$0xff]
      %v744 = vld [vmem:[%s158 + $0x11e0] sm:$0xff]
      %v745 = vld [vmem:[%s158 + $0x11e8] sm:$0xff]
      %v746 = vld [vmem:[%s158 + $0x11f0] sm:$0xff]
      %v747 = vld [vmem:[%s158 + $0x11f8] sm:$0xff]
      %v748 = vld [vmem:[%s158 + $0x1200] sm:$0xff]
      %v749 = vld [vmem:[%s158 + $0x1208] sm:$0xff]
      %v750 = vld [vmem:[%s158 + $0x1210] sm:$0xff]
      %v751 = vld [vmem:[%s158 + $0x1218] sm:$0xff]
      %v752 = vld [vmem:[%s158 + $0x1220] sm:$0xff]
      %v753 = vld [vmem:[%s158 + $0x1228] sm:$0xff]
      %v754 = vld [vmem:[%s158 + $0x1230] sm:$0xff]
      %v755 = vld [vmem:[%s158 + $0x1238] sm:$0xff]
      %v756 = vld [vmem:[%s158 + $0x1240] sm:$0xff]
      %v757 = vld [vmem:[%s158 + $0x1248] sm:$0xff]
      %v758 = vld [vmem:[%s158 + $0x1250] sm:$0xff]
      %v759 = vld [vmem:[%s158 + $0x1258] sm:$0xff]
      %v760 = vld [vmem:[%s158 + $0x1260] sm:$0xff]
      %v761 = vld [vmem:[%s158 + $0x1268] sm:$0xff]
      %v762 = vld [vmem:[%s158 + $0x1270] sm:$0xff]
      %v763 = vld [vmem:[%s158 + $0x1278] sm:$0xff]
      %v764 = vld [vmem:[%s158 + $0x1280] sm:$0xff]
      %v765 = vld [vmem:[%s158 + $0x1288] sm:$0xff]
      %v766 = vld [vmem:[%s158 + $0x1290] sm:$0xff]
      %v767 = vld [vmem:[%s158 + $0x1298] sm:$0xff]
      %v768 = vld [vmem:[%s158 + $0x12a0] sm:$0xff]
      %v769 = vld [vmem:[%s158 + $0x12a8] sm:$0xff]
      %v770 = vld [vmem:[%s158 + $0x12b0] sm:$0xff]
      %v771 = vld [vmem:[%s158 + $0x12b8] sm:$0xff]
      %v772 = vld [vmem:[%s158 + $0x12c0] sm:$0xff]
      %v773 = vld [vmem:[%s158 + $0x12c8] sm:$0xff]
      %v774 = vld [vmem:[%s158 + $0x12d0] sm:$0xff]
      %v775 = vld [vmem:[%s158 + $0x12d8] sm:$0xff]
      %v776 = vld [vmem:[%s158 + $0x12e0] sm:$0xff]
      %v777 = vld [vmem:[%s158 + $0x12e8] sm:$0xff]
      %v778 = vld [vmem:[%s158 + $0x12f0] sm:$0xff]
      %v779 = vld [vmem:[%s158 + $0x12f8] sm:$0xff]
      %v780 = vld [vmem:[%s158 + $0x1300] sm:$0xff]
      %v781 = vld [vmem:[%s158 + $0x1308] sm:$0xff]
      %v782 = vld [vmem:[%s158 + $0x1310] sm:$0xff]
      %v783 = vld [vmem:[%s158 + $0x1318] sm:$0xff]
      %v784 = vld [vmem:[%s158 + $0x1320] sm:$0xff]
      %v785 = vld [vmem:[%s158 + $0x1328] sm:$0xff]
      %v786 = vld [vmem:[%s158 + $0x1330] sm:$0xff]
      %v787 = vld [vmem:[%s158 + $0x1338] sm:$0xff]
      %v788 = vld [vmem:[%s158 + $0x1340] sm:$0xff]
      %v789 = vld [vmem:[%s158 + $0x1348] sm:$0xff]
      %v790 = vld [vmem:[%s158 + $0x1350] sm:$0xff]
      %v791 = vld [vmem:[%s158 + $0x1358] sm:$0xff]
      %v792 = vld [vmem:[%s158 + $0x1360] sm:$0xff]
      %v793 = vld [vmem:[%s158 + $0x1368] sm:$0xff]
      %v794 = vld [vmem:[%s158 + $0x1370] sm:$0xff]
      %v795 = vld [vmem:[%s158 + $0x1378] sm:$0xff]
      %v796 = vld [vmem:[%s158 + $0x1380] sm:$0xff]
      %v797 = vld [vmem:[%s158 + $0x1388] sm:$0xff]
      %v798 = vld [vmem:[%s158 + $0x1390] sm:$0xff]
      %v799 = vld [vmem:[%s158 + $0x1398] sm:$0xff]
      %v800 = vld [vmem:[%s158 + $0x13a0] sm:$0xff]
      %v801 = vld [vmem:[%s158 + $0x13a8] sm:$0xff]
      %v802 = vld [vmem:[%s158 + $0x13b0] sm:$0xff]
      %v803 = vld [vmem:[%s158 + $0x13b8] sm:$0xff]
      %v804 = vld [vmem:[%s158 + $0x13c0] sm:$0xff]
      %v805 = vld [vmem:[%s158 + $0x13c8] sm:$0xff]
      %v806 = vld [vmem:[%s158 + $0x13d0] sm:$0xff]
      %v807 = vld [vmem:[%s158 + $0x13d8] sm:$0xff]
      %v808 = vld [vmem:[%s158 + $0x13e0] sm:$0xff]
      %v809 = vld [vmem:[%s158 + $0x13e8] sm:$0xff]
      %v810 = vld [vmem:[%s158 + $0x13f0] sm:$0xff]
      %v811 = vld [vmem:[%s158 + $0x13f8] sm:$0xff]
      %v812 = vld [vmem:[%s158 + $0x1400] sm:$0xff]
      %v813 = vld [vmem:[%s158 + $0x1408] sm:$0xff]
      %v814 = vld [vmem:[%s158 + $0x1410] sm:$0xff]
      %v815 = vld [vmem:[%s158 + $0x1418] sm:$0xff]
      %v816 = vld [vmem:[%s158 + $0x1420] sm:$0xff]
      %v817 = vld [vmem:[%s158 + $0x1428] sm:$0xff]
      %v818 = vld [vmem:[%s158 + $0x1430] sm:$0xff]
      %v819 = vld [vmem:[%s158 + $0x1438] sm:$0xff]
      %v820 = vld [vmem:[%s158 + $0x1440] sm:$0xff]
      %v821 = vld [vmem:[%s158 + $0x1448] sm:$0xff]
      %v822 = vld [vmem:[%s158 + $0x1450] sm:$0xff]
      %v823 = vld [vmem:[%s158 + $0x1458] sm:$0xff]
      %v824 = vld [vmem:[%s158 + $0x1460] sm:$0xff]
      %v825 = vld [vmem:[%s158 + $0x1468] sm:$0xff]
      %v826 = vld [vmem:[%s158 + $0x1470] sm:$0xff]
      %v827 = vld [vmem:[%s158 + $0x1478] sm:$0xff]
      %v828 = vld [vmem:[%s158 + $0x1480] sm:$0xff]
      %v829 = vld [vmem:[%s158 + $0x1488] sm:$0xff]
      %v830 = vld [vmem:[%s158 + $0x1490] sm:$0xff]
      %v831 = vld [vmem:[%s158 + $0x1498] sm:$0xff]
      %v832 = vld [vmem:[%s158 + $0x14a0] sm:$0xff]
      %v833 = vld [vmem:[%s158 + $0x14a8] sm:$0xff]
      %v834 = vld [vmem:[%s158 + $0x14b0] sm:$0xff]
      %v835 = vld [vmem:[%s158 + $0x14b8] sm:$0xff]
      %v836 = vld [vmem:[%s158 + $0x14c0] sm:$0xff]
      %v837 = vld [vmem:[%s158 + $0x14c8] sm:$0xff]
      %v838 = vld [vmem:[%s158 + $0x14d0] sm:$0xff]
      %v839 = vld [vmem:[%s158 + $0x14d8] sm:$0xff]
      %v840 = vld [vmem:[%s158 + $0x14e0] sm:$0xff]
      %v841 = vld [vmem:[%s158 + $0x14e8] sm:$0xff]
      %v842 = vld [vmem:[%s158 + $0x14f0] sm:$0xff]
      %v843 = vld [vmem:[%s158 + $0x14f8] sm:$0xff]
      %v844 = vld [vmem:[%s158 + $0x1500] sm:$0xff]
      %v845 = vld [vmem:[%s158 + $0x1508] sm:$0xff]
      %v846 = vld [vmem:[%s158 + $0x1510] sm:$0xff]
      %v847 = vld [vmem:[%s158 + $0x1518] sm:$0xff]
      %v848 = vld [vmem:[%s158 + $0x1520] sm:$0xff]
      %v849 = vld [vmem:[%s158 + $0x1528] sm:$0xff]
      %v850 = vld [vmem:[%s158 + $0x1530] sm:$0xff]
      %v851 = vld [vmem:[%s158 + $0x1538] sm:$0xff]
      %v852 = vld [vmem:[%s158 + $0x1540] sm:$0xff]
      %v853 = vld [vmem:[%s158 + $0x1548] sm:$0xff]
      %v854 = vld [vmem:[%s158 + $0x1550] sm:$0xff]
      %v855 = vld [vmem:[%s158 + $0x1558] sm:$0xff]
      %v856 = vld [vmem:[%s158 + $0x1560] sm:$0xff]
      %v857 = vld [vmem:[%s158 + $0x1568] sm:$0xff]
      %v858 = vld [vmem:[%s158 + $0x1570] sm:$0xff]
      %v859 = vld [vmem:[%s158 + $0x1578] sm:$0xff]
      %v860 = vld [vmem:[%s158 + $0x1580] sm:$0xff]
      %v861 = vld [vmem:[%s158 + $0x1588] sm:$0xff]
      %v862 = vld [vmem:[%s158 + $0x1590] sm:$0xff]
      %v863 = vld [vmem:[%s158 + $0x1598] sm:$0xff]
      %v864 = vld [vmem:[%s158 + $0x15a0] sm:$0xff]
      %v865 = vld [vmem:[%s158 + $0x15a8] sm:$0xff]
      %v866 = vld [vmem:[%s158 + $0x15b0] sm:$0xff]
      %v867 = vld [vmem:[%s158 + $0x15b8] sm:$0xff]
      %v868 = vld [vmem:[%s158 + $0x15c0] sm:$0xff]
      %v869 = vld [vmem:[%s158 + $0x15c8] sm:$0xff]
      %v870 = vld [vmem:[%s158 + $0x15d0] sm:$0xff]
      %v871 = vld [vmem:[%s158 + $0x15d8] sm:$0xff]
      %v872 = vld [vmem:[%s158 + $0x15e0] sm:$0xff]
      %v873 = vld [vmem:[%s158 + $0x15e8] sm:$0xff]
      %v874 = vld [vmem:[%s158 + $0x15f0] sm:$0xff]
      %v875 = vld [vmem:[%s158 + $0x15f8] sm:$0xff]
      %v876 = vld [vmem:[%s158 + $0x1600] sm:$0xff]
      %v877 = vld [vmem:[%s158 + $0x1608] sm:$0xff]
      %v878 = vld [vmem:[%s158 + $0x1610] sm:$0xff]
      %v879 = vld [vmem:[%s158 + $0x1618] sm:$0xff]
      %v880 = vld [vmem:[%s158 + $0x1620] sm:$0xff]
      %v881 = vld [vmem:[%s158 + $0x1628] sm:$0xff]
      %v882 = vld [vmem:[%s158 + $0x1630] sm:$0xff]
      %v883 = vld [vmem:[%s158 + $0x1638] sm:$0xff]
      %v884 = vld [vmem:[%s158 + $0x1640] sm:$0xff]
      %v885 = vld [vmem:[%s158 + $0x1648] sm:$0xff]
      %v886 = vld [vmem:[%s158 + $0x1650] sm:$0xff]
      %v887 = vld [vmem:[%s158 + $0x1658] sm:$0xff]
      %v888 = vld [vmem:[%s158 + $0x1660] sm:$0xff]
      %v889 = vld [vmem:[%s158 + $0x1668] sm:$0xff]
      %v890 = vld [vmem:[%s158 + $0x1670] sm:$0xff]
      %v891 = vld [vmem:[%s158 + $0x1678] sm:$0xff]
      %v892 = vld [vmem:[%s158 + $0x1680] sm:$0xff]
      %v893 = vld [vmem:[%s158 + $0x1688] sm:$0xff]
      %v894 = vld [vmem:[%s158 + $0x1690] sm:$0xff]
      %v895 = vld [vmem:[%s158 + $0x1698] sm:$0xff]
      %v896 = vld [vmem:[%s158 + $0x16a0] sm:$0xff]
      %v897 = vld [vmem:[%s158 + $0x16a8] sm:$0xff]
      %v898 = vld [vmem:[%s158 + $0x16b0] sm:$0xff]
      %v899 = vld [vmem:[%s158 + $0x16b8] sm:$0xff]
      %v900 = vld [vmem:[%s158 + $0x16c0] sm:$0xff]
      %v901 = vld [vmem:[%s158 + $0x16c8] sm:$0xff]
      %v902 = vld [vmem:[%s158 + $0x16d0] sm:$0xff]
      %v903 = vld [vmem:[%s158 + $0x16d8] sm:$0xff]
      %v904 = vld [vmem:[%s158 + $0x16e0] sm:$0xff]
      %v905 = vld [vmem:[%s158 + $0x16e8] sm:$0xff]
      %v906 = vld [vmem:[%s158 + $0x16f0] sm:$0xff]
      %v907 = vld [vmem:[%s158 + $0x16f8] sm:$0xff]
      %v908 = vld [vmem:[%s158 + $0x1700] sm:$0xff]
      %v909 = vld [vmem:[%s158 + $0x1708] sm:$0xff]
      %v910 = vld [vmem:[%s158 + $0x1710] sm:$0xff]
      %v911 = vld [vmem:[%s158 + $0x1718] sm:$0xff]
      %v912 = vld [vmem:[%s158 + $0x1720] sm:$0xff]
      %v913 = vld [vmem:[%s158 + $0x1728] sm:$0xff]
      %v914 = vld [vmem:[%s158 + $0x1730] sm:$0xff]
      %v915 = vld [vmem:[%s158 + $0x1738] sm:$0xff]
      %v916 = vld [vmem:[%s158 + $0x1740] sm:$0xff]
      %v917 = vld [vmem:[%s158 + $0x1748] sm:$0xff]
      %v918 = vld [vmem:[%s158 + $0x1750] sm:$0xff]
      %v919 = vld [vmem:[%s158 + $0x1758] sm:$0xff]
      %v920 = vld [vmem:[%s158 + $0x1760] sm:$0xff]
      %v921 = vld [vmem:[%s158 + $0x1768] sm:$0xff]
      %v922 = vld [vmem:[%s158 + $0x1770] sm:$0xff]
      %v923 = vld [vmem:[%s158 + $0x1778] sm:$0xff]
      %v924 = vld [vmem:[%s158 + $0x1780] sm:$0xff]
      %v925 = vld [vmem:[%s158 + $0x1788] sm:$0xff]
      %v926 = vld [vmem:[%s158 + $0x1790] sm:$0xff]
      %v927 = vld [vmem:[%s158 + $0x1798] sm:$0xff]
      %v928 = vld [vmem:[%s158 + $0x17a0] sm:$0xff]
      %v929 = vld [vmem:[%s158 + $0x17a8] sm:$0xff]
      %v930 = vld [vmem:[%s158 + $0x17b0] sm:$0xff]
      %v931 = vld [vmem:[%s158 + $0x17b8] sm:$0xff]
      %v932 = vld [vmem:[%s158 + $0x17c0] sm:$0xff]
      %v933 = vld [vmem:[%s158 + $0x17c8] sm:$0xff]
      %v934 = vld [vmem:[%s158 + $0x17d0] sm:$0xff]
      %v935 = vld [vmem:[%s158 + $0x17d8] sm:$0xff]
      %v936 = vld [vmem:[%s158 + $0x17e0] sm:$0xff]
      %v937 = vld [vmem:[%s158 + $0x17e8] sm:$0xff]
      %v938 = vld [vmem:[%s158 + $0x17f0] sm:$0xff]
      %v939 = vld [vmem:[%s158 + $0x17f8] sm:$0xff]
      %v940 = vld [vmem:[%s158 + $0x1800] sm:$0xff]
      %v941 = vld [vmem:[%s158 + $0x1808] sm:$0xff]
      %v942 = vld [vmem:[%s158 + $0x1810] sm:$0xff]
      %v943 = vld [vmem:[%s158 + $0x1818] sm:$0xff]
      %v944 = vld [vmem:[%s158 + $0x1820] sm:$0xff]
      %v945 = vld [vmem:[%s158 + $0x1828] sm:$0xff]
      %v946 = vld [vmem:[%s158 + $0x1830] sm:$0xff]
      %v947 = vld [vmem:[%s158 + $0x1838] sm:$0xff]
      %v948 = vld [vmem:[%s158 + $0x1840] sm:$0xff]
      %v949 = vld [vmem:[%s158 + $0x1848] sm:$0xff]
      %v950 = vld [vmem:[%s158 + $0x1850] sm:$0xff]
      %v951 = vld [vmem:[%s158 + $0x1858] sm:$0xff]
      %v952 = vld [vmem:[%s158 + $0x1860] sm:$0xff]
      %v953 = vld [vmem:[%s158 + $0x1868] sm:$0xff]
      %v954 = vld [vmem:[%s158 + $0x1870] sm:$0xff]
      %v955 = vld [vmem:[%s158 + $0x1878] sm:$0xff]
      %v956 = vld [vmem:[%s158 + $0x1880] sm:$0xff]
      %v957 = vld [vmem:[%s158 + $0x1888] sm:$0xff]
      %v958 = vld [vmem:[%s158 + $0x1890] sm:$0xff]
      %v959 = vld [vmem:[%s158 + $0x1898] sm:$0xff]
      %v960 = vld [vmem:[%s158 + $0x18a0] sm:$0xff]
      %v961 = vld [vmem:[%s158 + $0x18a8] sm:$0xff]
      %v962 = vld [vmem:[%s158 + $0x18b0] sm:$0xff]
      %v963 = vld [vmem:[%s158 + $0x18b8] sm:$0xff]
      %v964 = vld [vmem:[%s158 + $0x18c0] sm:$0xff]
      %v965 = vld [vmem:[%s158 + $0x18c8] sm:$0xff]
      %v966 = vld [vmem:[%s158 + $0x18d0] sm:$0xff]
      %v967 = vld [vmem:[%s158 + $0x18d8] sm:$0xff]
      %v968 = vld [vmem:[%s158 + $0x18e0] sm:$0xff]
      %v969 = vld [vmem:[%s158 + $0x18e8] sm:$0xff]
      %v970 = vld [vmem:[%s158 + $0x18f0] sm:$0xff]
      %v971 = vld [vmem:[%s158 + $0x18f8] sm:$0xff]
      %v972 = vld [vmem:[%s158 + $0x1900] sm:$0xff]
      %v973 = vld [vmem:[%s158 + $0x1908] sm:$0xff]
      %v974 = vld [vmem:[%s158 + $0x1910] sm:$0xff]
      %v975 = vld [vmem:[%s158 + $0x1918] sm:$0xff]
      %v976 = vld [vmem:[%s158 + $0x1920] sm:$0xff]
      %v977 = vld [vmem:[%s158 + $0x1928] sm:$0xff]
      %v978 = vld [vmem:[%s158 + $0x1930] sm:$0xff]
      %v979 = vld [vmem:[%s158 + $0x1938] sm:$0xff]
      %v980 = vld [vmem:[%s158 + $0x1940] sm:$0xff]
      %v981 = vld [vmem:[%s158 + $0x1948] sm:$0xff]
      %v982 = vld [vmem:[%s158 + $0x1950] sm:$0xff]
      %v983 = vld [vmem:[%s158 + $0x1958] sm:$0xff]
      %v984 = vld [vmem:[%s158 + $0x1960] sm:$0xff]
      %v985 = vld [vmem:[%s158 + $0x1968] sm:$0xff]
      %v986 = vld [vmem:[%s158 + $0x1970] sm:$0xff]
      %v987 = vld [vmem:[%s158 + $0x1978] sm:$0xff]
      %v988 = vld [vmem:[%s158 + $0x1980] sm:$0xff]
      %v989 = vld [vmem:[%s158 + $0x1988] sm:$0xff]
      %v990 = vld [vmem:[%s158 + $0x1990] sm:$0xff]
      %v991 = vld [vmem:[%s158 + $0x1998] sm:$0xff]
      %v992 = vld [vmem:[%s158 + $0x19a0] sm:$0xff]
      %v993 = vld [vmem:[%s158 + $0x19a8] sm:$0xff]
      %v994 = vld [vmem:[%s158 + $0x19b0] sm:$0xff]
      %v995 = vld [vmem:[%s158 + $0x19b8] sm:$0xff]
      %v996 = vld [vmem:[%s158 + $0x19c0] sm:$0xff]
      %v997 = vld [vmem:[%s158 + $0x19c8] sm:$0xff]
      %v998 = vld [vmem:[%s158 + $0x19d0] sm:$0xff]
      %v999 = vld [vmem:[%s158 + $0x19d8] sm:$0xff]
      %v1000 = vld [vmem:[%s158 + $0x19e0] sm:$0xff]
      %v1001 = vld [vmem:[%s158 + $0x19e8] sm:$0xff]
      %v1002 = vld [vmem:[%s158 + $0x19f0] sm:$0xff]
      %v1003 = vld [vmem:[%s158 + $0x19f8] sm:$0xff]
      %v1004 = vld [vmem:[%s158 + $0x1a00] sm:$0xff]
      %v1005 = vld [vmem:[%s158 + $0x1a08] sm:$0xff]
      %v1006 = vld [vmem:[%s158 + $0x1a10] sm:$0xff]
      %v1007 = vld [vmem:[%s158 + $0x1a18] sm:$0xff]
      %v1008 = vld [vmem:[%s158 + $0x1a20] sm:$0xff]
      %v1009 = vld [vmem:[%s158 + $0x1a28] sm:$0xff]
      %v1010 = vld [vmem:[%s158 + $0x1a30] sm:$0xff]
      %v1011 = vld [vmem:[%s158 + $0x1a38] sm:$0xff]
      %v1012 = vld [vmem:[%s158 + $0x1a40] sm:$0xff]
      %v1013 = vld [vmem:[%s158 + $0x1a48] sm:$0xff]
      %v1014 = vld [vmem:[%s158 + $0x1a50] sm:$0xff]
      %v1015 = vld [vmem:[%s158 + $0x1a58] sm:$0xff]
      %v1016 = vld [vmem:[%s158 + $0x1a60] sm:$0xff]
      %v1017 = vld [vmem:[%s158 + $0x1a68] sm:$0xff]
      %v1018 = vld [vmem:[%s158 + $0x1a70] sm:$0xff]
      %v1019 = vld [vmem:[%s158 + $0x1a78] sm:$0xff]
      %v1020 = vld [vmem:[%s158 + $0x1a80] sm:$0xff]
      %v1021 = vld [vmem:[%s158 + $0x1a88] sm:$0xff]
      %v1022 = vld [vmem:[%s158 + $0x1a90] sm:$0xff]
      %v1023 = vld [vmem:[%s158 + $0x1a98] sm:$0xff]
      %v1024 = vld [vmem:[%s158 + $0x1aa0] sm:$0xff]
      %v1025 = vld [vmem:[%s158 + $0x1aa8] sm:$0xff]
      %v1026 = vld [vmem:[%s158 + $0x1ab0] sm:$0xff]
      %v1027 = vld [vmem:[%s158 + $0x1ab8] sm:$0xff]
      %v1028 = vld [vmem:[%s158 + $0x1ac0] sm:$0xff]
      %v1029 = vld [vmem:[%s158 + $0x1ac8] sm:$0xff]
      %v1030 = vld [vmem:[%s158 + $0x1ad0] sm:$0xff]
      %v1031 = vld [vmem:[%s158 + $0x1ad8] sm:$0xff]
      %v1032 = vld [vmem:[%s158 + $0x1ae0] sm:$0xff]
      %v1033 = vld [vmem:[%s158 + $0x1ae8] sm:$0xff]
      %v1034 = vld [vmem:[%s158 + $0x1af0] sm:$0xff]
      %v1035 = vld [vmem:[%s158 + $0x1af8] sm:$0xff]
      %v1036 = vld [vmem:[%s158 + $0x1b00] sm:$0xff]
      %v1037 = vld [vmem:[%s158 + $0x1b08] sm:$0xff]
      %v1038 = vld [vmem:[%s158 + $0x1b10] sm:$0xff]
      %v1039 = vld [vmem:[%s158 + $0x1b18] sm:$0xff]
      %v1040 = vld [vmem:[%s158 + $0x1b20] sm:$0xff]
      %v1041 = vld [vmem:[%s158 + $0x1b28] sm:$0xff]
      %v1042 = vld [vmem:[%s158 + $0x1b30] sm:$0xff]
      %v1043 = vld [vmem:[%s158 + $0x1b38] sm:$0xff]
      %v1044 = vld [vmem:[%s158 + $0x1b40] sm:$0xff]
      %v1045 = vld [vmem:[%s158 + $0x1b48] sm:$0xff]
      %v1046 = vld [vmem:[%s158 + $0x1b50] sm:$0xff]
      %v1047 = vld [vmem:[%s158 + $0x1b58] sm:$0xff]
      %v1048 = vld [vmem:[%s158 + $0x1b60] sm:$0xff]
      %v1049 = vld [vmem:[%s158 + $0x1b68] sm:$0xff]
      %v1050 = vld [vmem:[%s158 + $0x1b70] sm:$0xff]
      %v1051 = vld [vmem:[%s158 + $0x1b78] sm:$0xff]
      %v1052 = vld [vmem:[%s158 + $0x1b80] sm:$0xff]
      %v1053 = vld [vmem:[%s158 + $0x1b88] sm:$0xff]
      %v1054 = vld [vmem:[%s158 + $0x1b90] sm:$0xff]
      %v1055 = vld [vmem:[%s158 + $0x1b98] sm:$0xff]
      %v1056 = vld [vmem:[%s158 + $0x1ba0] sm:$0xff]
      %v1057 = vld [vmem:[%s158 + $0x1ba8] sm:$0xff]
      %v1058 = vld [vmem:[%s158 + $0x1bb0] sm:$0xff]
      %v1059 = vld [vmem:[%s158 + $0x1bb8] sm:$0xff]
      %v1060 = vld [vmem:[%s158 + $0x1bc0] sm:$0xff]
      %v1061 = vld [vmem:[%s158 + $0x1bc8] sm:$0xff]
      %v1062 = vld [vmem:[%s158 + $0x1bd0] sm:$0xff]
      %v1063 = vld [vmem:[%s158 + $0x1bd8] sm:$0xff]
      %v1064 = vld [vmem:[%s158 + $0x1be0] sm:$0xff]
      %v1065 = vld [vmem:[%s158 + $0x1be8] sm:$0xff]
      %v1066 = vld [vmem:[%s158 + $0x1bf0] sm:$0xff]
      %v1067 = vld [vmem:[%s158 + $0x1bf8] sm:$0xff]
      %v1068 = vld [vmem:[%s158 + $0x1c00] sm:$0xff]
      %v1069 = vld [vmem:[%s158 + $0x1c08] sm:$0xff]
      %v1070 = vld [vmem:[%s158 + $0x1c10] sm:$0xff]
      %v1071 = vld [vmem:[%s158 + $0x1c18] sm:$0xff]
      %v1072 = vld [vmem:[%s158 + $0x1c20] sm:$0xff]
      %v1073 = vld [vmem:[%s158 + $0x1c28] sm:$0xff]
      %v1074 = vld [vmem:[%s158 + $0x1c30] sm:$0xff]
      %v1075 = vld [vmem:[%s158 + $0x1c38] sm:$0xff]
      %v1076 = vld [vmem:[%s158 + $0x1c40] sm:$0xff]
      %v1077 = vld [vmem:[%s158 + $0x1c48] sm:$0xff]
      %v1078 = vld [vmem:[%s158 + $0x1c50] sm:$0xff]
      %v1079 = vld [vmem:[%s158 + $0x1c58] sm:$0xff]
      %v1080 = vld [vmem:[%s158 + $0x1c60] sm:$0xff]
      %v1081 = vld [vmem:[%s158 + $0x1c68] sm:$0xff]
      %v1082 = vld [vmem:[%s158 + $0x1c70] sm:$0xff]
      %v1083 = vld [vmem:[%s158 + $0x1c78] sm:$0xff]
      %v1084 = vld [vmem:[%s158 + $0x1c80] sm:$0xff]
      %v1085 = vld [vmem:[%s158 + $0x1c88] sm:$0xff]
      %v1086 = vld [vmem:[%s158 + $0x1c90] sm:$0xff]
      %v1087 = vld [vmem:[%s158 + $0x1c98] sm:$0xff]
      %v1088 = vld [vmem:[%s158 + $0x1ca0] sm:$0xff]
      %v1089 = vld [vmem:[%s158 + $0x1ca8] sm:$0xff]
      %v1090 = vld [vmem:[%s158 + $0x1cb0] sm:$0xff]
      %v1091 = vld [vmem:[%s158 + $0x1cb8] sm:$0xff]
      %v1092 = vld [vmem:[%s158 + $0x1cc0] sm:$0xff]
      %v1093 = vld [vmem:[%s158 + $0x1cc8] sm:$0xff]
      %v1094 = vld [vmem:[%s158 + $0x1cd0] sm:$0xff]
      %v1095 = vld [vmem:[%s158 + $0x1cd8] sm:$0xff]
      %v1096 = vld [vmem:[%s158 + $0x1ce0] sm:$0xff]
      %v1097 = vld [vmem:[%s158 + $0x1ce8] sm:$0xff]
      %v1098 = vld [vmem:[%s158 + $0x1cf0] sm:$0xff]
      %v1099 = vld [vmem:[%s158 + $0x1cf8] sm:$0xff]
      %v1100 = vld [vmem:[%s158 + $0x1d00] sm:$0xff]
      %v1101 = vld [vmem:[%s158 + $0x1d08] sm:$0xff]
      %v1102 = vld [vmem:[%s158 + $0x1d10] sm:$0xff]
      %v1103 = vld [vmem:[%s158 + $0x1d18] sm:$0xff]
      %v1104 = vld [vmem:[%s158 + $0x1d20] sm:$0xff]
      %v1105 = vld [vmem:[%s158 + $0x1d28] sm:$0xff]
      %v1106 = vld [vmem:[%s158 + $0x1d30] sm:$0xff]
      %v1107 = vld [vmem:[%s158 + $0x1d38] sm:$0xff]
      %v1108 = vld [vmem:[%s158 + $0x1d40] sm:$0xff]
      %v1109 = vld [vmem:[%s158 + $0x1d48] sm:$0xff]
      %v1110 = vld [vmem:[%s158 + $0x1d50] sm:$0xff]
      %v1111 = vld [vmem:[%s158 + $0x1d58] sm:$0xff]
      %v1112 = vld [vmem:[%s158 + $0x1d60] sm:$0xff]
      %v1113 = vld [vmem:[%s158 + $0x1d68] sm:$0xff]
      %v1114 = vld [vmem:[%s158 + $0x1d70] sm:$0xff]
      %v1115 = vld [vmem:[%s158 + $0x1d78] sm:$0xff]
      %v1116 = vld [vmem:[%s158 + $0x1d80] sm:$0xff]
      %v1117 = vld [vmem:[%s158 + $0x1d88] sm:$0xff]
      %v1118 = vld [vmem:[%s158 + $0x1d90] sm:$0xff]
      %v1119 = vld [vmem:[%s158 + $0x1d98] sm:$0xff]
      %v1120 = vld [vmem:[%s158 + $0x1da0] sm:$0xff]
      %v1121 = vld [vmem:[%s158 + $0x1da8] sm:$0xff]
      %v1122 = vld [vmem:[%s158 + $0x1db0] sm:$0xff]
      %v1123 = vld [vmem:[%s158 + $0x1db8] sm:$0xff]
      %v1124 = vld [vmem:[%s158 + $0x1dc0] sm:$0xff]
      %v1125 = vld [vmem:[%s158 + $0x1dc8] sm:$0xff]
      %v1126 = vld [vmem:[%s158 + $0x1dd0] sm:$0xff]
      %v1127 = vld [vmem:[%s158 + $0x1dd8] sm:$0xff]
      %v1128 = vld [vmem:[%s158 + $0x1de0] sm:$0xff]
      %v1129 = vld [vmem:[%s158 + $0x1de8] sm:$0xff]
      %v1130 = vld [vmem:[%s158 + $0x1df0] sm:$0xff]
      %v1131 = vld [vmem:[%s158 + $0x1df8] sm:$0xff]
      %v1132 = vld [vmem:[%s158 + $0x1e00] sm:$0xff]
      %v1133 = vld [vmem:[%s158 + $0x1e08] sm:$0xff]
      %v1134 = vld [vmem:[%s158 + $0x1e10] sm:$0xff]
      %v1135 = vld [vmem:[%s158 + $0x1e18] sm:$0xff]
      %v1136 = vld [vmem:[%s158 + $0x1e20] sm:$0xff]
      %v1137 = vld [vmem:[%s158 + $0x1e28] sm:$0xff]
      %v1138 = vld [vmem:[%s158 + $0x1e30] sm:$0xff]
      %v1139 = vld [vmem:[%s158 + $0x1e38] sm:$0xff]
      %v1140 = vld [vmem:[%s158 + $0x1e40] sm:$0xff]
      %v1141 = vld [vmem:[%s158 + $0x1e48] sm:$0xff]
      %v1142 = vld [vmem:[%s158 + $0x1e50] sm:$0xff]
      %v1143 = vld [vmem:[%s158 + $0x1e58] sm:$0xff]
      %v1144 = vld [vmem:[%s158 + $0x1e60] sm:$0xff]
      %v1145 = vld [vmem:[%s158 + $0x1e68] sm:$0xff]
      %v1146 = vld [vmem:[%s158 + $0x1e70] sm:$0xff]
      %v1147 = vld [vmem:[%s158 + $0x1e78] sm:$0xff]
      %v1148 = vld [vmem:[%s158 + $0x1e80] sm:$0xff]
      %v1149 = vld [vmem:[%s158 + $0x1e88] sm:$0xff]
      %v1150 = vld [vmem:[%s158 + $0x1e90] sm:$0xff]
      %v1151 = vld [vmem:[%s158 + $0x1e98] sm:$0xff]
      %v1152 = vld [vmem:[%s158 + $0x1ea0] sm:$0xff]
      %v1153 = vld [vmem:[%s158 + $0x1ea8] sm:$0xff]
      %v1154 = vld [vmem:[%s158 + $0x1eb0] sm:$0xff]
      %v1155 = vld [vmem:[%s158 + $0x1eb8] sm:$0xff]
      %v1156 = vld [vmem:[%s158 + $0x1ec0] sm:$0xff]
      %v1157 = vld [vmem:[%s158 + $0x1ec8] sm:$0xff]
      %v1158 = vld [vmem:[%s158 + $0x1ed0] sm:$0xff]
      %v1159 = vld [vmem:[%s158 + $0x1ed8] sm:$0xff]
      %v1160 = vld [vmem:[%s158 + $0x1ee0] sm:$0xff]
      %v1161 = vld [vmem:[%s158 + $0x1ee8] sm:$0xff]
      %v1162 = vld [vmem:[%s158 + $0x1ef0] sm:$0xff]
      %v1163 = vld [vmem:[%s158 + $0x1ef8] sm:$0xff]
      %v1164 = vld [vmem:[%s158 + $0x1f00] sm:$0xff]
      %v1165 = vld [vmem:[%s158 + $0x1f08] sm:$0xff]
      %v1166 = vld [vmem:[%s158 + $0x1f10] sm:$0xff]
      %v1167 = vld [vmem:[%s158 + $0x1f18] sm:$0xff]
      %v1168 = vld [vmem:[%s158 + $0x1f20] sm:$0xff]
      %v1169 = vld [vmem:[%s158 + $0x1f28] sm:$0xff]
      %v1170 = vld [vmem:[%s158 + $0x1f30] sm:$0xff]
      %v1171 = vld [vmem:[%s158 + $0x1f38] sm:$0xff]
      %v1172 = vld [vmem:[%s158 + $0x1f40] sm:$0xff]
      %v1173 = vld [vmem:[%s158 + $0x1f48] sm:$0xff]
      %v1174 = vld [vmem:[%s158 + $0x1f50] sm:$0xff]
      %v1175 = vld [vmem:[%s158 + $0x1f58] sm:$0xff]
      %v1176 = vld [vmem:[%s158 + $0x1f60] sm:$0xff]
      %v1177 = vld [vmem:[%s158 + $0x1f68] sm:$0xff]
      %v1178 = vld [vmem:[%s158 + $0x1f70] sm:$0xff]
      %v1179 = vld [vmem:[%s158 + $0x1f78] sm:$0xff]
      %v1180 = vld [vmem:[%s158 + $0x1f80] sm:$0xff]
      %v1181 = vld [vmem:[%s158 + $0x1f88] sm:$0xff]
      %v1182 = vld [vmem:[%s158 + $0x1f90] sm:$0xff]
      %v1183 = vld [vmem:[%s158 + $0x1f98] sm:$0xff]
      %v1184 = vld [vmem:[%s158 + $0x1fa0] sm:$0xff]
      %v1185 = vld [vmem:[%s158 + $0x1fa8] sm:$0xff]
      %v1186 = vld [vmem:[%s158 + $0x1fb0] sm:$0xff]
      %v1187 = vld [vmem:[%s158 + $0x1fb8] sm:$0xff]
      %v1188 = vld [vmem:[%s158 + $0x1fc0] sm:$0xff]
      %v1189 = vld [vmem:[%s158 + $0x1fc8] sm:$0xff]
      %v1190 = vld [vmem:[%s158 + $0x1fd0] sm:$0xff]
      %v1191 = vld [vmem:[%s158 + $0x1fd8] sm:$0xff]
      %v1192 = vld [vmem:[%s158 + $0x1fe0] sm:$0xff]
      %v1193 = vld [vmem:[%s158 + $0x1fe8] sm:$0xff]
      %v1194 = vld [vmem:[%s158 + $0x1ff0] sm:$0xff]
      %v1195 = vld [vmem:[%s158 + $0x1ff8] sm:$0xff]
      %v1196 = vld [vmem:[%s164] sm:$0xff]
      %v1197 = vld [vmem:[%s164 + $0x8] sm:$0xff]
      %v1198 = vld [vmem:[%s164 + $0x10] sm:$0xff]
      %v1199 = vld [vmem:[%s164 + $0x18] sm:$0xff]
      %v1200 = vld [vmem:[%s164 + $0x20] sm:$0xff]
      %v1201 = vld [vmem:[%s164 + $0x28] sm:$0xff]
      %v1202 = vld [vmem:[%s164 + $0x30] sm:$0xff]
      %v1203 = vld [vmem:[%s164 + $0x38] sm:$0xff]
      %v1204 = vld [vmem:[%s164 + $0x40] sm:$0xff]
      %v1205 = vld [vmem:[%s164 + $0x48] sm:$0xff]
      %v1206 = vld [vmem:[%s164 + $0x50] sm:$0xff]
      %v1207 = vld [vmem:[%s164 + $0x58] sm:$0xff]
      %v1208 = vld [vmem:[%s164 + $0x60] sm:$0xff]
      %v1209 = vld [vmem:[%s164 + $0x68] sm:$0xff]
      %v1210 = vld [vmem:[%s164 + $0x70] sm:$0xff]
      %v1211 = vld [vmem:[%s164 + $0x78] sm:$0xff]
      %v1212 = vld [vmem:[%s164 + $0x80] sm:$0xff]
      %v1213 = vld [vmem:[%s164 + $0x88] sm:$0xff]
      %v1214 = vld [vmem:[%s164 + $0x90] sm:$0xff]
      %v1215 = vld [vmem:[%s164 + $0x98] sm:$0xff]
      %v1216 = vld [vmem:[%s164 + $0xa0] sm:$0xff]
      %v1217 = vld [vmem:[%s164 + $0xa8] sm:$0xff]
      %v1218 = vld [vmem:[%s164 + $0xb0] sm:$0xff]
      %v1219 = vld [vmem:[%s164 + $0xb8] sm:$0xff]
      %v1220 = vld [vmem:[%s164 + $0xc0] sm:$0xff]
      %v1221 = vld [vmem:[%s164 + $0xc8] sm:$0xff]
      %v1222 = vld [vmem:[%s164 + $0xd0] sm:$0xff]
      %v1223 = vld [vmem:[%s164 + $0xd8] sm:$0xff]
      %v1224 = vld [vmem:[%s164 + $0xe0] sm:$0xff]
      %v1225 = vld [vmem:[%s164 + $0xe8] sm:$0xff]
      %v1226 = vld [vmem:[%s164 + $0xf0] sm:$0xff]
      %v1227 = vld [vmem:[%s164 + $0xf8] sm:$0xff]
      %v1228 = vld [vmem:[%s164 + $0x100] sm:$0xff]
      %v1229 = vld [vmem:[%s164 + $0x108] sm:$0xff]
      %v1230 = vld [vmem:[%s164 + $0x110] sm:$0xff]
      %v1231 = vld [vmem:[%s164 + $0x118] sm:$0xff]
      %v1232 = vld [vmem:[%s164 + $0x120] sm:$0xff]
      %v1233 = vld [vmem:[%s164 + $0x128] sm:$0xff]
      %v1234 = vld [vmem:[%s164 + $0x130] sm:$0xff]
      %v1235 = vld [vmem:[%s164 + $0x138] sm:$0xff]
      %v1236 = vld [vmem:[%s164 + $0x140] sm:$0xff]
      %v1237 = vld [vmem:[%s164 + $0x148] sm:$0xff]
      %v1238 = vld [vmem:[%s164 + $0x150] sm:$0xff]
      %v1239 = vld [vmem:[%s164 + $0x158] sm:$0xff]
      %v1240 = vld [vmem:[%s164 + $0x160] sm:$0xff]
      %v1241 = vld [vmem:[%s164 + $0x168] sm:$0xff]
      %v1242 = vld [vmem:[%s164 + $0x170] sm:$0xff]
      %v1243 = vld [vmem:[%s164 + $0x178] sm:$0xff]
      %v1244 = vld [vmem:[%s164 + $0x180] sm:$0xff]
      %v1245 = vld [vmem:[%s164 + $0x188] sm:$0xff]
      %v1246 = vld [vmem:[%s164 + $0x190] sm:$0xff]
      %v1247 = vld [vmem:[%s164 + $0x198] sm:$0xff]
      %v1248 = vld [vmem:[%s164 + $0x1a0] sm:$0xff]
      %v1249 = vld [vmem:[%s164 + $0x1a8] sm:$0xff]
      %v1250 = vld [vmem:[%s164 + $0x1b0] sm:$0xff]
      %v1251 = vld [vmem:[%s164 + $0x1b8] sm:$0xff]
      %v1252 = vld [vmem:[%s164 + $0x1c0] sm:$0xff]
      %v1253 = vld [vmem:[%s164 + $0x1c8] sm:$0xff]
      %v1254 = vld [vmem:[%s164 + $0x1d0] sm:$0xff]
      %v1255 = vld [vmem:[%s164 + $0x1d8] sm:$0xff]
      %v1256 = vld [vmem:[%s164 + $0x1e0] sm:$0xff]
      %v1257 = vld [vmem:[%s164 + $0x1e8] sm:$0xff]
      %v1258 = vld [vmem:[%s164 + $0x1f0] sm:$0xff]
      %v1259 = vld [vmem:[%s164 + $0x1f8] sm:$0xff]
      %v1324 = vrot.slane %v1196, 1
      %v1325 = vrot.slane %v1196, 2
      %v1326 = vrot.slane %v1196, 3
      %v1327 = vrot.slane %v1196, 4
      %v1328 = vrot.slane %v1196, 5
      %v1329 = vrot.slane %v1196, 6
      %v1330 = vrot.slane %v1196, 7
      %v1331 = vrot.slane %v1197, 1
      %v1332 = vrot.slane %v1197, 2
      %v1333 = vrot.slane %v1197, 3
      %v1334 = vrot.slane %v1197, 4
      %v1335 = vrot.slane %v1197, 5
      %v1336 = vrot.slane %v1197, 6
      %v1337 = vrot.slane %v1197, 7
      %v1338 = vrot.slane %v1198, 1
      %v1339 = vrot.slane %v1198, 2
      %v1340 = vrot.slane %v1198, 3
      %v1341 = vrot.slane %v1198, 4
      %v1342 = vrot.slane %v1198, 5
      %v1343 = vrot.slane %v1198, 6
      %v1344 = vrot.slane %v1198, 7
      %v1345 = vrot.slane %v1199, 1
      %v1346 = vrot.slane %v1199, 2
      %v1347 = vrot.slane %v1199, 3
      %v1348 = vrot.slane %v1199, 4
      %v1349 = vrot.slane %v1199, 5
      %v1350 = vrot.slane %v1199, 6
      %v1351 = vrot.slane %v1199, 7
      %v1352 = vrot.slane %v1200, 1
      %v1353 = vrot.slane %v1200, 2
      %v1354 = vrot.slane %v1200, 3
      %v1355 = vrot.slane %v1200, 4
      %v1356 = vrot.slane %v1200, 5
      %v1357 = vrot.slane %v1200, 6
      %v1358 = vrot.slane %v1200, 7
      %v1359 = vrot.slane %v1201, 1
      %v1360 = vrot.slane %v1201, 2
      %v1361 = vrot.slane %v1201, 3
      %v1362 = vrot.slane %v1201, 4
      %v1363 = vrot.slane %v1201, 5
      %v1364 = vrot.slane %v1201, 6
      %v1365 = vrot.slane %v1201, 7
      %v1366 = vrot.slane %v1202, 1
      %v1367 = vrot.slane %v1202, 2
      %v1368 = vrot.slane %v1202, 3
      %v1369 = vrot.slane %v1202, 4
      %v1370 = vrot.slane %v1202, 5
      %v1371 = vrot.slane %v1202, 6
      %v1372 = vrot.slane %v1202, 7
      %v1373 = vrot.slane %v1203, 1
      %v1374 = vrot.slane %v1203, 2
      %v1375 = vrot.slane %v1203, 3
      %v1376 = vrot.slane %v1203, 4
      %v1377 = vrot.slane %v1203, 5
      %v1378 = vrot.slane %v1203, 6
      %v1379 = vrot.slane %v1203, 7
      %v1380 = vrot.slane %v1204, 1
      %v1381 = vrot.slane %v1204, 2
      %v1382 = vrot.slane %v1204, 3
      %v1383 = vrot.slane %v1204, 4
      %v1384 = vrot.slane %v1204, 5
      %v1385 = vrot.slane %v1204, 6
      %v1386 = vrot.slane %v1204, 7
      %v1387 = vrot.slane %v1205, 1
      %v1388 = vrot.slane %v1205, 2
      %v1389 = vrot.slane %v1205, 3
      %v1390 = vrot.slane %v1205, 4
      %v1391 = vrot.slane %v1205, 5
      %v1392 = vrot.slane %v1205, 6
      %v1393 = vrot.slane %v1205, 7
      %v1394 = vrot.slane %v1206, 1
      %v1395 = vrot.slane %v1206, 2
      %v1396 = vrot.slane %v1206, 3
      %v1397 = vrot.slane %v1206, 4
      %v1398 = vrot.slane %v1206, 5
      %v1399 = vrot.slane %v1206, 6
      %v1400 = vrot.slane %v1206, 7
      %v1401 = vrot.slane %v1207, 1
      %v1402 = vrot.slane %v1207, 2
      %v1403 = vrot.slane %v1207, 3
      %v1404 = vrot.slane %v1207, 4
      %v1405 = vrot.slane %v1207, 5
      %v1406 = vrot.slane %v1207, 6
      %v1407 = vrot.slane %v1207, 7
      %v1408 = vrot.slane %v1208, 1
      %v1409 = vrot.slane %v1208, 2
      %v1410 = vrot.slane %v1208, 3
      %v1411 = vrot.slane %v1208, 4
      %v1412 = vrot.slane %v1208, 5
      %v1413 = vrot.slane %v1208, 6
      %v1414 = vrot.slane %v1208, 7
      %v1415 = vrot.slane %v1209, 1
      %v1416 = vrot.slane %v1209, 2
      %v1417 = vrot.slane %v1209, 3
      %v1418 = vrot.slane %v1209, 4
      %v1419 = vrot.slane %v1209, 5
      %v1420 = vrot.slane %v1209, 6
      %v1421 = vrot.slane %v1209, 7
      %v1422 = vrot.slane %v1210, 1
      %v1423 = vrot.slane %v1210, 2
      %v1424 = vrot.slane %v1210, 3
      %v1425 = vrot.slane %v1210, 4
      %v1426 = vrot.slane %v1210, 5
      %v1427 = vrot.slane %v1210, 6
      %v1428 = vrot.slane %v1210, 7
      %v1429 = vrot.slane %v1211, 1
      %v1430 = vrot.slane %v1211, 2
      %v1431 = vrot.slane %v1211, 3
      %v1432 = vrot.slane %v1211, 4
      %v1433 = vrot.slane %v1211, 5
      %v1434 = vrot.slane %v1211, 6
      %v1435 = vrot.slane %v1211, 7
      %v1436 = vrot.slane %v1212, 1
      %v1437 = vrot.slane %v1212, 2
      %v1438 = vrot.slane %v1212, 3
      %v1439 = vrot.slane %v1212, 4
      %v1440 = vrot.slane %v1212, 5
      %v1441 = vrot.slane %v1212, 6
      %v1442 = vrot.slane %v1212, 7
      %v1443 = vrot.slane %v1213, 1
      %v1444 = vrot.slane %v1213, 2
      %v1445 = vrot.slane %v1213, 3
      %v1446 = vrot.slane %v1213, 4
      %v1447 = vrot.slane %v1213, 5
      %v1448 = vrot.slane %v1213, 6
      %v1449 = vrot.slane %v1213, 7
      %v1450 = vrot.slane %v1214, 1
      %v1451 = vrot.slane %v1214, 2
      %v1452 = vrot.slane %v1214, 3
      %v1453 = vrot.slane %v1214, 4
      %v1454 = vrot.slane %v1214, 5
      %v1455 = vrot.slane %v1214, 6
      %v1456 = vrot.slane %v1214, 7
      %v1457 = vrot.slane %v1215, 1
      %v1458 = vrot.slane %v1215, 2
      %v1459 = vrot.slane %v1215, 3
      %v1460 = vrot.slane %v1215, 4
      %v1461 = vrot.slane %v1215, 5
      %v1462 = vrot.slane %v1215, 6
      %v1463 = vrot.slane %v1215, 7
      %v1464 = vrot.slane %v1216, 1
      %v1465 = vrot.slane %v1216, 2
      %v1466 = vrot.slane %v1216, 3
      %v1467 = vrot.slane %v1216, 4
      %v1468 = vrot.slane %v1216, 5
      %v1469 = vrot.slane %v1216, 6
      %v1470 = vrot.slane %v1216, 7
      %v1471 = vrot.slane %v1217, 1
      %v1472 = vrot.slane %v1217, 2
      %v1473 = vrot.slane %v1217, 3
      %v1474 = vrot.slane %v1217, 4
      %v1475 = vrot.slane %v1217, 5
      %v1476 = vrot.slane %v1217, 6
      %v1477 = vrot.slane %v1217, 7
      %v1478 = vrot.slane %v1218, 1
      %v1479 = vrot.slane %v1218, 2
      %v1480 = vrot.slane %v1218, 3
      %v1481 = vrot.slane %v1218, 4
      %v1482 = vrot.slane %v1218, 5
      %v1483 = vrot.slane %v1218, 6
      %v1484 = vrot.slane %v1218, 7
      %v1485 = vrot.slane %v1219, 1
      %v1486 = vrot.slane %v1219, 2
      %v1487 = vrot.slane %v1219, 3
      %v1488 = vrot.slane %v1219, 4
      %v1489 = vrot.slane %v1219, 5
      %v1490 = vrot.slane %v1219, 6
      %v1491 = vrot.slane %v1219, 7
      %v1492 = vrot.slane %v1220, 1
      %v1493 = vrot.slane %v1220, 2
      %v1494 = vrot.slane %v1220, 3
      %v1495 = vrot.slane %v1220, 4
      %v1496 = vrot.slane %v1220, 5
      %v1497 = vrot.slane %v1220, 6
      %v1498 = vrot.slane %v1220, 7
      %v1499 = vrot.slane %v1221, 1
      %v1500 = vrot.slane %v1221, 2
      %v1501 = vrot.slane %v1221, 3
      %v1502 = vrot.slane %v1221, 4
      %v1503 = vrot.slane %v1221, 5
      %v1504 = vrot.slane %v1221, 6
      %v1505 = vrot.slane %v1221, 7
      %v1506 = vrot.slane %v1222, 1
      %v1507 = vrot.slane %v1222, 2
      %v1508 = vrot.slane %v1222, 3
      %v1509 = vrot.slane %v1222, 4
      %v1510 = vrot.slane %v1222, 5
      %v1511 = vrot.slane %v1222, 6
      %v1512 = vrot.slane %v1222, 7
      %v1513 = vrot.slane %v1223, 1
      %v1514 = vrot.slane %v1223, 2
      %v1515 = vrot.slane %v1223, 3
      %v1516 = vrot.slane %v1223, 4
      %v1517 = vrot.slane %v1223, 5
      %v1518 = vrot.slane %v1223, 6
      %v1519 = vrot.slane %v1223, 7
      %v1520 = vrot.slane %v1224, 1
      %v1521 = vrot.slane %v1224, 2
      %v1522 = vrot.slane %v1224, 3
      %v1523 = vrot.slane %v1224, 4
      %v1524 = vrot.slane %v1224, 5
      %v1525 = vrot.slane %v1224, 6
      %v1526 = vrot.slane %v1224, 7
      %v1527 = vrot.slane %v1225, 1
      %v1528 = vrot.slane %v1225, 2
      %v1529 = vrot.slane %v1225, 3
      %v1530 = vrot.slane %v1225, 4
      %v1531 = vrot.slane %v1225, 5
      %v1532 = vrot.slane %v1225, 6
      %v1533 = vrot.slane %v1225, 7
      %v1534 = vrot.slane %v1226, 1
      %v1535 = vrot.slane %v1226, 2
      %v1536 = vrot.slane %v1226, 3
      %v1537 = vrot.slane %v1226, 4
      %v1538 = vrot.slane %v1226, 5
      %v1539 = vrot.slane %v1226, 6
      %v1540 = vrot.slane %v1226, 7
      %v1541 = vrot.slane %v1227, 1
      %v1542 = vrot.slane %v1227, 2
      %v1543 = vrot.slane %v1227, 3
      %v1544 = vrot.slane %v1227, 4
      %v1545 = vrot.slane %v1227, 5
      %v1546 = vrot.slane %v1227, 6
      %v1547 = vrot.slane %v1227, 7
      %v1548 = vrot.slane %v1228, 1
      %v1549 = vrot.slane %v1228, 2
      %v1550 = vrot.slane %v1228, 3
      %v1551 = vrot.slane %v1228, 4
      %v1552 = vrot.slane %v1228, 5
      %v1553 = vrot.slane %v1228, 6
      %v1554 = vrot.slane %v1228, 7
      %v1555 = vrot.slane %v1229, 1
      %v1556 = vrot.slane %v1229, 2
      %v1557 = vrot.slane %v1229, 3
      %v1558 = vrot.slane %v1229, 4
      %v1559 = vrot.slane %v1229, 5
      %v1560 = vrot.slane %v1229, 6
      %v1561 = vrot.slane %v1229, 7
      %v1562 = vrot.slane %v1230, 1
      %v1563 = vrot.slane %v1230, 2
      %v1564 = vrot.slane %v1230, 3
      %v1565 = vrot.slane %v1230, 4
      %v1566 = vrot.slane %v1230, 5
      %v1567 = vrot.slane %v1230, 6
      %v1568 = vrot.slane %v1230, 7
      %v1569 = vrot.slane %v1231, 1
      %v1570 = vrot.slane %v1231, 2
      %v1571 = vrot.slane %v1231, 3
      %v1572 = vrot.slane %v1231, 4
      %v1573 = vrot.slane %v1231, 5
      %v1574 = vrot.slane %v1231, 6
      %v1575 = vrot.slane %v1231, 7
      %v1576 = vrot.slane %v1232, 1
      %v1577 = vrot.slane %v1232, 2
      %v1578 = vrot.slane %v1232, 3
      %v1579 = vrot.slane %v1232, 4
      %v1580 = vrot.slane %v1232, 5
      %v1581 = vrot.slane %v1232, 6
      %v1582 = vrot.slane %v1232, 7
      %v1583 = vrot.slane %v1233, 1
      %v1584 = vrot.slane %v1233, 2
      %v1585 = vrot.slane %v1233, 3
      %v1586 = vrot.slane %v1233, 4
      %v1587 = vrot.slane %v1233, 5
      %v1588 = vrot.slane %v1233, 6
      %v1589 = vrot.slane %v1233, 7
      %v1590 = vrot.slane %v1234, 1
      %v1591 = vrot.slane %v1234, 2
      %v1592 = vrot.slane %v1234, 3
      %v1593 = vrot.slane %v1234, 4
      %v1594 = vrot.slane %v1234, 5
      %v1595 = vrot.slane %v1234, 6
      %v1596 = vrot.slane %v1234, 7
      %v1597 = vrot.slane %v1235, 1
      %v1598 = vrot.slane %v1235, 2
      %v1599 = vrot.slane %v1235, 3
      %v1600 = vrot.slane %v1235, 4
      %v1601 = vrot.slane %v1235, 5
      %v1602 = vrot.slane %v1235, 6
      %v1603 = vrot.slane %v1235, 7
      %v1604 = vrot.slane %v1236, 1
      %v1605 = vrot.slane %v1236, 2
      %v1606 = vrot.slane %v1236, 3
      %v1607 = vrot.slane %v1236, 4
      %v1608 = vrot.slane %v1236, 5
      %v1609 = vrot.slane %v1236, 6
      %v1610 = vrot.slane %v1236, 7
      %v1611 = vrot.slane %v1237, 1
      %v1612 = vrot.slane %v1237, 2
      %v1613 = vrot.slane %v1237, 3
      %v1614 = vrot.slane %v1237, 4
      %v1615 = vrot.slane %v1237, 5
      %v1616 = vrot.slane %v1237, 6
      %v1617 = vrot.slane %v1237, 7
      %v1618 = vrot.slane %v1238, 1
      %v1619 = vrot.slane %v1238, 2
      %v1620 = vrot.slane %v1238, 3
      %v1621 = vrot.slane %v1238, 4
      %v1622 = vrot.slane %v1238, 5
      %v1623 = vrot.slane %v1238, 6
      %v1624 = vrot.slane %v1238, 7
      %v1625 = vrot.slane %v1239, 1
      %v1626 = vrot.slane %v1239, 2
      %v1627 = vrot.slane %v1239, 3
      %v1628 = vrot.slane %v1239, 4
      %v1629 = vrot.slane %v1239, 5
      %v1630 = vrot.slane %v1239, 6
      %v1631 = vrot.slane %v1239, 7
      %v1632 = vrot.slane %v1240, 1
      %v1633 = vrot.slane %v1240, 2
      %v1634 = vrot.slane %v1240, 3
      %v1635 = vrot.slane %v1240, 4
      %v1636 = vrot.slane %v1240, 5
      %v1637 = vrot.slane %v1240, 6
      %v1638 = vrot.slane %v1240, 7
      %v1639 = vrot.slane %v1241, 1
      %v1640 = vrot.slane %v1241, 2
      %v1641 = vrot.slane %v1241, 3
      %v1642 = vrot.slane %v1241, 4
      %v1643 = vrot.slane %v1241, 5
      %v1644 = vrot.slane %v1241, 6
      %v1645 = vrot.slane %v1241, 7
      %v1646 = vrot.slane %v1242, 1
      %v1647 = vrot.slane %v1242, 2
      %v1648 = vrot.slane %v1242, 3
      %v1649 = vrot.slane %v1242, 4
      %v1650 = vrot.slane %v1242, 5
      %v1651 = vrot.slane %v1242, 6
      %v1652 = vrot.slane %v1242, 7
      %v1653 = vrot.slane %v1243, 1
      %v1654 = vrot.slane %v1243, 2
      %v1655 = vrot.slane %v1243, 3
      %v1656 = vrot.slane %v1243, 4
      %v1657 = vrot.slane %v1243, 5
      %v1658 = vrot.slane %v1243, 6
      %v1659 = vrot.slane %v1243, 7
      %v1660 = vrot.slane %v1244, 1
      %v1661 = vrot.slane %v1244, 2
      %v1662 = vrot.slane %v1244, 3
      %v1663 = vrot.slane %v1244, 4
      %v1664 = vrot.slane %v1244, 5
      %v1665 = vrot.slane %v1244, 6
      %v1666 = vrot.slane %v1244, 7
      %v1667 = vrot.slane %v1245, 1
      %v1668 = vrot.slane %v1245, 2
      %v1669 = vrot.slane %v1245, 3
      %v1670 = vrot.slane %v1245, 4
      %v1671 = vrot.slane %v1245, 5
      %v1672 = vrot.slane %v1245, 6
      %v1673 = vrot.slane %v1245, 7
      %v1674 = vrot.slane %v1246, 1
      %v1675 = vrot.slane %v1246, 2
      %v1676 = vrot.slane %v1246, 3
      %v1677 = vrot.slane %v1246, 4
      %v1678 = vrot.slane %v1246, 5
      %v1679 = vrot.slane %v1246, 6
      %v1680 = vrot.slane %v1246, 7
      %v1681 = vrot.slane %v1247, 1
      %v1682 = vrot.slane %v1247, 2
      %v1683 = vrot.slane %v1247, 3
      %v1684 = vrot.slane %v1247, 4
      %v1685 = vrot.slane %v1247, 5
      %v1686 = vrot.slane %v1247, 6
      %v1687 = vrot.slane %v1247, 7
      %v1688 = vrot.slane %v1248, 1
      %v1689 = vrot.slane %v1248, 2
      %v1690 = vrot.slane %v1248, 3
      %v1691 = vrot.slane %v1248, 4
      %v1692 = vrot.slane %v1248, 5
      %v1693 = vrot.slane %v1248, 6
      %v1694 = vrot.slane %v1248, 7
      %v1695 = vrot.slane %v1249, 1
      %v1696 = vrot.slane %v1249, 2
      %v1697 = vrot.slane %v1249, 3
      %v1698 = vrot.slane %v1249, 4
      %v1699 = vrot.slane %v1249, 5
      %v1700 = vrot.slane %v1249, 6
      %v1701 = vrot.slane %v1249, 7
      %v1702 = vrot.slane %v1250, 1
      %v1703 = vrot.slane %v1250, 2
      %v1704 = vrot.slane %v1250, 3
      %v1705 = vrot.slane %v1250, 4
      %v1706 = vrot.slane %v1250, 5
      %v1707 = vrot.slane %v1250, 6
      %v1708 = vrot.slane %v1250, 7
      %v1709 = vrot.slane %v1251, 1
      %v1710 = vrot.slane %v1251, 2
      %v1711 = vrot.slane %v1251, 3
      %v1712 = vrot.slane %v1251, 4
      %v1713 = vrot.slane %v1251, 5
      %v1714 = vrot.slane %v1251, 6
      %v1715 = vrot.slane %v1251, 7
      %v1716 = vrot.slane %v1252, 1
      %v1717 = vrot.slane %v1252, 2
      %v1718 = vrot.slane %v1252, 3
      %v1719 = vrot.slane %v1252, 4
      %v1720 = vrot.slane %v1252, 5
      %v1721 = vrot.slane %v1252, 6
      %v1722 = vrot.slane %v1252, 7
      %v1723 = vrot.slane %v1253, 1
      %v1724 = vrot.slane %v1253, 2
      %v1725 = vrot.slane %v1253, 3
      %v1726 = vrot.slane %v1253, 4
      %v1727 = vrot.slane %v1253, 5
      %v1728 = vrot.slane %v1253, 6
      %v1729 = vrot.slane %v1253, 7
      %v1730 = vrot.slane %v1254, 1
      %v1731 = vrot.slane %v1254, 2
      %v1732 = vrot.slane %v1254, 3
      %v1733 = vrot.slane %v1254, 4
      %v1734 = vrot.slane %v1254, 5
      %v1735 = vrot.slane %v1254, 6
      %v1736 = vrot.slane %v1254, 7
      %v1737 = vrot.slane %v1255, 1
      %v1738 = vrot.slane %v1255, 2
      %v1739 = vrot.slane %v1255, 3
      %v1740 = vrot.slane %v1255, 4
      %v1741 = vrot.slane %v1255, 5
      %v1742 = vrot.slane %v1255, 6
      %v1743 = vrot.slane %v1255, 7
      %v1744 = vrot.slane %v1256, 1
      %v1745 = vrot.slane %v1256, 2
      %v1746 = vrot.slane %v1256, 3
      %v1747 = vrot.slane %v1256, 4
      %v1748 = vrot.slane %v1256, 5
      %v1749 = vrot.slane %v1256, 6
      %v1750 = vrot.slane %v1256, 7
      %v1751 = vrot.slane %v1257, 1
      %v1752 = vrot.slane %v1257, 2
      %v1753 = vrot.slane %v1257, 3
      %v1754 = vrot.slane %v1257, 4
      %v1755 = vrot.slane %v1257, 5
      %v1756 = vrot.slane %v1257, 6
      %v1757 = vrot.slane %v1257, 7
      %v1758 = vrot.slane %v1258, 1
      %v1759 = vrot.slane %v1258, 2
      %v1760 = vrot.slane %v1258, 3
      %v1761 = vrot.slane %v1258, 4
      %v1762 = vrot.slane %v1258, 5
      %v1763 = vrot.slane %v1258, 6
      %v1764 = vrot.slane %v1258, 7
      %v1765 = vrot.slane %v1259, 1
      %v1766 = vrot.slane %v1259, 2
      %v1767 = vrot.slane %v1259, 3
      %v1768 = vrot.slane %v1259, 4
      %v1769 = vrot.slane %v1259, 5
      %v1770 = vrot.slane %v1259, 6
      %v1771 = vrot.slane %v1259, 7
      %v1772 = vperm.slane %v1196, 0
      %v1773 = vperm.slane %v1324, 0
      %v1774 = vperm.slane %v1325, 0
      %v1775 = vperm.slane %v1326, 0
      %v1776 = vperm.slane %v1327, 0
      %v1777 = vperm.slane %v1328, 0
      %v1778 = vperm.slane %v1329, 0
      %v1779 = vperm.slane %v1330, 0
      %v1780 = vperm.slane %v1197, 0
      %v1781 = vperm.slane %v1331, 0
      %v1782 = vperm.slane %v1332, 0
      %v1783 = vperm.slane %v1333, 0
      %v1784 = vperm.slane %v1334, 0
      %v1785 = vperm.slane %v1335, 0
      %v1786 = vperm.slane %v1336, 0
      %v1787 = vperm.slane %v1337, 0
      %v1788 = vperm.slane %v1198, 0
      %v1789 = vperm.slane %v1338, 0
      %v1790 = vperm.slane %v1339, 0
      %v1791 = vperm.slane %v1340, 0
      %v1792 = vperm.slane %v1341, 0
      %v1793 = vperm.slane %v1342, 0
      %v1794 = vperm.slane %v1343, 0
      %v1795 = vperm.slane %v1344, 0
      %v1796 = vperm.slane %v1199, 0
      %v1797 = vperm.slane %v1345, 0
      %v1798 = vperm.slane %v1346, 0
      %v1799 = vperm.slane %v1347, 0
      %v1800 = vperm.slane %v1348, 0
      %v1801 = vperm.slane %v1349, 0
      %v1802 = vperm.slane %v1350, 0
      %v1803 = vperm.slane %v1351, 0
      %v1804 = vperm.slane %v1200, 0
      %v1805 = vperm.slane %v1352, 0
      %v1806 = vperm.slane %v1353, 0
      %v1807 = vperm.slane %v1354, 0
      %v1808 = vperm.slane %v1355, 0
      %v1809 = vperm.slane %v1356, 0
      %v1810 = vperm.slane %v1357, 0
      %v1811 = vperm.slane %v1358, 0
      %v1812 = vperm.slane %v1201, 0
      %v1813 = vperm.slane %v1359, 0
      %v1814 = vperm.slane %v1360, 0
      %v1815 = vperm.slane %v1361, 0
      %v1816 = vperm.slane %v1362, 0
      %v1817 = vperm.slane %v1363, 0
      %v1818 = vperm.slane %v1364, 0
      %v1819 = vperm.slane %v1365, 0
      %v1820 = vperm.slane %v1202, 0
      %v1821 = vperm.slane %v1366, 0
      %v1822 = vperm.slane %v1367, 0
      %v1823 = vperm.slane %v1368, 0
      %v1824 = vperm.slane %v1369, 0
      %v1825 = vperm.slane %v1370, 0
      %v1826 = vperm.slane %v1371, 0
      %v1827 = vperm.slane %v1372, 0
      %v1828 = vperm.slane %v1203, 0
      %v1829 = vperm.slane %v1373, 0
      %v1830 = vperm.slane %v1374, 0
      %v1831 = vperm.slane %v1375, 0
      %v1832 = vperm.slane %v1376, 0
      %v1833 = vperm.slane %v1377, 0
      %v1834 = vperm.slane %v1378, 0
      %v1835 = vperm.slane %v1379, 0
      %v1836 = vperm.slane %v1204, 0
      %v1837 = vperm.slane %v1380, 0
      %v1838 = vperm.slane %v1381, 0
      %v1839 = vperm.slane %v1382, 0
      %v1840 = vperm.slane %v1383, 0
      %v1841 = vperm.slane %v1384, 0
      %v1842 = vperm.slane %v1385, 0
      %v1843 = vperm.slane %v1386, 0
      %v1844 = vperm.slane %v1205, 0
      %v1845 = vperm.slane %v1387, 0
      %v1846 = vperm.slane %v1388, 0
      %v1847 = vperm.slane %v1389, 0
      %v1848 = vperm.slane %v1390, 0
      %v1849 = vperm.slane %v1391, 0
      %v1850 = vperm.slane %v1392, 0
      %v1851 = vperm.slane %v1393, 0
      %v1852 = vperm.slane %v1206, 0
      %v1853 = vperm.slane %v1394, 0
      %v1854 = vperm.slane %v1395, 0
      %v1855 = vperm.slane %v1396, 0
      %v1856 = vperm.slane %v1397, 0
      %v1857 = vperm.slane %v1398, 0
      %v1858 = vperm.slane %v1399, 0
      %v1859 = vperm.slane %v1400, 0
      %v1860 = vperm.slane %v1207, 0
      %v1861 = vperm.slane %v1401, 0
      %v1862 = vperm.slane %v1402, 0
      %v1863 = vperm.slane %v1403, 0
      %v1864 = vperm.slane %v1404, 0
      %v1865 = vperm.slane %v1405, 0
      %v1866 = vperm.slane %v1406, 0
      %v1867 = vperm.slane %v1407, 0
      %v1868 = vperm.slane %v1208, 0
      %v1869 = vperm.slane %v1408, 0
      %v1870 = vperm.slane %v1409, 0
      %v1871 = vperm.slane %v1410, 0
      %v1872 = vperm.slane %v1411, 0
      %v1873 = vperm.slane %v1412, 0
      %v1874 = vperm.slane %v1413, 0
      %v1875 = vperm.slane %v1414, 0
      %v1876 = vperm.slane %v1209, 0
      %v1877 = vperm.slane %v1415, 0
      %v1878 = vperm.slane %v1416, 0
      %v1879 = vperm.slane %v1417, 0
      %v1880 = vperm.slane %v1418, 0
      %v1881 = vperm.slane %v1419, 0
      %v1882 = vperm.slane %v1420, 0
      %v1883 = vperm.slane %v1421, 0
      %v1884 = vperm.slane %v1210, 0
      %v1885 = vperm.slane %v1422, 0
      %v1886 = vperm.slane %v1423, 0
      %v1887 = vperm.slane %v1424, 0
      %v1888 = vperm.slane %v1425, 0
      %v1889 = vperm.slane %v1426, 0
      %v1890 = vperm.slane %v1427, 0
      %v1891 = vperm.slane %v1428, 0
      %v1892 = vperm.slane %v1211, 0
      %v1893 = vperm.slane %v1429, 0
      %v1894 = vperm.slane %v1430, 0
      %v1895 = vperm.slane %v1431, 0
      %v1896 = vperm.slane %v1432, 0
      %v1897 = vperm.slane %v1433, 0
      %v1898 = vperm.slane %v1434, 0
      %v1899 = vperm.slane %v1435, 0
      %v1900 = vperm.slane %v1212, 0
      %v1901 = vperm.slane %v1436, 0
      %v1902 = vperm.slane %v1437, 0
      %v1903 = vperm.slane %v1438, 0
      %v1904 = vperm.slane %v1439, 0
      %v1905 = vperm.slane %v1440, 0
      %v1906 = vperm.slane %v1441, 0
      %v1907 = vperm.slane %v1442, 0
      %v1908 = vperm.slane %v1213, 0
      %v1909 = vperm.slane %v1443, 0
      %v1910 = vperm.slane %v1444, 0
      %v1911 = vperm.slane %v1445, 0
      %v1912 = vperm.slane %v1446, 0
      %v1913 = vperm.slane %v1447, 0
      %v1914 = vperm.slane %v1448, 0
      %v1915 = vperm.slane %v1449, 0
      %v1916 = vperm.slane %v1214, 0
      %v1917 = vperm.slane %v1450, 0
      %v1918 = vperm.slane %v1451, 0
      %v1919 = vperm.slane %v1452, 0
      %v1920 = vperm.slane %v1453, 0
      %v1921 = vperm.slane %v1454, 0
      %v1922 = vperm.slane %v1455, 0
      %v1923 = vperm.slane %v1456, 0
      %v1924 = vperm.slane %v1215, 0
      %v1925 = vperm.slane %v1457, 0
      %v1926 = vperm.slane %v1458, 0
      %v1927 = vperm.slane %v1459, 0
      %v1928 = vperm.slane %v1460, 0
      %v1929 = vperm.slane %v1461, 0
      %v1930 = vperm.slane %v1462, 0
      %v1931 = vperm.slane %v1463, 0
      %v1932 = vperm.slane %v1216, 0
      %v1933 = vperm.slane %v1464, 0
      %v1934 = vperm.slane %v1465, 0
      %v1935 = vperm.slane %v1466, 0
      %v1936 = vperm.slane %v1467, 0
      %v1937 = vperm.slane %v1468, 0
      %v1938 = vperm.slane %v1469, 0
      %v1939 = vperm.slane %v1470, 0
      %v1940 = vperm.slane %v1217, 0
      %v1941 = vperm.slane %v1471, 0
      %v1942 = vperm.slane %v1472, 0
      %v1943 = vperm.slane %v1473, 0
      %v1944 = vperm.slane %v1474, 0
      %v1945 = vperm.slane %v1475, 0
      %v1946 = vperm.slane %v1476, 0
      %v1947 = vperm.slane %v1477, 0
      %v1948 = vperm.slane %v1218, 0
      %v1949 = vperm.slane %v1478, 0
      %v1950 = vperm.slane %v1479, 0
      %v1951 = vperm.slane %v1480, 0
      %v1952 = vperm.slane %v1481, 0
      %v1953 = vperm.slane %v1482, 0
      %v1954 = vperm.slane %v1483, 0
      %v1955 = vperm.slane %v1484, 0
      %v1956 = vperm.slane %v1219, 0
      %v1957 = vperm.slane %v1485, 0
      %v1958 = vperm.slane %v1486, 0
      %v1959 = vperm.slane %v1487, 0
      %v1960 = vperm.slane %v1488, 0
      %v1961 = vperm.slane %v1489, 0
      %v1962 = vperm.slane %v1490, 0
      %v1963 = vperm.slane %v1491, 0
      %v1964 = vperm.slane %v1220, 0
      %v1965 = vperm.slane %v1492, 0
      %v1966 = vperm.slane %v1493, 0
      %v1967 = vperm.slane %v1494, 0
      %v1968 = vperm.slane %v1495, 0
      %v1969 = vperm.slane %v1496, 0
      %v1970 = vperm.slane %v1497, 0
      %v1971 = vperm.slane %v1498, 0
      %v1972 = vperm.slane %v1221, 0
      %v1973 = vperm.slane %v1499, 0
      %v1974 = vperm.slane %v1500, 0
      %v1975 = vperm.slane %v1501, 0
      %v1976 = vperm.slane %v1502, 0
      %v1977 = vperm.slane %v1503, 0
      %v1978 = vperm.slane %v1504, 0
      %v1979 = vperm.slane %v1505, 0
      %v1980 = vperm.slane %v1222, 0
      %v1981 = vperm.slane %v1506, 0
      %v1982 = vperm.slane %v1507, 0
      %v1983 = vperm.slane %v1508, 0
      %v1984 = vperm.slane %v1509, 0
      %v1985 = vperm.slane %v1510, 0
      %v1986 = vperm.slane %v1511, 0
      %v1987 = vperm.slane %v1512, 0
      %v1988 = vperm.slane %v1223, 0
      %v1989 = vperm.slane %v1513, 0
      %v1990 = vperm.slane %v1514, 0
      %v1991 = vperm.slane %v1515, 0
      %v1992 = vperm.slane %v1516, 0
      %v1993 = vperm.slane %v1517, 0
      %v1994 = vperm.slane %v1518, 0
      %v1995 = vperm.slane %v1519, 0
      %v1996 = vperm.slane %v1224, 0
      %v1997 = vperm.slane %v1520, 0
      %v1998 = vperm.slane %v1521, 0
      %v1999 = vperm.slane %v1522, 0
      %v2000 = vperm.slane %v1523, 0
      %v2001 = vperm.slane %v1524, 0
      %v2002 = vperm.slane %v1525, 0
      %v2003 = vperm.slane %v1526, 0
      %v2004 = vperm.slane %v1225, 0
      %v2005 = vperm.slane %v1527, 0
      %v2006 = vperm.slane %v1528, 0
      %v2007 = vperm.slane %v1529, 0
      %v2008 = vperm.slane %v1530, 0
      %v2009 = vperm.slane %v1531, 0
      %v2010 = vperm.slane %v1532, 0
      %v2011 = vperm.slane %v1533, 0
      %v2012 = vperm.slane %v1226, 0
      %v2013 = vperm.slane %v1534, 0
      %v2014 = vperm.slane %v1535, 0
      %v2015 = vperm.slane %v1536, 0
      %v2016 = vperm.slane %v1537, 0
      %v2017 = vperm.slane %v1538, 0
      %v2018 = vperm.slane %v1539, 0
      %v2019 = vperm.slane %v1540, 0
      %v2020 = vperm.slane %v1227, 0
      %v2021 = vperm.slane %v1541, 0
      %v2022 = vperm.slane %v1542, 0
      %v2023 = vperm.slane %v1543, 0
      %v2024 = vperm.slane %v1544, 0
      %v2025 = vperm.slane %v1545, 0
      %v2026 = vperm.slane %v1546, 0
      %v2027 = vperm.slane %v1547, 0
      %v2028 = vperm.slane %v1228, 0
      %v2029 = vperm.slane %v1548, 0
      %v2030 = vperm.slane %v1549, 0
      %v2031 = vperm.slane %v1550, 0
      %v2032 = vperm.slane %v1551, 0
      %v2033 = vperm.slane %v1552, 0
      %v2034 = vperm.slane %v1553, 0
      %v2035 = vperm.slane %v1554, 0
      %v2036 = vperm.slane %v1229, 0
      %v2037 = vperm.slane %v1555, 0
      %v2038 = vperm.slane %v1556, 0
      %v2039 = vperm.slane %v1557, 0
      %v2040 = vperm.slane %v1558, 0
      %v2041 = vperm.slane %v1559, 0
      %v2042 = vperm.slane %v1560, 0
      %v2043 = vperm.slane %v1561, 0
      %v2044 = vperm.slane %v1230, 0
      %v2045 = vperm.slane %v1562, 0
      %v2046 = vperm.slane %v1563, 0
      %v2047 = vperm.slane %v1564, 0
      %v2048 = vperm.slane %v1565, 0
      %v2049 = vperm.slane %v1566, 0
      %v2050 = vperm.slane %v1567, 0
      %v2051 = vperm.slane %v1568, 0
      %v2052 = vperm.slane %v1231, 0
      %v2053 = vperm.slane %v1569, 0
      %v2054 = vperm.slane %v1570, 0
      %v2055 = vperm.slane %v1571, 0
      %v2056 = vperm.slane %v1572, 0
      %v2057 = vperm.slane %v1573, 0
      %v2058 = vperm.slane %v1574, 0
      %v2059 = vperm.slane %v1575, 0
      %v2060 = vperm.slane %v1232, 0
      %v2061 = vperm.slane %v1576, 0
      %v2062 = vperm.slane %v1577, 0
      %v2063 = vperm.slane %v1578, 0
      %v2064 = vperm.slane %v1579, 0
      %v2065 = vperm.slane %v1580, 0
      %v2066 = vperm.slane %v1581, 0
      %v2067 = vperm.slane %v1582, 0
      %v2068 = vperm.slane %v1233, 0
      %v2069 = vperm.slane %v1583, 0
      %v2070 = vperm.slane %v1584, 0
      %v2071 = vperm.slane %v1585, 0
      %v2072 = vperm.slane %v1586, 0
      %v2073 = vperm.slane %v1587, 0
      %v2074 = vperm.slane %v1588, 0
      %v2075 = vperm.slane %v1589, 0
      %v2076 = vperm.slane %v1234, 0
      %v2077 = vperm.slane %v1590, 0
      %v2078 = vperm.slane %v1591, 0
      %v2079 = vperm.slane %v1592, 0
      %v2080 = vperm.slane %v1593, 0
      %v2081 = vperm.slane %v1594, 0
      %v2082 = vperm.slane %v1595, 0
      %v2083 = vperm.slane %v1596, 0
      %v2084 = vperm.slane %v1235, 0
      %v2085 = vperm.slane %v1597, 0
      %v2086 = vperm.slane %v1598, 0
      %v2087 = vperm.slane %v1599, 0
      %v2088 = vperm.slane %v1600, 0
      %v2089 = vperm.slane %v1601, 0
      %v2090 = vperm.slane %v1602, 0
      %v2091 = vperm.slane %v1603, 0
      %v2092 = vperm.slane %v1236, 0
      %v2093 = vperm.slane %v1604, 0
      %v2094 = vperm.slane %v1605, 0
      %v2095 = vperm.slane %v1606, 0
      %v2096 = vperm.slane %v1607, 0
      %v2097 = vperm.slane %v1608, 0
      %v2098 = vperm.slane %v1609, 0
      %v2099 = vperm.slane %v1610, 0
      %v2100 = vperm.slane %v1237, 0
      %v2101 = vperm.slane %v1611, 0
      %v2102 = vperm.slane %v1612, 0
      %v2103 = vperm.slane %v1613, 0
      %v2104 = vperm.slane %v1614, 0
      %v2105 = vperm.slane %v1615, 0
      %v2106 = vperm.slane %v1616, 0
      %v2107 = vperm.slane %v1617, 0
      %v2108 = vperm.slane %v1238, 0
      %v2109 = vperm.slane %v1618, 0
      %v2110 = vperm.slane %v1619, 0
      %v2111 = vperm.slane %v1620, 0
      %v2112 = vperm.slane %v1621, 0
      %v2113 = vperm.slane %v1622, 0
      %v2114 = vperm.slane %v1623, 0
      %v2115 = vperm.slane %v1624, 0
      %v2116 = vperm.slane %v1239, 0
      %v2117 = vperm.slane %v1625, 0
      %v2118 = vperm.slane %v1626, 0
      %v2119 = vperm.slane %v1627, 0
      %v2120 = vperm.slane %v1628, 0
      %v2121 = vperm.slane %v1629, 0
      %v2122 = vperm.slane %v1630, 0
      %v2123 = vperm.slane %v1631, 0
      %v2124 = vperm.slane %v1240, 0
      %v2125 = vperm.slane %v1632, 0
      %v2126 = vperm.slane %v1633, 0
      %v2127 = vperm.slane %v1634, 0
      %v2128 = vperm.slane %v1635, 0
      %v2129 = vperm.slane %v1636, 0
      %v2130 = vperm.slane %v1637, 0
      %v2131 = vperm.slane %v1638, 0
      %v2132 = vperm.slane %v1241, 0
      %v2133 = vperm.slane %v1639, 0
      %v2134 = vperm.slane %v1640, 0
      %v2135 = vperm.slane %v1641, 0
      %v2136 = vperm.slane %v1642, 0
      %v2137 = vperm.slane %v1643, 0
      %v2138 = vperm.slane %v1644, 0
      %v2139 = vperm.slane %v1645, 0
      %v2140 = vperm.slane %v1242, 0
      %v2141 = vperm.slane %v1646, 0
      %v2142 = vperm.slane %v1647, 0
      %v2143 = vperm.slane %v1648, 0
      %v2144 = vperm.slane %v1649, 0
      %v2145 = vperm.slane %v1650, 0
      %v2146 = vperm.slane %v1651, 0
      %v2147 = vperm.slane %v1652, 0
      %v2148 = vperm.slane %v1243, 0
      %v2149 = vperm.slane %v1653, 0
      %v2150 = vperm.slane %v1654, 0
      %v2151 = vperm.slane %v1655, 0
      %v2152 = vperm.slane %v1656, 0
      %v2153 = vperm.slane %v1657, 0
      %v2154 = vperm.slane %v1658, 0
      %v2155 = vperm.slane %v1659, 0
      %v2156 = vperm.slane %v1244, 0
      %v2157 = vperm.slane %v1660, 0
      %v2158 = vperm.slane %v1661, 0
      %v2159 = vperm.slane %v1662, 0
      %v2160 = vperm.slane %v1663, 0
      %v2161 = vperm.slane %v1664, 0
      %v2162 = vperm.slane %v1665, 0
      %v2163 = vperm.slane %v1666, 0
      %v2164 = vperm.slane %v1245, 0
      %v2165 = vperm.slane %v1667, 0
      %v2166 = vperm.slane %v1668, 0
      %v2167 = vperm.slane %v1669, 0
      %v2168 = vperm.slane %v1670, 0
      %v2169 = vperm.slane %v1671, 0
      %v2170 = vperm.slane %v1672, 0
      %v2171 = vperm.slane %v1673, 0
      %v2172 = vperm.slane %v1246, 0
      %v2173 = vperm.slane %v1674, 0
      %v2174 = vperm.slane %v1675, 0
      %v2175 = vperm.slane %v1676, 0
      %v2176 = vperm.slane %v1677, 0
      %v2177 = vperm.slane %v1678, 0
      %v2178 = vperm.slane %v1679, 0
      %v2179 = vperm.slane %v1680, 0
      %v2180 = vperm.slane %v1247, 0
      %v2181 = vperm.slane %v1681, 0
      %v2182 = vperm.slane %v1682, 0
      %v2183 = vperm.slane %v1683, 0
      %v2184 = vperm.slane %v1684, 0
      %v2185 = vperm.slane %v1685, 0
      %v2186 = vperm.slane %v1686, 0
      %v2187 = vperm.slane %v1687, 0
      %v2188 = vperm.slane %v1248, 0
      %v2189 = vperm.slane %v1688, 0
      %v2190 = vperm.slane %v1689, 0
      %v2191 = vperm.slane %v1690, 0
      %v2192 = vperm.slane %v1691, 0
      %v2193 = vperm.slane %v1692, 0
      %v2194 = vperm.slane %v1693, 0
      %v2195 = vperm.slane %v1694, 0
      %v2196 = vperm.slane %v1249, 0
      %v2197 = vperm.slane %v1695, 0
      %v2198 = vperm.slane %v1696, 0
      %v2199 = vperm.slane %v1697, 0
      %v2200 = vperm.slane %v1698, 0
      %v2201 = vperm.slane %v1699, 0
      %v2202 = vperm.slane %v1700, 0
      %v2203 = vperm.slane %v1701, 0
      %v2204 = vperm.slane %v1250, 0
      %v2205 = vperm.slane %v1702, 0
      %v2206 = vperm.slane %v1703, 0
      %v2207 = vperm.slane %v1704, 0
      %v2208 = vperm.slane %v1705, 0
      %v2209 = vperm.slane %v1706, 0
      %v2210 = vperm.slane %v1707, 0
      %v2211 = vperm.slane %v1708, 0
      %v2212 = vperm.slane %v1251, 0
      %v2213 = vperm.slane %v1709, 0
      %v2214 = vperm.slane %v1710, 0
      %v2215 = vperm.slane %v1711, 0
      %v2216 = vperm.slane %v1712, 0
      %v2217 = vperm.slane %v1713, 0
      %v2218 = vperm.slane %v1714, 0
      %v2219 = vperm.slane %v1715, 0
      %v2220 = vperm.slane %v1252, 0
      %v2221 = vperm.slane %v1716, 0
      %v2222 = vperm.slane %v1717, 0
      %v2223 = vperm.slane %v1718, 0
      %v2224 = vperm.slane %v1719, 0
      %v2225 = vperm.slane %v1720, 0
      %v2226 = vperm.slane %v1721, 0
      %v2227 = vperm.slane %v1722, 0
      %v2228 = vperm.slane %v1253, 0
      %v2229 = vperm.slane %v1723, 0
      %v2230 = vperm.slane %v1724, 0
      %v2231 = vperm.slane %v1725, 0
      %v2232 = vperm.slane %v1726, 0
      %v2233 = vperm.slane %v1727, 0
      %v2234 = vperm.slane %v1728, 0
      %v2235 = vperm.slane %v1729, 0
      %v2236 = vperm.slane %v1254, 0
      %v2237 = vperm.slane %v1730, 0
      %v2238 = vperm.slane %v1731, 0
      %v2239 = vperm.slane %v1732, 0
      %v2240 = vperm.slane %v1733, 0
      %v2241 = vperm.slane %v1734, 0
      %v2242 = vperm.slane %v1735, 0
      %v2243 = vperm.slane %v1736, 0
      %v2244 = vperm.slane %v1255, 0
      %v2245 = vperm.slane %v1737, 0
      %v2246 = vperm.slane %v1738, 0
      %v2247 = vperm.slane %v1739, 0
      %v2248 = vperm.slane %v1740, 0
      %v2249 = vperm.slane %v1741, 0
      %v2250 = vperm.slane %v1742, 0
      %v2251 = vperm.slane %v1743, 0
      %v2252 = vperm.slane %v1256, 0
      %v2253 = vperm.slane %v1744, 0
      %v2254 = vperm.slane %v1745, 0
      %v2255 = vperm.slane %v1746, 0
      %v2256 = vperm.slane %v1747, 0
      %v2257 = vperm.slane %v1748, 0
      %v2258 = vperm.slane %v1749, 0
      %v2259 = vperm.slane %v1750, 0
      %v2260 = vperm.slane %v1257, 0
      %v2261 = vperm.slane %v1751, 0
      %v2262 = vperm.slane %v1752, 0
      %v2263 = vperm.slane %v1753, 0
      %v2264 = vperm.slane %v1754, 0
      %v2265 = vperm.slane %v1755, 0
      %v2266 = vperm.slane %v1756, 0
      %v2267 = vperm.slane %v1757, 0
      %v2268 = vperm.slane %v1258, 0
      %v2269 = vperm.slane %v1758, 0
      %v2270 = vperm.slane %v1759, 0
      %v2271 = vperm.slane %v1760, 0
      %v2272 = vperm.slane %v1761, 0
      %v2273 = vperm.slane %v1762, 0
      %v2274 = vperm.slane %v1763, 0
      %v2275 = vperm.slane %v1764, 0
      %v2276 = vperm.slane %v1259, 0
      %v2277 = vperm.slane %v1765, 0
      %v2278 = vperm.slane %v1766, 0
      %v2279 = vperm.slane %v1767, 0
      %v2280 = vperm.slane %v1768, 0
      %v2281 = vperm.slane %v1769, 0
      %v2282 = vperm.slane %v1770, 0
      %v2283 = vperm.slane %v1771, 0
      %v2796 = vmul.f32 %v172, %v1772
      %v2797 = vmul.f32 %v173, %v1772
      %v2798 = vmul.f32 %v174, %v1773
      %v2799 = vmul.f32 %v175, %v1773
      %v2800 = vmul.f32 %v176, %v1774
      %v2801 = vmul.f32 %v177, %v1774
      %v2802 = vmul.f32 %v178, %v1775
      %v2803 = vmul.f32 %v179, %v1775
      %v2804 = vmul.f32 %v180, %v1776
      %v2805 = vmul.f32 %v181, %v1776
      %v2806 = vmul.f32 %v182, %v1777
      %v2807 = vmul.f32 %v183, %v1777
      %v2808 = vmul.f32 %v184, %v1778
      %v2809 = vmul.f32 %v185, %v1778
      %v2810 = vmul.f32 %v186, %v1779
      %v2811 = vmul.f32 %v187, %v1779
      %v2812 = vmul.f32 %v188, %v1780
      %v2813 = vmul.f32 %v189, %v1780
      %v2814 = vmul.f32 %v190, %v1781
      %v2815 = vmul.f32 %v191, %v1781
      %v2816 = vmul.f32 %v192, %v1782
      %v2817 = vmul.f32 %v193, %v1782
      %v2818 = vmul.f32 %v194, %v1783
      %v2819 = vmul.f32 %v195, %v1783
      %v2820 = vmul.f32 %v196, %v1784
      %v2821 = vmul.f32 %v197, %v1784
      %v2822 = vmul.f32 %v198, %v1785
      %v2823 = vmul.f32 %v199, %v1785
      %v2824 = vmul.f32 %v200, %v1786
      %v2825 = vmul.f32 %v201, %v1786
      %v2826 = vmul.f32 %v202, %v1787
      %v2827 = vmul.f32 %v203, %v1787
      %v2828 = vmul.f32 %v204, %v1788
      %v2829 = vmul.f32 %v205, %v1788
      %v2830 = vmul.f32 %v206, %v1789
      %v2831 = vmul.f32 %v207, %v1789
      %v2832 = vmul.f32 %v208, %v1790
      %v2833 = vmul.f32 %v209, %v1790
      %v2834 = vmul.f32 %v210, %v1791
      %v2835 = vmul.f32 %v211, %v1791
      %v2836 = vmul.f32 %v212, %v1792
      %v2837 = vmul.f32 %v213, %v1792
      %v2838 = vmul.f32 %v214, %v1793
      %v2839 = vmul.f32 %v215, %v1793
      %v2840 = vmul.f32 %v216, %v1794
      %v2841 = vmul.f32 %v217, %v1794
      %v2842 = vmul.f32 %v218, %v1795
      %v2843 = vmul.f32 %v219, %v1795
      %v2844 = vmul.f32 %v220, %v1796
      %v2845 = vmul.f32 %v221, %v1796
      %v2846 = vmul.f32 %v222, %v1797
      %v2847 = vmul.f32 %v223, %v1797
      %v2848 = vmul.f32 %v224, %v1798
      %v2849 = vmul.f32 %v225, %v1798
      %v2850 = vmul.f32 %v226, %v1799
      %v2851 = vmul.f32 %v227, %v1799
      %v2852 = vmul.f32 %v228, %v1800
      %v2853 = vmul.f32 %v229, %v1800
      %v2854 = vmul.f32 %v230, %v1801
      %v2855 = vmul.f32 %v231, %v1801
      %v2856 = vmul.f32 %v232, %v1802
      %v2857 = vmul.f32 %v233, %v1802
      %v2858 = vmul.f32 %v234, %v1803
      %v2859 = vmul.f32 %v235, %v1803
      %v2860 = vmul.f32 %v236, %v1804
      %v2861 = vmul.f32 %v237, %v1804
      %v2862 = vmul.f32 %v238, %v1805
      %v2863 = vmul.f32 %v239, %v1805
      %v2864 = vmul.f32 %v240, %v1806
      %v2865 = vmul.f32 %v241, %v1806
      %v2866 = vmul.f32 %v242, %v1807
      %v2867 = vmul.f32 %v243, %v1807
      %v2868 = vmul.f32 %v244, %v1808
      %v2869 = vmul.f32 %v245, %v1808
      %v2870 = vmul.f32 %v246, %v1809
      %v2871 = vmul.f32 %v247, %v1809
      %v2872 = vmul.f32 %v248, %v1810
      %v2873 = vmul.f32 %v249, %v1810
      %v2874 = vmul.f32 %v250, %v1811
      %v2875 = vmul.f32 %v251, %v1811
      %v2876 = vmul.f32 %v252, %v1812
      %v2877 = vmul.f32 %v253, %v1812
      %v2878 = vmul.f32 %v254, %v1813
      %v2879 = vmul.f32 %v255, %v1813
      %v2880 = vmul.f32 %v256, %v1814
      %v2881 = vmul.f32 %v257, %v1814
      %v2882 = vmul.f32 %v258, %v1815
      %v2883 = vmul.f32 %v259, %v1815
      %v2884 = vmul.f32 %v260, %v1816
      %v2885 = vmul.f32 %v261, %v1816
      %v2886 = vmul.f32 %v262, %v1817
      %v2887 = vmul.f32 %v263, %v1817
      %v2888 = vmul.f32 %v264, %v1818
      %v2889 = vmul.f32 %v265, %v1818
      %v2890 = vmul.f32 %v266, %v1819
      %v2891 = vmul.f32 %v267, %v1819
      %v2892 = vmul.f32 %v268, %v1820
      %v2893 = vmul.f32 %v269, %v1820
      %v2894 = vmul.f32 %v270, %v1821
      %v2895 = vmul.f32 %v271, %v1821
      %v2896 = vmul.f32 %v272, %v1822
      %v2897 = vmul.f32 %v273, %v1822
      %v2898 = vmul.f32 %v274, %v1823
      %v2899 = vmul.f32 %v275, %v1823
      %v2900 = vmul.f32 %v276, %v1824
      %v2901 = vmul.f32 %v277, %v1824
      %v2902 = vmul.f32 %v278, %v1825
      %v2903 = vmul.f32 %v279, %v1825
      %v2904 = vmul.f32 %v280, %v1826
      %v2905 = vmul.f32 %v281, %v1826
      %v2906 = vmul.f32 %v282, %v1827
      %v2907 = vmul.f32 %v283, %v1827
      %v2908 = vmul.f32 %v284, %v1828
      %v2909 = vmul.f32 %v285, %v1828
      %v2910 = vmul.f32 %v286, %v1829
      %v2911 = vmul.f32 %v287, %v1829
      %v2912 = vmul.f32 %v288, %v1830
      %v2913 = vmul.f32 %v289, %v1830
      %v2914 = vmul.f32 %v290, %v1831
      %v2915 = vmul.f32 %v291, %v1831
      %v2916 = vmul.f32 %v292, %v1832
      %v2917 = vmul.f32 %v293, %v1832
      %v2918 = vmul.f32 %v294, %v1833
      %v2919 = vmul.f32 %v295, %v1833
      %v2920 = vmul.f32 %v296, %v1834
      %v2921 = vmul.f32 %v297, %v1834
      %v2922 = vmul.f32 %v298, %v1835
      %v2923 = vmul.f32 %v299, %v1835
      %v2924 = vmul.f32 %v300, %v1836
      %v2925 = vmul.f32 %v301, %v1836
      %v2926 = vmul.f32 %v302, %v1837
      %v2927 = vmul.f32 %v303, %v1837
      %v2928 = vmul.f32 %v304, %v1838
      %v2929 = vmul.f32 %v305, %v1838
      %v2930 = vmul.f32 %v306, %v1839
      %v2931 = vmul.f32 %v307, %v1839
      %v2932 = vmul.f32 %v308, %v1840
      %v2933 = vmul.f32 %v309, %v1840
      %v2934 = vmul.f32 %v310, %v1841
      %v2935 = vmul.f32 %v311, %v1841
      %v2936 = vmul.f32 %v312, %v1842
      %v2937 = vmul.f32 %v313, %v1842
      %v2938 = vmul.f32 %v314, %v1843
      %v2939 = vmul.f32 %v315, %v1843
      %v2940 = vmul.f32 %v316, %v1844
      %v2941 = vmul.f32 %v317, %v1844
      %v2942 = vmul.f32 %v318, %v1845
      %v2943 = vmul.f32 %v319, %v1845
      %v2944 = vmul.f32 %v320, %v1846
      %v2945 = vmul.f32 %v321, %v1846
      %v2946 = vmul.f32 %v322, %v1847
      %v2947 = vmul.f32 %v323, %v1847
      %v2948 = vmul.f32 %v324, %v1848
      %v2949 = vmul.f32 %v325, %v1848
      %v2950 = vmul.f32 %v326, %v1849
      %v2951 = vmul.f32 %v327, %v1849
      %v2952 = vmul.f32 %v328, %v1850
      %v2953 = vmul.f32 %v329, %v1850
      %v2954 = vmul.f32 %v330, %v1851
      %v2955 = vmul.f32 %v331, %v1851
      %v2956 = vmul.f32 %v332, %v1852
      %v2957 = vmul.f32 %v333, %v1852
      %v2958 = vmul.f32 %v334, %v1853
      %v2959 = vmul.f32 %v335, %v1853
      %v2960 = vmul.f32 %v336, %v1854
      %v2961 = vmul.f32 %v337, %v1854
      %v2962 = vmul.f32 %v338, %v1855
      %v2963 = vmul.f32 %v339, %v1855
      %v2964 = vmul.f32 %v340, %v1856
      %v2965 = vmul.f32 %v341, %v1856
      %v2966 = vmul.f32 %v342, %v1857
      %v2967 = vmul.f32 %v343, %v1857
      %v2968 = vmul.f32 %v344, %v1858
      %v2969 = vmul.f32 %v345, %v1858
      %v2970 = vmul.f32 %v346, %v1859
      %v2971 = vmul.f32 %v347, %v1859
      %v2972 = vmul.f32 %v348, %v1860
      %v2973 = vmul.f32 %v349, %v1860
      %v2974 = vmul.f32 %v350, %v1861
      %v2975 = vmul.f32 %v351, %v1861
      %v2976 = vmul.f32 %v352, %v1862
      %v2977 = vmul.f32 %v353, %v1862
      %v2978 = vmul.f32 %v354, %v1863
      %v2979 = vmul.f32 %v355, %v1863
      %v2980 = vmul.f32 %v356, %v1864
      %v2981 = vmul.f32 %v357, %v1864
      %v2982 = vmul.f32 %v358, %v1865
      %v2983 = vmul.f32 %v359, %v1865
      %v2984 = vmul.f32 %v360, %v1866
      %v2985 = vmul.f32 %v361, %v1866
      %v2986 = vmul.f32 %v362, %v1867
      %v2987 = vmul.f32 %v363, %v1867
      %v2988 = vmul.f32 %v364, %v1868
      %v2989 = vmul.f32 %v365, %v1868
      %v2990 = vmul.f32 %v366, %v1869
      %v2991 = vmul.f32 %v367, %v1869
      %v2992 = vmul.f32 %v368, %v1870
      %v2993 = vmul.f32 %v369, %v1870
      %v2994 = vmul.f32 %v370, %v1871
      %v2995 = vmul.f32 %v371, %v1871
      %v2996 = vmul.f32 %v372, %v1872
      %v2997 = vmul.f32 %v373, %v1872
      %v2998 = vmul.f32 %v374, %v1873
      %v2999 = vmul.f32 %v375, %v1873
      %v3000 = vmul.f32 %v376, %v1874
      %v3001 = vmul.f32 %v377, %v1874
      %v3002 = vmul.f32 %v378, %v1875
      %v3003 = vmul.f32 %v379, %v1875
      %v3004 = vmul.f32 %v380, %v1876
      %v3005 = vmul.f32 %v381, %v1876
      %v3006 = vmul.f32 %v382, %v1877
      %v3007 = vmul.f32 %v383, %v1877
      %v3008 = vmul.f32 %v384, %v1878
      %v3009 = vmul.f32 %v385, %v1878
      %v3010 = vmul.f32 %v386, %v1879
      %v3011 = vmul.f32 %v387, %v1879
      %v3012 = vmul.f32 %v388, %v1880
      %v3013 = vmul.f32 %v389, %v1880
      %v3014 = vmul.f32 %v390, %v1881
      %v3015 = vmul.f32 %v391, %v1881
      %v3016 = vmul.f32 %v392, %v1882
      %v3017 = vmul.f32 %v393, %v1882
      %v3018 = vmul.f32 %v394, %v1883
      %v3019 = vmul.f32 %v395, %v1883
      %v3020 = vmul.f32 %v396, %v1884
      %v3021 = vmul.f32 %v397, %v1884
      %v3022 = vmul.f32 %v398, %v1885
      %v3023 = vmul.f32 %v399, %v1885
      %v3024 = vmul.f32 %v400, %v1886
      %v3025 = vmul.f32 %v401, %v1886
      %v3026 = vmul.f32 %v402, %v1887
      %v3027 = vmul.f32 %v403, %v1887
      %v3028 = vmul.f32 %v404, %v1888
      %v3029 = vmul.f32 %v405, %v1888
      %v3030 = vmul.f32 %v406, %v1889
      %v3031 = vmul.f32 %v407, %v1889
      %v3032 = vmul.f32 %v408, %v1890
      %v3033 = vmul.f32 %v409, %v1890
      %v3034 = vmul.f32 %v410, %v1891
      %v3035 = vmul.f32 %v411, %v1891
      %v3036 = vmul.f32 %v412, %v1892
      %v3037 = vmul.f32 %v413, %v1892
      %v3038 = vmul.f32 %v414, %v1893
      %v3039 = vmul.f32 %v415, %v1893
      %v3040 = vmul.f32 %v416, %v1894
      %v3041 = vmul.f32 %v417, %v1894
      %v3042 = vmul.f32 %v418, %v1895
      %v3043 = vmul.f32 %v419, %v1895
      %v3044 = vmul.f32 %v420, %v1896
      %v3045 = vmul.f32 %v421, %v1896
      %v3046 = vmul.f32 %v422, %v1897
      %v3047 = vmul.f32 %v423, %v1897
      %v3048 = vmul.f32 %v424, %v1898
      %v3049 = vmul.f32 %v425, %v1898
      %v3050 = vmul.f32 %v426, %v1899
      %v3051 = vmul.f32 %v427, %v1899
      %v3052 = vmul.f32 %v428, %v1900
      %v3053 = vmul.f32 %v429, %v1900
      %v3054 = vmul.f32 %v430, %v1901
      %v3055 = vmul.f32 %v431, %v1901
      %v3056 = vmul.f32 %v432, %v1902
      %v3057 = vmul.f32 %v433, %v1902
      %v3058 = vmul.f32 %v434, %v1903
      %v3059 = vmul.f32 %v435, %v1903
      %v3060 = vmul.f32 %v436, %v1904
      %v3061 = vmul.f32 %v437, %v1904
      %v3062 = vmul.f32 %v438, %v1905
      %v3063 = vmul.f32 %v439, %v1905
      %v3064 = vmul.f32 %v440, %v1906
      %v3065 = vmul.f32 %v441, %v1906
      %v3066 = vmul.f32 %v442, %v1907
      %v3067 = vmul.f32 %v443, %v1907
      %v3068 = vmul.f32 %v444, %v1908
      %v3069 = vmul.f32 %v445, %v1908
      %v3070 = vmul.f32 %v446, %v1909
      %v3071 = vmul.f32 %v447, %v1909
      %v3072 = vmul.f32 %v448, %v1910
      %v3073 = vmul.f32 %v449, %v1910
      %v3074 = vmul.f32 %v450, %v1911
      %v3075 = vmul.f32 %v451, %v1911
      %v3076 = vmul.f32 %v452, %v1912
      %v3077 = vmul.f32 %v453, %v1912
      %v3078 = vmul.f32 %v454, %v1913
      %v3079 = vmul.f32 %v455, %v1913
      %v3080 = vmul.f32 %v456, %v1914
      %v3081 = vmul.f32 %v457, %v1914
      %v3082 = vmul.f32 %v458, %v1915
      %v3083 = vmul.f32 %v459, %v1915
      %v3084 = vmul.f32 %v460, %v1916
      %v3085 = vmul.f32 %v461, %v1916
      %v3086 = vmul.f32 %v462, %v1917
      %v3087 = vmul.f32 %v463, %v1917
      %v3088 = vmul.f32 %v464, %v1918
      %v3089 = vmul.f32 %v465, %v1918
      %v3090 = vmul.f32 %v466, %v1919
      %v3091 = vmul.f32 %v467, %v1919
      %v3092 = vmul.f32 %v468, %v1920
      %v3093 = vmul.f32 %v469, %v1920
      %v3094 = vmul.f32 %v470, %v1921
      %v3095 = vmul.f32 %v471, %v1921
      %v3096 = vmul.f32 %v472, %v1922
      %v3097 = vmul.f32 %v473, %v1922
      %v3098 = vmul.f32 %v474, %v1923
      %v3099 = vmul.f32 %v475, %v1923
      %v3100 = vmul.f32 %v476, %v1924
      %v3101 = vmul.f32 %v477, %v1924
      %v3102 = vmul.f32 %v478, %v1925
      %v3103 = vmul.f32 %v479, %v1925
      %v3104 = vmul.f32 %v480, %v1926
      %v3105 = vmul.f32 %v481, %v1926
      %v3106 = vmul.f32 %v482, %v1927
      %v3107 = vmul.f32 %v483, %v1927
      %v3108 = vmul.f32 %v484, %v1928
      %v3109 = vmul.f32 %v485, %v1928
      %v3110 = vmul.f32 %v486, %v1929
      %v3111 = vmul.f32 %v487, %v1929
      %v3112 = vmul.f32 %v488, %v1930
      %v3113 = vmul.f32 %v489, %v1930
      %v3114 = vmul.f32 %v490, %v1931
      %v3115 = vmul.f32 %v491, %v1931
      %v3116 = vmul.f32 %v492, %v1932
      %v3117 = vmul.f32 %v493, %v1932
      %v3118 = vmul.f32 %v494, %v1933
      %v3119 = vmul.f32 %v495, %v1933
      %v3120 = vmul.f32 %v496, %v1934
      %v3121 = vmul.f32 %v497, %v1934
      %v3122 = vmul.f32 %v498, %v1935
      %v3123 = vmul.f32 %v499, %v1935
      %v3124 = vmul.f32 %v500, %v1936
      %v3125 = vmul.f32 %v501, %v1936
      %v3126 = vmul.f32 %v502, %v1937
      %v3127 = vmul.f32 %v503, %v1937
      %v3128 = vmul.f32 %v504, %v1938
      %v3129 = vmul.f32 %v505, %v1938
      %v3130 = vmul.f32 %v506, %v1939
      %v3131 = vmul.f32 %v507, %v1939
      %v3132 = vmul.f32 %v508, %v1940
      %v3133 = vmul.f32 %v509, %v1940
      %v3134 = vmul.f32 %v510, %v1941
      %v3135 = vmul.f32 %v511, %v1941
      %v3136 = vmul.f32 %v512, %v1942
      %v3137 = vmul.f32 %v513, %v1942
      %v3138 = vmul.f32 %v514, %v1943
      %v3139 = vmul.f32 %v515, %v1943
      %v3140 = vmul.f32 %v516, %v1944
      %v3141 = vmul.f32 %v517, %v1944
      %v3142 = vmul.f32 %v518, %v1945
      %v3143 = vmul.f32 %v519, %v1945
      %v3144 = vmul.f32 %v520, %v1946
      %v3145 = vmul.f32 %v521, %v1946
      %v3146 = vmul.f32 %v522, %v1947
      %v3147 = vmul.f32 %v523, %v1947
      %v3148 = vmul.f32 %v524, %v1948
      %v3149 = vmul.f32 %v525, %v1948
      %v3150 = vmul.f32 %v526, %v1949
      %v3151 = vmul.f32 %v527, %v1949
      %v3152 = vmul.f32 %v528, %v1950
      %v3153 = vmul.f32 %v529, %v1950
      %v3154 = vmul.f32 %v530, %v1951
      %v3155 = vmul.f32 %v531, %v1951
      %v3156 = vmul.f32 %v532, %v1952
      %v3157 = vmul.f32 %v533, %v1952
      %v3158 = vmul.f32 %v534, %v1953
      %v3159 = vmul.f32 %v535, %v1953
      %v3160 = vmul.f32 %v536, %v1954
      %v3161 = vmul.f32 %v537, %v1954
      %v3162 = vmul.f32 %v538, %v1955
      %v3163 = vmul.f32 %v539, %v1955
      %v3164 = vmul.f32 %v540, %v1956
      %v3165 = vmul.f32 %v541, %v1956
      %v3166 = vmul.f32 %v542, %v1957
      %v3167 = vmul.f32 %v543, %v1957
      %v3168 = vmul.f32 %v544, %v1958
      %v3169 = vmul.f32 %v545, %v1958
      %v3170 = vmul.f32 %v546, %v1959
      %v3171 = vmul.f32 %v547, %v1959
      %v3172 = vmul.f32 %v548, %v1960
      %v3173 = vmul.f32 %v549, %v1960
      %v3174 = vmul.f32 %v550, %v1961
      %v3175 = vmul.f32 %v551, %v1961
      %v3176 = vmul.f32 %v552, %v1962
      %v3177 = vmul.f32 %v553, %v1962
      %v3178 = vmul.f32 %v554, %v1963
      %v3179 = vmul.f32 %v555, %v1963
      %v3180 = vmul.f32 %v556, %v1964
      %v3181 = vmul.f32 %v557, %v1964
      %v3182 = vmul.f32 %v558, %v1965
      %v3183 = vmul.f32 %v559, %v1965
      %v3184 = vmul.f32 %v560, %v1966
      %v3185 = vmul.f32 %v561, %v1966
      %v3186 = vmul.f32 %v562, %v1967
      %v3187 = vmul.f32 %v563, %v1967
      %v3188 = vmul.f32 %v564, %v1968
      %v3189 = vmul.f32 %v565, %v1968
      %v3190 = vmul.f32 %v566, %v1969
      %v3191 = vmul.f32 %v567, %v1969
      %v3192 = vmul.f32 %v568, %v1970
      %v3193 = vmul.f32 %v569, %v1970
      %v3194 = vmul.f32 %v570, %v1971
      %v3195 = vmul.f32 %v571, %v1971
      %v3196 = vmul.f32 %v572, %v1972
      %v3197 = vmul.f32 %v573, %v1972
      %v3198 = vmul.f32 %v574, %v1973
      %v3199 = vmul.f32 %v575, %v1973
      %v3200 = vmul.f32 %v576, %v1974
      %v3201 = vmul.f32 %v577, %v1974
      %v3202 = vmul.f32 %v578, %v1975
      %v3203 = vmul.f32 %v579, %v1975
      %v3204 = vmul.f32 %v580, %v1976
      %v3205 = vmul.f32 %v581, %v1976
      %v3206 = vmul.f32 %v582, %v1977
      %v3207 = vmul.f32 %v583, %v1977
      %v3208 = vmul.f32 %v584, %v1978
      %v3209 = vmul.f32 %v585, %v1978
      %v3210 = vmul.f32 %v586, %v1979
      %v3211 = vmul.f32 %v587, %v1979
      %v3212 = vmul.f32 %v588, %v1980
      %v3213 = vmul.f32 %v589, %v1980
      %v3214 = vmul.f32 %v590, %v1981
      %v3215 = vmul.f32 %v591, %v1981
      %v3216 = vmul.f32 %v592, %v1982
      %v3217 = vmul.f32 %v593, %v1982
      %v3218 = vmul.f32 %v594, %v1983
      %v3219 = vmul.f32 %v595, %v1983
      %v3220 = vmul.f32 %v596, %v1984
      %v3221 = vmul.f32 %v597, %v1984
      %v3222 = vmul.f32 %v598, %v1985
      %v3223 = vmul.f32 %v599, %v1985
      %v3224 = vmul.f32 %v600, %v1986
      %v3225 = vmul.f32 %v601, %v1986
      %v3226 = vmul.f32 %v602, %v1987
      %v3227 = vmul.f32 %v603, %v1987
      %v3228 = vmul.f32 %v604, %v1988
      %v3229 = vmul.f32 %v605, %v1988
      %v3230 = vmul.f32 %v606, %v1989
      %v3231 = vmul.f32 %v607, %v1989
      %v3232 = vmul.f32 %v608, %v1990
      %v3233 = vmul.f32 %v609, %v1990
      %v3234 = vmul.f32 %v610, %v1991
      %v3235 = vmul.f32 %v611, %v1991
      %v3236 = vmul.f32 %v612, %v1992
      %v3237 = vmul.f32 %v613, %v1992
      %v3238 = vmul.f32 %v614, %v1993
      %v3239 = vmul.f32 %v615, %v1993
      %v3240 = vmul.f32 %v616, %v1994
      %v3241 = vmul.f32 %v617, %v1994
      %v3242 = vmul.f32 %v618, %v1995
      %v3243 = vmul.f32 %v619, %v1995
      %v3244 = vmul.f32 %v620, %v1996
      %v3245 = vmul.f32 %v621, %v1996
      %v3246 = vmul.f32 %v622, %v1997
      %v3247 = vmul.f32 %v623, %v1997
      %v3248 = vmul.f32 %v624, %v1998
      %v3249 = vmul.f32 %v625, %v1998
      %v3250 = vmul.f32 %v626, %v1999
      %v3251 = vmul.f32 %v627, %v1999
      %v3252 = vmul.f32 %v628, %v2000
      %v3253 = vmul.f32 %v629, %v2000
      %v3254 = vmul.f32 %v630, %v2001
      %v3255 = vmul.f32 %v631, %v2001
      %v3256 = vmul.f32 %v632, %v2002
      %v3257 = vmul.f32 %v633, %v2002
      %v3258 = vmul.f32 %v634, %v2003
      %v3259 = vmul.f32 %v635, %v2003
      %v3260 = vmul.f32 %v636, %v2004
      %v3261 = vmul.f32 %v637, %v2004
      %v3262 = vmul.f32 %v638, %v2005
      %v3263 = vmul.f32 %v639, %v2005
      %v3264 = vmul.f32 %v640, %v2006
      %v3265 = vmul.f32 %v641, %v2006
      %v3266 = vmul.f32 %v642, %v2007
      %v3267 = vmul.f32 %v643, %v2007
      %v3268 = vmul.f32 %v644, %v2008
      %v3269 = vmul.f32 %v645, %v2008
      %v3270 = vmul.f32 %v646, %v2009
      %v3271 = vmul.f32 %v647, %v2009
      %v3272 = vmul.f32 %v648, %v2010
      %v3273 = vmul.f32 %v649, %v2010
      %v3274 = vmul.f32 %v650, %v2011
      %v3275 = vmul.f32 %v651, %v2011
      %v3276 = vmul.f32 %v652, %v2012
      %v3277 = vmul.f32 %v653, %v2012
      %v3278 = vmul.f32 %v654, %v2013
      %v3279 = vmul.f32 %v655, %v2013
      %v3280 = vmul.f32 %v656, %v2014
      %v3281 = vmul.f32 %v657, %v2014
      %v3282 = vmul.f32 %v658, %v2015
      %v3283 = vmul.f32 %v659, %v2015
      %v3284 = vmul.f32 %v660, %v2016
      %v3285 = vmul.f32 %v661, %v2016
      %v3286 = vmul.f32 %v662, %v2017
      %v3287 = vmul.f32 %v663, %v2017
      %v3288 = vmul.f32 %v664, %v2018
      %v3289 = vmul.f32 %v665, %v2018
      %v3290 = vmul.f32 %v666, %v2019
      %v3291 = vmul.f32 %v667, %v2019
      %v3292 = vmul.f32 %v668, %v2020
      %v3293 = vmul.f32 %v669, %v2020
      %v3294 = vmul.f32 %v670, %v2021
      %v3295 = vmul.f32 %v671, %v2021
      %v3296 = vmul.f32 %v672, %v2022
      %v3297 = vmul.f32 %v673, %v2022
      %v3298 = vmul.f32 %v674, %v2023
      %v3299 = vmul.f32 %v675, %v2023
      %v3300 = vmul.f32 %v676, %v2024
      %v3301 = vmul.f32 %v677, %v2024
      %v3302 = vmul.f32 %v678, %v2025
      %v3303 = vmul.f32 %v679, %v2025
      %v3304 = vmul.f32 %v680, %v2026
      %v3305 = vmul.f32 %v681, %v2026
      %v3306 = vmul.f32 %v682, %v2027
      %v3307 = vmul.f32 %v683, %v2027
      %v3308 = vmul.f32 %v684, %v2028
      %v3309 = vmul.f32 %v685, %v2028
      %v3310 = vmul.f32 %v686, %v2029
      %v3311 = vmul.f32 %v687, %v2029
      %v3312 = vmul.f32 %v688, %v2030
      %v3313 = vmul.f32 %v689, %v2030
      %v3314 = vmul.f32 %v690, %v2031
      %v3315 = vmul.f32 %v691, %v2031
      %v3316 = vmul.f32 %v692, %v2032
      %v3317 = vmul.f32 %v693, %v2032
      %v3318 = vmul.f32 %v694, %v2033
      %v3319 = vmul.f32 %v695, %v2033
      %v3320 = vmul.f32 %v696, %v2034
      %v3321 = vmul.f32 %v697, %v2034
      %v3322 = vmul.f32 %v698, %v2035
      %v3323 = vmul.f32 %v699, %v2035
      %v3324 = vmul.f32 %v700, %v2036
      %v3325 = vmul.f32 %v701, %v2036
      %v3326 = vmul.f32 %v702, %v2037
      %v3327 = vmul.f32 %v703, %v2037
      %v3328 = vmul.f32 %v704, %v2038
      %v3329 = vmul.f32 %v705, %v2038
      %v3330 = vmul.f32 %v706, %v2039
      %v3331 = vmul.f32 %v707, %v2039
      %v3332 = vmul.f32 %v708, %v2040
      %v3333 = vmul.f32 %v709, %v2040
      %v3334 = vmul.f32 %v710, %v2041
      %v3335 = vmul.f32 %v711, %v2041
      %v3336 = vmul.f32 %v712, %v2042
      %v3337 = vmul.f32 %v713, %v2042
      %v3338 = vmul.f32 %v714, %v2043
      %v3339 = vmul.f32 %v715, %v2043
      %v3340 = vmul.f32 %v716, %v2044
      %v3341 = vmul.f32 %v717, %v2044
      %v3342 = vmul.f32 %v718, %v2045
      %v3343 = vmul.f32 %v719, %v2045
      %v3344 = vmul.f32 %v720, %v2046
      %v3345 = vmul.f32 %v721, %v2046
      %v3346 = vmul.f32 %v722, %v2047
      %v3347 = vmul.f32 %v723, %v2047
      %v3348 = vmul.f32 %v724, %v2048
      %v3349 = vmul.f32 %v725, %v2048
      %v3350 = vmul.f32 %v726, %v2049
      %v3351 = vmul.f32 %v727, %v2049
      %v3352 = vmul.f32 %v728, %v2050
      %v3353 = vmul.f32 %v729, %v2050
      %v3354 = vmul.f32 %v730, %v2051
      %v3355 = vmul.f32 %v731, %v2051
      %v3356 = vmul.f32 %v732, %v2052
      %v3357 = vmul.f32 %v733, %v2052
      %v3358 = vmul.f32 %v734, %v2053
      %v3359 = vmul.f32 %v735, %v2053
      %v3360 = vmul.f32 %v736, %v2054
      %v3361 = vmul.f32 %v737, %v2054
      %v3362 = vmul.f32 %v738, %v2055
      %v3363 = vmul.f32 %v739, %v2055
      %v3364 = vmul.f32 %v740, %v2056
      %v3365 = vmul.f32 %v741, %v2056
      %v3366 = vmul.f32 %v742, %v2057
      %v3367 = vmul.f32 %v743, %v2057
      %v3368 = vmul.f32 %v744, %v2058
      %v3369 = vmul.f32 %v745, %v2058
      %v3370 = vmul.f32 %v746, %v2059
      %v3371 = vmul.f32 %v747, %v2059
      %v3372 = vmul.f32 %v748, %v2060
      %v3373 = vmul.f32 %v749, %v2060
      %v3374 = vmul.f32 %v750, %v2061
      %v3375 = vmul.f32 %v751, %v2061
      %v3376 = vmul.f32 %v752, %v2062
      %v3377 = vmul.f32 %v753, %v2062
      %v3378 = vmul.f32 %v754, %v2063
      %v3379 = vmul.f32 %v755, %v2063
      %v3380 = vmul.f32 %v756, %v2064
      %v3381 = vmul.f32 %v757, %v2064
      %v3382 = vmul.f32 %v758, %v2065
      %v3383 = vmul.f32 %v759, %v2065
      %v3384 = vmul.f32 %v760, %v2066
      %v3385 = vmul.f32 %v761, %v2066
      %v3386 = vmul.f32 %v762, %v2067
      %v3387 = vmul.f32 %v763, %v2067
      %v3388 = vmul.f32 %v764, %v2068
      %v3389 = vmul.f32 %v765, %v2068
      %v3390 = vmul.f32 %v766, %v2069
      %v3391 = vmul.f32 %v767, %v2069
      %v3392 = vmul.f32 %v768, %v2070
      %v3393 = vmul.f32 %v769, %v2070
      %v3394 = vmul.f32 %v770, %v2071
      %v3395 = vmul.f32 %v771, %v2071
      %v3396 = vmul.f32 %v772, %v2072
      %v3397 = vmul.f32 %v773, %v2072
      %v3398 = vmul.f32 %v774, %v2073
      %v3399 = vmul.f32 %v775, %v2073
      %v3400 = vmul.f32 %v776, %v2074
      %v3401 = vmul.f32 %v777, %v2074
      %v3402 = vmul.f32 %v778, %v2075
      %v3403 = vmul.f32 %v779, %v2075
      %v3404 = vmul.f32 %v780, %v2076
      %v3405 = vmul.f32 %v781, %v2076
      %v3406 = vmul.f32 %v782, %v2077
      %v3407 = vmul.f32 %v783, %v2077
      %v3408 = vmul.f32 %v784, %v2078
      %v3409 = vmul.f32 %v785, %v2078
      %v3410 = vmul.f32 %v786, %v2079
      %v3411 = vmul.f32 %v787, %v2079
      %v3412 = vmul.f32 %v788, %v2080
      %v3413 = vmul.f32 %v789, %v2080
      %v3414 = vmul.f32 %v790, %v2081
      %v3415 = vmul.f32 %v791, %v2081
      %v3416 = vmul.f32 %v792, %v2082
      %v3417 = vmul.f32 %v793, %v2082
      %v3418 = vmul.f32 %v794, %v2083
      %v3419 = vmul.f32 %v795, %v2083
      %v3420 = vmul.f32 %v796, %v2084
      %v3421 = vmul.f32 %v797, %v2084
      %v3422 = vmul.f32 %v798, %v2085
      %v3423 = vmul.f32 %v799, %v2085
      %v3424 = vmul.f32 %v800, %v2086
      %v3425 = vmul.f32 %v801, %v2086
      %v3426 = vmul.f32 %v802, %v2087
      %v3427 = vmul.f32 %v803, %v2087
      %v3428 = vmul.f32 %v804, %v2088
      %v3429 = vmul.f32 %v805, %v2088
      %v3430 = vmul.f32 %v806, %v2089
      %v3431 = vmul.f32 %v807, %v2089
      %v3432 = vmul.f32 %v808, %v2090
      %v3433 = vmul.f32 %v809, %v2090
      %v3434 = vmul.f32 %v810, %v2091
      %v3435 = vmul.f32 %v811, %v2091
      %v3436 = vmul.f32 %v812, %v2092
      %v3437 = vmul.f32 %v813, %v2092
      %v3438 = vmul.f32 %v814, %v2093
      %v3439 = vmul.f32 %v815, %v2093
      %v3440 = vmul.f32 %v816, %v2094
      %v3441 = vmul.f32 %v817, %v2094
      %v3442 = vmul.f32 %v818, %v2095
      %v3443 = vmul.f32 %v819, %v2095
      %v3444 = vmul.f32 %v820, %v2096
      %v3445 = vmul.f32 %v821, %v2096
      %v3446 = vmul.f32 %v822, %v2097
      %v3447 = vmul.f32 %v823, %v2097
      %v3448 = vmul.f32 %v824, %v2098
      %v3449 = vmul.f32 %v825, %v2098
      %v3450 = vmul.f32 %v826, %v2099
      %v3451 = vmul.f32 %v827, %v2099
      %v3452 = vmul.f32 %v828, %v2100
      %v3453 = vmul.f32 %v829, %v2100
      %v3454 = vmul.f32 %v830, %v2101
      %v3455 = vmul.f32 %v831, %v2101
      %v3456 = vmul.f32 %v832, %v2102
      %v3457 = vmul.f32 %v833, %v2102
      %v3458 = vmul.f32 %v834, %v2103
      %v3459 = vmul.f32 %v835, %v2103
      %v3460 = vmul.f32 %v836, %v2104
      %v3461 = vmul.f32 %v837, %v2104
      %v3462 = vmul.f32 %v838, %v2105
      %v3463 = vmul.f32 %v839, %v2105
      %v3464 = vmul.f32 %v840, %v2106
      %v3465 = vmul.f32 %v841, %v2106
      %v3466 = vmul.f32 %v842, %v2107
      %v3467 = vmul.f32 %v843, %v2107
      %v3468 = vmul.f32 %v844, %v2108
      %v3469 = vmul.f32 %v845, %v2108
      %v3470 = vmul.f32 %v846, %v2109
      %v3471 = vmul.f32 %v847, %v2109
      %v3472 = vmul.f32 %v848, %v2110
      %v3473 = vmul.f32 %v849, %v2110
      %v3474 = vmul.f32 %v850, %v2111
      %v3475 = vmul.f32 %v851, %v2111
      %v3476 = vmul.f32 %v852, %v2112
      %v3477 = vmul.f32 %v853, %v2112
      %v3478 = vmul.f32 %v854, %v2113
      %v3479 = vmul.f32 %v855, %v2113
      %v3480 = vmul.f32 %v856, %v2114
      %v3481 = vmul.f32 %v857, %v2114
      %v3482 = vmul.f32 %v858, %v2115
      %v3483 = vmul.f32 %v859, %v2115
      %v3484 = vmul.f32 %v860, %v2116
      %v3485 = vmul.f32 %v861, %v2116
      %v3486 = vmul.f32 %v862, %v2117
      %v3487 = vmul.f32 %v863, %v2117
      %v3488 = vmul.f32 %v864, %v2118
      %v3489 = vmul.f32 %v865, %v2118
      %v3490 = vmul.f32 %v866, %v2119
      %v3491 = vmul.f32 %v867, %v2119
      %v3492 = vmul.f32 %v868, %v2120
      %v3493 = vmul.f32 %v869, %v2120
      %v3494 = vmul.f32 %v870, %v2121
      %v3495 = vmul.f32 %v871, %v2121
      %v3496 = vmul.f32 %v872, %v2122
      %v3497 = vmul.f32 %v873, %v2122
      %v3498 = vmul.f32 %v874, %v2123
      %v3499 = vmul.f32 %v875, %v2123
      %v3500 = vmul.f32 %v876, %v2124
      %v3501 = vmul.f32 %v877, %v2124
      %v3502 = vmul.f32 %v878, %v2125
      %v3503 = vmul.f32 %v879, %v2125
      %v3504 = vmul.f32 %v880, %v2126
      %v3505 = vmul.f32 %v881, %v2126
      %v3506 = vmul.f32 %v882, %v2127
      %v3507 = vmul.f32 %v883, %v2127
      %v3508 = vmul.f32 %v884, %v2128
      %v3509 = vmul.f32 %v885, %v2128
      %v3510 = vmul.f32 %v886, %v2129
      %v3511 = vmul.f32 %v887, %v2129
      %v3512 = vmul.f32 %v888, %v2130
      %v3513 = vmul.f32 %v889, %v2130
      %v3514 = vmul.f32 %v890, %v2131
      %v3515 = vmul.f32 %v891, %v2131
      %v3516 = vmul.f32 %v892, %v2132
      %v3517 = vmul.f32 %v893, %v2132
      %v3518 = vmul.f32 %v894, %v2133
      %v3519 = vmul.f32 %v895, %v2133
      %v3520 = vmul.f32 %v896, %v2134
      %v3521 = vmul.f32 %v897, %v2134
      %v3522 = vmul.f32 %v898, %v2135
      %v3523 = vmul.f32 %v899, %v2135
      %v3524 = vmul.f32 %v900, %v2136
      %v3525 = vmul.f32 %v901, %v2136
      %v3526 = vmul.f32 %v902, %v2137
      %v3527 = vmul.f32 %v903, %v2137
      %v3528 = vmul.f32 %v904, %v2138
      %v3529 = vmul.f32 %v905, %v2138
      %v3530 = vmul.f32 %v906, %v2139
      %v3531 = vmul.f32 %v907, %v2139
      %v3532 = vmul.f32 %v908, %v2140
      %v3533 = vmul.f32 %v909, %v2140
      %v3534 = vmul.f32 %v910, %v2141
      %v3535 = vmul.f32 %v911, %v2141
      %v3536 = vmul.f32 %v912, %v2142
      %v3537 = vmul.f32 %v913, %v2142
      %v3538 = vmul.f32 %v914, %v2143
      %v3539 = vmul.f32 %v915, %v2143
      %v3540 = vmul.f32 %v916, %v2144
      %v3541 = vmul.f32 %v917, %v2144
      %v3542 = vmul.f32 %v918, %v2145
      %v3543 = vmul.f32 %v919, %v2145
      %v3544 = vmul.f32 %v920, %v2146
      %v3545 = vmul.f32 %v921, %v2146
      %v3546 = vmul.f32 %v922, %v2147
      %v3547 = vmul.f32 %v923, %v2147
      %v3548 = vmul.f32 %v924, %v2148
      %v3549 = vmul.f32 %v925, %v2148
      %v3550 = vmul.f32 %v926, %v2149
      %v3551 = vmul.f32 %v927, %v2149
      %v3552 = vmul.f32 %v928, %v2150
      %v3553 = vmul.f32 %v929, %v2150
      %v3554 = vmul.f32 %v930, %v2151
      %v3555 = vmul.f32 %v931, %v2151
      %v3556 = vmul.f32 %v932, %v2152
      %v3557 = vmul.f32 %v933, %v2152
      %v3558 = vmul.f32 %v934, %v2153
      %v3559 = vmul.f32 %v935, %v2153
      %v3560 = vmul.f32 %v936, %v2154
      %v3561 = vmul.f32 %v937, %v2154
      %v3562 = vmul.f32 %v938, %v2155
      %v3563 = vmul.f32 %v939, %v2155
      %v3564 = vmul.f32 %v940, %v2156
      %v3565 = vmul.f32 %v941, %v2156
      %v3566 = vmul.f32 %v942, %v2157
      %v3567 = vmul.f32 %v943, %v2157
      %v3568 = vmul.f32 %v944, %v2158
      %v3569 = vmul.f32 %v945, %v2158
      %v3570 = vmul.f32 %v946, %v2159
      %v3571 = vmul.f32 %v947, %v2159
      %v3572 = vmul.f32 %v948, %v2160
      %v3573 = vmul.f32 %v949, %v2160
      %v3574 = vmul.f32 %v950, %v2161
      %v3575 = vmul.f32 %v951, %v2161
      %v3576 = vmul.f32 %v952, %v2162
      %v3577 = vmul.f32 %v953, %v2162
      %v3578 = vmul.f32 %v954, %v2163
      %v3579 = vmul.f32 %v955, %v2163
      %v3580 = vmul.f32 %v956, %v2164
      %v3581 = vmul.f32 %v957, %v2164
      %v3582 = vmul.f32 %v958, %v2165
      %v3583 = vmul.f32 %v959, %v2165
      %v3584 = vmul.f32 %v960, %v2166
      %v3585 = vmul.f32 %v961, %v2166
      %v3586 = vmul.f32 %v962, %v2167
      %v3587 = vmul.f32 %v963, %v2167
      %v3588 = vmul.f32 %v964, %v2168
      %v3589 = vmul.f32 %v965, %v2168
      %v3590 = vmul.f32 %v966, %v2169
      %v3591 = vmul.f32 %v967, %v2169
      %v3592 = vmul.f32 %v968, %v2170
      %v3593 = vmul.f32 %v969, %v2170
      %v3594 = vmul.f32 %v970, %v2171
      %v3595 = vmul.f32 %v971, %v2171
      %v3596 = vmul.f32 %v972, %v2172
      %v3597 = vmul.f32 %v973, %v2172
      %v3598 = vmul.f32 %v974, %v2173
      %v3599 = vmul.f32 %v975, %v2173
      %v3600 = vmul.f32 %v976, %v2174
      %v3601 = vmul.f32 %v977, %v2174
      %v3602 = vmul.f32 %v978, %v2175
      %v3603 = vmul.f32 %v979, %v2175
      %v3604 = vmul.f32 %v980, %v2176
      %v3605 = vmul.f32 %v981, %v2176
      %v3606 = vmul.f32 %v982, %v2177
      %v3607 = vmul.f32 %v983, %v2177
      %v3608 = vmul.f32 %v984, %v2178
      %v3609 = vmul.f32 %v985, %v2178
      %v3610 = vmul.f32 %v986, %v2179
      %v3611 = vmul.f32 %v987, %v2179
      %v3612 = vmul.f32 %v988, %v2180
      %v3613 = vmul.f32 %v989, %v2180
      %v3614 = vmul.f32 %v990, %v2181
      %v3615 = vmul.f32 %v991, %v2181
      %v3616 = vmul.f32 %v992, %v2182
      %v3617 = vmul.f32 %v993, %v2182
      %v3618 = vmul.f32 %v994, %v2183
      %v3619 = vmul.f32 %v995, %v2183
      %v3620 = vmul.f32 %v996, %v2184
      %v3621 = vmul.f32 %v997, %v2184
      %v3622 = vmul.f32 %v998, %v2185
      %v3623 = vmul.f32 %v999, %v2185
      %v3624 = vmul.f32 %v1000, %v2186
      %v3625 = vmul.f32 %v1001, %v2186
      %v3626 = vmul.f32 %v1002, %v2187
      %v3627 = vmul.f32 %v1003, %v2187
      %v3628 = vmul.f32 %v1004, %v2188
      %v3629 = vmul.f32 %v1005, %v2188
      %v3630 = vmul.f32 %v1006, %v2189
      %v3631 = vmul.f32 %v1007, %v2189
      %v3632 = vmul.f32 %v1008, %v2190
      %v3633 = vmul.f32 %v1009, %v2190
      %v3634 = vmul.f32 %v1010, %v2191
      %v3635 = vmul.f32 %v1011, %v2191
      %v3636 = vmul.f32 %v1012, %v2192
      %v3637 = vmul.f32 %v1013, %v2192
      %v3638 = vmul.f32 %v1014, %v2193
      %v3639 = vmul.f32 %v1015, %v2193
      %v3640 = vmul.f32 %v1016, %v2194
      %v3641 = vmul.f32 %v1017, %v2194
      %v3642 = vmul.f32 %v1018, %v2195
      %v3643 = vmul.f32 %v1019, %v2195
      %v3644 = vmul.f32 %v1020, %v2196
      %v3645 = vmul.f32 %v1021, %v2196
      %v3646 = vmul.f32 %v1022, %v2197
      %v3647 = vmul.f32 %v1023, %v2197
      %v3648 = vmul.f32 %v1024, %v2198
      %v3649 = vmul.f32 %v1025, %v2198
      %v3650 = vmul.f32 %v1026, %v2199
      %v3651 = vmul.f32 %v1027, %v2199
      %v3652 = vmul.f32 %v1028, %v2200
      %v3653 = vmul.f32 %v1029, %v2200
      %v3654 = vmul.f32 %v1030, %v2201
      %v3655 = vmul.f32 %v1031, %v2201
      %v3656 = vmul.f32 %v1032, %v2202
      %v3657 = vmul.f32 %v1033, %v2202
      %v3658 = vmul.f32 %v1034, %v2203
      %v3659 = vmul.f32 %v1035, %v2203
      %v3660 = vmul.f32 %v1036, %v2204
      %v3661 = vmul.f32 %v1037, %v2204
      %v3662 = vmul.f32 %v1038, %v2205
      %v3663 = vmul.f32 %v1039, %v2205
      %v3664 = vmul.f32 %v1040, %v2206
      %v3665 = vmul.f32 %v1041, %v2206
      %v3666 = vmul.f32 %v1042, %v2207
      %v3667 = vmul.f32 %v1043, %v2207
      %v3668 = vmul.f32 %v1044, %v2208
      %v3669 = vmul.f32 %v1045, %v2208
      %v3670 = vmul.f32 %v1046, %v2209
      %v3671 = vmul.f32 %v1047, %v2209
      %v3672 = vmul.f32 %v1048, %v2210
      %v3673 = vmul.f32 %v1049, %v2210
      %v3674 = vmul.f32 %v1050, %v2211
      %v3675 = vmul.f32 %v1051, %v2211
      %v3676 = vmul.f32 %v1052, %v2212
      %v3677 = vmul.f32 %v1053, %v2212
      %v3678 = vmul.f32 %v1054, %v2213
      %v3679 = vmul.f32 %v1055, %v2213
      %v3680 = vmul.f32 %v1056, %v2214
      %v3681 = vmul.f32 %v1057, %v2214
      %v3682 = vmul.f32 %v1058, %v2215
      %v3683 = vmul.f32 %v1059, %v2215
      %v3684 = vmul.f32 %v1060, %v2216
      %v3685 = vmul.f32 %v1061, %v2216
      %v3686 = vmul.f32 %v1062, %v2217
      %v3687 = vmul.f32 %v1063, %v2217
      %v3688 = vmul.f32 %v1064, %v2218
      %v3689 = vmul.f32 %v1065, %v2218
      %v3690 = vmul.f32 %v1066, %v2219
      %v3691 = vmul.f32 %v1067, %v2219
      %v3692 = vmul.f32 %v1068, %v2220
      %v3693 = vmul.f32 %v1069, %v2220
      %v3694 = vmul.f32 %v1070, %v2221
      %v3695 = vmul.f32 %v1071, %v2221
      %v3696 = vmul.f32 %v1072, %v2222
      %v3697 = vmul.f32 %v1073, %v2222
      %v3698 = vmul.f32 %v1074, %v2223
      %v3699 = vmul.f32 %v1075, %v2223
      %v3700 = vmul.f32 %v1076, %v2224
      %v3701 = vmul.f32 %v1077, %v2224
      %v3702 = vmul.f32 %v1078, %v2225
      %v3703 = vmul.f32 %v1079, %v2225
      %v3704 = vmul.f32 %v1080, %v2226
      %v3705 = vmul.f32 %v1081, %v2226
      %v3706 = vmul.f32 %v1082, %v2227
      %v3707 = vmul.f32 %v1083, %v2227
      %v3708 = vmul.f32 %v1084, %v2228
      %v3709 = vmul.f32 %v1085, %v2228
      %v3710 = vmul.f32 %v1086, %v2229
      %v3711 = vmul.f32 %v1087, %v2229
      %v3712 = vmul.f32 %v1088, %v2230
      %v3713 = vmul.f32 %v1089, %v2230
      %v3714 = vmul.f32 %v1090, %v2231
      %v3715 = vmul.f32 %v1091, %v2231
      %v3716 = vmul.f32 %v1092, %v2232
      %v3717 = vmul.f32 %v1093, %v2232
      %v3718 = vmul.f32 %v1094, %v2233
      %v3719 = vmul.f32 %v1095, %v2233
      %v3720 = vmul.f32 %v1096, %v2234
      %v3721 = vmul.f32 %v1097, %v2234
      %v3722 = vmul.f32 %v1098, %v2235
      %v3723 = vmul.f32 %v1099, %v2235
      %v3724 = vmul.f32 %v1100, %v2236
      %v3725 = vmul.f32 %v1101, %v2236
      %v3726 = vmul.f32 %v1102, %v2237
      %v3727 = vmul.f32 %v1103, %v2237
      %v3728 = vmul.f32 %v1104, %v2238
      %v3729 = vmul.f32 %v1105, %v2238
      %v3730 = vmul.f32 %v1106, %v2239
      %v3731 = vmul.f32 %v1107, %v2239
      %v3732 = vmul.f32 %v1108, %v2240
      %v3733 = vmul.f32 %v1109, %v2240
      %v3734 = vmul.f32 %v1110, %v2241
      %v3735 = vmul.f32 %v1111, %v2241
      %v3736 = vmul.f32 %v1112, %v2242
      %v3737 = vmul.f32 %v1113, %v2242
      %v3738 = vmul.f32 %v1114, %v2243
      %v3739 = vmul.f32 %v1115, %v2243
      %v3740 = vmul.f32 %v1116, %v2244
      %v3741 = vmul.f32 %v1117, %v2244
      %v3742 = vmul.f32 %v1118, %v2245
      %v3743 = vmul.f32 %v1119, %v2245
      %v3744 = vmul.f32 %v1120, %v2246
      %v3745 = vmul.f32 %v1121, %v2246
      %v3746 = vmul.f32 %v1122, %v2247
      %v3747 = vmul.f32 %v1123, %v2247
      %v3748 = vmul.f32 %v1124, %v2248
      %v3749 = vmul.f32 %v1125, %v2248
      %v3750 = vmul.f32 %v1126, %v2249
      %v3751 = vmul.f32 %v1127, %v2249
      %v3752 = vmul.f32 %v1128, %v2250
      %v3753 = vmul.f32 %v1129, %v2250
      %v3754 = vmul.f32 %v1130, %v2251
      %v3755 = vmul.f32 %v1131, %v2251
      %v3756 = vmul.f32 %v1132, %v2252
      %v3757 = vmul.f32 %v1133, %v2252
      %v3758 = vmul.f32 %v1134, %v2253
      %v3759 = vmul.f32 %v1135, %v2253
      %v3760 = vmul.f32 %v1136, %v2254
      %v3761 = vmul.f32 %v1137, %v2254
      %v3762 = vmul.f32 %v1138, %v2255
      %v3763 = vmul.f32 %v1139, %v2255
      %v3764 = vmul.f32 %v1140, %v2256
      %v3765 = vmul.f32 %v1141, %v2256
      %v3766 = vmul.f32 %v1142, %v2257
      %v3767 = vmul.f32 %v1143, %v2257
      %v3768 = vmul.f32 %v1144, %v2258
      %v3769 = vmul.f32 %v1145, %v2258
      %v3770 = vmul.f32 %v1146, %v2259
      %v3771 = vmul.f32 %v1147, %v2259
      %v3772 = vmul.f32 %v1148, %v2260
      %v3773 = vmul.f32 %v1149, %v2260
      %v3774 = vmul.f32 %v1150, %v2261
      %v3775 = vmul.f32 %v1151, %v2261
      %v3776 = vmul.f32 %v1152, %v2262
      %v3777 = vmul.f32 %v1153, %v2262
      %v3778 = vmul.f32 %v1154, %v2263
      %v3779 = vmul.f32 %v1155, %v2263
      %v3780 = vmul.f32 %v1156, %v2264
      %v3781 = vmul.f32 %v1157, %v2264
      %v3782 = vmul.f32 %v1158, %v2265
      %v3783 = vmul.f32 %v1159, %v2265
      %v3784 = vmul.f32 %v1160, %v2266
      %v3785 = vmul.f32 %v1161, %v2266
      %v3786 = vmul.f32 %v1162, %v2267
      %v3787 = vmul.f32 %v1163, %v2267
      %v3788 = vmul.f32 %v1164, %v2268
      %v3789 = vmul.f32 %v1165, %v2268
      %v3790 = vmul.f32 %v1166, %v2269
      %v3791 = vmul.f32 %v1167, %v2269
      %v3792 = vmul.f32 %v1168, %v2270
      %v3793 = vmul.f32 %v1169, %v2270
      %v3794 = vmul.f32 %v1170, %v2271
      %v3795 = vmul.f32 %v1171, %v2271
      %v3796 = vmul.f32 %v1172, %v2272
      %v3797 = vmul.f32 %v1173, %v2272
      %v3798 = vmul.f32 %v1174, %v2273
      %v3799 = vmul.f32 %v1175, %v2273
      %v3800 = vmul.f32 %v1176, %v2274
      %v3801 = vmul.f32 %v1177, %v2274
      %v3802 = vmul.f32 %v1178, %v2275
      %v3803 = vmul.f32 %v1179, %v2275
      %v3804 = vmul.f32 %v1180, %v2276
      %v3805 = vmul.f32 %v1181, %v2276
      %v3806 = vmul.f32 %v1182, %v2277
      %v3807 = vmul.f32 %v1183, %v2277
      %v3808 = vmul.f32 %v1184, %v2278
      %v3809 = vmul.f32 %v1185, %v2278
      %v3810 = vmul.f32 %v1186, %v2279
      %v3811 = vmul.f32 %v1187, %v2279
      %v3812 = vmul.f32 %v1188, %v2280
      %v3813 = vmul.f32 %v1189, %v2280
      %v3814 = vmul.f32 %v1190, %v2281
      %v3815 = vmul.f32 %v1191, %v2281
      %v3816 = vmul.f32 %v1192, %v2282
      %v3817 = vmul.f32 %v1193, %v2282
      %v3818 = vmul.f32 %v1194, %v2283
      %v3819 = vmul.f32 %v1195, %v2283
      %vm3820 = vcmask 334848
      %v3821 = vsel %vm3820, %v2796, 0.0
      %3822 = vadd.xlane.f32.xlu0 %v3821
      %v3823 = vpop.xlane.xlu0 %3822
      %v3824 = vsel %vm3820, %v2797, 0.0
      %3825 = vadd.xlane.f32.xlu0 %v3824
      %v3826 = vpop.xlane.xlu0 %3825
      %v3827 = vsel %vm3820, %v2798, 0.0
      %3828 = vadd.xlane.f32.xlu0 %v3827
      %v3829 = vpop.xlane.xlu0 %3828
      %v3830 = vsel %vm3820, %v2799, 0.0
      %3831 = vadd.xlane.f32.xlu0 %v3830
      %v3832 = vpop.xlane.xlu0 %3831
      %v3833 = vsel %vm3820, %v2800, 0.0
      %3834 = vadd.xlane.f32.xlu0 %v3833
      %v3835 = vpop.xlane.xlu0 %3834
      %v3836 = vsel %vm3820, %v2801, 0.0
      %3837 = vadd.xlane.f32.xlu0 %v3836
      %v3838 = vpop.xlane.xlu0 %3837
      %v3839 = vsel %vm3820, %v2802, 0.0
      %3840 = vadd.xlane.f32.xlu0 %v3839
      %v3841 = vpop.xlane.xlu0 %3840
      %v3842 = vsel %vm3820, %v2803, 0.0
      %3843 = vadd.xlane.f32.xlu0 %v3842
      %v3844 = vpop.xlane.xlu0 %3843
      %v3845 = vsel %vm3820, %v2804, 0.0
      %3846 = vadd.xlane.f32.xlu0 %v3845
      %v3847 = vpop.xlane.xlu0 %3846
      %v3848 = vsel %vm3820, %v2805, 0.0
      %3849 = vadd.xlane.f32.xlu0 %v3848
      %v3850 = vpop.xlane.xlu0 %3849
      %v3851 = vsel %vm3820, %v2806, 0.0
      %3852 = vadd.xlane.f32.xlu0 %v3851
      %v3853 = vpop.xlane.xlu0 %3852
      %v3854 = vsel %vm3820, %v2807, 0.0
      %3855 = vadd.xlane.f32.xlu0 %v3854
      %v3856 = vpop.xlane.xlu0 %3855
      %v3857 = vsel %vm3820, %v2808, 0.0
      %3858 = vadd.xlane.f32.xlu0 %v3857
      %v3859 = vpop.xlane.xlu0 %3858
      %v3860 = vsel %vm3820, %v2809, 0.0
      %3861 = vadd.xlane.f32.xlu0 %v3860
      %v3862 = vpop.xlane.xlu0 %3861
      %v3863 = vsel %vm3820, %v2810, 0.0
      %3864 = vadd.xlane.f32.xlu0 %v3863
      %v3865 = vpop.xlane.xlu0 %3864
      %v3866 = vsel %vm3820, %v2811, 0.0
      %3867 = vadd.xlane.f32.xlu0 %v3866
      %v3868 = vpop.xlane.xlu0 %3867
      %v3869 = vsel %vm3820, %v2812, 0.0
      %3870 = vadd.xlane.f32.xlu0 %v3869
      %v3871 = vpop.xlane.xlu0 %3870
      %v3872 = vsel %vm3820, %v2813, 0.0
      %3873 = vadd.xlane.f32.xlu0 %v3872
      %v3874 = vpop.xlane.xlu0 %3873
      %v3875 = vsel %vm3820, %v2814, 0.0
      %3876 = vadd.xlane.f32.xlu0 %v3875
      %v3877 = vpop.xlane.xlu0 %3876
      %v3878 = vsel %vm3820, %v2815, 0.0
      %3879 = vadd.xlane.f32.xlu0 %v3878
      %v3880 = vpop.xlane.xlu0 %3879
      %v3881 = vsel %vm3820, %v2816, 0.0
      %3882 = vadd.xlane.f32.xlu0 %v3881
      %v3883 = vpop.xlane.xlu0 %3882
      %v3884 = vsel %vm3820, %v2817, 0.0
      %3885 = vadd.xlane.f32.xlu0 %v3884
      %v3886 = vpop.xlane.xlu0 %3885
      %v3887 = vsel %vm3820, %v2818, 0.0
      %3888 = vadd.xlane.f32.xlu0 %v3887
      %v3889 = vpop.xlane.xlu0 %3888
      %v3890 = vsel %vm3820, %v2819, 0.0
      %3891 = vadd.xlane.f32.xlu0 %v3890
      %v3892 = vpop.xlane.xlu0 %3891
      %v3893 = vsel %vm3820, %v2820, 0.0
      %3894 = vadd.xlane.f32.xlu0 %v3893
      %v3895 = vpop.xlane.xlu0 %3894
      %v3896 = vsel %vm3820, %v2821, 0.0
      %3897 = vadd.xlane.f32.xlu0 %v3896
      %v3898 = vpop.xlane.xlu0 %3897
      %v3899 = vsel %vm3820, %v2822, 0.0
      %3900 = vadd.xlane.f32.xlu0 %v3899
      %v3901 = vpop.xlane.xlu0 %3900
      %v3902 = vsel %vm3820, %v2823, 0.0
      %3903 = vadd.xlane.f32.xlu0 %v3902
      %v3904 = vpop.xlane.xlu0 %3903
      %v3905 = vsel %vm3820, %v2824, 0.0
      %3906 = vadd.xlane.f32.xlu0 %v3905
      %v3907 = vpop.xlane.xlu0 %3906
      %v3908 = vsel %vm3820, %v2825, 0.0
      %3909 = vadd.xlane.f32.xlu0 %v3908
      %v3910 = vpop.xlane.xlu0 %3909
      %v3911 = vsel %vm3820, %v2826, 0.0
      %3912 = vadd.xlane.f32.xlu0 %v3911
      %v3913 = vpop.xlane.xlu0 %3912
      %v3914 = vsel %vm3820, %v2827, 0.0
      %3915 = vadd.xlane.f32.xlu0 %v3914
      %v3916 = vpop.xlane.xlu0 %3915
      %v3917 = vsel %vm3820, %v2828, 0.0
      %3918 = vadd.xlane.f32.xlu0 %v3917
      %v3919 = vpop.xlane.xlu0 %3918
      %v3920 = vsel %vm3820, %v2829, 0.0
      %3921 = vadd.xlane.f32.xlu0 %v3920
      %v3922 = vpop.xlane.xlu0 %3921
      %v3923 = vsel %vm3820, %v2830, 0.0
      %3924 = vadd.xlane.f32.xlu0 %v3923
      %v3925 = vpop.xlane.xlu0 %3924
      %v3926 = vsel %vm3820, %v2831, 0.0
      %3927 = vadd.xlane.f32.xlu0 %v3926
      %v3928 = vpop.xlane.xlu0 %3927
      %v3929 = vsel %vm3820, %v2832, 0.0
      %3930 = vadd.xlane.f32.xlu0 %v3929
      %v3931 = vpop.xlane.xlu0 %3930
      %v3932 = vsel %vm3820, %v2833, 0.0
      %3933 = vadd.xlane.f32.xlu0 %v3932
      %v3934 = vpop.xlane.xlu0 %3933
      %v3935 = vsel %vm3820, %v2834, 0.0
      %3936 = vadd.xlane.f32.xlu0 %v3935
      %v3937 = vpop.xlane.xlu0 %3936
      %v3938 = vsel %vm3820, %v2835, 0.0
      %3939 = vadd.xlane.f32.xlu0 %v3938
      %v3940 = vpop.xlane.xlu0 %3939
      %v3941 = vsel %vm3820, %v2836, 0.0
      %3942 = vadd.xlane.f32.xlu0 %v3941
      %v3943 = vpop.xlane.xlu0 %3942
      %v3944 = vsel %vm3820, %v2837, 0.0
      %3945 = vadd.xlane.f32.xlu0 %v3944
      %v3946 = vpop.xlane.xlu0 %3945
      %v3947 = vsel %vm3820, %v2838, 0.0
      %3948 = vadd.xlane.f32.xlu0 %v3947
      %v3949 = vpop.xlane.xlu0 %3948
      %v3950 = vsel %vm3820, %v2839, 0.0
      %3951 = vadd.xlane.f32.xlu0 %v3950
      %v3952 = vpop.xlane.xlu0 %3951
      %v3953 = vsel %vm3820, %v2840, 0.0
      %3954 = vadd.xlane.f32.xlu0 %v3953
      %v3955 = vpop.xlane.xlu0 %3954
      %v3956 = vsel %vm3820, %v2841, 0.0
      %3957 = vadd.xlane.f32.xlu0 %v3956
      %v3958 = vpop.xlane.xlu0 %3957
      %v3959 = vsel %vm3820, %v2842, 0.0
      %3960 = vadd.xlane.f32.xlu0 %v3959
      %v3961 = vpop.xlane.xlu0 %3960
      %v3962 = vsel %vm3820, %v2843, 0.0
      %3963 = vadd.xlane.f32.xlu0 %v3962
      %v3964 = vpop.xlane.xlu0 %3963
      %v3965 = vsel %vm3820, %v2844, 0.0
      %3966 = vadd.xlane.f32.xlu0 %v3965
      %v3967 = vpop.xlane.xlu0 %3966
      %v3968 = vsel %vm3820, %v2845, 0.0
      %3969 = vadd.xlane.f32.xlu0 %v3968
      %v3970 = vpop.xlane.xlu0 %3969
      %v3971 = vsel %vm3820, %v2846, 0.0
      %3972 = vadd.xlane.f32.xlu0 %v3971
      %v3973 = vpop.xlane.xlu0 %3972
      %v3974 = vsel %vm3820, %v2847, 0.0
      %3975 = vadd.xlane.f32.xlu0 %v3974
      %v3976 = vpop.xlane.xlu0 %3975
      %v3977 = vsel %vm3820, %v2848, 0.0
      %3978 = vadd.xlane.f32.xlu0 %v3977
      %v3979 = vpop.xlane.xlu0 %3978
      %v3980 = vsel %vm3820, %v2849, 0.0
      %3981 = vadd.xlane.f32.xlu0 %v3980
      %v3982 = vpop.xlane.xlu0 %3981
      %v3983 = vsel %vm3820, %v2850, 0.0
      %3984 = vadd.xlane.f32.xlu0 %v3983
      %v3985 = vpop.xlane.xlu0 %3984
      %v3986 = vsel %vm3820, %v2851, 0.0
      %3987 = vadd.xlane.f32.xlu0 %v3986
      %v3988 = vpop.xlane.xlu0 %3987
      %v3989 = vsel %vm3820, %v2852, 0.0
      %3990 = vadd.xlane.f32.xlu0 %v3989
      %v3991 = vpop.xlane.xlu0 %3990
      %v3992 = vsel %vm3820, %v2853, 0.0
      %3993 = vadd.xlane.f32.xlu0 %v3992
      %v3994 = vpop.xlane.xlu0 %3993
      %v3995 = vsel %vm3820, %v2854, 0.0
      %3996 = vadd.xlane.f32.xlu0 %v3995
      %v3997 = vpop.xlane.xlu0 %3996
      %v3998 = vsel %vm3820, %v2855, 0.0
      %3999 = vadd.xlane.f32.xlu0 %v3998
      %v4000 = vpop.xlane.xlu0 %3999
      %v4001 = vsel %vm3820, %v2856, 0.0
      %4002 = vadd.xlane.f32.xlu0 %v4001
      %v4003 = vpop.xlane.xlu0 %4002
      %v4004 = vsel %vm3820, %v2857, 0.0
      %4005 = vadd.xlane.f32.xlu0 %v4004
      %v4006 = vpop.xlane.xlu0 %4005
      %v4007 = vsel %vm3820, %v2858, 0.0
      %4008 = vadd.xlane.f32.xlu0 %v4007
      %v4009 = vpop.xlane.xlu0 %4008
      %v4010 = vsel %vm3820, %v2859, 0.0
      %4011 = vadd.xlane.f32.xlu0 %v4010
      %v4012 = vpop.xlane.xlu0 %4011
      %v4013 = vsel %vm3820, %v2860, 0.0
      %4014 = vadd.xlane.f32.xlu0 %v4013
      %v4015 = vpop.xlane.xlu0 %4014
      %v4016 = vsel %vm3820, %v2861, 0.0
      %4017 = vadd.xlane.f32.xlu0 %v4016
      %v4018 = vpop.xlane.xlu0 %4017
      %v4019 = vsel %vm3820, %v2862, 0.0
      %4020 = vadd.xlane.f32.xlu0 %v4019
      %v4021 = vpop.xlane.xlu0 %4020
      %v4022 = vsel %vm3820, %v2863, 0.0
      %4023 = vadd.xlane.f32.xlu0 %v4022
      %v4024 = vpop.xlane.xlu0 %4023
      %v4025 = vsel %vm3820, %v2864, 0.0
      %4026 = vadd.xlane.f32.xlu0 %v4025
      %v4027 = vpop.xlane.xlu0 %4026
      %v4028 = vsel %vm3820, %v2865, 0.0
      %4029 = vadd.xlane.f32.xlu0 %v4028
      %v4030 = vpop.xlane.xlu0 %4029
      %v4031 = vsel %vm3820, %v2866, 0.0
      %4032 = vadd.xlane.f32.xlu0 %v4031
      %v4033 = vpop.xlane.xlu0 %4032
      %v4034 = vsel %vm3820, %v2867, 0.0
      %4035 = vadd.xlane.f32.xlu0 %v4034
      %v4036 = vpop.xlane.xlu0 %4035
      %v4037 = vsel %vm3820, %v2868, 0.0
      %4038 = vadd.xlane.f32.xlu0 %v4037
      %v4039 = vpop.xlane.xlu0 %4038
      %v4040 = vsel %vm3820, %v2869, 0.0
      %4041 = vadd.xlane.f32.xlu0 %v4040
      %v4042 = vpop.xlane.xlu0 %4041
      %v4043 = vsel %vm3820, %v2870, 0.0
      %4044 = vadd.xlane.f32.xlu0 %v4043
      %v4045 = vpop.xlane.xlu0 %4044
      %v4046 = vsel %vm3820, %v2871, 0.0
      %4047 = vadd.xlane.f32.xlu0 %v4046
      %v4048 = vpop.xlane.xlu0 %4047
      %v4049 = vsel %vm3820, %v2872, 0.0
      %4050 = vadd.xlane.f32.xlu0 %v4049
      %v4051 = vpop.xlane.xlu0 %4050
      %v4052 = vsel %vm3820, %v2873, 0.0
      %4053 = vadd.xlane.f32.xlu0 %v4052
      %v4054 = vpop.xlane.xlu0 %4053
      %v4055 = vsel %vm3820, %v2874, 0.0
      %4056 = vadd.xlane.f32.xlu0 %v4055
      %v4057 = vpop.xlane.xlu0 %4056
      %v4058 = vsel %vm3820, %v2875, 0.0
      %4059 = vadd.xlane.f32.xlu0 %v4058
      %v4060 = vpop.xlane.xlu0 %4059
      %v4061 = vsel %vm3820, %v2876, 0.0
      %4062 = vadd.xlane.f32.xlu0 %v4061
      %v4063 = vpop.xlane.xlu0 %4062
      %v4064 = vsel %vm3820, %v2877, 0.0
      %4065 = vadd.xlane.f32.xlu0 %v4064
      %v4066 = vpop.xlane.xlu0 %4065
      %v4067 = vsel %vm3820, %v2878, 0.0
      %4068 = vadd.xlane.f32.xlu0 %v4067
      %v4069 = vpop.xlane.xlu0 %4068
      %v4070 = vsel %vm3820, %v2879, 0.0
      %4071 = vadd.xlane.f32.xlu0 %v4070
      %v4072 = vpop.xlane.xlu0 %4071
      %v4073 = vsel %vm3820, %v2880, 0.0
      %4074 = vadd.xlane.f32.xlu0 %v4073
      %v4075 = vpop.xlane.xlu0 %4074
      %v4076 = vsel %vm3820, %v2881, 0.0
      %4077 = vadd.xlane.f32.xlu0 %v4076
      %v4078 = vpop.xlane.xlu0 %4077
      %v4079 = vsel %vm3820, %v2882, 0.0
      %4080 = vadd.xlane.f32.xlu0 %v4079
      %v4081 = vpop.xlane.xlu0 %4080
      %v4082 = vsel %vm3820, %v2883, 0.0
      %4083 = vadd.xlane.f32.xlu0 %v4082
      %v4084 = vpop.xlane.xlu0 %4083
      %v4085 = vsel %vm3820, %v2884, 0.0
      %4086 = vadd.xlane.f32.xlu0 %v4085
      %v4087 = vpop.xlane.xlu0 %4086
      %v4088 = vsel %vm3820, %v2885, 0.0
      %4089 = vadd.xlane.f32.xlu0 %v4088
      %v4090 = vpop.xlane.xlu0 %4089
      %v4091 = vsel %vm3820, %v2886, 0.0
      %4092 = vadd.xlane.f32.xlu0 %v4091
      %v4093 = vpop.xlane.xlu0 %4092
      %v4094 = vsel %vm3820, %v2887, 0.0
      %4095 = vadd.xlane.f32.xlu0 %v4094
      %v4096 = vpop.xlane.xlu0 %4095
      %v4097 = vsel %vm3820, %v2888, 0.0
      %4098 = vadd.xlane.f32.xlu0 %v4097
      %v4099 = vpop.xlane.xlu0 %4098
      %v4100 = vsel %vm3820, %v2889, 0.0
      %4101 = vadd.xlane.f32.xlu0 %v4100
      %v4102 = vpop.xlane.xlu0 %4101
      %v4103 = vsel %vm3820, %v2890, 0.0
      %4104 = vadd.xlane.f32.xlu0 %v4103
      %v4105 = vpop.xlane.xlu0 %4104
      %v4106 = vsel %vm3820, %v2891, 0.0
      %4107 = vadd.xlane.f32.xlu0 %v4106
      %v4108 = vpop.xlane.xlu0 %4107
      %v4109 = vsel %vm3820, %v2892, 0.0
      %4110 = vadd.xlane.f32.xlu0 %v4109
      %v4111 = vpop.xlane.xlu0 %4110
      %v4112 = vsel %vm3820, %v2893, 0.0
      %4113 = vadd.xlane.f32.xlu0 %v4112
      %v4114 = vpop.xlane.xlu0 %4113
      %v4115 = vsel %vm3820, %v2894, 0.0
      %4116 = vadd.xlane.f32.xlu0 %v4115
      %v4117 = vpop.xlane.xlu0 %4116
      %v4118 = vsel %vm3820, %v2895, 0.0
      %4119 = vadd.xlane.f32.xlu0 %v4118
      %v4120 = vpop.xlane.xlu0 %4119
      %v4121 = vsel %vm3820, %v2896, 0.0
      %4122 = vadd.xlane.f32.xlu0 %v4121
      %v4123 = vpop.xlane.xlu0 %4122
      %v4124 = vsel %vm3820, %v2897, 0.0
      %4125 = vadd.xlane.f32.xlu0 %v4124
      %v4126 = vpop.xlane.xlu0 %4125
      %v4127 = vsel %vm3820, %v2898, 0.0
      %4128 = vadd.xlane.f32.xlu0 %v4127
      %v4129 = vpop.xlane.xlu0 %4128
      %v4130 = vsel %vm3820, %v2899, 0.0
      %4131 = vadd.xlane.f32.xlu0 %v4130
      %v4132 = vpop.xlane.xlu0 %4131
      %v4133 = vsel %vm3820, %v2900, 0.0
      %4134 = vadd.xlane.f32.xlu0 %v4133
      %v4135 = vpop.xlane.xlu0 %4134
      %v4136 = vsel %vm3820, %v2901, 0.0
      %4137 = vadd.xlane.f32.xlu0 %v4136
      %v4138 = vpop.xlane.xlu0 %4137
      %v4139 = vsel %vm3820, %v2902, 0.0
      %4140 = vadd.xlane.f32.xlu0 %v4139
      %v4141 = vpop.xlane.xlu0 %4140
      %v4142 = vsel %vm3820, %v2903, 0.0
      %4143 = vadd.xlane.f32.xlu0 %v4142
      %v4144 = vpop.xlane.xlu0 %4143
      %v4145 = vsel %vm3820, %v2904, 0.0
      %4146 = vadd.xlane.f32.xlu0 %v4145
      %v4147 = vpop.xlane.xlu0 %4146
      %v4148 = vsel %vm3820, %v2905, 0.0
      %4149 = vadd.xlane.f32.xlu0 %v4148
      %v4150 = vpop.xlane.xlu0 %4149
      %v4151 = vsel %vm3820, %v2906, 0.0
      %4152 = vadd.xlane.f32.xlu0 %v4151
      %v4153 = vpop.xlane.xlu0 %4152
      %v4154 = vsel %vm3820, %v2907, 0.0
      %4155 = vadd.xlane.f32.xlu0 %v4154
      %v4156 = vpop.xlane.xlu0 %4155
      %v4157 = vsel %vm3820, %v2908, 0.0
      %4158 = vadd.xlane.f32.xlu0 %v4157
      %v4159 = vpop.xlane.xlu0 %4158
      %v4160 = vsel %vm3820, %v2909, 0.0
      %4161 = vadd.xlane.f32.xlu0 %v4160
      %v4162 = vpop.xlane.xlu0 %4161
      %v4163 = vsel %vm3820, %v2910, 0.0
      %4164 = vadd.xlane.f32.xlu0 %v4163
      %v4165 = vpop.xlane.xlu0 %4164
      %v4166 = vsel %vm3820, %v2911, 0.0
      %4167 = vadd.xlane.f32.xlu0 %v4166
      %v4168 = vpop.xlane.xlu0 %4167
      %v4169 = vsel %vm3820, %v2912, 0.0
      %4170 = vadd.xlane.f32.xlu0 %v4169
      %v4171 = vpop.xlane.xlu0 %4170
      %v4172 = vsel %vm3820, %v2913, 0.0
      %4173 = vadd.xlane.f32.xlu0 %v4172
      %v4174 = vpop.xlane.xlu0 %4173
      %v4175 = vsel %vm3820, %v2914, 0.0
      %4176 = vadd.xlane.f32.xlu0 %v4175
      %v4177 = vpop.xlane.xlu0 %4176
      %v4178 = vsel %vm3820, %v2915, 0.0
      %4179 = vadd.xlane.f32.xlu0 %v4178
      %v4180 = vpop.xlane.xlu0 %4179
      %v4181 = vsel %vm3820, %v2916, 0.0
      %4182 = vadd.xlane.f32.xlu0 %v4181
      %v4183 = vpop.xlane.xlu0 %4182
      %v4184 = vsel %vm3820, %v2917, 0.0
      %4185 = vadd.xlane.f32.xlu0 %v4184
      %v4186 = vpop.xlane.xlu0 %4185
      %v4187 = vsel %vm3820, %v2918, 0.0
      %4188 = vadd.xlane.f32.xlu0 %v4187
      %v4189 = vpop.xlane.xlu0 %4188
      %v4190 = vsel %vm3820, %v2919, 0.0
      %4191 = vadd.xlane.f32.xlu0 %v4190
      %v4192 = vpop.xlane.xlu0 %4191
      %v4193 = vsel %vm3820, %v2920, 0.0
      %4194 = vadd.xlane.f32.xlu0 %v4193
      %v4195 = vpop.xlane.xlu0 %4194
      %v4196 = vsel %vm3820, %v2921, 0.0
      %4197 = vadd.xlane.f32.xlu0 %v4196
      %v4198 = vpop.xlane.xlu0 %4197
      %v4199 = vsel %vm3820, %v2922, 0.0
      %4200 = vadd.xlane.f32.xlu0 %v4199
      %v4201 = vpop.xlane.xlu0 %4200
      %v4202 = vsel %vm3820, %v2923, 0.0
      %4203 = vadd.xlane.f32.xlu0 %v4202
      %v4204 = vpop.xlane.xlu0 %4203
      %v4205 = vsel %vm3820, %v2924, 0.0
      %4206 = vadd.xlane.f32.xlu0 %v4205
      %v4207 = vpop.xlane.xlu0 %4206
      %v4208 = vsel %vm3820, %v2925, 0.0
      %4209 = vadd.xlane.f32.xlu0 %v4208
      %v4210 = vpop.xlane.xlu0 %4209
      %v4211 = vsel %vm3820, %v2926, 0.0
      %4212 = vadd.xlane.f32.xlu0 %v4211
      %v4213 = vpop.xlane.xlu0 %4212
      %v4214 = vsel %vm3820, %v2927, 0.0
      %4215 = vadd.xlane.f32.xlu0 %v4214
      %v4216 = vpop.xlane.xlu0 %4215
      %v4217 = vsel %vm3820, %v2928, 0.0
      %4218 = vadd.xlane.f32.xlu0 %v4217
      %v4219 = vpop.xlane.xlu0 %4218
      %v4220 = vsel %vm3820, %v2929, 0.0
      %4221 = vadd.xlane.f32.xlu0 %v4220
      %v4222 = vpop.xlane.xlu0 %4221
      %v4223 = vsel %vm3820, %v2930, 0.0
      %4224 = vadd.xlane.f32.xlu0 %v4223
      %v4225 = vpop.xlane.xlu0 %4224
      %v4226 = vsel %vm3820, %v2931, 0.0
      %4227 = vadd.xlane.f32.xlu0 %v4226
      %v4228 = vpop.xlane.xlu0 %4227
      %v4229 = vsel %vm3820, %v2932, 0.0
      %4230 = vadd.xlane.f32.xlu0 %v4229
      %v4231 = vpop.xlane.xlu0 %4230
      %v4232 = vsel %vm3820, %v2933, 0.0
      %4233 = vadd.xlane.f32.xlu0 %v4232
      %v4234 = vpop.xlane.xlu0 %4233
      %v4235 = vsel %vm3820, %v2934, 0.0
      %4236 = vadd.xlane.f32.xlu0 %v4235
      %v4237 = vpop.xlane.xlu0 %4236
      %v4238 = vsel %vm3820, %v2935, 0.0
      %4239 = vadd.xlane.f32.xlu0 %v4238
      %v4240 = vpop.xlane.xlu0 %4239
      %v4241 = vsel %vm3820, %v2936, 0.0
      %4242 = vadd.xlane.f32.xlu0 %v4241
      %v4243 = vpop.xlane.xlu0 %4242
      %v4244 = vsel %vm3820, %v2937, 0.0
      %4245 = vadd.xlane.f32.xlu0 %v4244
      %v4246 = vpop.xlane.xlu0 %4245
      %v4247 = vsel %vm3820, %v2938, 0.0
      %4248 = vadd.xlane.f32.xlu0 %v4247
      %v4249 = vpop.xlane.xlu0 %4248
      %v4250 = vsel %vm3820, %v2939, 0.0
      %4251 = vadd.xlane.f32.xlu0 %v4250
      %v4252 = vpop.xlane.xlu0 %4251
      %v4253 = vsel %vm3820, %v2940, 0.0
      %4254 = vadd.xlane.f32.xlu0 %v4253
      %v4255 = vpop.xlane.xlu0 %4254
      %v4256 = vsel %vm3820, %v2941, 0.0
      %4257 = vadd.xlane.f32.xlu0 %v4256
      %v4258 = vpop.xlane.xlu0 %4257
      %v4259 = vsel %vm3820, %v2942, 0.0
      %4260 = vadd.xlane.f32.xlu0 %v4259
      %v4261 = vpop.xlane.xlu0 %4260
      %v4262 = vsel %vm3820, %v2943, 0.0
      %4263 = vadd.xlane.f32.xlu0 %v4262
      %v4264 = vpop.xlane.xlu0 %4263
      %v4265 = vsel %vm3820, %v2944, 0.0
      %4266 = vadd.xlane.f32.xlu0 %v4265
      %v4267 = vpop.xlane.xlu0 %4266
      %v4268 = vsel %vm3820, %v2945, 0.0
      %4269 = vadd.xlane.f32.xlu0 %v4268
      %v4270 = vpop.xlane.xlu0 %4269
      %v4271 = vsel %vm3820, %v2946, 0.0
      %4272 = vadd.xlane.f32.xlu0 %v4271
      %v4273 = vpop.xlane.xlu0 %4272
      %v4274 = vsel %vm3820, %v2947, 0.0
      %4275 = vadd.xlane.f32.xlu0 %v4274
      %v4276 = vpop.xlane.xlu0 %4275
      %v4277 = vsel %vm3820, %v2948, 0.0
      %4278 = vadd.xlane.f32.xlu0 %v4277
      %v4279 = vpop.xlane.xlu0 %4278
      %v4280 = vsel %vm3820, %v2949, 0.0
      %4281 = vadd.xlane.f32.xlu0 %v4280
      %v4282 = vpop.xlane.xlu0 %4281
      %v4283 = vsel %vm3820, %v2950, 0.0
      %4284 = vadd.xlane.f32.xlu0 %v4283
      %v4285 = vpop.xlane.xlu0 %4284
      %v4286 = vsel %vm3820, %v2951, 0.0
      %4287 = vadd.xlane.f32.xlu0 %v4286
      %v4288 = vpop.xlane.xlu0 %4287
      %v4289 = vsel %vm3820, %v2952, 0.0
      %4290 = vadd.xlane.f32.xlu0 %v4289
      %v4291 = vpop.xlane.xlu0 %4290
      %v4292 = vsel %vm3820, %v2953, 0.0
      %4293 = vadd.xlane.f32.xlu0 %v4292
      %v4294 = vpop.xlane.xlu0 %4293
      %v4295 = vsel %vm3820, %v2954, 0.0
      %4296 = vadd.xlane.f32.xlu0 %v4295
      %v4297 = vpop.xlane.xlu0 %4296
      %v4298 = vsel %vm3820, %v2955, 0.0
      %4299 = vadd.xlane.f32.xlu0 %v4298
      %v4300 = vpop.xlane.xlu0 %4299
      %v4301 = vsel %vm3820, %v2956, 0.0
      %4302 = vadd.xlane.f32.xlu0 %v4301
      %v4303 = vpop.xlane.xlu0 %4302
      %v4304 = vsel %vm3820, %v2957, 0.0
      %4305 = vadd.xlane.f32.xlu0 %v4304
      %v4306 = vpop.xlane.xlu0 %4305
      %v4307 = vsel %vm3820, %v2958, 0.0
      %4308 = vadd.xlane.f32.xlu0 %v4307
      %v4309 = vpop.xlane.xlu0 %4308
      %v4310 = vsel %vm3820, %v2959, 0.0
      %4311 = vadd.xlane.f32.xlu0 %v4310
      %v4312 = vpop.xlane.xlu0 %4311
      %v4313 = vsel %vm3820, %v2960, 0.0
      %4314 = vadd.xlane.f32.xlu0 %v4313
      %v4315 = vpop.xlane.xlu0 %4314
      %v4316 = vsel %vm3820, %v2961, 0.0
      %4317 = vadd.xlane.f32.xlu0 %v4316
      %v4318 = vpop.xlane.xlu0 %4317
      %v4319 = vsel %vm3820, %v2962, 0.0
      %4320 = vadd.xlane.f32.xlu0 %v4319
      %v4321 = vpop.xlane.xlu0 %4320
      %v4322 = vsel %vm3820, %v2963, 0.0
      %4323 = vadd.xlane.f32.xlu0 %v4322
      %v4324 = vpop.xlane.xlu0 %4323
      %v4325 = vsel %vm3820, %v2964, 0.0
      %4326 = vadd.xlane.f32.xlu0 %v4325
      %v4327 = vpop.xlane.xlu0 %4326
      %v4328 = vsel %vm3820, %v2965, 0.0
      %4329 = vadd.xlane.f32.xlu0 %v4328
      %v4330 = vpop.xlane.xlu0 %4329
      %v4331 = vsel %vm3820, %v2966, 0.0
      %4332 = vadd.xlane.f32.xlu0 %v4331
      %v4333 = vpop.xlane.xlu0 %4332
      %v4334 = vsel %vm3820, %v2967, 0.0
      %4335 = vadd.xlane.f32.xlu0 %v4334
      %v4336 = vpop.xlane.xlu0 %4335
      %v4337 = vsel %vm3820, %v2968, 0.0
      %4338 = vadd.xlane.f32.xlu0 %v4337
      %v4339 = vpop.xlane.xlu0 %4338
      %v4340 = vsel %vm3820, %v2969, 0.0
      %4341 = vadd.xlane.f32.xlu0 %v4340
      %v4342 = vpop.xlane.xlu0 %4341
      %v4343 = vsel %vm3820, %v2970, 0.0
      %4344 = vadd.xlane.f32.xlu0 %v4343
      %v4345 = vpop.xlane.xlu0 %4344
      %v4346 = vsel %vm3820, %v2971, 0.0
      %4347 = vadd.xlane.f32.xlu0 %v4346
      %v4348 = vpop.xlane.xlu0 %4347
      %v4349 = vsel %vm3820, %v2972, 0.0
      %4350 = vadd.xlane.f32.xlu0 %v4349
      %v4351 = vpop.xlane.xlu0 %4350
      %v4352 = vsel %vm3820, %v2973, 0.0
      %4353 = vadd.xlane.f32.xlu0 %v4352
      %v4354 = vpop.xlane.xlu0 %4353
      %v4355 = vsel %vm3820, %v2974, 0.0
      %4356 = vadd.xlane.f32.xlu0 %v4355
      %v4357 = vpop.xlane.xlu0 %4356
      %v4358 = vsel %vm3820, %v2975, 0.0
      %4359 = vadd.xlane.f32.xlu0 %v4358
      %v4360 = vpop.xlane.xlu0 %4359
      %v4361 = vsel %vm3820, %v2976, 0.0
      %4362 = vadd.xlane.f32.xlu0 %v4361
      %v4363 = vpop.xlane.xlu0 %4362
      %v4364 = vsel %vm3820, %v2977, 0.0
      %4365 = vadd.xlane.f32.xlu0 %v4364
      %v4366 = vpop.xlane.xlu0 %4365
      %v4367 = vsel %vm3820, %v2978, 0.0
      %4368 = vadd.xlane.f32.xlu0 %v4367
      %v4369 = vpop.xlane.xlu0 %4368
      %v4370 = vsel %vm3820, %v2979, 0.0
      %4371 = vadd.xlane.f32.xlu0 %v4370
      %v4372 = vpop.xlane.xlu0 %4371
      %v4373 = vsel %vm3820, %v2980, 0.0
      %4374 = vadd.xlane.f32.xlu0 %v4373
      %v4375 = vpop.xlane.xlu0 %4374
      %v4376 = vsel %vm3820, %v2981, 0.0
      %4377 = vadd.xlane.f32.xlu0 %v4376
      %v4378 = vpop.xlane.xlu0 %4377
      %v4379 = vsel %vm3820, %v2982, 0.0
      %4380 = vadd.xlane.f32.xlu0 %v4379
      %v4381 = vpop.xlane.xlu0 %4380
      %v4382 = vsel %vm3820, %v2983, 0.0
      %4383 = vadd.xlane.f32.xlu0 %v4382
      %v4384 = vpop.xlane.xlu0 %4383
      %v4385 = vsel %vm3820, %v2984, 0.0
      %4386 = vadd.xlane.f32.xlu0 %v4385
      %v4387 = vpop.xlane.xlu0 %4386
      %v4388 = vsel %vm3820, %v2985, 0.0
      %4389 = vadd.xlane.f32.xlu0 %v4388
      %v4390 = vpop.xlane.xlu0 %4389
      %v4391 = vsel %vm3820, %v2986, 0.0
      %4392 = vadd.xlane.f32.xlu0 %v4391
      %v4393 = vpop.xlane.xlu0 %4392
      %v4394 = vsel %vm3820, %v2987, 0.0
      %4395 = vadd.xlane.f32.xlu0 %v4394
      %v4396 = vpop.xlane.xlu0 %4395
      %v4397 = vsel %vm3820, %v2988, 0.0
      %4398 = vadd.xlane.f32.xlu0 %v4397
      %v4399 = vpop.xlane.xlu0 %4398
      %v4400 = vsel %vm3820, %v2989, 0.0
      %4401 = vadd.xlane.f32.xlu0 %v4400
      %v4402 = vpop.xlane.xlu0 %4401
      %v4403 = vsel %vm3820, %v2990, 0.0
      %4404 = vadd.xlane.f32.xlu0 %v4403
      %v4405 = vpop.xlane.xlu0 %4404
      %v4406 = vsel %vm3820, %v2991, 0.0
      %4407 = vadd.xlane.f32.xlu0 %v4406
      %v4408 = vpop.xlane.xlu0 %4407
      %v4409 = vsel %vm3820, %v2992, 0.0
      %4410 = vadd.xlane.f32.xlu0 %v4409
      %v4411 = vpop.xlane.xlu0 %4410
      %v4412 = vsel %vm3820, %v2993, 0.0
      %4413 = vadd.xlane.f32.xlu0 %v4412
      %v4414 = vpop.xlane.xlu0 %4413
      %v4415 = vsel %vm3820, %v2994, 0.0
      %4416 = vadd.xlane.f32.xlu0 %v4415
      %v4417 = vpop.xlane.xlu0 %4416
      %v4418 = vsel %vm3820, %v2995, 0.0
      %4419 = vadd.xlane.f32.xlu0 %v4418
      %v4420 = vpop.xlane.xlu0 %4419
      %v4421 = vsel %vm3820, %v2996, 0.0
      %4422 = vadd.xlane.f32.xlu0 %v4421
      %v4423 = vpop.xlane.xlu0 %4422
      %v4424 = vsel %vm3820, %v2997, 0.0
      %4425 = vadd.xlane.f32.xlu0 %v4424
      %v4426 = vpop.xlane.xlu0 %4425
      %v4427 = vsel %vm3820, %v2998, 0.0
      %4428 = vadd.xlane.f32.xlu0 %v4427
      %v4429 = vpop.xlane.xlu0 %4428
      %v4430 = vsel %vm3820, %v2999, 0.0
      %4431 = vadd.xlane.f32.xlu0 %v4430
      %v4432 = vpop.xlane.xlu0 %4431
      %v4433 = vsel %vm3820, %v3000, 0.0
      %4434 = vadd.xlane.f32.xlu0 %v4433
      %v4435 = vpop.xlane.xlu0 %4434
      %v4436 = vsel %vm3820, %v3001, 0.0
      %4437 = vadd.xlane.f32.xlu0 %v4436
      %v4438 = vpop.xlane.xlu0 %4437
      %v4439 = vsel %vm3820, %v3002, 0.0
      %4440 = vadd.xlane.f32.xlu0 %v4439
      %v4441 = vpop.xlane.xlu0 %4440
      %v4442 = vsel %vm3820, %v3003, 0.0
      %4443 = vadd.xlane.f32.xlu0 %v4442
      %v4444 = vpop.xlane.xlu0 %4443
      %v4445 = vsel %vm3820, %v3004, 0.0
      %4446 = vadd.xlane.f32.xlu0 %v4445
      %v4447 = vpop.xlane.xlu0 %4446
      %v4448 = vsel %vm3820, %v3005, 0.0
      %4449 = vadd.xlane.f32.xlu0 %v4448
      %v4450 = vpop.xlane.xlu0 %4449
      %v4451 = vsel %vm3820, %v3006, 0.0
      %4452 = vadd.xlane.f32.xlu0 %v4451
      %v4453 = vpop.xlane.xlu0 %4452
      %v4454 = vsel %vm3820, %v3007, 0.0
      %4455 = vadd.xlane.f32.xlu0 %v4454
      %v4456 = vpop.xlane.xlu0 %4455
      %v4457 = vsel %vm3820, %v3008, 0.0
      %4458 = vadd.xlane.f32.xlu0 %v4457
      %v4459 = vpop.xlane.xlu0 %4458
      %v4460 = vsel %vm3820, %v3009, 0.0
      %4461 = vadd.xlane.f32.xlu0 %v4460
      %v4462 = vpop.xlane.xlu0 %4461
      %v4463 = vsel %vm3820, %v3010, 0.0
      %4464 = vadd.xlane.f32.xlu0 %v4463
      %v4465 = vpop.xlane.xlu0 %4464
      %v4466 = vsel %vm3820, %v3011, 0.0
      %4467 = vadd.xlane.f32.xlu0 %v4466
      %v4468 = vpop.xlane.xlu0 %4467
      %v4469 = vsel %vm3820, %v3012, 0.0
      %4470 = vadd.xlane.f32.xlu0 %v4469
      %v4471 = vpop.xlane.xlu0 %4470
      %v4472 = vsel %vm3820, %v3013, 0.0
      %4473 = vadd.xlane.f32.xlu0 %v4472
      %v4474 = vpop.xlane.xlu0 %4473
      %v4475 = vsel %vm3820, %v3014, 0.0
      %4476 = vadd.xlane.f32.xlu0 %v4475
      %v4477 = vpop.xlane.xlu0 %4476
      %v4478 = vsel %vm3820, %v3015, 0.0
      %4479 = vadd.xlane.f32.xlu0 %v4478
      %v4480 = vpop.xlane.xlu0 %4479
      %v4481 = vsel %vm3820, %v3016, 0.0
      %4482 = vadd.xlane.f32.xlu0 %v4481
      %v4483 = vpop.xlane.xlu0 %4482
      %v4484 = vsel %vm3820, %v3017, 0.0
      %4485 = vadd.xlane.f32.xlu0 %v4484
      %v4486 = vpop.xlane.xlu0 %4485
      %v4487 = vsel %vm3820, %v3018, 0.0
      %4488 = vadd.xlane.f32.xlu0 %v4487
      %v4489 = vpop.xlane.xlu0 %4488
      %v4490 = vsel %vm3820, %v3019, 0.0
      %4491 = vadd.xlane.f32.xlu0 %v4490
      %v4492 = vpop.xlane.xlu0 %4491
      %v4493 = vsel %vm3820, %v3020, 0.0
      %4494 = vadd.xlane.f32.xlu0 %v4493
      %v4495 = vpop.xlane.xlu0 %4494
      %v4496 = vsel %vm3820, %v3021, 0.0
      %4497 = vadd.xlane.f32.xlu0 %v4496
      %v4498 = vpop.xlane.xlu0 %4497
      %v4499 = vsel %vm3820, %v3022, 0.0
      %4500 = vadd.xlane.f32.xlu0 %v4499
      %v4501 = vpop.xlane.xlu0 %4500
      %v4502 = vsel %vm3820, %v3023, 0.0
      %4503 = vadd.xlane.f32.xlu0 %v4502
      %v4504 = vpop.xlane.xlu0 %4503
      %v4505 = vsel %vm3820, %v3024, 0.0
      %4506 = vadd.xlane.f32.xlu0 %v4505
      %v4507 = vpop.xlane.xlu0 %4506
      %v4508 = vsel %vm3820, %v3025, 0.0
      %4509 = vadd.xlane.f32.xlu0 %v4508
      %v4510 = vpop.xlane.xlu0 %4509
      %v4511 = vsel %vm3820, %v3026, 0.0
      %4512 = vadd.xlane.f32.xlu0 %v4511
      %v4513 = vpop.xlane.xlu0 %4512
      %v4514 = vsel %vm3820, %v3027, 0.0
      %4515 = vadd.xlane.f32.xlu0 %v4514
      %v4516 = vpop.xlane.xlu0 %4515
      %v4517 = vsel %vm3820, %v3028, 0.0
      %4518 = vadd.xlane.f32.xlu0 %v4517
      %v4519 = vpop.xlane.xlu0 %4518
      %v4520 = vsel %vm3820, %v3029, 0.0
      %4521 = vadd.xlane.f32.xlu0 %v4520
      %v4522 = vpop.xlane.xlu0 %4521
      %v4523 = vsel %vm3820, %v3030, 0.0
      %4524 = vadd.xlane.f32.xlu0 %v4523
      %v4525 = vpop.xlane.xlu0 %4524
      %v4526 = vsel %vm3820, %v3031, 0.0
      %4527 = vadd.xlane.f32.xlu0 %v4526
      %v4528 = vpop.xlane.xlu0 %4527
      %v4529 = vsel %vm3820, %v3032, 0.0
      %4530 = vadd.xlane.f32.xlu0 %v4529
      %v4531 = vpop.xlane.xlu0 %4530
      %v4532 = vsel %vm3820, %v3033, 0.0
      %4533 = vadd.xlane.f32.xlu0 %v4532
      %v4534 = vpop.xlane.xlu0 %4533
      %v4535 = vsel %vm3820, %v3034, 0.0
      %4536 = vadd.xlane.f32.xlu0 %v4535
      %v4537 = vpop.xlane.xlu0 %4536
      %v4538 = vsel %vm3820, %v3035, 0.0
      %4539 = vadd.xlane.f32.xlu0 %v4538
      %v4540 = vpop.xlane.xlu0 %4539
      %v4541 = vsel %vm3820, %v3036, 0.0
      %4542 = vadd.xlane.f32.xlu0 %v4541
      %v4543 = vpop.xlane.xlu0 %4542
      %v4544 = vsel %vm3820, %v3037, 0.0
      %4545 = vadd.xlane.f32.xlu0 %v4544
      %v4546 = vpop.xlane.xlu0 %4545
      %v4547 = vsel %vm3820, %v3038, 0.0
      %4548 = vadd.xlane.f32.xlu0 %v4547
      %v4549 = vpop.xlane.xlu0 %4548
      %v4550 = vsel %vm3820, %v3039, 0.0
      %4551 = vadd.xlane.f32.xlu0 %v4550
      %v4552 = vpop.xlane.xlu0 %4551
      %v4553 = vsel %vm3820, %v3040, 0.0
      %4554 = vadd.xlane.f32.xlu0 %v4553
      %v4555 = vpop.xlane.xlu0 %4554
      %v4556 = vsel %vm3820, %v3041, 0.0
      %4557 = vadd.xlane.f32.xlu0 %v4556
      %v4558 = vpop.xlane.xlu0 %4557
      %v4559 = vsel %vm3820, %v3042, 0.0
      %4560 = vadd.xlane.f32.xlu0 %v4559
      %v4561 = vpop.xlane.xlu0 %4560
      %v4562 = vsel %vm3820, %v3043, 0.0
      %4563 = vadd.xlane.f32.xlu0 %v4562
      %v4564 = vpop.xlane.xlu0 %4563
      %v4565 = vsel %vm3820, %v3044, 0.0
      %4566 = vadd.xlane.f32.xlu0 %v4565
      %v4567 = vpop.xlane.xlu0 %4566
      %v4568 = vsel %vm3820, %v3045, 0.0
      %4569 = vadd.xlane.f32.xlu0 %v4568
      %v4570 = vpop.xlane.xlu0 %4569
      %v4571 = vsel %vm3820, %v3046, 0.0
      %4572 = vadd.xlane.f32.xlu0 %v4571
      %v4573 = vpop.xlane.xlu0 %4572
      %v4574 = vsel %vm3820, %v3047, 0.0
      %4575 = vadd.xlane.f32.xlu0 %v4574
      %v4576 = vpop.xlane.xlu0 %4575
      %v4577 = vsel %vm3820, %v3048, 0.0
      %4578 = vadd.xlane.f32.xlu0 %v4577
      %v4579 = vpop.xlane.xlu0 %4578
      %v4580 = vsel %vm3820, %v3049, 0.0
      %4581 = vadd.xlane.f32.xlu0 %v4580
      %v4582 = vpop.xlane.xlu0 %4581
      %v4583 = vsel %vm3820, %v3050, 0.0
      %4584 = vadd.xlane.f32.xlu0 %v4583
      %v4585 = vpop.xlane.xlu0 %4584
      %v4586 = vsel %vm3820, %v3051, 0.0
      %4587 = vadd.xlane.f32.xlu0 %v4586
      %v4588 = vpop.xlane.xlu0 %4587
      %v4589 = vsel %vm3820, %v3052, 0.0
      %4590 = vadd.xlane.f32.xlu0 %v4589
      %v4591 = vpop.xlane.xlu0 %4590
      %v4592 = vsel %vm3820, %v3053, 0.0
      %4593 = vadd.xlane.f32.xlu0 %v4592
      %v4594 = vpop.xlane.xlu0 %4593
      %v4595 = vsel %vm3820, %v3054, 0.0
      %4596 = vadd.xlane.f32.xlu0 %v4595
      %v4597 = vpop.xlane.xlu0 %4596
      %v4598 = vsel %vm3820, %v3055, 0.0
      %4599 = vadd.xlane.f32.xlu0 %v4598
      %v4600 = vpop.xlane.xlu0 %4599
      %v4601 = vsel %vm3820, %v3056, 0.0
      %4602 = vadd.xlane.f32.xlu0 %v4601
      %v4603 = vpop.xlane.xlu0 %4602
      %v4604 = vsel %vm3820, %v3057, 0.0
      %4605 = vadd.xlane.f32.xlu0 %v4604
      %v4606 = vpop.xlane.xlu0 %4605
      %v4607 = vsel %vm3820, %v3058, 0.0
      %4608 = vadd.xlane.f32.xlu0 %v4607
      %v4609 = vpop.xlane.xlu0 %4608
      %v4610 = vsel %vm3820, %v3059, 0.0
      %4611 = vadd.xlane.f32.xlu0 %v4610
      %v4612 = vpop.xlane.xlu0 %4611
      %v4613 = vsel %vm3820, %v3060, 0.0
      %4614 = vadd.xlane.f32.xlu0 %v4613
      %v4615 = vpop.xlane.xlu0 %4614
      %v4616 = vsel %vm3820, %v3061, 0.0
      %4617 = vadd.xlane.f32.xlu0 %v4616
      %v4618 = vpop.xlane.xlu0 %4617
      %v4619 = vsel %vm3820, %v3062, 0.0
      %4620 = vadd.xlane.f32.xlu0 %v4619
      %v4621 = vpop.xlane.xlu0 %4620
      %v4622 = vsel %vm3820, %v3063, 0.0
      %4623 = vadd.xlane.f32.xlu0 %v4622
      %v4624 = vpop.xlane.xlu0 %4623
      %v4625 = vsel %vm3820, %v3064, 0.0
      %4626 = vadd.xlane.f32.xlu0 %v4625
      %v4627 = vpop.xlane.xlu0 %4626
      %v4628 = vsel %vm3820, %v3065, 0.0
      %4629 = vadd.xlane.f32.xlu0 %v4628
      %v4630 = vpop.xlane.xlu0 %4629
      %v4631 = vsel %vm3820, %v3066, 0.0
      %4632 = vadd.xlane.f32.xlu0 %v4631
      %v4633 = vpop.xlane.xlu0 %4632
      %v4634 = vsel %vm3820, %v3067, 0.0
      %4635 = vadd.xlane.f32.xlu0 %v4634
      %v4636 = vpop.xlane.xlu0 %4635
      %v4637 = vsel %vm3820, %v3068, 0.0
      %4638 = vadd.xlane.f32.xlu0 %v4637
      %v4639 = vpop.xlane.xlu0 %4638
      %v4640 = vsel %vm3820, %v3069, 0.0
      %4641 = vadd.xlane.f32.xlu0 %v4640
      %v4642 = vpop.xlane.xlu0 %4641
      %v4643 = vsel %vm3820, %v3070, 0.0
      %4644 = vadd.xlane.f32.xlu0 %v4643
      %v4645 = vpop.xlane.xlu0 %4644
      %v4646 = vsel %vm3820, %v3071, 0.0
      %4647 = vadd.xlane.f32.xlu0 %v4646
      %v4648 = vpop.xlane.xlu0 %4647
      %v4649 = vsel %vm3820, %v3072, 0.0
      %4650 = vadd.xlane.f32.xlu0 %v4649
      %v4651 = vpop.xlane.xlu0 %4650
      %v4652 = vsel %vm3820, %v3073, 0.0
      %4653 = vadd.xlane.f32.xlu0 %v4652
      %v4654 = vpop.xlane.xlu0 %4653
      %v4655 = vsel %vm3820, %v3074, 0.0
      %4656 = vadd.xlane.f32.xlu0 %v4655
      %v4657 = vpop.xlane.xlu0 %4656
      %v4658 = vsel %vm3820, %v3075, 0.0
      %4659 = vadd.xlane.f32.xlu0 %v4658
      %v4660 = vpop.xlane.xlu0 %4659
      %v4661 = vsel %vm3820, %v3076, 0.0
      %4662 = vadd.xlane.f32.xlu0 %v4661
      %v4663 = vpop.xlane.xlu0 %4662
      %v4664 = vsel %vm3820, %v3077, 0.0
      %4665 = vadd.xlane.f32.xlu0 %v4664
      %v4666 = vpop.xlane.xlu0 %4665
      %v4667 = vsel %vm3820, %v3078, 0.0
      %4668 = vadd.xlane.f32.xlu0 %v4667
      %v4669 = vpop.xlane.xlu0 %4668
      %v4670 = vsel %vm3820, %v3079, 0.0
      %4671 = vadd.xlane.f32.xlu0 %v4670
      %v4672 = vpop.xlane.xlu0 %4671
      %v4673 = vsel %vm3820, %v3080, 0.0
      %4674 = vadd.xlane.f32.xlu0 %v4673
      %v4675 = vpop.xlane.xlu0 %4674
      %v4676 = vsel %vm3820, %v3081, 0.0
      %4677 = vadd.xlane.f32.xlu0 %v4676
      %v4678 = vpop.xlane.xlu0 %4677
      %v4679 = vsel %vm3820, %v3082, 0.0
      %4680 = vadd.xlane.f32.xlu0 %v4679
      %v4681 = vpop.xlane.xlu0 %4680
      %v4682 = vsel %vm3820, %v3083, 0.0
      %4683 = vadd.xlane.f32.xlu0 %v4682
      %v4684 = vpop.xlane.xlu0 %4683
      %v4685 = vsel %vm3820, %v3084, 0.0
      %4686 = vadd.xlane.f32.xlu0 %v4685
      %v4687 = vpop.xlane.xlu0 %4686
      %v4688 = vsel %vm3820, %v3085, 0.0
      %4689 = vadd.xlane.f32.xlu0 %v4688
      %v4690 = vpop.xlane.xlu0 %4689
      %v4691 = vsel %vm3820, %v3086, 0.0
      %4692 = vadd.xlane.f32.xlu0 %v4691
      %v4693 = vpop.xlane.xlu0 %4692
      %v4694 = vsel %vm3820, %v3087, 0.0
      %4695 = vadd.xlane.f32.xlu0 %v4694
      %v4696 = vpop.xlane.xlu0 %4695
      %v4697 = vsel %vm3820, %v3088, 0.0
      %4698 = vadd.xlane.f32.xlu0 %v4697
      %v4699 = vpop.xlane.xlu0 %4698
      %v4700 = vsel %vm3820, %v3089, 0.0
      %4701 = vadd.xlane.f32.xlu0 %v4700
      %v4702 = vpop.xlane.xlu0 %4701
      %v4703 = vsel %vm3820, %v3090, 0.0
      %4704 = vadd.xlane.f32.xlu0 %v4703
      %v4705 = vpop.xlane.xlu0 %4704
      %v4706 = vsel %vm3820, %v3091, 0.0
      %4707 = vadd.xlane.f32.xlu0 %v4706
      %v4708 = vpop.xlane.xlu0 %4707
      %v4709 = vsel %vm3820, %v3092, 0.0
      %4710 = vadd.xlane.f32.xlu0 %v4709
      %v4711 = vpop.xlane.xlu0 %4710
      %v4712 = vsel %vm3820, %v3093, 0.0
      %4713 = vadd.xlane.f32.xlu0 %v4712
      %v4714 = vpop.xlane.xlu0 %4713
      %v4715 = vsel %vm3820, %v3094, 0.0
      %4716 = vadd.xlane.f32.xlu0 %v4715
      %v4717 = vpop.xlane.xlu0 %4716
      %v4718 = vsel %vm3820, %v3095, 0.0
      %4719 = vadd.xlane.f32.xlu0 %v4718
      %v4720 = vpop.xlane.xlu0 %4719
      %v4721 = vsel %vm3820, %v3096, 0.0
      %4722 = vadd.xlane.f32.xlu0 %v4721
      %v4723 = vpop.xlane.xlu0 %4722
      %v4724 = vsel %vm3820, %v3097, 0.0
      %4725 = vadd.xlane.f32.xlu0 %v4724
      %v4726 = vpop.xlane.xlu0 %4725
      %v4727 = vsel %vm3820, %v3098, 0.0
      %4728 = vadd.xlane.f32.xlu0 %v4727
      %v4729 = vpop.xlane.xlu0 %4728
      %v4730 = vsel %vm3820, %v3099, 0.0
      %4731 = vadd.xlane.f32.xlu0 %v4730
      %v4732 = vpop.xlane.xlu0 %4731
      %v4733 = vsel %vm3820, %v3100, 0.0
      %4734 = vadd.xlane.f32.xlu0 %v4733
      %v4735 = vpop.xlane.xlu0 %4734
      %v4736 = vsel %vm3820, %v3101, 0.0
      %4737 = vadd.xlane.f32.xlu0 %v4736
      %v4738 = vpop.xlane.xlu0 %4737
      %v4739 = vsel %vm3820, %v3102, 0.0
      %4740 = vadd.xlane.f32.xlu0 %v4739
      %v4741 = vpop.xlane.xlu0 %4740
      %v4742 = vsel %vm3820, %v3103, 0.0
      %4743 = vadd.xlane.f32.xlu0 %v4742
      %v4744 = vpop.xlane.xlu0 %4743
      %v4745 = vsel %vm3820, %v3104, 0.0
      %4746 = vadd.xlane.f32.xlu0 %v4745
      %v4747 = vpop.xlane.xlu0 %4746
      %v4748 = vsel %vm3820, %v3105, 0.0
      %4749 = vadd.xlane.f32.xlu0 %v4748
      %v4750 = vpop.xlane.xlu0 %4749
      %v4751 = vsel %vm3820, %v3106, 0.0
      %4752 = vadd.xlane.f32.xlu0 %v4751
      %v4753 = vpop.xlane.xlu0 %4752
      %v4754 = vsel %vm3820, %v3107, 0.0
      %4755 = vadd.xlane.f32.xlu0 %v4754
      %v4756 = vpop.xlane.xlu0 %4755
      %v4757 = vsel %vm3820, %v3108, 0.0
      %4758 = vadd.xlane.f32.xlu0 %v4757
      %v4759 = vpop.xlane.xlu0 %4758
      %v4760 = vsel %vm3820, %v3109, 0.0
      %4761 = vadd.xlane.f32.xlu0 %v4760
      %v4762 = vpop.xlane.xlu0 %4761
      %v4763 = vsel %vm3820, %v3110, 0.0
      %4764 = vadd.xlane.f32.xlu0 %v4763
      %v4765 = vpop.xlane.xlu0 %4764
      %v4766 = vsel %vm3820, %v3111, 0.0
      %4767 = vadd.xlane.f32.xlu0 %v4766
      %v4768 = vpop.xlane.xlu0 %4767
      %v4769 = vsel %vm3820, %v3112, 0.0
      %4770 = vadd.xlane.f32.xlu0 %v4769
      %v4771 = vpop.xlane.xlu0 %4770
      %v4772 = vsel %vm3820, %v3113, 0.0
      %4773 = vadd.xlane.f32.xlu0 %v4772
      %v4774 = vpop.xlane.xlu0 %4773
      %v4775 = vsel %vm3820, %v3114, 0.0
      %4776 = vadd.xlane.f32.xlu0 %v4775
      %v4777 = vpop.xlane.xlu0 %4776
      %v4778 = vsel %vm3820, %v3115, 0.0
      %4779 = vadd.xlane.f32.xlu0 %v4778
      %v4780 = vpop.xlane.xlu0 %4779
      %v4781 = vsel %vm3820, %v3116, 0.0
      %4782 = vadd.xlane.f32.xlu0 %v4781
      %v4783 = vpop.xlane.xlu0 %4782
      %v4784 = vsel %vm3820, %v3117, 0.0
      %4785 = vadd.xlane.f32.xlu0 %v4784
      %v4786 = vpop.xlane.xlu0 %4785
      %v4787 = vsel %vm3820, %v3118, 0.0
      %4788 = vadd.xlane.f32.xlu0 %v4787
      %v4789 = vpop.xlane.xlu0 %4788
      %v4790 = vsel %vm3820, %v3119, 0.0
      %4791 = vadd.xlane.f32.xlu0 %v4790
      %v4792 = vpop.xlane.xlu0 %4791
      %v4793 = vsel %vm3820, %v3120, 0.0
      %4794 = vadd.xlane.f32.xlu0 %v4793
      %v4795 = vpop.xlane.xlu0 %4794
      %v4796 = vsel %vm3820, %v3121, 0.0
      %4797 = vadd.xlane.f32.xlu0 %v4796
      %v4798 = vpop.xlane.xlu0 %4797
      %v4799 = vsel %vm3820, %v3122, 0.0
      %4800 = vadd.xlane.f32.xlu0 %v4799
      %v4801 = vpop.xlane.xlu0 %4800
      %v4802 = vsel %vm3820, %v3123, 0.0
      %4803 = vadd.xlane.f32.xlu0 %v4802
      %v4804 = vpop.xlane.xlu0 %4803
      %v4805 = vsel %vm3820, %v3124, 0.0
      %4806 = vadd.xlane.f32.xlu0 %v4805
      %v4807 = vpop.xlane.xlu0 %4806
      %v4808 = vsel %vm3820, %v3125, 0.0
      %4809 = vadd.xlane.f32.xlu0 %v4808
      %v4810 = vpop.xlane.xlu0 %4809
      %v4811 = vsel %vm3820, %v3126, 0.0
      %4812 = vadd.xlane.f32.xlu0 %v4811
      %v4813 = vpop.xlane.xlu0 %4812
      %v4814 = vsel %vm3820, %v3127, 0.0
      %4815 = vadd.xlane.f32.xlu0 %v4814
      %v4816 = vpop.xlane.xlu0 %4815
      %v4817 = vsel %vm3820, %v3128, 0.0
      %4818 = vadd.xlane.f32.xlu0 %v4817
      %v4819 = vpop.xlane.xlu0 %4818
      %v4820 = vsel %vm3820, %v3129, 0.0
      %4821 = vadd.xlane.f32.xlu0 %v4820
      %v4822 = vpop.xlane.xlu0 %4821
      %v4823 = vsel %vm3820, %v3130, 0.0
      %4824 = vadd.xlane.f32.xlu0 %v4823
      %v4825 = vpop.xlane.xlu0 %4824
      %v4826 = vsel %vm3820, %v3131, 0.0
      %4827 = vadd.xlane.f32.xlu0 %v4826
      %v4828 = vpop.xlane.xlu0 %4827
      %v4829 = vsel %vm3820, %v3132, 0.0
      %4830 = vadd.xlane.f32.xlu0 %v4829
      %v4831 = vpop.xlane.xlu0 %4830
      %v4832 = vsel %vm3820, %v3133, 0.0
      %4833 = vadd.xlane.f32.xlu0 %v4832
      %v4834 = vpop.xlane.xlu0 %4833
      %v4835 = vsel %vm3820, %v3134, 0.0
      %4836 = vadd.xlane.f32.xlu0 %v4835
      %v4837 = vpop.xlane.xlu0 %4836
      %v4838 = vsel %vm3820, %v3135, 0.0
      %4839 = vadd.xlane.f32.xlu0 %v4838
      %v4840 = vpop.xlane.xlu0 %4839
      %v4841 = vsel %vm3820, %v3136, 0.0
      %4842 = vadd.xlane.f32.xlu0 %v4841
      %v4843 = vpop.xlane.xlu0 %4842
      %v4844 = vsel %vm3820, %v3137, 0.0
      %4845 = vadd.xlane.f32.xlu0 %v4844
      %v4846 = vpop.xlane.xlu0 %4845
      %v4847 = vsel %vm3820, %v3138, 0.0
      %4848 = vadd.xlane.f32.xlu0 %v4847
      %v4849 = vpop.xlane.xlu0 %4848
      %v4850 = vsel %vm3820, %v3139, 0.0
      %4851 = vadd.xlane.f32.xlu0 %v4850
      %v4852 = vpop.xlane.xlu0 %4851
      %v4853 = vsel %vm3820, %v3140, 0.0
      %4854 = vadd.xlane.f32.xlu0 %v4853
      %v4855 = vpop.xlane.xlu0 %4854
      %v4856 = vsel %vm3820, %v3141, 0.0
      %4857 = vadd.xlane.f32.xlu0 %v4856
      %v4858 = vpop.xlane.xlu0 %4857
      %v4859 = vsel %vm3820, %v3142, 0.0
      %4860 = vadd.xlane.f32.xlu0 %v4859
      %v4861 = vpop.xlane.xlu0 %4860
      %v4862 = vsel %vm3820, %v3143, 0.0
      %4863 = vadd.xlane.f32.xlu0 %v4862
      %v4864 = vpop.xlane.xlu0 %4863
      %v4865 = vsel %vm3820, %v3144, 0.0
      %4866 = vadd.xlane.f32.xlu0 %v4865
      %v4867 = vpop.xlane.xlu0 %4866
      %v4868 = vsel %vm3820, %v3145, 0.0
      %4869 = vadd.xlane.f32.xlu0 %v4868
      %v4870 = vpop.xlane.xlu0 %4869
      %v4871 = vsel %vm3820, %v3146, 0.0
      %4872 = vadd.xlane.f32.xlu0 %v4871
      %v4873 = vpop.xlane.xlu0 %4872
      %v4874 = vsel %vm3820, %v3147, 0.0
      %4875 = vadd.xlane.f32.xlu0 %v4874
      %v4876 = vpop.xlane.xlu0 %4875
      %v4877 = vsel %vm3820, %v3148, 0.0
      %4878 = vadd.xlane.f32.xlu0 %v4877
      %v4879 = vpop.xlane.xlu0 %4878
      %v4880 = vsel %vm3820, %v3149, 0.0
      %4881 = vadd.xlane.f32.xlu0 %v4880
      %v4882 = vpop.xlane.xlu0 %4881
      %v4883 = vsel %vm3820, %v3150, 0.0
      %4884 = vadd.xlane.f32.xlu0 %v4883
      %v4885 = vpop.xlane.xlu0 %4884
      %v4886 = vsel %vm3820, %v3151, 0.0
      %4887 = vadd.xlane.f32.xlu0 %v4886
      %v4888 = vpop.xlane.xlu0 %4887
      %v4889 = vsel %vm3820, %v3152, 0.0
      %4890 = vadd.xlane.f32.xlu0 %v4889
      %v4891 = vpop.xlane.xlu0 %4890
      %v4892 = vsel %vm3820, %v3153, 0.0
      %4893 = vadd.xlane.f32.xlu0 %v4892
      %v4894 = vpop.xlane.xlu0 %4893
      %v4895 = vsel %vm3820, %v3154, 0.0
      %4896 = vadd.xlane.f32.xlu0 %v4895
      %v4897 = vpop.xlane.xlu0 %4896
      %v4898 = vsel %vm3820, %v3155, 0.0
      %4899 = vadd.xlane.f32.xlu0 %v4898
      %v4900 = vpop.xlane.xlu0 %4899
      %v4901 = vsel %vm3820, %v3156, 0.0
      %4902 = vadd.xlane.f32.xlu0 %v4901
      %v4903 = vpop.xlane.xlu0 %4902
      %v4904 = vsel %vm3820, %v3157, 0.0
      %4905 = vadd.xlane.f32.xlu0 %v4904
      %v4906 = vpop.xlane.xlu0 %4905
      %v4907 = vsel %vm3820, %v3158, 0.0
      %4908 = vadd.xlane.f32.xlu0 %v4907
      %v4909 = vpop.xlane.xlu0 %4908
      %v4910 = vsel %vm3820, %v3159, 0.0
      %4911 = vadd.xlane.f32.xlu0 %v4910
      %v4912 = vpop.xlane.xlu0 %4911
      %v4913 = vsel %vm3820, %v3160, 0.0
      %4914 = vadd.xlane.f32.xlu0 %v4913
      %v4915 = vpop.xlane.xlu0 %4914
      %v4916 = vsel %vm3820, %v3161, 0.0
      %4917 = vadd.xlane.f32.xlu0 %v4916
      %v4918 = vpop.xlane.xlu0 %4917
      %v4919 = vsel %vm3820, %v3162, 0.0
      %4920 = vadd.xlane.f32.xlu0 %v4919
      %v4921 = vpop.xlane.xlu0 %4920
      %v4922 = vsel %vm3820, %v3163, 0.0
      %4923 = vadd.xlane.f32.xlu0 %v4922
      %v4924 = vpop.xlane.xlu0 %4923
      %v4925 = vsel %vm3820, %v3164, 0.0
      %4926 = vadd.xlane.f32.xlu0 %v4925
      %v4927 = vpop.xlane.xlu0 %4926
      %v4928 = vsel %vm3820, %v3165, 0.0
      %4929 = vadd.xlane.f32.xlu0 %v4928
      %v4930 = vpop.xlane.xlu0 %4929
      %v4931 = vsel %vm3820, %v3166, 0.0
      %4932 = vadd.xlane.f32.xlu0 %v4931
      %v4933 = vpop.xlane.xlu0 %4932
      %v4934 = vsel %vm3820, %v3167, 0.0
      %4935 = vadd.xlane.f32.xlu0 %v4934
      %v4936 = vpop.xlane.xlu0 %4935
      %v4937 = vsel %vm3820, %v3168, 0.0
      %4938 = vadd.xlane.f32.xlu0 %v4937
      %v4939 = vpop.xlane.xlu0 %4938
      %v4940 = vsel %vm3820, %v3169, 0.0
      %4941 = vadd.xlane.f32.xlu0 %v4940
      %v4942 = vpop.xlane.xlu0 %4941
      %v4943 = vsel %vm3820, %v3170, 0.0
      %4944 = vadd.xlane.f32.xlu0 %v4943
      %v4945 = vpop.xlane.xlu0 %4944
      %v4946 = vsel %vm3820, %v3171, 0.0
      %4947 = vadd.xlane.f32.xlu0 %v4946
      %v4948 = vpop.xlane.xlu0 %4947
      %v4949 = vsel %vm3820, %v3172, 0.0
      %4950 = vadd.xlane.f32.xlu0 %v4949
      %v4951 = vpop.xlane.xlu0 %4950
      %v4952 = vsel %vm3820, %v3173, 0.0
      %4953 = vadd.xlane.f32.xlu0 %v4952
      %v4954 = vpop.xlane.xlu0 %4953
      %v4955 = vsel %vm3820, %v3174, 0.0
      %4956 = vadd.xlane.f32.xlu0 %v4955
      %v4957 = vpop.xlane.xlu0 %4956
      %v4958 = vsel %vm3820, %v3175, 0.0
      %4959 = vadd.xlane.f32.xlu0 %v4958
      %v4960 = vpop.xlane.xlu0 %4959
      %v4961 = vsel %vm3820, %v3176, 0.0
      %4962 = vadd.xlane.f32.xlu0 %v4961
      %v4963 = vpop.xlane.xlu0 %4962
      %v4964 = vsel %vm3820, %v3177, 0.0
      %4965 = vadd.xlane.f32.xlu0 %v4964
      %v4966 = vpop.xlane.xlu0 %4965
      %v4967 = vsel %vm3820, %v3178, 0.0
      %4968 = vadd.xlane.f32.xlu0 %v4967
      %v4969 = vpop.xlane.xlu0 %4968
      %v4970 = vsel %vm3820, %v3179, 0.0
      %4971 = vadd.xlane.f32.xlu0 %v4970
      %v4972 = vpop.xlane.xlu0 %4971
      %v4973 = vsel %vm3820, %v3180, 0.0
      %4974 = vadd.xlane.f32.xlu0 %v4973
      %v4975 = vpop.xlane.xlu0 %4974
      %v4976 = vsel %vm3820, %v3181, 0.0
      %4977 = vadd.xlane.f32.xlu0 %v4976
      %v4978 = vpop.xlane.xlu0 %4977
      %v4979 = vsel %vm3820, %v3182, 0.0
      %4980 = vadd.xlane.f32.xlu0 %v4979
      %v4981 = vpop.xlane.xlu0 %4980
      %v4982 = vsel %vm3820, %v3183, 0.0
      %4983 = vadd.xlane.f32.xlu0 %v4982
      %v4984 = vpop.xlane.xlu0 %4983
      %v4985 = vsel %vm3820, %v3184, 0.0
      %4986 = vadd.xlane.f32.xlu0 %v4985
      %v4987 = vpop.xlane.xlu0 %4986
      %v4988 = vsel %vm3820, %v3185, 0.0
      %4989 = vadd.xlane.f32.xlu0 %v4988
      %v4990 = vpop.xlane.xlu0 %4989
      %v4991 = vsel %vm3820, %v3186, 0.0
      %4992 = vadd.xlane.f32.xlu0 %v4991
      %v4993 = vpop.xlane.xlu0 %4992
      %v4994 = vsel %vm3820, %v3187, 0.0
      %4995 = vadd.xlane.f32.xlu0 %v4994
      %v4996 = vpop.xlane.xlu0 %4995
      %v4997 = vsel %vm3820, %v3188, 0.0
      %4998 = vadd.xlane.f32.xlu0 %v4997
      %v4999 = vpop.xlane.xlu0 %4998
      %v5000 = vsel %vm3820, %v3189, 0.0
      %5001 = vadd.xlane.f32.xlu0 %v5000
      %v5002 = vpop.xlane.xlu0 %5001
      %v5003 = vsel %vm3820, %v3190, 0.0
      %5004 = vadd.xlane.f32.xlu0 %v5003
      %v5005 = vpop.xlane.xlu0 %5004
      %v5006 = vsel %vm3820, %v3191, 0.0
      %5007 = vadd.xlane.f32.xlu0 %v5006
      %v5008 = vpop.xlane.xlu0 %5007
      %v5009 = vsel %vm3820, %v3192, 0.0
      %5010 = vadd.xlane.f32.xlu0 %v5009
      %v5011 = vpop.xlane.xlu0 %5010
      %v5012 = vsel %vm3820, %v3193, 0.0
      %5013 = vadd.xlane.f32.xlu0 %v5012
      %v5014 = vpop.xlane.xlu0 %5013
      %v5015 = vsel %vm3820, %v3194, 0.0
      %5016 = vadd.xlane.f32.xlu0 %v5015
      %v5017 = vpop.xlane.xlu0 %5016
      %v5018 = vsel %vm3820, %v3195, 0.0
      %5019 = vadd.xlane.f32.xlu0 %v5018
      %v5020 = vpop.xlane.xlu0 %5019
      %v5021 = vsel %vm3820, %v3196, 0.0
      %5022 = vadd.xlane.f32.xlu0 %v5021
      %v5023 = vpop.xlane.xlu0 %5022
      %v5024 = vsel %vm3820, %v3197, 0.0
      %5025 = vadd.xlane.f32.xlu0 %v5024
      %v5026 = vpop.xlane.xlu0 %5025
      %v5027 = vsel %vm3820, %v3198, 0.0
      %5028 = vadd.xlane.f32.xlu0 %v5027
      %v5029 = vpop.xlane.xlu0 %5028
      %v5030 = vsel %vm3820, %v3199, 0.0
      %5031 = vadd.xlane.f32.xlu0 %v5030
      %v5032 = vpop.xlane.xlu0 %5031
      %v5033 = vsel %vm3820, %v3200, 0.0
      %5034 = vadd.xlane.f32.xlu0 %v5033
      %v5035 = vpop.xlane.xlu0 %5034
      %v5036 = vsel %vm3820, %v3201, 0.0
      %5037 = vadd.xlane.f32.xlu0 %v5036
      %v5038 = vpop.xlane.xlu0 %5037
      %v5039 = vsel %vm3820, %v3202, 0.0
      %5040 = vadd.xlane.f32.xlu0 %v5039
      %v5041 = vpop.xlane.xlu0 %5040
      %v5042 = vsel %vm3820, %v3203, 0.0
      %5043 = vadd.xlane.f32.xlu0 %v5042
      %v5044 = vpop.xlane.xlu0 %5043
      %v5045 = vsel %vm3820, %v3204, 0.0
      %5046 = vadd.xlane.f32.xlu0 %v5045
      %v5047 = vpop.xlane.xlu0 %5046
      %v5048 = vsel %vm3820, %v3205, 0.0
      %5049 = vadd.xlane.f32.xlu0 %v5048
      %v5050 = vpop.xlane.xlu0 %5049
      %v5051 = vsel %vm3820, %v3206, 0.0
      %5052 = vadd.xlane.f32.xlu0 %v5051
      %v5053 = vpop.xlane.xlu0 %5052
      %v5054 = vsel %vm3820, %v3207, 0.0
      %5055 = vadd.xlane.f32.xlu0 %v5054
      %v5056 = vpop.xlane.xlu0 %5055
      %v5057 = vsel %vm3820, %v3208, 0.0
      %5058 = vadd.xlane.f32.xlu0 %v5057
      %v5059 = vpop.xlane.xlu0 %5058
      %v5060 = vsel %vm3820, %v3209, 0.0
      %5061 = vadd.xlane.f32.xlu0 %v5060
      %v5062 = vpop.xlane.xlu0 %5061
      %v5063 = vsel %vm3820, %v3210, 0.0
      %5064 = vadd.xlane.f32.xlu0 %v5063
      %v5065 = vpop.xlane.xlu0 %5064
      %v5066 = vsel %vm3820, %v3211, 0.0
      %5067 = vadd.xlane.f32.xlu0 %v5066
      %v5068 = vpop.xlane.xlu0 %5067
      %v5069 = vsel %vm3820, %v3212, 0.0
      %5070 = vadd.xlane.f32.xlu0 %v5069
      %v5071 = vpop.xlane.xlu0 %5070
      %v5072 = vsel %vm3820, %v3213, 0.0
      %5073 = vadd.xlane.f32.xlu0 %v5072
      %v5074 = vpop.xlane.xlu0 %5073
      %v5075 = vsel %vm3820, %v3214, 0.0
      %5076 = vadd.xlane.f32.xlu0 %v5075
      %v5077 = vpop.xlane.xlu0 %5076
      %v5078 = vsel %vm3820, %v3215, 0.0
      %5079 = vadd.xlane.f32.xlu0 %v5078
      %v5080 = vpop.xlane.xlu0 %5079
      %v5081 = vsel %vm3820, %v3216, 0.0
      %5082 = vadd.xlane.f32.xlu0 %v5081
      %v5083 = vpop.xlane.xlu0 %5082
      %v5084 = vsel %vm3820, %v3217, 0.0
      %5085 = vadd.xlane.f32.xlu0 %v5084
      %v5086 = vpop.xlane.xlu0 %5085
      %v5087 = vsel %vm3820, %v3218, 0.0
      %5088 = vadd.xlane.f32.xlu0 %v5087
      %v5089 = vpop.xlane.xlu0 %5088
      %v5090 = vsel %vm3820, %v3219, 0.0
      %5091 = vadd.xlane.f32.xlu0 %v5090
      %v5092 = vpop.xlane.xlu0 %5091
      %v5093 = vsel %vm3820, %v3220, 0.0
      %5094 = vadd.xlane.f32.xlu0 %v5093
      %v5095 = vpop.xlane.xlu0 %5094
      %v5096 = vsel %vm3820, %v3221, 0.0
      %5097 = vadd.xlane.f32.xlu0 %v5096
      %v5098 = vpop.xlane.xlu0 %5097
      %v5099 = vsel %vm3820, %v3222, 0.0
      %5100 = vadd.xlane.f32.xlu0 %v5099
      %v5101 = vpop.xlane.xlu0 %5100
      %v5102 = vsel %vm3820, %v3223, 0.0
      %5103 = vadd.xlane.f32.xlu0 %v5102
      %v5104 = vpop.xlane.xlu0 %5103
      %v5105 = vsel %vm3820, %v3224, 0.0
      %5106 = vadd.xlane.f32.xlu0 %v5105
      %v5107 = vpop.xlane.xlu0 %5106
      %v5108 = vsel %vm3820, %v3225, 0.0
      %5109 = vadd.xlane.f32.xlu0 %v5108
      %v5110 = vpop.xlane.xlu0 %5109
      %v5111 = vsel %vm3820, %v3226, 0.0
      %5112 = vadd.xlane.f32.xlu0 %v5111
      %v5113 = vpop.xlane.xlu0 %5112
      %v5114 = vsel %vm3820, %v3227, 0.0
      %5115 = vadd.xlane.f32.xlu0 %v5114
      %v5116 = vpop.xlane.xlu0 %5115
      %v5117 = vsel %vm3820, %v3228, 0.0
      %5118 = vadd.xlane.f32.xlu0 %v5117
      %v5119 = vpop.xlane.xlu0 %5118
      %v5120 = vsel %vm3820, %v3229, 0.0
      %5121 = vadd.xlane.f32.xlu0 %v5120
      %v5122 = vpop.xlane.xlu0 %5121
      %v5123 = vsel %vm3820, %v3230, 0.0
      %5124 = vadd.xlane.f32.xlu0 %v5123
      %v5125 = vpop.xlane.xlu0 %5124
      %v5126 = vsel %vm3820, %v3231, 0.0
      %5127 = vadd.xlane.f32.xlu0 %v5126
      %v5128 = vpop.xlane.xlu0 %5127
      %v5129 = vsel %vm3820, %v3232, 0.0
      %5130 = vadd.xlane.f32.xlu0 %v5129
      %v5131 = vpop.xlane.xlu0 %5130
      %v5132 = vsel %vm3820, %v3233, 0.0
      %5133 = vadd.xlane.f32.xlu0 %v5132
      %v5134 = vpop.xlane.xlu0 %5133
      %v5135 = vsel %vm3820, %v3234, 0.0
      %5136 = vadd.xlane.f32.xlu0 %v5135
      %v5137 = vpop.xlane.xlu0 %5136
      %v5138 = vsel %vm3820, %v3235, 0.0
      %5139 = vadd.xlane.f32.xlu0 %v5138
      %v5140 = vpop.xlane.xlu0 %5139
      %v5141 = vsel %vm3820, %v3236, 0.0
      %5142 = vadd.xlane.f32.xlu0 %v5141
      %v5143 = vpop.xlane.xlu0 %5142
      %v5144 = vsel %vm3820, %v3237, 0.0
      %5145 = vadd.xlane.f32.xlu0 %v5144
      %v5146 = vpop.xlane.xlu0 %5145
      %v5147 = vsel %vm3820, %v3238, 0.0
      %5148 = vadd.xlane.f32.xlu0 %v5147
      %v5149 = vpop.xlane.xlu0 %5148
      %v5150 = vsel %vm3820, %v3239, 0.0
      %5151 = vadd.xlane.f32.xlu0 %v5150
      %v5152 = vpop.xlane.xlu0 %5151
      %v5153 = vsel %vm3820, %v3240, 0.0
      %5154 = vadd.xlane.f32.xlu0 %v5153
      %v5155 = vpop.xlane.xlu0 %5154
      %v5156 = vsel %vm3820, %v3241, 0.0
      %5157 = vadd.xlane.f32.xlu0 %v5156
      %v5158 = vpop.xlane.xlu0 %5157
      %v5159 = vsel %vm3820, %v3242, 0.0
      %5160 = vadd.xlane.f32.xlu0 %v5159
      %v5161 = vpop.xlane.xlu0 %5160
      %v5162 = vsel %vm3820, %v3243, 0.0
      %5163 = vadd.xlane.f32.xlu0 %v5162
      %v5164 = vpop.xlane.xlu0 %5163
      %v5165 = vsel %vm3820, %v3244, 0.0
      %5166 = vadd.xlane.f32.xlu0 %v5165
      %v5167 = vpop.xlane.xlu0 %5166
      %v5168 = vsel %vm3820, %v3245, 0.0
      %5169 = vadd.xlane.f32.xlu0 %v5168
      %v5170 = vpop.xlane.xlu0 %5169
      %v5171 = vsel %vm3820, %v3246, 0.0
      %5172 = vadd.xlane.f32.xlu0 %v5171
      %v5173 = vpop.xlane.xlu0 %5172
      %v5174 = vsel %vm3820, %v3247, 0.0
      %5175 = vadd.xlane.f32.xlu0 %v5174
      %v5176 = vpop.xlane.xlu0 %5175
      %v5177 = vsel %vm3820, %v3248, 0.0
      %5178 = vadd.xlane.f32.xlu0 %v5177
      %v5179 = vpop.xlane.xlu0 %5178
      %v5180 = vsel %vm3820, %v3249, 0.0
      %5181 = vadd.xlane.f32.xlu0 %v5180
      %v5182 = vpop.xlane.xlu0 %5181
      %v5183 = vsel %vm3820, %v3250, 0.0
      %5184 = vadd.xlane.f32.xlu0 %v5183
      %v5185 = vpop.xlane.xlu0 %5184
      %v5186 = vsel %vm3820, %v3251, 0.0
      %5187 = vadd.xlane.f32.xlu0 %v5186
      %v5188 = vpop.xlane.xlu0 %5187
      %v5189 = vsel %vm3820, %v3252, 0.0
      %5190 = vadd.xlane.f32.xlu0 %v5189
      %v5191 = vpop.xlane.xlu0 %5190
      %v5192 = vsel %vm3820, %v3253, 0.0
      %5193 = vadd.xlane.f32.xlu0 %v5192
      %v5194 = vpop.xlane.xlu0 %5193
      %v5195 = vsel %vm3820, %v3254, 0.0
      %5196 = vadd.xlane.f32.xlu0 %v5195
      %v5197 = vpop.xlane.xlu0 %5196
      %v5198 = vsel %vm3820, %v3255, 0.0
      %5199 = vadd.xlane.f32.xlu0 %v5198
      %v5200 = vpop.xlane.xlu0 %5199
      %v5201 = vsel %vm3820, %v3256, 0.0
      %5202 = vadd.xlane.f32.xlu0 %v5201
      %v5203 = vpop.xlane.xlu0 %5202
      %v5204 = vsel %vm3820, %v3257, 0.0
      %5205 = vadd.xlane.f32.xlu0 %v5204
      %v5206 = vpop.xlane.xlu0 %5205
      %v5207 = vsel %vm3820, %v3258, 0.0
      %5208 = vadd.xlane.f32.xlu0 %v5207
      %v5209 = vpop.xlane.xlu0 %5208
      %v5210 = vsel %vm3820, %v3259, 0.0
      %5211 = vadd.xlane.f32.xlu0 %v5210
      %v5212 = vpop.xlane.xlu0 %5211
      %v5213 = vsel %vm3820, %v3260, 0.0
      %5214 = vadd.xlane.f32.xlu0 %v5213
      %v5215 = vpop.xlane.xlu0 %5214
      %v5216 = vsel %vm3820, %v3261, 0.0
      %5217 = vadd.xlane.f32.xlu0 %v5216
      %v5218 = vpop.xlane.xlu0 %5217
      %v5219 = vsel %vm3820, %v3262, 0.0
      %5220 = vadd.xlane.f32.xlu0 %v5219
      %v5221 = vpop.xlane.xlu0 %5220
      %v5222 = vsel %vm3820, %v3263, 0.0
      %5223 = vadd.xlane.f32.xlu0 %v5222
      %v5224 = vpop.xlane.xlu0 %5223
      %v5225 = vsel %vm3820, %v3264, 0.0
      %5226 = vadd.xlane.f32.xlu0 %v5225
      %v5227 = vpop.xlane.xlu0 %5226
      %v5228 = vsel %vm3820, %v3265, 0.0
      %5229 = vadd.xlane.f32.xlu0 %v5228
      %v5230 = vpop.xlane.xlu0 %5229
      %v5231 = vsel %vm3820, %v3266, 0.0
      %5232 = vadd.xlane.f32.xlu0 %v5231
      %v5233 = vpop.xlane.xlu0 %5232
      %v5234 = vsel %vm3820, %v3267, 0.0
      %5235 = vadd.xlane.f32.xlu0 %v5234
      %v5236 = vpop.xlane.xlu0 %5235
      %v5237 = vsel %vm3820, %v3268, 0.0
      %5238 = vadd.xlane.f32.xlu0 %v5237
      %v5239 = vpop.xlane.xlu0 %5238
      %v5240 = vsel %vm3820, %v3269, 0.0
      %5241 = vadd.xlane.f32.xlu0 %v5240
      %v5242 = vpop.xlane.xlu0 %5241
      %v5243 = vsel %vm3820, %v3270, 0.0
      %5244 = vadd.xlane.f32.xlu0 %v5243
      %v5245 = vpop.xlane.xlu0 %5244
      %v5246 = vsel %vm3820, %v3271, 0.0
      %5247 = vadd.xlane.f32.xlu0 %v5246
      %v5248 = vpop.xlane.xlu0 %5247
      %v5249 = vsel %vm3820, %v3272, 0.0
      %5250 = vadd.xlane.f32.xlu0 %v5249
      %v5251 = vpop.xlane.xlu0 %5250
      %v5252 = vsel %vm3820, %v3273, 0.0
      %5253 = vadd.xlane.f32.xlu0 %v5252
      %v5254 = vpop.xlane.xlu0 %5253
      %v5255 = vsel %vm3820, %v3274, 0.0
      %5256 = vadd.xlane.f32.xlu0 %v5255
      %v5257 = vpop.xlane.xlu0 %5256
      %v5258 = vsel %vm3820, %v3275, 0.0
      %5259 = vadd.xlane.f32.xlu0 %v5258
      %v5260 = vpop.xlane.xlu0 %5259
      %v5261 = vsel %vm3820, %v3276, 0.0
      %5262 = vadd.xlane.f32.xlu0 %v5261
      %v5263 = vpop.xlane.xlu0 %5262
      %v5264 = vsel %vm3820, %v3277, 0.0
      %5265 = vadd.xlane.f32.xlu0 %v5264
      %v5266 = vpop.xlane.xlu0 %5265
      %v5267 = vsel %vm3820, %v3278, 0.0
      %5268 = vadd.xlane.f32.xlu0 %v5267
      %v5269 = vpop.xlane.xlu0 %5268
      %v5270 = vsel %vm3820, %v3279, 0.0
      %5271 = vadd.xlane.f32.xlu0 %v5270
      %v5272 = vpop.xlane.xlu0 %5271
      %v5273 = vsel %vm3820, %v3280, 0.0
      %5274 = vadd.xlane.f32.xlu0 %v5273
      %v5275 = vpop.xlane.xlu0 %5274
      %v5276 = vsel %vm3820, %v3281, 0.0
      %5277 = vadd.xlane.f32.xlu0 %v5276
      %v5278 = vpop.xlane.xlu0 %5277
      %v5279 = vsel %vm3820, %v3282, 0.0
      %5280 = vadd.xlane.f32.xlu0 %v5279
      %v5281 = vpop.xlane.xlu0 %5280
      %v5282 = vsel %vm3820, %v3283, 0.0
      %5283 = vadd.xlane.f32.xlu0 %v5282
      %v5284 = vpop.xlane.xlu0 %5283
      %v5285 = vsel %vm3820, %v3284, 0.0
      %5286 = vadd.xlane.f32.xlu0 %v5285
      %v5287 = vpop.xlane.xlu0 %5286
      %v5288 = vsel %vm3820, %v3285, 0.0
      %5289 = vadd.xlane.f32.xlu0 %v5288
      %v5290 = vpop.xlane.xlu0 %5289
      %v5291 = vsel %vm3820, %v3286, 0.0
      %5292 = vadd.xlane.f32.xlu0 %v5291
      %v5293 = vpop.xlane.xlu0 %5292
      %v5294 = vsel %vm3820, %v3287, 0.0
      %5295 = vadd.xlane.f32.xlu0 %v5294
      %v5296 = vpop.xlane.xlu0 %5295
      %v5297 = vsel %vm3820, %v3288, 0.0
      %5298 = vadd.xlane.f32.xlu0 %v5297
      %v5299 = vpop.xlane.xlu0 %5298
      %v5300 = vsel %vm3820, %v3289, 0.0
      %5301 = vadd.xlane.f32.xlu0 %v5300
      %v5302 = vpop.xlane.xlu0 %5301
      %v5303 = vsel %vm3820, %v3290, 0.0
      %5304 = vadd.xlane.f32.xlu0 %v5303
      %v5305 = vpop.xlane.xlu0 %5304
      %v5306 = vsel %vm3820, %v3291, 0.0
      %5307 = vadd.xlane.f32.xlu0 %v5306
      %v5308 = vpop.xlane.xlu0 %5307
      %v5309 = vsel %vm3820, %v3292, 0.0
      %5310 = vadd.xlane.f32.xlu0 %v5309
      %v5311 = vpop.xlane.xlu0 %5310
      %v5312 = vsel %vm3820, %v3293, 0.0
      %5313 = vadd.xlane.f32.xlu0 %v5312
      %v5314 = vpop.xlane.xlu0 %5313
      %v5315 = vsel %vm3820, %v3294, 0.0
      %5316 = vadd.xlane.f32.xlu0 %v5315
      %v5317 = vpop.xlane.xlu0 %5316
      %v5318 = vsel %vm3820, %v3295, 0.0
      %5319 = vadd.xlane.f32.xlu0 %v5318
      %v5320 = vpop.xlane.xlu0 %5319
      %v5321 = vsel %vm3820, %v3296, 0.0
      %5322 = vadd.xlane.f32.xlu0 %v5321
      %v5323 = vpop.xlane.xlu0 %5322
      %v5324 = vsel %vm3820, %v3297, 0.0
      %5325 = vadd.xlane.f32.xlu0 %v5324
      %v5326 = vpop.xlane.xlu0 %5325
      %v5327 = vsel %vm3820, %v3298, 0.0
      %5328 = vadd.xlane.f32.xlu0 %v5327
      %v5329 = vpop.xlane.xlu0 %5328
      %v5330 = vsel %vm3820, %v3299, 0.0
      %5331 = vadd.xlane.f32.xlu0 %v5330
      %v5332 = vpop.xlane.xlu0 %5331
      %v5333 = vsel %vm3820, %v3300, 0.0
      %5334 = vadd.xlane.f32.xlu0 %v5333
      %v5335 = vpop.xlane.xlu0 %5334
      %v5336 = vsel %vm3820, %v3301, 0.0
      %5337 = vadd.xlane.f32.xlu0 %v5336
      %v5338 = vpop.xlane.xlu0 %5337
      %v5339 = vsel %vm3820, %v3302, 0.0
      %5340 = vadd.xlane.f32.xlu0 %v5339
      %v5341 = vpop.xlane.xlu0 %5340
      %v5342 = vsel %vm3820, %v3303, 0.0
      %5343 = vadd.xlane.f32.xlu0 %v5342
      %v5344 = vpop.xlane.xlu0 %5343
      %v5345 = vsel %vm3820, %v3304, 0.0
      %5346 = vadd.xlane.f32.xlu0 %v5345
      %v5347 = vpop.xlane.xlu0 %5346
      %v5348 = vsel %vm3820, %v3305, 0.0
      %5349 = vadd.xlane.f32.xlu0 %v5348
      %v5350 = vpop.xlane.xlu0 %5349
      %v5351 = vsel %vm3820, %v3306, 0.0
      %5352 = vadd.xlane.f32.xlu0 %v5351
      %v5353 = vpop.xlane.xlu0 %5352
      %v5354 = vsel %vm3820, %v3307, 0.0
      %5355 = vadd.xlane.f32.xlu0 %v5354
      %v5356 = vpop.xlane.xlu0 %5355
      %v5357 = vsel %vm3820, %v3308, 0.0
      %5358 = vadd.xlane.f32.xlu0 %v5357
      %v5359 = vpop.xlane.xlu0 %5358
      %v5360 = vsel %vm3820, %v3309, 0.0
      %5361 = vadd.xlane.f32.xlu0 %v5360
      %v5362 = vpop.xlane.xlu0 %5361
      %v5363 = vsel %vm3820, %v3310, 0.0
      %5364 = vadd.xlane.f32.xlu0 %v5363
      %v5365 = vpop.xlane.xlu0 %5364
      %v5366 = vsel %vm3820, %v3311, 0.0
      %5367 = vadd.xlane.f32.xlu0 %v5366
      %v5368 = vpop.xlane.xlu0 %5367
      %v5369 = vsel %vm3820, %v3312, 0.0
      %5370 = vadd.xlane.f32.xlu0 %v5369
      %v5371 = vpop.xlane.xlu0 %5370
      %v5372 = vsel %vm3820, %v3313, 0.0
      %5373 = vadd.xlane.f32.xlu0 %v5372
      %v5374 = vpop.xlane.xlu0 %5373
      %v5375 = vsel %vm3820, %v3314, 0.0
      %5376 = vadd.xlane.f32.xlu0 %v5375
      %v5377 = vpop.xlane.xlu0 %5376
      %v5378 = vsel %vm3820, %v3315, 0.0
      %5379 = vadd.xlane.f32.xlu0 %v5378
      %v5380 = vpop.xlane.xlu0 %5379
      %v5381 = vsel %vm3820, %v3316, 0.0
      %5382 = vadd.xlane.f32.xlu0 %v5381
      %v5383 = vpop.xlane.xlu0 %5382
      %v5384 = vsel %vm3820, %v3317, 0.0
      %5385 = vadd.xlane.f32.xlu0 %v5384
      %v5386 = vpop.xlane.xlu0 %5385
      %v5387 = vsel %vm3820, %v3318, 0.0
      %5388 = vadd.xlane.f32.xlu0 %v5387
      %v5389 = vpop.xlane.xlu0 %5388
      %v5390 = vsel %vm3820, %v3319, 0.0
      %5391 = vadd.xlane.f32.xlu0 %v5390
      %v5392 = vpop.xlane.xlu0 %5391
      %v5393 = vsel %vm3820, %v3320, 0.0
      %5394 = vadd.xlane.f32.xlu0 %v5393
      %v5395 = vpop.xlane.xlu0 %5394
      %v5396 = vsel %vm3820, %v3321, 0.0
      %5397 = vadd.xlane.f32.xlu0 %v5396
      %v5398 = vpop.xlane.xlu0 %5397
      %v5399 = vsel %vm3820, %v3322, 0.0
      %5400 = vadd.xlane.f32.xlu0 %v5399
      %v5401 = vpop.xlane.xlu0 %5400
      %v5402 = vsel %vm3820, %v3323, 0.0
      %5403 = vadd.xlane.f32.xlu0 %v5402
      %v5404 = vpop.xlane.xlu0 %5403
      %v5405 = vsel %vm3820, %v3324, 0.0
      %5406 = vadd.xlane.f32.xlu0 %v5405
      %v5407 = vpop.xlane.xlu0 %5406
      %v5408 = vsel %vm3820, %v3325, 0.0
      %5409 = vadd.xlane.f32.xlu0 %v5408
      %v5410 = vpop.xlane.xlu0 %5409
      %v5411 = vsel %vm3820, %v3326, 0.0
      %5412 = vadd.xlane.f32.xlu0 %v5411
      %v5413 = vpop.xlane.xlu0 %5412
      %v5414 = vsel %vm3820, %v3327, 0.0
      %5415 = vadd.xlane.f32.xlu0 %v5414
      %v5416 = vpop.xlane.xlu0 %5415
      %v5417 = vsel %vm3820, %v3328, 0.0
      %5418 = vadd.xlane.f32.xlu0 %v5417
      %v5419 = vpop.xlane.xlu0 %5418
      %v5420 = vsel %vm3820, %v3329, 0.0
      %5421 = vadd.xlane.f32.xlu0 %v5420
      %v5422 = vpop.xlane.xlu0 %5421
      %v5423 = vsel %vm3820, %v3330, 0.0
      %5424 = vadd.xlane.f32.xlu0 %v5423
      %v5425 = vpop.xlane.xlu0 %5424
      %v5426 = vsel %vm3820, %v3331, 0.0
      %5427 = vadd.xlane.f32.xlu0 %v5426
      %v5428 = vpop.xlane.xlu0 %5427
      %v5429 = vsel %vm3820, %v3332, 0.0
      %5430 = vadd.xlane.f32.xlu0 %v5429
      %v5431 = vpop.xlane.xlu0 %5430
      %v5432 = vsel %vm3820, %v3333, 0.0
      %5433 = vadd.xlane.f32.xlu0 %v5432
      %v5434 = vpop.xlane.xlu0 %5433
      %v5435 = vsel %vm3820, %v3334, 0.0
      %5436 = vadd.xlane.f32.xlu0 %v5435
      %v5437 = vpop.xlane.xlu0 %5436
      %v5438 = vsel %vm3820, %v3335, 0.0
      %5439 = vadd.xlane.f32.xlu0 %v5438
      %v5440 = vpop.xlane.xlu0 %5439
      %v5441 = vsel %vm3820, %v3336, 0.0
      %5442 = vadd.xlane.f32.xlu0 %v5441
      %v5443 = vpop.xlane.xlu0 %5442
      %v5444 = vsel %vm3820, %v3337, 0.0
      %5445 = vadd.xlane.f32.xlu0 %v5444
      %v5446 = vpop.xlane.xlu0 %5445
      %v5447 = vsel %vm3820, %v3338, 0.0
      %5448 = vadd.xlane.f32.xlu0 %v5447
      %v5449 = vpop.xlane.xlu0 %5448
      %v5450 = vsel %vm3820, %v3339, 0.0
      %5451 = vadd.xlane.f32.xlu0 %v5450
      %v5452 = vpop.xlane.xlu0 %5451
      %v5453 = vsel %vm3820, %v3340, 0.0
      %5454 = vadd.xlane.f32.xlu0 %v5453
      %v5455 = vpop.xlane.xlu0 %5454
      %v5456 = vsel %vm3820, %v3341, 0.0
      %5457 = vadd.xlane.f32.xlu0 %v5456
      %v5458 = vpop.xlane.xlu0 %5457
      %v5459 = vsel %vm3820, %v3342, 0.0
      %5460 = vadd.xlane.f32.xlu0 %v5459
      %v5461 = vpop.xlane.xlu0 %5460
      %v5462 = vsel %vm3820, %v3343, 0.0
      %5463 = vadd.xlane.f32.xlu0 %v5462
      %v5464 = vpop.xlane.xlu0 %5463
      %v5465 = vsel %vm3820, %v3344, 0.0
      %5466 = vadd.xlane.f32.xlu0 %v5465
      %v5467 = vpop.xlane.xlu0 %5466
      %v5468 = vsel %vm3820, %v3345, 0.0
      %5469 = vadd.xlane.f32.xlu0 %v5468
      %v5470 = vpop.xlane.xlu0 %5469
      %v5471 = vsel %vm3820, %v3346, 0.0
      %5472 = vadd.xlane.f32.xlu0 %v5471
      %v5473 = vpop.xlane.xlu0 %5472
      %v5474 = vsel %vm3820, %v3347, 0.0
      %5475 = vadd.xlane.f32.xlu0 %v5474
      %v5476 = vpop.xlane.xlu0 %5475
      %v5477 = vsel %vm3820, %v3348, 0.0
      %5478 = vadd.xlane.f32.xlu0 %v5477
      %v5479 = vpop.xlane.xlu0 %5478
      %v5480 = vsel %vm3820, %v3349, 0.0
      %5481 = vadd.xlane.f32.xlu0 %v5480
      %v5482 = vpop.xlane.xlu0 %5481
      %v5483 = vsel %vm3820, %v3350, 0.0
      %5484 = vadd.xlane.f32.xlu0 %v5483
      %v5485 = vpop.xlane.xlu0 %5484
      %v5486 = vsel %vm3820, %v3351, 0.0
      %5487 = vadd.xlane.f32.xlu0 %v5486
      %v5488 = vpop.xlane.xlu0 %5487
      %v5489 = vsel %vm3820, %v3352, 0.0
      %5490 = vadd.xlane.f32.xlu0 %v5489
      %v5491 = vpop.xlane.xlu0 %5490
      %v5492 = vsel %vm3820, %v3353, 0.0
      %5493 = vadd.xlane.f32.xlu0 %v5492
      %v5494 = vpop.xlane.xlu0 %5493
      %v5495 = vsel %vm3820, %v3354, 0.0
      %5496 = vadd.xlane.f32.xlu0 %v5495
      %v5497 = vpop.xlane.xlu0 %5496
      %v5498 = vsel %vm3820, %v3355, 0.0
      %5499 = vadd.xlane.f32.xlu0 %v5498
      %v5500 = vpop.xlane.xlu0 %5499
      %v5501 = vsel %vm3820, %v3356, 0.0
      %5502 = vadd.xlane.f32.xlu0 %v5501
      %v5503 = vpop.xlane.xlu0 %5502
      %v5504 = vsel %vm3820, %v3357, 0.0
      %5505 = vadd.xlane.f32.xlu0 %v5504
      %v5506 = vpop.xlane.xlu0 %5505
      %v5507 = vsel %vm3820, %v3358, 0.0
      %5508 = vadd.xlane.f32.xlu0 %v5507
      %v5509 = vpop.xlane.xlu0 %5508
      %v5510 = vsel %vm3820, %v3359, 0.0
      %5511 = vadd.xlane.f32.xlu0 %v5510
      %v5512 = vpop.xlane.xlu0 %5511
      %v5513 = vsel %vm3820, %v3360, 0.0
      %5514 = vadd.xlane.f32.xlu0 %v5513
      %v5515 = vpop.xlane.xlu0 %5514
      %v5516 = vsel %vm3820, %v3361, 0.0
      %5517 = vadd.xlane.f32.xlu0 %v5516
      %v5518 = vpop.xlane.xlu0 %5517
      %v5519 = vsel %vm3820, %v3362, 0.0
      %5520 = vadd.xlane.f32.xlu0 %v5519
      %v5521 = vpop.xlane.xlu0 %5520
      %v5522 = vsel %vm3820, %v3363, 0.0
      %5523 = vadd.xlane.f32.xlu0 %v5522
      %v5524 = vpop.xlane.xlu0 %5523
      %v5525 = vsel %vm3820, %v3364, 0.0
      %5526 = vadd.xlane.f32.xlu0 %v5525
      %v5527 = vpop.xlane.xlu0 %5526
      %v5528 = vsel %vm3820, %v3365, 0.0
      %5529 = vadd.xlane.f32.xlu0 %v5528
      %v5530 = vpop.xlane.xlu0 %5529
      %v5531 = vsel %vm3820, %v3366, 0.0
      %5532 = vadd.xlane.f32.xlu0 %v5531
      %v5533 = vpop.xlane.xlu0 %5532
      %v5534 = vsel %vm3820, %v3367, 0.0
      %5535 = vadd.xlane.f32.xlu0 %v5534
      %v5536 = vpop.xlane.xlu0 %5535
      %v5537 = vsel %vm3820, %v3368, 0.0
      %5538 = vadd.xlane.f32.xlu0 %v5537
      %v5539 = vpop.xlane.xlu0 %5538
      %v5540 = vsel %vm3820, %v3369, 0.0
      %5541 = vadd.xlane.f32.xlu0 %v5540
      %v5542 = vpop.xlane.xlu0 %5541
      %v5543 = vsel %vm3820, %v3370, 0.0
      %5544 = vadd.xlane.f32.xlu0 %v5543
      %v5545 = vpop.xlane.xlu0 %5544
      %v5546 = vsel %vm3820, %v3371, 0.0
      %5547 = vadd.xlane.f32.xlu0 %v5546
      %v5548 = vpop.xlane.xlu0 %5547
      %v5549 = vsel %vm3820, %v3372, 0.0
      %5550 = vadd.xlane.f32.xlu0 %v5549
      %v5551 = vpop.xlane.xlu0 %5550
      %v5552 = vsel %vm3820, %v3373, 0.0
      %5553 = vadd.xlane.f32.xlu0 %v5552
      %v5554 = vpop.xlane.xlu0 %5553
      %v5555 = vsel %vm3820, %v3374, 0.0
      %5556 = vadd.xlane.f32.xlu0 %v5555
      %v5557 = vpop.xlane.xlu0 %5556
      %v5558 = vsel %vm3820, %v3375, 0.0
      %5559 = vadd.xlane.f32.xlu0 %v5558
      %v5560 = vpop.xlane.xlu0 %5559
      %v5561 = vsel %vm3820, %v3376, 0.0
      %5562 = vadd.xlane.f32.xlu0 %v5561
      %v5563 = vpop.xlane.xlu0 %5562
      %v5564 = vsel %vm3820, %v3377, 0.0
      %5565 = vadd.xlane.f32.xlu0 %v5564
      %v5566 = vpop.xlane.xlu0 %5565
      %v5567 = vsel %vm3820, %v3378, 0.0
      %5568 = vadd.xlane.f32.xlu0 %v5567
      %v5569 = vpop.xlane.xlu0 %5568
      %v5570 = vsel %vm3820, %v3379, 0.0
      %5571 = vadd.xlane.f32.xlu0 %v5570
      %v5572 = vpop.xlane.xlu0 %5571
      %v5573 = vsel %vm3820, %v3380, 0.0
      %5574 = vadd.xlane.f32.xlu0 %v5573
      %v5575 = vpop.xlane.xlu0 %5574
      %v5576 = vsel %vm3820, %v3381, 0.0
      %5577 = vadd.xlane.f32.xlu0 %v5576
      %v5578 = vpop.xlane.xlu0 %5577
      %v5579 = vsel %vm3820, %v3382, 0.0
      %5580 = vadd.xlane.f32.xlu0 %v5579
      %v5581 = vpop.xlane.xlu0 %5580
      %v5582 = vsel %vm3820, %v3383, 0.0
      %5583 = vadd.xlane.f32.xlu0 %v5582
      %v5584 = vpop.xlane.xlu0 %5583
      %v5585 = vsel %vm3820, %v3384, 0.0
      %5586 = vadd.xlane.f32.xlu0 %v5585
      %v5587 = vpop.xlane.xlu0 %5586
      %v5588 = vsel %vm3820, %v3385, 0.0
      %5589 = vadd.xlane.f32.xlu0 %v5588
      %v5590 = vpop.xlane.xlu0 %5589
      %v5591 = vsel %vm3820, %v3386, 0.0
      %5592 = vadd.xlane.f32.xlu0 %v5591
      %v5593 = vpop.xlane.xlu0 %5592
      %v5594 = vsel %vm3820, %v3387, 0.0
      %5595 = vadd.xlane.f32.xlu0 %v5594
      %v5596 = vpop.xlane.xlu0 %5595
      %v5597 = vsel %vm3820, %v3388, 0.0
      %5598 = vadd.xlane.f32.xlu0 %v5597
      %v5599 = vpop.xlane.xlu0 %5598
      %v5600 = vsel %vm3820, %v3389, 0.0
      %5601 = vadd.xlane.f32.xlu0 %v5600
      %v5602 = vpop.xlane.xlu0 %5601
      %v5603 = vsel %vm3820, %v3390, 0.0
      %5604 = vadd.xlane.f32.xlu0 %v5603
      %v5605 = vpop.xlane.xlu0 %5604
      %v5606 = vsel %vm3820, %v3391, 0.0
      %5607 = vadd.xlane.f32.xlu0 %v5606
      %v5608 = vpop.xlane.xlu0 %5607
      %v5609 = vsel %vm3820, %v3392, 0.0
      %5610 = vadd.xlane.f32.xlu0 %v5609
      %v5611 = vpop.xlane.xlu0 %5610
      %v5612 = vsel %vm3820, %v3393, 0.0
      %5613 = vadd.xlane.f32.xlu0 %v5612
      %v5614 = vpop.xlane.xlu0 %5613
      %v5615 = vsel %vm3820, %v3394, 0.0
      %5616 = vadd.xlane.f32.xlu0 %v5615
      %v5617 = vpop.xlane.xlu0 %5616
      %v5618 = vsel %vm3820, %v3395, 0.0
      %5619 = vadd.xlane.f32.xlu0 %v5618
      %v5620 = vpop.xlane.xlu0 %5619
      %v5621 = vsel %vm3820, %v3396, 0.0
      %5622 = vadd.xlane.f32.xlu0 %v5621
      %v5623 = vpop.xlane.xlu0 %5622
      %v5624 = vsel %vm3820, %v3397, 0.0
      %5625 = vadd.xlane.f32.xlu0 %v5624
      %v5626 = vpop.xlane.xlu0 %5625
      %v5627 = vsel %vm3820, %v3398, 0.0
      %5628 = vadd.xlane.f32.xlu0 %v5627
      %v5629 = vpop.xlane.xlu0 %5628
      %v5630 = vsel %vm3820, %v3399, 0.0
      %5631 = vadd.xlane.f32.xlu0 %v5630
      %v5632 = vpop.xlane.xlu0 %5631
      %v5633 = vsel %vm3820, %v3400, 0.0
      %5634 = vadd.xlane.f32.xlu0 %v5633
      %v5635 = vpop.xlane.xlu0 %5634
      %v5636 = vsel %vm3820, %v3401, 0.0
      %5637 = vadd.xlane.f32.xlu0 %v5636
      %v5638 = vpop.xlane.xlu0 %5637
      %v5639 = vsel %vm3820, %v3402, 0.0
      %5640 = vadd.xlane.f32.xlu0 %v5639
      %v5641 = vpop.xlane.xlu0 %5640
      %v5642 = vsel %vm3820, %v3403, 0.0
      %5643 = vadd.xlane.f32.xlu0 %v5642
      %v5644 = vpop.xlane.xlu0 %5643
      %v5645 = vsel %vm3820, %v3404, 0.0
      %5646 = vadd.xlane.f32.xlu0 %v5645
      %v5647 = vpop.xlane.xlu0 %5646
      %v5648 = vsel %vm3820, %v3405, 0.0
      %5649 = vadd.xlane.f32.xlu0 %v5648
      %v5650 = vpop.xlane.xlu0 %5649
      %v5651 = vsel %vm3820, %v3406, 0.0
      %5652 = vadd.xlane.f32.xlu0 %v5651
      %v5653 = vpop.xlane.xlu0 %5652
      %v5654 = vsel %vm3820, %v3407, 0.0
      %5655 = vadd.xlane.f32.xlu0 %v5654
      %v5656 = vpop.xlane.xlu0 %5655
      %v5657 = vsel %vm3820, %v3408, 0.0
      %5658 = vadd.xlane.f32.xlu0 %v5657
      %v5659 = vpop.xlane.xlu0 %5658
      %v5660 = vsel %vm3820, %v3409, 0.0
      %5661 = vadd.xlane.f32.xlu0 %v5660
      %v5662 = vpop.xlane.xlu0 %5661
      %v5663 = vsel %vm3820, %v3410, 0.0
      %5664 = vadd.xlane.f32.xlu0 %v5663
      %v5665 = vpop.xlane.xlu0 %5664
      %v5666 = vsel %vm3820, %v3411, 0.0
      %5667 = vadd.xlane.f32.xlu0 %v5666
      %v5668 = vpop.xlane.xlu0 %5667
      %v5669 = vsel %vm3820, %v3412, 0.0
      %5670 = vadd.xlane.f32.xlu0 %v5669
      %v5671 = vpop.xlane.xlu0 %5670
      %v5672 = vsel %vm3820, %v3413, 0.0
      %5673 = vadd.xlane.f32.xlu0 %v5672
      %v5674 = vpop.xlane.xlu0 %5673
      %v5675 = vsel %vm3820, %v3414, 0.0
      %5676 = vadd.xlane.f32.xlu0 %v5675
      %v5677 = vpop.xlane.xlu0 %5676
      %v5678 = vsel %vm3820, %v3415, 0.0
      %5679 = vadd.xlane.f32.xlu0 %v5678
      %v5680 = vpop.xlane.xlu0 %5679
      %v5681 = vsel %vm3820, %v3416, 0.0
      %5682 = vadd.xlane.f32.xlu0 %v5681
      %v5683 = vpop.xlane.xlu0 %5682
      %v5684 = vsel %vm3820, %v3417, 0.0
      %5685 = vadd.xlane.f32.xlu0 %v5684
      %v5686 = vpop.xlane.xlu0 %5685
      %v5687 = vsel %vm3820, %v3418, 0.0
      %5688 = vadd.xlane.f32.xlu0 %v5687
      %v5689 = vpop.xlane.xlu0 %5688
      %v5690 = vsel %vm3820, %v3419, 0.0
      %5691 = vadd.xlane.f32.xlu0 %v5690
      %v5692 = vpop.xlane.xlu0 %5691
      %v5693 = vsel %vm3820, %v3420, 0.0
      %5694 = vadd.xlane.f32.xlu0 %v5693
      %v5695 = vpop.xlane.xlu0 %5694
      %v5696 = vsel %vm3820, %v3421, 0.0
      %5697 = vadd.xlane.f32.xlu0 %v5696
      %v5698 = vpop.xlane.xlu0 %5697
      %v5699 = vsel %vm3820, %v3422, 0.0
      %5700 = vadd.xlane.f32.xlu0 %v5699
      %v5701 = vpop.xlane.xlu0 %5700
      %v5702 = vsel %vm3820, %v3423, 0.0
      %5703 = vadd.xlane.f32.xlu0 %v5702
      %v5704 = vpop.xlane.xlu0 %5703
      %v5705 = vsel %vm3820, %v3424, 0.0
      %5706 = vadd.xlane.f32.xlu0 %v5705
      %v5707 = vpop.xlane.xlu0 %5706
      %v5708 = vsel %vm3820, %v3425, 0.0
      %5709 = vadd.xlane.f32.xlu0 %v5708
      %v5710 = vpop.xlane.xlu0 %5709
      %v5711 = vsel %vm3820, %v3426, 0.0
      %5712 = vadd.xlane.f32.xlu0 %v5711
      %v5713 = vpop.xlane.xlu0 %5712
      %v5714 = vsel %vm3820, %v3427, 0.0
      %5715 = vadd.xlane.f32.xlu0 %v5714
      %v5716 = vpop.xlane.xlu0 %5715
      %v5717 = vsel %vm3820, %v3428, 0.0
      %5718 = vadd.xlane.f32.xlu0 %v5717
      %v5719 = vpop.xlane.xlu0 %5718
      %v5720 = vsel %vm3820, %v3429, 0.0
      %5721 = vadd.xlane.f32.xlu0 %v5720
      %v5722 = vpop.xlane.xlu0 %5721
      %v5723 = vsel %vm3820, %v3430, 0.0
      %5724 = vadd.xlane.f32.xlu0 %v5723
      %v5725 = vpop.xlane.xlu0 %5724
      %v5726 = vsel %vm3820, %v3431, 0.0
      %5727 = vadd.xlane.f32.xlu0 %v5726
      %v5728 = vpop.xlane.xlu0 %5727
      %v5729 = vsel %vm3820, %v3432, 0.0
      %5730 = vadd.xlane.f32.xlu0 %v5729
      %v5731 = vpop.xlane.xlu0 %5730
      %v5732 = vsel %vm3820, %v3433, 0.0
      %5733 = vadd.xlane.f32.xlu0 %v5732
      %v5734 = vpop.xlane.xlu0 %5733
      %v5735 = vsel %vm3820, %v3434, 0.0
      %5736 = vadd.xlane.f32.xlu0 %v5735
      %v5737 = vpop.xlane.xlu0 %5736
      %v5738 = vsel %vm3820, %v3435, 0.0
      %5739 = vadd.xlane.f32.xlu0 %v5738
      %v5740 = vpop.xlane.xlu0 %5739
      %v5741 = vsel %vm3820, %v3436, 0.0
      %5742 = vadd.xlane.f32.xlu0 %v5741
      %v5743 = vpop.xlane.xlu0 %5742
      %v5744 = vsel %vm3820, %v3437, 0.0
      %5745 = vadd.xlane.f32.xlu0 %v5744
      %v5746 = vpop.xlane.xlu0 %5745
      %v5747 = vsel %vm3820, %v3438, 0.0
      %5748 = vadd.xlane.f32.xlu0 %v5747
      %v5749 = vpop.xlane.xlu0 %5748
      %v5750 = vsel %vm3820, %v3439, 0.0
      %5751 = vadd.xlane.f32.xlu0 %v5750
      %v5752 = vpop.xlane.xlu0 %5751
      %v5753 = vsel %vm3820, %v3440, 0.0
      %5754 = vadd.xlane.f32.xlu0 %v5753
      %v5755 = vpop.xlane.xlu0 %5754
      %v5756 = vsel %vm3820, %v3441, 0.0
      %5757 = vadd.xlane.f32.xlu0 %v5756
      %v5758 = vpop.xlane.xlu0 %5757
      %v5759 = vsel %vm3820, %v3442, 0.0
      %5760 = vadd.xlane.f32.xlu0 %v5759
      %v5761 = vpop.xlane.xlu0 %5760
      %v5762 = vsel %vm3820, %v3443, 0.0
      %5763 = vadd.xlane.f32.xlu0 %v5762
      %v5764 = vpop.xlane.xlu0 %5763
      %v5765 = vsel %vm3820, %v3444, 0.0
      %5766 = vadd.xlane.f32.xlu0 %v5765
      %v5767 = vpop.xlane.xlu0 %5766
      %v5768 = vsel %vm3820, %v3445, 0.0
      %5769 = vadd.xlane.f32.xlu0 %v5768
      %v5770 = vpop.xlane.xlu0 %5769
      %v5771 = vsel %vm3820, %v3446, 0.0
      %5772 = vadd.xlane.f32.xlu0 %v5771
      %v5773 = vpop.xlane.xlu0 %5772
      %v5774 = vsel %vm3820, %v3447, 0.0
      %5775 = vadd.xlane.f32.xlu0 %v5774
      %v5776 = vpop.xlane.xlu0 %5775
      %v5777 = vsel %vm3820, %v3448, 0.0
      %5778 = vadd.xlane.f32.xlu0 %v5777
      %v5779 = vpop.xlane.xlu0 %5778
      %v5780 = vsel %vm3820, %v3449, 0.0
      %5781 = vadd.xlane.f32.xlu0 %v5780
      %v5782 = vpop.xlane.xlu0 %5781
      %v5783 = vsel %vm3820, %v3450, 0.0
      %5784 = vadd.xlane.f32.xlu0 %v5783
      %v5785 = vpop.xlane.xlu0 %5784
      %v5786 = vsel %vm3820, %v3451, 0.0
      %5787 = vadd.xlane.f32.xlu0 %v5786
      %v5788 = vpop.xlane.xlu0 %5787
      %v5789 = vsel %vm3820, %v3452, 0.0
      %5790 = vadd.xlane.f32.xlu0 %v5789
      %v5791 = vpop.xlane.xlu0 %5790
      %v5792 = vsel %vm3820, %v3453, 0.0
      %5793 = vadd.xlane.f32.xlu0 %v5792
      %v5794 = vpop.xlane.xlu0 %5793
      %v5795 = vsel %vm3820, %v3454, 0.0
      %5796 = vadd.xlane.f32.xlu0 %v5795
      %v5797 = vpop.xlane.xlu0 %5796
      %v5798 = vsel %vm3820, %v3455, 0.0
      %5799 = vadd.xlane.f32.xlu0 %v5798
      %v5800 = vpop.xlane.xlu0 %5799
      %v5801 = vsel %vm3820, %v3456, 0.0
      %5802 = vadd.xlane.f32.xlu0 %v5801
      %v5803 = vpop.xlane.xlu0 %5802
      %v5804 = vsel %vm3820, %v3457, 0.0
      %5805 = vadd.xlane.f32.xlu0 %v5804
      %v5806 = vpop.xlane.xlu0 %5805
      %v5807 = vsel %vm3820, %v3458, 0.0
      %5808 = vadd.xlane.f32.xlu0 %v5807
      %v5809 = vpop.xlane.xlu0 %5808
      %v5810 = vsel %vm3820, %v3459, 0.0
      %5811 = vadd.xlane.f32.xlu0 %v5810
      %v5812 = vpop.xlane.xlu0 %5811
      %v5813 = vsel %vm3820, %v3460, 0.0
      %5814 = vadd.xlane.f32.xlu0 %v5813
      %v5815 = vpop.xlane.xlu0 %5814
      %v5816 = vsel %vm3820, %v3461, 0.0
      %5817 = vadd.xlane.f32.xlu0 %v5816
      %v5818 = vpop.xlane.xlu0 %5817
      %v5819 = vsel %vm3820, %v3462, 0.0
      %5820 = vadd.xlane.f32.xlu0 %v5819
      %v5821 = vpop.xlane.xlu0 %5820
      %v5822 = vsel %vm3820, %v3463, 0.0
      %5823 = vadd.xlane.f32.xlu0 %v5822
      %v5824 = vpop.xlane.xlu0 %5823
      %v5825 = vsel %vm3820, %v3464, 0.0
      %5826 = vadd.xlane.f32.xlu0 %v5825
      %v5827 = vpop.xlane.xlu0 %5826
      %v5828 = vsel %vm3820, %v3465, 0.0
      %5829 = vadd.xlane.f32.xlu0 %v5828
      %v5830 = vpop.xlane.xlu0 %5829
      %v5831 = vsel %vm3820, %v3466, 0.0
      %5832 = vadd.xlane.f32.xlu0 %v5831
      %v5833 = vpop.xlane.xlu0 %5832
      %v5834 = vsel %vm3820, %v3467, 0.0
      %5835 = vadd.xlane.f32.xlu0 %v5834
      %v5836 = vpop.xlane.xlu0 %5835
      %v5837 = vsel %vm3820, %v3468, 0.0
      %5838 = vadd.xlane.f32.xlu0 %v5837
      %v5839 = vpop.xlane.xlu0 %5838
      %v5840 = vsel %vm3820, %v3469, 0.0
      %5841 = vadd.xlane.f32.xlu0 %v5840
      %v5842 = vpop.xlane.xlu0 %5841
      %v5843 = vsel %vm3820, %v3470, 0.0
      %5844 = vadd.xlane.f32.xlu0 %v5843
      %v5845 = vpop.xlane.xlu0 %5844
      %v5846 = vsel %vm3820, %v3471, 0.0
      %5847 = vadd.xlane.f32.xlu0 %v5846
      %v5848 = vpop.xlane.xlu0 %5847
      %v5849 = vsel %vm3820, %v3472, 0.0
      %5850 = vadd.xlane.f32.xlu0 %v5849
      %v5851 = vpop.xlane.xlu0 %5850
      %v5852 = vsel %vm3820, %v3473, 0.0
      %5853 = vadd.xlane.f32.xlu0 %v5852
      %v5854 = vpop.xlane.xlu0 %5853
      %v5855 = vsel %vm3820, %v3474, 0.0
      %5856 = vadd.xlane.f32.xlu0 %v5855
      %v5857 = vpop.xlane.xlu0 %5856
      %v5858 = vsel %vm3820, %v3475, 0.0
      %5859 = vadd.xlane.f32.xlu0 %v5858
      %v5860 = vpop.xlane.xlu0 %5859
      %v5861 = vsel %vm3820, %v3476, 0.0
      %5862 = vadd.xlane.f32.xlu0 %v5861
      %v5863 = vpop.xlane.xlu0 %5862
      %v5864 = vsel %vm3820, %v3477, 0.0
      %5865 = vadd.xlane.f32.xlu0 %v5864
      %v5866 = vpop.xlane.xlu0 %5865
      %v5867 = vsel %vm3820, %v3478, 0.0
      %5868 = vadd.xlane.f32.xlu0 %v5867
      %v5869 = vpop.xlane.xlu0 %5868
      %v5870 = vsel %vm3820, %v3479, 0.0
      %5871 = vadd.xlane.f32.xlu0 %v5870
      %v5872 = vpop.xlane.xlu0 %5871
      %v5873 = vsel %vm3820, %v3480, 0.0
      %5874 = vadd.xlane.f32.xlu0 %v5873
      %v5875 = vpop.xlane.xlu0 %5874
      %v5876 = vsel %vm3820, %v3481, 0.0
      %5877 = vadd.xlane.f32.xlu0 %v5876
      %v5878 = vpop.xlane.xlu0 %5877
      %v5879 = vsel %vm3820, %v3482, 0.0
      %5880 = vadd.xlane.f32.xlu0 %v5879
      %v5881 = vpop.xlane.xlu0 %5880
      %v5882 = vsel %vm3820, %v3483, 0.0
      %5883 = vadd.xlane.f32.xlu0 %v5882
      %v5884 = vpop.xlane.xlu0 %5883
      %v5885 = vsel %vm3820, %v3484, 0.0
      %5886 = vadd.xlane.f32.xlu0 %v5885
      %v5887 = vpop.xlane.xlu0 %5886
      %v5888 = vsel %vm3820, %v3485, 0.0
      %5889 = vadd.xlane.f32.xlu0 %v5888
      %v5890 = vpop.xlane.xlu0 %5889
      %v5891 = vsel %vm3820, %v3486, 0.0
      %5892 = vadd.xlane.f32.xlu0 %v5891
      %v5893 = vpop.xlane.xlu0 %5892
      %v5894 = vsel %vm3820, %v3487, 0.0
      %5895 = vadd.xlane.f32.xlu0 %v5894
      %v5896 = vpop.xlane.xlu0 %5895
      %v5897 = vsel %vm3820, %v3488, 0.0
      %5898 = vadd.xlane.f32.xlu0 %v5897
      %v5899 = vpop.xlane.xlu0 %5898
      %v5900 = vsel %vm3820, %v3489, 0.0
      %5901 = vadd.xlane.f32.xlu0 %v5900
      %v5902 = vpop.xlane.xlu0 %5901
      %v5903 = vsel %vm3820, %v3490, 0.0
      %5904 = vadd.xlane.f32.xlu0 %v5903
      %v5905 = vpop.xlane.xlu0 %5904
      %v5906 = vsel %vm3820, %v3491, 0.0
      %5907 = vadd.xlane.f32.xlu0 %v5906
      %v5908 = vpop.xlane.xlu0 %5907
      %v5909 = vsel %vm3820, %v3492, 0.0
      %5910 = vadd.xlane.f32.xlu0 %v5909
      %v5911 = vpop.xlane.xlu0 %5910
      %v5912 = vsel %vm3820, %v3493, 0.0
      %5913 = vadd.xlane.f32.xlu0 %v5912
      %v5914 = vpop.xlane.xlu0 %5913
      %v5915 = vsel %vm3820, %v3494, 0.0
      %5916 = vadd.xlane.f32.xlu0 %v5915
      %v5917 = vpop.xlane.xlu0 %5916
      %v5918 = vsel %vm3820, %v3495, 0.0
      %5919 = vadd.xlane.f32.xlu0 %v5918
      %v5920 = vpop.xlane.xlu0 %5919
      %v5921 = vsel %vm3820, %v3496, 0.0
      %5922 = vadd.xlane.f32.xlu0 %v5921
      %v5923 = vpop.xlane.xlu0 %5922
      %v5924 = vsel %vm3820, %v3497, 0.0
      %5925 = vadd.xlane.f32.xlu0 %v5924
      %v5926 = vpop.xlane.xlu0 %5925
      %v5927 = vsel %vm3820, %v3498, 0.0
      %5928 = vadd.xlane.f32.xlu0 %v5927
      %v5929 = vpop.xlane.xlu0 %5928
      %v5930 = vsel %vm3820, %v3499, 0.0
      %5931 = vadd.xlane.f32.xlu0 %v5930
      %v5932 = vpop.xlane.xlu0 %5931
      %v5933 = vsel %vm3820, %v3500, 0.0
      %5934 = vadd.xlane.f32.xlu0 %v5933
      %v5935 = vpop.xlane.xlu0 %5934
      %v5936 = vsel %vm3820, %v3501, 0.0
      %5937 = vadd.xlane.f32.xlu0 %v5936
      %v5938 = vpop.xlane.xlu0 %5937
      %v5939 = vsel %vm3820, %v3502, 0.0
      %5940 = vadd.xlane.f32.xlu0 %v5939
      %v5941 = vpop.xlane.xlu0 %5940
      %v5942 = vsel %vm3820, %v3503, 0.0
      %5943 = vadd.xlane.f32.xlu0 %v5942
      %v5944 = vpop.xlane.xlu0 %5943
      %v5945 = vsel %vm3820, %v3504, 0.0
      %5946 = vadd.xlane.f32.xlu0 %v5945
      %v5947 = vpop.xlane.xlu0 %5946
      %v5948 = vsel %vm3820, %v3505, 0.0
      %5949 = vadd.xlane.f32.xlu0 %v5948
      %v5950 = vpop.xlane.xlu0 %5949
      %v5951 = vsel %vm3820, %v3506, 0.0
      %5952 = vadd.xlane.f32.xlu0 %v5951
      %v5953 = vpop.xlane.xlu0 %5952
      %v5954 = vsel %vm3820, %v3507, 0.0
      %5955 = vadd.xlane.f32.xlu0 %v5954
      %v5956 = vpop.xlane.xlu0 %5955
      %v5957 = vsel %vm3820, %v3508, 0.0
      %5958 = vadd.xlane.f32.xlu0 %v5957
      %v5959 = vpop.xlane.xlu0 %5958
      %v5960 = vsel %vm3820, %v3509, 0.0
      %5961 = vadd.xlane.f32.xlu0 %v5960
      %v5962 = vpop.xlane.xlu0 %5961
      %v5963 = vsel %vm3820, %v3510, 0.0
      %5964 = vadd.xlane.f32.xlu0 %v5963
      %v5965 = vpop.xlane.xlu0 %5964
      %v5966 = vsel %vm3820, %v3511, 0.0
      %5967 = vadd.xlane.f32.xlu0 %v5966
      %v5968 = vpop.xlane.xlu0 %5967
      %v5969 = vsel %vm3820, %v3512, 0.0
      %5970 = vadd.xlane.f32.xlu0 %v5969
      %v5971 = vpop.xlane.xlu0 %5970
      %v5972 = vsel %vm3820, %v3513, 0.0
      %5973 = vadd.xlane.f32.xlu0 %v5972
      %v5974 = vpop.xlane.xlu0 %5973
      %v5975 = vsel %vm3820, %v3514, 0.0
      %5976 = vadd.xlane.f32.xlu0 %v5975
      %v5977 = vpop.xlane.xlu0 %5976
      %v5978 = vsel %vm3820, %v3515, 0.0
      %5979 = vadd.xlane.f32.xlu0 %v5978
      %v5980 = vpop.xlane.xlu0 %5979
      %v5981 = vsel %vm3820, %v3516, 0.0
      %5982 = vadd.xlane.f32.xlu0 %v5981
      %v5983 = vpop.xlane.xlu0 %5982
      %v5984 = vsel %vm3820, %v3517, 0.0
      %5985 = vadd.xlane.f32.xlu0 %v5984
      %v5986 = vpop.xlane.xlu0 %5985
      %v5987 = vsel %vm3820, %v3518, 0.0
      %5988 = vadd.xlane.f32.xlu0 %v5987
      %v5989 = vpop.xlane.xlu0 %5988
      %v5990 = vsel %vm3820, %v3519, 0.0
      %5991 = vadd.xlane.f32.xlu0 %v5990
      %v5992 = vpop.xlane.xlu0 %5991
      %v5993 = vsel %vm3820, %v3520, 0.0
      %5994 = vadd.xlane.f32.xlu0 %v5993
      %v5995 = vpop.xlane.xlu0 %5994
      %v5996 = vsel %vm3820, %v3521, 0.0
      %5997 = vadd.xlane.f32.xlu0 %v5996
      %v5998 = vpop.xlane.xlu0 %5997
      %v5999 = vsel %vm3820, %v3522, 0.0
      %6000 = vadd.xlane.f32.xlu0 %v5999
      %v6001 = vpop.xlane.xlu0 %6000
      %v6002 = vsel %vm3820, %v3523, 0.0
      %6003 = vadd.xlane.f32.xlu0 %v6002
      %v6004 = vpop.xlane.xlu0 %6003
      %v6005 = vsel %vm3820, %v3524, 0.0
      %6006 = vadd.xlane.f32.xlu0 %v6005
      %v6007 = vpop.xlane.xlu0 %6006
      %v6008 = vsel %vm3820, %v3525, 0.0
      %6009 = vadd.xlane.f32.xlu0 %v6008
      %v6010 = vpop.xlane.xlu0 %6009
      %v6011 = vsel %vm3820, %v3526, 0.0
      %6012 = vadd.xlane.f32.xlu0 %v6011
      %v6013 = vpop.xlane.xlu0 %6012
      %v6014 = vsel %vm3820, %v3527, 0.0
      %6015 = vadd.xlane.f32.xlu0 %v6014
      %v6016 = vpop.xlane.xlu0 %6015
      %v6017 = vsel %vm3820, %v3528, 0.0
      %6018 = vadd.xlane.f32.xlu0 %v6017
      %v6019 = vpop.xlane.xlu0 %6018
      %v6020 = vsel %vm3820, %v3529, 0.0
      %6021 = vadd.xlane.f32.xlu0 %v6020
      %v6022 = vpop.xlane.xlu0 %6021
      %v6023 = vsel %vm3820, %v3530, 0.0
      %6024 = vadd.xlane.f32.xlu0 %v6023
      %v6025 = vpop.xlane.xlu0 %6024
      %v6026 = vsel %vm3820, %v3531, 0.0
      %6027 = vadd.xlane.f32.xlu0 %v6026
      %v6028 = vpop.xlane.xlu0 %6027
      %v6029 = vsel %vm3820, %v3532, 0.0
      %6030 = vadd.xlane.f32.xlu0 %v6029
      %v6031 = vpop.xlane.xlu0 %6030
      %v6032 = vsel %vm3820, %v3533, 0.0
      %6033 = vadd.xlane.f32.xlu0 %v6032
      %v6034 = vpop.xlane.xlu0 %6033
      %v6035 = vsel %vm3820, %v3534, 0.0
      %6036 = vadd.xlane.f32.xlu0 %v6035
      %v6037 = vpop.xlane.xlu0 %6036
      %v6038 = vsel %vm3820, %v3535, 0.0
      %6039 = vadd.xlane.f32.xlu0 %v6038
      %v6040 = vpop.xlane.xlu0 %6039
      %v6041 = vsel %vm3820, %v3536, 0.0
      %6042 = vadd.xlane.f32.xlu0 %v6041
      %v6043 = vpop.xlane.xlu0 %6042
      %v6044 = vsel %vm3820, %v3537, 0.0
      %6045 = vadd.xlane.f32.xlu0 %v6044
      %v6046 = vpop.xlane.xlu0 %6045
      %v6047 = vsel %vm3820, %v3538, 0.0
      %6048 = vadd.xlane.f32.xlu0 %v6047
      %v6049 = vpop.xlane.xlu0 %6048
      %v6050 = vsel %vm3820, %v3539, 0.0
      %6051 = vadd.xlane.f32.xlu0 %v6050
      %v6052 = vpop.xlane.xlu0 %6051
      %v6053 = vsel %vm3820, %v3540, 0.0
      %6054 = vadd.xlane.f32.xlu0 %v6053
      %v6055 = vpop.xlane.xlu0 %6054
      %v6056 = vsel %vm3820, %v3541, 0.0
      %6057 = vadd.xlane.f32.xlu0 %v6056
      %v6058 = vpop.xlane.xlu0 %6057
      %v6059 = vsel %vm3820, %v3542, 0.0
      %6060 = vadd.xlane.f32.xlu0 %v6059
      %v6061 = vpop.xlane.xlu0 %6060
      %v6062 = vsel %vm3820, %v3543, 0.0
      %6063 = vadd.xlane.f32.xlu0 %v6062
      %v6064 = vpop.xlane.xlu0 %6063
      %v6065 = vsel %vm3820, %v3544, 0.0
      %6066 = vadd.xlane.f32.xlu0 %v6065
      %v6067 = vpop.xlane.xlu0 %6066
      %v6068 = vsel %vm3820, %v3545, 0.0
      %6069 = vadd.xlane.f32.xlu0 %v6068
      %v6070 = vpop.xlane.xlu0 %6069
      %v6071 = vsel %vm3820, %v3546, 0.0
      %6072 = vadd.xlane.f32.xlu0 %v6071
      %v6073 = vpop.xlane.xlu0 %6072
      %v6074 = vsel %vm3820, %v3547, 0.0
      %6075 = vadd.xlane.f32.xlu0 %v6074
      %v6076 = vpop.xlane.xlu0 %6075
      %v6077 = vsel %vm3820, %v3548, 0.0
      %6078 = vadd.xlane.f32.xlu0 %v6077
      %v6079 = vpop.xlane.xlu0 %6078
      %v6080 = vsel %vm3820, %v3549, 0.0
      %6081 = vadd.xlane.f32.xlu0 %v6080
      %v6082 = vpop.xlane.xlu0 %6081
      %v6083 = vsel %vm3820, %v3550, 0.0
      %6084 = vadd.xlane.f32.xlu0 %v6083
      %v6085 = vpop.xlane.xlu0 %6084
      %v6086 = vsel %vm3820, %v3551, 0.0
      %6087 = vadd.xlane.f32.xlu0 %v6086
      %v6088 = vpop.xlane.xlu0 %6087
      %v6089 = vsel %vm3820, %v3552, 0.0
      %6090 = vadd.xlane.f32.xlu0 %v6089
      %v6091 = vpop.xlane.xlu0 %6090
      %v6092 = vsel %vm3820, %v3553, 0.0
      %6093 = vadd.xlane.f32.xlu0 %v6092
      %v6094 = vpop.xlane.xlu0 %6093
      %v6095 = vsel %vm3820, %v3554, 0.0
      %6096 = vadd.xlane.f32.xlu0 %v6095
      %v6097 = vpop.xlane.xlu0 %6096
      %v6098 = vsel %vm3820, %v3555, 0.0
      %6099 = vadd.xlane.f32.xlu0 %v6098
      %v6100 = vpop.xlane.xlu0 %6099
      %v6101 = vsel %vm3820, %v3556, 0.0
      %6102 = vadd.xlane.f32.xlu0 %v6101
      %v6103 = vpop.xlane.xlu0 %6102
      %v6104 = vsel %vm3820, %v3557, 0.0
      %6105 = vadd.xlane.f32.xlu0 %v6104
      %v6106 = vpop.xlane.xlu0 %6105
      %v6107 = vsel %vm3820, %v3558, 0.0
      %6108 = vadd.xlane.f32.xlu0 %v6107
      %v6109 = vpop.xlane.xlu0 %6108
      %v6110 = vsel %vm3820, %v3559, 0.0
      %6111 = vadd.xlane.f32.xlu0 %v6110
      %v6112 = vpop.xlane.xlu0 %6111
      %v6113 = vsel %vm3820, %v3560, 0.0
      %6114 = vadd.xlane.f32.xlu0 %v6113
      %v6115 = vpop.xlane.xlu0 %6114
      %v6116 = vsel %vm3820, %v3561, 0.0
      %6117 = vadd.xlane.f32.xlu0 %v6116
      %v6118 = vpop.xlane.xlu0 %6117
      %v6119 = vsel %vm3820, %v3562, 0.0
      %6120 = vadd.xlane.f32.xlu0 %v6119
      %v6121 = vpop.xlane.xlu0 %6120
      %v6122 = vsel %vm3820, %v3563, 0.0
      %6123 = vadd.xlane.f32.xlu0 %v6122
      %v6124 = vpop.xlane.xlu0 %6123
      %v6125 = vsel %vm3820, %v3564, 0.0
      %6126 = vadd.xlane.f32.xlu0 %v6125
      %v6127 = vpop.xlane.xlu0 %6126
      %v6128 = vsel %vm3820, %v3565, 0.0
      %6129 = vadd.xlane.f32.xlu0 %v6128
      %v6130 = vpop.xlane.xlu0 %6129
      %v6131 = vsel %vm3820, %v3566, 0.0
      %6132 = vadd.xlane.f32.xlu0 %v6131
      %v6133 = vpop.xlane.xlu0 %6132
      %v6134 = vsel %vm3820, %v3567, 0.0
      %6135 = vadd.xlane.f32.xlu0 %v6134
      %v6136 = vpop.xlane.xlu0 %6135
      %v6137 = vsel %vm3820, %v3568, 0.0
      %6138 = vadd.xlane.f32.xlu0 %v6137
      %v6139 = vpop.xlane.xlu0 %6138
      %v6140 = vsel %vm3820, %v3569, 0.0
      %6141 = vadd.xlane.f32.xlu0 %v6140
      %v6142 = vpop.xlane.xlu0 %6141
      %v6143 = vsel %vm3820, %v3570, 0.0
      %6144 = vadd.xlane.f32.xlu0 %v6143
      %v6145 = vpop.xlane.xlu0 %6144
      %v6146 = vsel %vm3820, %v3571, 0.0
      %6147 = vadd.xlane.f32.xlu0 %v6146
      %v6148 = vpop.xlane.xlu0 %6147
      %v6149 = vsel %vm3820, %v3572, 0.0
      %6150 = vadd.xlane.f32.xlu0 %v6149
      %v6151 = vpop.xlane.xlu0 %6150
      %v6152 = vsel %vm3820, %v3573, 0.0
      %6153 = vadd.xlane.f32.xlu0 %v6152
      %v6154 = vpop.xlane.xlu0 %6153
      %v6155 = vsel %vm3820, %v3574, 0.0
      %6156 = vadd.xlane.f32.xlu0 %v6155
      %v6157 = vpop.xlane.xlu0 %6156
      %v6158 = vsel %vm3820, %v3575, 0.0
      %6159 = vadd.xlane.f32.xlu0 %v6158
      %v6160 = vpop.xlane.xlu0 %6159
      %v6161 = vsel %vm3820, %v3576, 0.0
      %6162 = vadd.xlane.f32.xlu0 %v6161
      %v6163 = vpop.xlane.xlu0 %6162
      %v6164 = vsel %vm3820, %v3577, 0.0
      %6165 = vadd.xlane.f32.xlu0 %v6164
      %v6166 = vpop.xlane.xlu0 %6165
      %v6167 = vsel %vm3820, %v3578, 0.0
      %6168 = vadd.xlane.f32.xlu0 %v6167
      %v6169 = vpop.xlane.xlu0 %6168
      %v6170 = vsel %vm3820, %v3579, 0.0
      %6171 = vadd.xlane.f32.xlu0 %v6170
      %v6172 = vpop.xlane.xlu0 %6171
      %v6173 = vsel %vm3820, %v3580, 0.0
      %6174 = vadd.xlane.f32.xlu0 %v6173
      %v6175 = vpop.xlane.xlu0 %6174
      %v6176 = vsel %vm3820, %v3581, 0.0
      %6177 = vadd.xlane.f32.xlu0 %v6176
      %v6178 = vpop.xlane.xlu0 %6177
      %v6179 = vsel %vm3820, %v3582, 0.0
      %6180 = vadd.xlane.f32.xlu0 %v6179
      %v6181 = vpop.xlane.xlu0 %6180
      %v6182 = vsel %vm3820, %v3583, 0.0
      %6183 = vadd.xlane.f32.xlu0 %v6182
      %v6184 = vpop.xlane.xlu0 %6183
      %v6185 = vsel %vm3820, %v3584, 0.0
      %6186 = vadd.xlane.f32.xlu0 %v6185
      %v6187 = vpop.xlane.xlu0 %6186
      %v6188 = vsel %vm3820, %v3585, 0.0
      %6189 = vadd.xlane.f32.xlu0 %v6188
      %v6190 = vpop.xlane.xlu0 %6189
      %v6191 = vsel %vm3820, %v3586, 0.0
      %6192 = vadd.xlane.f32.xlu0 %v6191
      %v6193 = vpop.xlane.xlu0 %6192
      %v6194 = vsel %vm3820, %v3587, 0.0
      %6195 = vadd.xlane.f32.xlu0 %v6194
      %v6196 = vpop.xlane.xlu0 %6195
      %v6197 = vsel %vm3820, %v3588, 0.0
      %6198 = vadd.xlane.f32.xlu0 %v6197
      %v6199 = vpop.xlane.xlu0 %6198
      %v6200 = vsel %vm3820, %v3589, 0.0
      %6201 = vadd.xlane.f32.xlu0 %v6200
      %v6202 = vpop.xlane.xlu0 %6201
      %v6203 = vsel %vm3820, %v3590, 0.0
      %6204 = vadd.xlane.f32.xlu0 %v6203
      %v6205 = vpop.xlane.xlu0 %6204
      %v6206 = vsel %vm3820, %v3591, 0.0
      %6207 = vadd.xlane.f32.xlu0 %v6206
      %v6208 = vpop.xlane.xlu0 %6207
      %v6209 = vsel %vm3820, %v3592, 0.0
      %6210 = vadd.xlane.f32.xlu0 %v6209
      %v6211 = vpop.xlane.xlu0 %6210
      %v6212 = vsel %vm3820, %v3593, 0.0
      %6213 = vadd.xlane.f32.xlu0 %v6212
      %v6214 = vpop.xlane.xlu0 %6213
      %v6215 = vsel %vm3820, %v3594, 0.0
      %6216 = vadd.xlane.f32.xlu0 %v6215
      %v6217 = vpop.xlane.xlu0 %6216
      %v6218 = vsel %vm3820, %v3595, 0.0
      %6219 = vadd.xlane.f32.xlu0 %v6218
      %v6220 = vpop.xlane.xlu0 %6219
      %v6221 = vsel %vm3820, %v3596, 0.0
      %6222 = vadd.xlane.f32.xlu0 %v6221
      %v6223 = vpop.xlane.xlu0 %6222
      %v6224 = vsel %vm3820, %v3597, 0.0
      %6225 = vadd.xlane.f32.xlu0 %v6224
      %v6226 = vpop.xlane.xlu0 %6225
      %v6227 = vsel %vm3820, %v3598, 0.0
      %6228 = vadd.xlane.f32.xlu0 %v6227
      %v6229 = vpop.xlane.xlu0 %6228
      %v6230 = vsel %vm3820, %v3599, 0.0
      %6231 = vadd.xlane.f32.xlu0 %v6230
      %v6232 = vpop.xlane.xlu0 %6231
      %v6233 = vsel %vm3820, %v3600, 0.0
      %6234 = vadd.xlane.f32.xlu0 %v6233
      %v6235 = vpop.xlane.xlu0 %6234
      %v6236 = vsel %vm3820, %v3601, 0.0
      %6237 = vadd.xlane.f32.xlu0 %v6236
      %v6238 = vpop.xlane.xlu0 %6237
      %v6239 = vsel %vm3820, %v3602, 0.0
      %6240 = vadd.xlane.f32.xlu0 %v6239
      %v6241 = vpop.xlane.xlu0 %6240
      %v6242 = vsel %vm3820, %v3603, 0.0
      %6243 = vadd.xlane.f32.xlu0 %v6242
      %v6244 = vpop.xlane.xlu0 %6243
      %v6245 = vsel %vm3820, %v3604, 0.0
      %6246 = vadd.xlane.f32.xlu0 %v6245
      %v6247 = vpop.xlane.xlu0 %6246
      %v6248 = vsel %vm3820, %v3605, 0.0
      %6249 = vadd.xlane.f32.xlu0 %v6248
      %v6250 = vpop.xlane.xlu0 %6249
      %v6251 = vsel %vm3820, %v3606, 0.0
      %6252 = vadd.xlane.f32.xlu0 %v6251
      %v6253 = vpop.xlane.xlu0 %6252
      %v6254 = vsel %vm3820, %v3607, 0.0
      %6255 = vadd.xlane.f32.xlu0 %v6254
      %v6256 = vpop.xlane.xlu0 %6255
      %v6257 = vsel %vm3820, %v3608, 0.0
      %6258 = vadd.xlane.f32.xlu0 %v6257
      %v6259 = vpop.xlane.xlu0 %6258
      %v6260 = vsel %vm3820, %v3609, 0.0
      %6261 = vadd.xlane.f32.xlu0 %v6260
      %v6262 = vpop.xlane.xlu0 %6261
      %v6263 = vsel %vm3820, %v3610, 0.0
      %6264 = vadd.xlane.f32.xlu0 %v6263
      %v6265 = vpop.xlane.xlu0 %6264
      %v6266 = vsel %vm3820, %v3611, 0.0
      %6267 = vadd.xlane.f32.xlu0 %v6266
      %v6268 = vpop.xlane.xlu0 %6267
      %v6269 = vsel %vm3820, %v3612, 0.0
      %6270 = vadd.xlane.f32.xlu0 %v6269
      %v6271 = vpop.xlane.xlu0 %6270
      %v6272 = vsel %vm3820, %v3613, 0.0
      %6273 = vadd.xlane.f32.xlu0 %v6272
      %v6274 = vpop.xlane.xlu0 %6273
      %v6275 = vsel %vm3820, %v3614, 0.0
      %6276 = vadd.xlane.f32.xlu0 %v6275
      %v6277 = vpop.xlane.xlu0 %6276
      %v6278 = vsel %vm3820, %v3615, 0.0
      %6279 = vadd.xlane.f32.xlu0 %v6278
      %v6280 = vpop.xlane.xlu0 %6279
      %v6281 = vsel %vm3820, %v3616, 0.0
      %6282 = vadd.xlane.f32.xlu0 %v6281
      %v6283 = vpop.xlane.xlu0 %6282
      %v6284 = vsel %vm3820, %v3617, 0.0
      %6285 = vadd.xlane.f32.xlu0 %v6284
      %v6286 = vpop.xlane.xlu0 %6285
      %v6287 = vsel %vm3820, %v3618, 0.0
      %6288 = vadd.xlane.f32.xlu0 %v6287
      %v6289 = vpop.xlane.xlu0 %6288
      %v6290 = vsel %vm3820, %v3619, 0.0
      %6291 = vadd.xlane.f32.xlu0 %v6290
      %v6292 = vpop.xlane.xlu0 %6291
      %v6293 = vsel %vm3820, %v3620, 0.0
      %6294 = vadd.xlane.f32.xlu0 %v6293
      %v6295 = vpop.xlane.xlu0 %6294
      %v6296 = vsel %vm3820, %v3621, 0.0
      %6297 = vadd.xlane.f32.xlu0 %v6296
      %v6298 = vpop.xlane.xlu0 %6297
      %v6299 = vsel %vm3820, %v3622, 0.0
      %6300 = vadd.xlane.f32.xlu0 %v6299
      %v6301 = vpop.xlane.xlu0 %6300
      %v6302 = vsel %vm3820, %v3623, 0.0
      %6303 = vadd.xlane.f32.xlu0 %v6302
      %v6304 = vpop.xlane.xlu0 %6303
      %v6305 = vsel %vm3820, %v3624, 0.0
      %6306 = vadd.xlane.f32.xlu0 %v6305
      %v6307 = vpop.xlane.xlu0 %6306
      %v6308 = vsel %vm3820, %v3625, 0.0
      %6309 = vadd.xlane.f32.xlu0 %v6308
      %v6310 = vpop.xlane.xlu0 %6309
      %v6311 = vsel %vm3820, %v3626, 0.0
      %6312 = vadd.xlane.f32.xlu0 %v6311
      %v6313 = vpop.xlane.xlu0 %6312
      %v6314 = vsel %vm3820, %v3627, 0.0
      %6315 = vadd.xlane.f32.xlu0 %v6314
      %v6316 = vpop.xlane.xlu0 %6315
      %v6317 = vsel %vm3820, %v3628, 0.0
      %6318 = vadd.xlane.f32.xlu0 %v6317
      %v6319 = vpop.xlane.xlu0 %6318
      %v6320 = vsel %vm3820, %v3629, 0.0
      %6321 = vadd.xlane.f32.xlu0 %v6320
      %v6322 = vpop.xlane.xlu0 %6321
      %v6323 = vsel %vm3820, %v3630, 0.0
      %6324 = vadd.xlane.f32.xlu0 %v6323
      %v6325 = vpop.xlane.xlu0 %6324
      %v6326 = vsel %vm3820, %v3631, 0.0
      %6327 = vadd.xlane.f32.xlu0 %v6326
      %v6328 = vpop.xlane.xlu0 %6327
      %v6329 = vsel %vm3820, %v3632, 0.0
      %6330 = vadd.xlane.f32.xlu0 %v6329
      %v6331 = vpop.xlane.xlu0 %6330
      %v6332 = vsel %vm3820, %v3633, 0.0
      %6333 = vadd.xlane.f32.xlu0 %v6332
      %v6334 = vpop.xlane.xlu0 %6333
      %v6335 = vsel %vm3820, %v3634, 0.0
      %6336 = vadd.xlane.f32.xlu0 %v6335
      %v6337 = vpop.xlane.xlu0 %6336
      %v6338 = vsel %vm3820, %v3635, 0.0
      %6339 = vadd.xlane.f32.xlu0 %v6338
      %v6340 = vpop.xlane.xlu0 %6339
      %v6341 = vsel %vm3820, %v3636, 0.0
      %6342 = vadd.xlane.f32.xlu0 %v6341
      %v6343 = vpop.xlane.xlu0 %6342
      %v6344 = vsel %vm3820, %v3637, 0.0
      %6345 = vadd.xlane.f32.xlu0 %v6344
      %v6346 = vpop.xlane.xlu0 %6345
      %v6347 = vsel %vm3820, %v3638, 0.0
      %6348 = vadd.xlane.f32.xlu0 %v6347
      %v6349 = vpop.xlane.xlu0 %6348
      %v6350 = vsel %vm3820, %v3639, 0.0
      %6351 = vadd.xlane.f32.xlu0 %v6350
      %v6352 = vpop.xlane.xlu0 %6351
      %v6353 = vsel %vm3820, %v3640, 0.0
      %6354 = vadd.xlane.f32.xlu0 %v6353
      %v6355 = vpop.xlane.xlu0 %6354
      %v6356 = vsel %vm3820, %v3641, 0.0
      %6357 = vadd.xlane.f32.xlu0 %v6356
      %v6358 = vpop.xlane.xlu0 %6357
      %v6359 = vsel %vm3820, %v3642, 0.0
      %6360 = vadd.xlane.f32.xlu0 %v6359
      %v6361 = vpop.xlane.xlu0 %6360
      %v6362 = vsel %vm3820, %v3643, 0.0
      %6363 = vadd.xlane.f32.xlu0 %v6362
      %v6364 = vpop.xlane.xlu0 %6363
      %v6365 = vsel %vm3820, %v3644, 0.0
      %6366 = vadd.xlane.f32.xlu0 %v6365
      %v6367 = vpop.xlane.xlu0 %6366
      %v6368 = vsel %vm3820, %v3645, 0.0
      %6369 = vadd.xlane.f32.xlu0 %v6368
      %v6370 = vpop.xlane.xlu0 %6369
      %v6371 = vsel %vm3820, %v3646, 0.0
      %6372 = vadd.xlane.f32.xlu0 %v6371
      %v6373 = vpop.xlane.xlu0 %6372
      %v6374 = vsel %vm3820, %v3647, 0.0
      %6375 = vadd.xlane.f32.xlu0 %v6374
      %v6376 = vpop.xlane.xlu0 %6375
      %v6377 = vsel %vm3820, %v3648, 0.0
      %6378 = vadd.xlane.f32.xlu0 %v6377
      %v6379 = vpop.xlane.xlu0 %6378
      %v6380 = vsel %vm3820, %v3649, 0.0
      %6381 = vadd.xlane.f32.xlu0 %v6380
      %v6382 = vpop.xlane.xlu0 %6381
      %v6383 = vsel %vm3820, %v3650, 0.0
      %6384 = vadd.xlane.f32.xlu0 %v6383
      %v6385 = vpop.xlane.xlu0 %6384
      %v6386 = vsel %vm3820, %v3651, 0.0
      %6387 = vadd.xlane.f32.xlu0 %v6386
      %v6388 = vpop.xlane.xlu0 %6387
      %v6389 = vsel %vm3820, %v3652, 0.0
      %6390 = vadd.xlane.f32.xlu0 %v6389
      %v6391 = vpop.xlane.xlu0 %6390
      %v6392 = vsel %vm3820, %v3653, 0.0
      %6393 = vadd.xlane.f32.xlu0 %v6392
      %v6394 = vpop.xlane.xlu0 %6393
      %v6395 = vsel %vm3820, %v3654, 0.0
      %6396 = vadd.xlane.f32.xlu0 %v6395
      %v6397 = vpop.xlane.xlu0 %6396
      %v6398 = vsel %vm3820, %v3655, 0.0
      %6399 = vadd.xlane.f32.xlu0 %v6398
      %v6400 = vpop.xlane.xlu0 %6399
      %v6401 = vsel %vm3820, %v3656, 0.0
      %6402 = vadd.xlane.f32.xlu0 %v6401
      %v6403 = vpop.xlane.xlu0 %6402
      %v6404 = vsel %vm3820, %v3657, 0.0
      %6405 = vadd.xlane.f32.xlu0 %v6404
      %v6406 = vpop.xlane.xlu0 %6405
      %v6407 = vsel %vm3820, %v3658, 0.0
      %6408 = vadd.xlane.f32.xlu0 %v6407
      %v6409 = vpop.xlane.xlu0 %6408
      %v6410 = vsel %vm3820, %v3659, 0.0
      %6411 = vadd.xlane.f32.xlu0 %v6410
      %v6412 = vpop.xlane.xlu0 %6411
      %v6413 = vsel %vm3820, %v3660, 0.0
      %6414 = vadd.xlane.f32.xlu0 %v6413
      %v6415 = vpop.xlane.xlu0 %6414
      %v6416 = vsel %vm3820, %v3661, 0.0
      %6417 = vadd.xlane.f32.xlu0 %v6416
      %v6418 = vpop.xlane.xlu0 %6417
      %v6419 = vsel %vm3820, %v3662, 0.0
      %6420 = vadd.xlane.f32.xlu0 %v6419
      %v6421 = vpop.xlane.xlu0 %6420
      %v6422 = vsel %vm3820, %v3663, 0.0
      %6423 = vadd.xlane.f32.xlu0 %v6422
      %v6424 = vpop.xlane.xlu0 %6423
      %v6425 = vsel %vm3820, %v3664, 0.0
      %6426 = vadd.xlane.f32.xlu0 %v6425
      %v6427 = vpop.xlane.xlu0 %6426
      %v6428 = vsel %vm3820, %v3665, 0.0
      %6429 = vadd.xlane.f32.xlu0 %v6428
      %v6430 = vpop.xlane.xlu0 %6429
      %v6431 = vsel %vm3820, %v3666, 0.0
      %6432 = vadd.xlane.f32.xlu0 %v6431
      %v6433 = vpop.xlane.xlu0 %6432
      %v6434 = vsel %vm3820, %v3667, 0.0
      %6435 = vadd.xlane.f32.xlu0 %v6434
      %v6436 = vpop.xlane.xlu0 %6435
      %v6437 = vsel %vm3820, %v3668, 0.0
      %6438 = vadd.xlane.f32.xlu0 %v6437
      %v6439 = vpop.xlane.xlu0 %6438
      %v6440 = vsel %vm3820, %v3669, 0.0
      %6441 = vadd.xlane.f32.xlu0 %v6440
      %v6442 = vpop.xlane.xlu0 %6441
      %v6443 = vsel %vm3820, %v3670, 0.0
      %6444 = vadd.xlane.f32.xlu0 %v6443
      %v6445 = vpop.xlane.xlu0 %6444
      %v6446 = vsel %vm3820, %v3671, 0.0
      %6447 = vadd.xlane.f32.xlu0 %v6446
      %v6448 = vpop.xlane.xlu0 %6447
      %v6449 = vsel %vm3820, %v3672, 0.0
      %6450 = vadd.xlane.f32.xlu0 %v6449
      %v6451 = vpop.xlane.xlu0 %6450
      %v6452 = vsel %vm3820, %v3673, 0.0
      %6453 = vadd.xlane.f32.xlu0 %v6452
      %v6454 = vpop.xlane.xlu0 %6453
      %v6455 = vsel %vm3820, %v3674, 0.0
      %6456 = vadd.xlane.f32.xlu0 %v6455
      %v6457 = vpop.xlane.xlu0 %6456
      %v6458 = vsel %vm3820, %v3675, 0.0
      %6459 = vadd.xlane.f32.xlu0 %v6458
      %v6460 = vpop.xlane.xlu0 %6459
      %v6461 = vsel %vm3820, %v3676, 0.0
      %6462 = vadd.xlane.f32.xlu0 %v6461
      %v6463 = vpop.xlane.xlu0 %6462
      %v6464 = vsel %vm3820, %v3677, 0.0
      %6465 = vadd.xlane.f32.xlu0 %v6464
      %v6466 = vpop.xlane.xlu0 %6465
      %v6467 = vsel %vm3820, %v3678, 0.0
      %6468 = vadd.xlane.f32.xlu0 %v6467
      %v6469 = vpop.xlane.xlu0 %6468
      %v6470 = vsel %vm3820, %v3679, 0.0
      %6471 = vadd.xlane.f32.xlu0 %v6470
      %v6472 = vpop.xlane.xlu0 %6471
      %v6473 = vsel %vm3820, %v3680, 0.0
      %6474 = vadd.xlane.f32.xlu0 %v6473
      %v6475 = vpop.xlane.xlu0 %6474
      %v6476 = vsel %vm3820, %v3681, 0.0
      %6477 = vadd.xlane.f32.xlu0 %v6476
      %v6478 = vpop.xlane.xlu0 %6477
      %v6479 = vsel %vm3820, %v3682, 0.0
      %6480 = vadd.xlane.f32.xlu0 %v6479
      %v6481 = vpop.xlane.xlu0 %6480
      %v6482 = vsel %vm3820, %v3683, 0.0
      %6483 = vadd.xlane.f32.xlu0 %v6482
      %v6484 = vpop.xlane.xlu0 %6483
      %v6485 = vsel %vm3820, %v3684, 0.0
      %6486 = vadd.xlane.f32.xlu0 %v6485
      %v6487 = vpop.xlane.xlu0 %6486
      %v6488 = vsel %vm3820, %v3685, 0.0
      %6489 = vadd.xlane.f32.xlu0 %v6488
      %v6490 = vpop.xlane.xlu0 %6489
      %v6491 = vsel %vm3820, %v3686, 0.0
      %6492 = vadd.xlane.f32.xlu0 %v6491
      %v6493 = vpop.xlane.xlu0 %6492
      %v6494 = vsel %vm3820, %v3687, 0.0
      %6495 = vadd.xlane.f32.xlu0 %v6494
      %v6496 = vpop.xlane.xlu0 %6495
      %v6497 = vsel %vm3820, %v3688, 0.0
      %6498 = vadd.xlane.f32.xlu0 %v6497
      %v6499 = vpop.xlane.xlu0 %6498
      %v6500 = vsel %vm3820, %v3689, 0.0
      %6501 = vadd.xlane.f32.xlu0 %v6500
      %v6502 = vpop.xlane.xlu0 %6501
      %v6503 = vsel %vm3820, %v3690, 0.0
      %6504 = vadd.xlane.f32.xlu0 %v6503
      %v6505 = vpop.xlane.xlu0 %6504
      %v6506 = vsel %vm3820, %v3691, 0.0
      %6507 = vadd.xlane.f32.xlu0 %v6506
      %v6508 = vpop.xlane.xlu0 %6507
      %v6509 = vsel %vm3820, %v3692, 0.0
      %6510 = vadd.xlane.f32.xlu0 %v6509
      %v6511 = vpop.xlane.xlu0 %6510
      %v6512 = vsel %vm3820, %v3693, 0.0
      %6513 = vadd.xlane.f32.xlu0 %v6512
      %v6514 = vpop.xlane.xlu0 %6513
      %v6515 = vsel %vm3820, %v3694, 0.0
      %6516 = vadd.xlane.f32.xlu0 %v6515
      %v6517 = vpop.xlane.xlu0 %6516
      %v6518 = vsel %vm3820, %v3695, 0.0
      %6519 = vadd.xlane.f32.xlu0 %v6518
      %v6520 = vpop.xlane.xlu0 %6519
      %v6521 = vsel %vm3820, %v3696, 0.0
      %6522 = vadd.xlane.f32.xlu0 %v6521
      %v6523 = vpop.xlane.xlu0 %6522
      %v6524 = vsel %vm3820, %v3697, 0.0
      %6525 = vadd.xlane.f32.xlu0 %v6524
      %v6526 = vpop.xlane.xlu0 %6525
      %v6527 = vsel %vm3820, %v3698, 0.0
      %6528 = vadd.xlane.f32.xlu0 %v6527
      %v6529 = vpop.xlane.xlu0 %6528
      %v6530 = vsel %vm3820, %v3699, 0.0
      %6531 = vadd.xlane.f32.xlu0 %v6530
      %v6532 = vpop.xlane.xlu0 %6531
      %v6533 = vsel %vm3820, %v3700, 0.0
      %6534 = vadd.xlane.f32.xlu0 %v6533
      %v6535 = vpop.xlane.xlu0 %6534
      %v6536 = vsel %vm3820, %v3701, 0.0
      %6537 = vadd.xlane.f32.xlu0 %v6536
      %v6538 = vpop.xlane.xlu0 %6537
      %v6539 = vsel %vm3820, %v3702, 0.0
      %6540 = vadd.xlane.f32.xlu0 %v6539
      %v6541 = vpop.xlane.xlu0 %6540
      %v6542 = vsel %vm3820, %v3703, 0.0
      %6543 = vadd.xlane.f32.xlu0 %v6542
      %v6544 = vpop.xlane.xlu0 %6543
      %v6545 = vsel %vm3820, %v3704, 0.0
      %6546 = vadd.xlane.f32.xlu0 %v6545
      %v6547 = vpop.xlane.xlu0 %6546
      %v6548 = vsel %vm3820, %v3705, 0.0
      %6549 = vadd.xlane.f32.xlu0 %v6548
      %v6550 = vpop.xlane.xlu0 %6549
      %v6551 = vsel %vm3820, %v3706, 0.0
      %6552 = vadd.xlane.f32.xlu0 %v6551
      %v6553 = vpop.xlane.xlu0 %6552
      %v6554 = vsel %vm3820, %v3707, 0.0
      %6555 = vadd.xlane.f32.xlu0 %v6554
      %v6556 = vpop.xlane.xlu0 %6555
      %v6557 = vsel %vm3820, %v3708, 0.0
      %6558 = vadd.xlane.f32.xlu0 %v6557
      %v6559 = vpop.xlane.xlu0 %6558
      %v6560 = vsel %vm3820, %v3709, 0.0
      %6561 = vadd.xlane.f32.xlu0 %v6560
      %v6562 = vpop.xlane.xlu0 %6561
      %v6563 = vsel %vm3820, %v3710, 0.0
      %6564 = vadd.xlane.f32.xlu0 %v6563
      %v6565 = vpop.xlane.xlu0 %6564
      %v6566 = vsel %vm3820, %v3711, 0.0
      %6567 = vadd.xlane.f32.xlu0 %v6566
      %v6568 = vpop.xlane.xlu0 %6567
      %v6569 = vsel %vm3820, %v3712, 0.0
      %6570 = vadd.xlane.f32.xlu0 %v6569
      %v6571 = vpop.xlane.xlu0 %6570
      %v6572 = vsel %vm3820, %v3713, 0.0
      %6573 = vadd.xlane.f32.xlu0 %v6572
      %v6574 = vpop.xlane.xlu0 %6573
      %v6575 = vsel %vm3820, %v3714, 0.0
      %6576 = vadd.xlane.f32.xlu0 %v6575
      %v6577 = vpop.xlane.xlu0 %6576
      %v6578 = vsel %vm3820, %v3715, 0.0
      %6579 = vadd.xlane.f32.xlu0 %v6578
      %v6580 = vpop.xlane.xlu0 %6579
      %v6581 = vsel %vm3820, %v3716, 0.0
      %6582 = vadd.xlane.f32.xlu0 %v6581
      %v6583 = vpop.xlane.xlu0 %6582
      %v6584 = vsel %vm3820, %v3717, 0.0
      %6585 = vadd.xlane.f32.xlu0 %v6584
      %v6586 = vpop.xlane.xlu0 %6585
      %v6587 = vsel %vm3820, %v3718, 0.0
      %6588 = vadd.xlane.f32.xlu0 %v6587
      %v6589 = vpop.xlane.xlu0 %6588
      %v6590 = vsel %vm3820, %v3719, 0.0
      %6591 = vadd.xlane.f32.xlu0 %v6590
      %v6592 = vpop.xlane.xlu0 %6591
      %v6593 = vsel %vm3820, %v3720, 0.0
      %6594 = vadd.xlane.f32.xlu0 %v6593
      %v6595 = vpop.xlane.xlu0 %6594
      %v6596 = vsel %vm3820, %v3721, 0.0
      %6597 = vadd.xlane.f32.xlu0 %v6596
      %v6598 = vpop.xlane.xlu0 %6597
      %v6599 = vsel %vm3820, %v3722, 0.0
      %6600 = vadd.xlane.f32.xlu0 %v6599
      %v6601 = vpop.xlane.xlu0 %6600
      %v6602 = vsel %vm3820, %v3723, 0.0
      %6603 = vadd.xlane.f32.xlu0 %v6602
      %v6604 = vpop.xlane.xlu0 %6603
      %v6605 = vsel %vm3820, %v3724, 0.0
      %6606 = vadd.xlane.f32.xlu0 %v6605
      %v6607 = vpop.xlane.xlu0 %6606
      %v6608 = vsel %vm3820, %v3725, 0.0
      %6609 = vadd.xlane.f32.xlu0 %v6608
      %v6610 = vpop.xlane.xlu0 %6609
      %v6611 = vsel %vm3820, %v3726, 0.0
      %6612 = vadd.xlane.f32.xlu0 %v6611
      %v6613 = vpop.xlane.xlu0 %6612
      %v6614 = vsel %vm3820, %v3727, 0.0
      %6615 = vadd.xlane.f32.xlu0 %v6614
      %v6616 = vpop.xlane.xlu0 %6615
      %v6617 = vsel %vm3820, %v3728, 0.0
      %6618 = vadd.xlane.f32.xlu0 %v6617
      %v6619 = vpop.xlane.xlu0 %6618
      %v6620 = vsel %vm3820, %v3729, 0.0
      %6621 = vadd.xlane.f32.xlu0 %v6620
      %v6622 = vpop.xlane.xlu0 %6621
      %v6623 = vsel %vm3820, %v3730, 0.0
      %6624 = vadd.xlane.f32.xlu0 %v6623
      %v6625 = vpop.xlane.xlu0 %6624
      %v6626 = vsel %vm3820, %v3731, 0.0
      %6627 = vadd.xlane.f32.xlu0 %v6626
      %v6628 = vpop.xlane.xlu0 %6627
      %v6629 = vsel %vm3820, %v3732, 0.0
      %6630 = vadd.xlane.f32.xlu0 %v6629
      %v6631 = vpop.xlane.xlu0 %6630
      %v6632 = vsel %vm3820, %v3733, 0.0
      %6633 = vadd.xlane.f32.xlu0 %v6632
      %v6634 = vpop.xlane.xlu0 %6633
      %v6635 = vsel %vm3820, %v3734, 0.0
      %6636 = vadd.xlane.f32.xlu0 %v6635
      %v6637 = vpop.xlane.xlu0 %6636
      %v6638 = vsel %vm3820, %v3735, 0.0
      %6639 = vadd.xlane.f32.xlu0 %v6638
      %v6640 = vpop.xlane.xlu0 %6639
      %v6641 = vsel %vm3820, %v3736, 0.0
      %6642 = vadd.xlane.f32.xlu0 %v6641
      %v6643 = vpop.xlane.xlu0 %6642
      %v6644 = vsel %vm3820, %v3737, 0.0
      %6645 = vadd.xlane.f32.xlu0 %v6644
      %v6646 = vpop.xlane.xlu0 %6645
      %v6647 = vsel %vm3820, %v3738, 0.0
      %6648 = vadd.xlane.f32.xlu0 %v6647
      %v6649 = vpop.xlane.xlu0 %6648
      %v6650 = vsel %vm3820, %v3739, 0.0
      %6651 = vadd.xlane.f32.xlu0 %v6650
      %v6652 = vpop.xlane.xlu0 %6651
      %v6653 = vsel %vm3820, %v3740, 0.0
      %6654 = vadd.xlane.f32.xlu0 %v6653
      %v6655 = vpop.xlane.xlu0 %6654
      %v6656 = vsel %vm3820, %v3741, 0.0
      %6657 = vadd.xlane.f32.xlu0 %v6656
      %v6658 = vpop.xlane.xlu0 %6657
      %v6659 = vsel %vm3820, %v3742, 0.0
      %6660 = vadd.xlane.f32.xlu0 %v6659
      %v6661 = vpop.xlane.xlu0 %6660
      %v6662 = vsel %vm3820, %v3743, 0.0
      %6663 = vadd.xlane.f32.xlu0 %v6662
      %v6664 = vpop.xlane.xlu0 %6663
      %v6665 = vsel %vm3820, %v3744, 0.0
      %6666 = vadd.xlane.f32.xlu0 %v6665
      %v6667 = vpop.xlane.xlu0 %6666
      %v6668 = vsel %vm3820, %v3745, 0.0
      %6669 = vadd.xlane.f32.xlu0 %v6668
      %v6670 = vpop.xlane.xlu0 %6669
      %v6671 = vsel %vm3820, %v3746, 0.0
      %6672 = vadd.xlane.f32.xlu0 %v6671
      %v6673 = vpop.xlane.xlu0 %6672
      %v6674 = vsel %vm3820, %v3747, 0.0
      %6675 = vadd.xlane.f32.xlu0 %v6674
      %v6676 = vpop.xlane.xlu0 %6675
      %v6677 = vsel %vm3820, %v3748, 0.0
      %6678 = vadd.xlane.f32.xlu0 %v6677
      %v6679 = vpop.xlane.xlu0 %6678
      %v6680 = vsel %vm3820, %v3749, 0.0
      %6681 = vadd.xlane.f32.xlu0 %v6680
      %v6682 = vpop.xlane.xlu0 %6681
      %v6683 = vsel %vm3820, %v3750, 0.0
      %6684 = vadd.xlane.f32.xlu0 %v6683
      %v6685 = vpop.xlane.xlu0 %6684
      %v6686 = vsel %vm3820, %v3751, 0.0
      %6687 = vadd.xlane.f32.xlu0 %v6686
      %v6688 = vpop.xlane.xlu0 %6687
      %v6689 = vsel %vm3820, %v3752, 0.0
      %6690 = vadd.xlane.f32.xlu0 %v6689
      %v6691 = vpop.xlane.xlu0 %6690
      %v6692 = vsel %vm3820, %v3753, 0.0
      %6693 = vadd.xlane.f32.xlu0 %v6692
      %v6694 = vpop.xlane.xlu0 %6693
      %v6695 = vsel %vm3820, %v3754, 0.0
      %6696 = vadd.xlane.f32.xlu0 %v6695
      %v6697 = vpop.xlane.xlu0 %6696
      %v6698 = vsel %vm3820, %v3755, 0.0
      %6699 = vadd.xlane.f32.xlu0 %v6698
      %v6700 = vpop.xlane.xlu0 %6699
      %v6701 = vsel %vm3820, %v3756, 0.0
      %6702 = vadd.xlane.f32.xlu0 %v6701
      %v6703 = vpop.xlane.xlu0 %6702
      %v6704 = vsel %vm3820, %v3757, 0.0
      %6705 = vadd.xlane.f32.xlu0 %v6704
      %v6706 = vpop.xlane.xlu0 %6705
      %v6707 = vsel %vm3820, %v3758, 0.0
      %6708 = vadd.xlane.f32.xlu0 %v6707
      %v6709 = vpop.xlane.xlu0 %6708
      %v6710 = vsel %vm3820, %v3759, 0.0
      %6711 = vadd.xlane.f32.xlu0 %v6710
      %v6712 = vpop.xlane.xlu0 %6711
      %v6713 = vsel %vm3820, %v3760, 0.0
      %6714 = vadd.xlane.f32.xlu0 %v6713
      %v6715 = vpop.xlane.xlu0 %6714
      %v6716 = vsel %vm3820, %v3761, 0.0
      %6717 = vadd.xlane.f32.xlu0 %v6716
      %v6718 = vpop.xlane.xlu0 %6717
      %v6719 = vsel %vm3820, %v3762, 0.0
      %6720 = vadd.xlane.f32.xlu0 %v6719
      %v6721 = vpop.xlane.xlu0 %6720
      %v6722 = vsel %vm3820, %v3763, 0.0
      %6723 = vadd.xlane.f32.xlu0 %v6722
      %v6724 = vpop.xlane.xlu0 %6723
      %v6725 = vsel %vm3820, %v3764, 0.0
      %6726 = vadd.xlane.f32.xlu0 %v6725
      %v6727 = vpop.xlane.xlu0 %6726
      %v6728 = vsel %vm3820, %v3765, 0.0
      %6729 = vadd.xlane.f32.xlu0 %v6728
      %v6730 = vpop.xlane.xlu0 %6729
      %v6731 = vsel %vm3820, %v3766, 0.0
      %6732 = vadd.xlane.f32.xlu0 %v6731
      %v6733 = vpop.xlane.xlu0 %6732
      %v6734 = vsel %vm3820, %v3767, 0.0
      %6735 = vadd.xlane.f32.xlu0 %v6734
      %v6736 = vpop.xlane.xlu0 %6735
      %v6737 = vsel %vm3820, %v3768, 0.0
      %6738 = vadd.xlane.f32.xlu0 %v6737
      %v6739 = vpop.xlane.xlu0 %6738
      %v6740 = vsel %vm3820, %v3769, 0.0
      %6741 = vadd.xlane.f32.xlu0 %v6740
      %v6742 = vpop.xlane.xlu0 %6741
      %v6743 = vsel %vm3820, %v3770, 0.0
      %6744 = vadd.xlane.f32.xlu0 %v6743
      %v6745 = vpop.xlane.xlu0 %6744
      %v6746 = vsel %vm3820, %v3771, 0.0
      %6747 = vadd.xlane.f32.xlu0 %v6746
      %v6748 = vpop.xlane.xlu0 %6747
      %v6749 = vsel %vm3820, %v3772, 0.0
      %6750 = vadd.xlane.f32.xlu0 %v6749
      %v6751 = vpop.xlane.xlu0 %6750
      %v6752 = vsel %vm3820, %v3773, 0.0
      %6753 = vadd.xlane.f32.xlu0 %v6752
      %v6754 = vpop.xlane.xlu0 %6753
      %v6755 = vsel %vm3820, %v3774, 0.0
      %6756 = vadd.xlane.f32.xlu0 %v6755
      %v6757 = vpop.xlane.xlu0 %6756
      %v6758 = vsel %vm3820, %v3775, 0.0
      %6759 = vadd.xlane.f32.xlu0 %v6758
      %v6760 = vpop.xlane.xlu0 %6759
      %v6761 = vsel %vm3820, %v3776, 0.0
      %6762 = vadd.xlane.f32.xlu0 %v6761
      %v6763 = vpop.xlane.xlu0 %6762
      %v6764 = vsel %vm3820, %v3777, 0.0
      %6765 = vadd.xlane.f32.xlu0 %v6764
      %v6766 = vpop.xlane.xlu0 %6765
      %v6767 = vsel %vm3820, %v3778, 0.0
      %6768 = vadd.xlane.f32.xlu0 %v6767
      %v6769 = vpop.xlane.xlu0 %6768
      %v6770 = vsel %vm3820, %v3779, 0.0
      %6771 = vadd.xlane.f32.xlu0 %v6770
      %v6772 = vpop.xlane.xlu0 %6771
      %v6773 = vsel %vm3820, %v3780, 0.0
      %6774 = vadd.xlane.f32.xlu0 %v6773
      %v6775 = vpop.xlane.xlu0 %6774
      %v6776 = vsel %vm3820, %v3781, 0.0
      %6777 = vadd.xlane.f32.xlu0 %v6776
      %v6778 = vpop.xlane.xlu0 %6777
      %v6779 = vsel %vm3820, %v3782, 0.0
      %6780 = vadd.xlane.f32.xlu0 %v6779
      %v6781 = vpop.xlane.xlu0 %6780
      %v6782 = vsel %vm3820, %v3783, 0.0
      %6783 = vadd.xlane.f32.xlu0 %v6782
      %v6784 = vpop.xlane.xlu0 %6783
      %v6785 = vsel %vm3820, %v3784, 0.0
      %6786 = vadd.xlane.f32.xlu0 %v6785
      %v6787 = vpop.xlane.xlu0 %6786
      %v6788 = vsel %vm3820, %v3785, 0.0
      %6789 = vadd.xlane.f32.xlu0 %v6788
      %v6790 = vpop.xlane.xlu0 %6789
      %v6791 = vsel %vm3820, %v3786, 0.0
      %6792 = vadd.xlane.f32.xlu0 %v6791
      %v6793 = vpop.xlane.xlu0 %6792
      %v6794 = vsel %vm3820, %v3787, 0.0
      %6795 = vadd.xlane.f32.xlu0 %v6794
      %v6796 = vpop.xlane.xlu0 %6795
      %v6797 = vsel %vm3820, %v3788, 0.0
      %6798 = vadd.xlane.f32.xlu0 %v6797
      %v6799 = vpop.xlane.xlu0 %6798
      %v6800 = vsel %vm3820, %v3789, 0.0
      %6801 = vadd.xlane.f32.xlu0 %v6800
      %v6802 = vpop.xlane.xlu0 %6801
      %v6803 = vsel %vm3820, %v3790, 0.0
      %6804 = vadd.xlane.f32.xlu0 %v6803
      %v6805 = vpop.xlane.xlu0 %6804
      %v6806 = vsel %vm3820, %v3791, 0.0
      %6807 = vadd.xlane.f32.xlu0 %v6806
      %v6808 = vpop.xlane.xlu0 %6807
      %v6809 = vsel %vm3820, %v3792, 0.0
      %6810 = vadd.xlane.f32.xlu0 %v6809
      %v6811 = vpop.xlane.xlu0 %6810
      %v6812 = vsel %vm3820, %v3793, 0.0
      %6813 = vadd.xlane.f32.xlu0 %v6812
      %v6814 = vpop.xlane.xlu0 %6813
      %v6815 = vsel %vm3820, %v3794, 0.0
      %6816 = vadd.xlane.f32.xlu0 %v6815
      %v6817 = vpop.xlane.xlu0 %6816
      %v6818 = vsel %vm3820, %v3795, 0.0
      %6819 = vadd.xlane.f32.xlu0 %v6818
      %v6820 = vpop.xlane.xlu0 %6819
      %v6821 = vsel %vm3820, %v3796, 0.0
      %6822 = vadd.xlane.f32.xlu0 %v6821
      %v6823 = vpop.xlane.xlu0 %6822
      %v6824 = vsel %vm3820, %v3797, 0.0
      %6825 = vadd.xlane.f32.xlu0 %v6824
      %v6826 = vpop.xlane.xlu0 %6825
      %v6827 = vsel %vm3820, %v3798, 0.0
      %6828 = vadd.xlane.f32.xlu0 %v6827
      %v6829 = vpop.xlane.xlu0 %6828
      %v6830 = vsel %vm3820, %v3799, 0.0
      %6831 = vadd.xlane.f32.xlu0 %v6830
      %v6832 = vpop.xlane.xlu0 %6831
      %v6833 = vsel %vm3820, %v3800, 0.0
      %6834 = vadd.xlane.f32.xlu0 %v6833
      %v6835 = vpop.xlane.xlu0 %6834
      %v6836 = vsel %vm3820, %v3801, 0.0
      %6837 = vadd.xlane.f32.xlu0 %v6836
      %v6838 = vpop.xlane.xlu0 %6837
      %v6839 = vsel %vm3820, %v3802, 0.0
      %6840 = vadd.xlane.f32.xlu0 %v6839
      %v6841 = vpop.xlane.xlu0 %6840
      %v6842 = vsel %vm3820, %v3803, 0.0
      %6843 = vadd.xlane.f32.xlu0 %v6842
      %v6844 = vpop.xlane.xlu0 %6843
      %v6845 = vsel %vm3820, %v3804, 0.0
      %6846 = vadd.xlane.f32.xlu0 %v6845
      %v6847 = vpop.xlane.xlu0 %6846
      %v6848 = vsel %vm3820, %v3805, 0.0
      %6849 = vadd.xlane.f32.xlu0 %v6848
      %v6850 = vpop.xlane.xlu0 %6849
      %v6851 = vsel %vm3820, %v3806, 0.0
      %6852 = vadd.xlane.f32.xlu0 %v6851
      %v6853 = vpop.xlane.xlu0 %6852
      %v6854 = vsel %vm3820, %v3807, 0.0
      %6855 = vadd.xlane.f32.xlu0 %v6854
      %v6856 = vpop.xlane.xlu0 %6855
      %v6857 = vsel %vm3820, %v3808, 0.0
      %6858 = vadd.xlane.f32.xlu0 %v6857
      %v6859 = vpop.xlane.xlu0 %6858
      %v6860 = vsel %vm3820, %v3809, 0.0
      %6861 = vadd.xlane.f32.xlu0 %v6860
      %v6862 = vpop.xlane.xlu0 %6861
      %v6863 = vsel %vm3820, %v3810, 0.0
      %6864 = vadd.xlane.f32.xlu0 %v6863
      %v6865 = vpop.xlane.xlu0 %6864
      %v6866 = vsel %vm3820, %v3811, 0.0
      %6867 = vadd.xlane.f32.xlu0 %v6866
      %v6868 = vpop.xlane.xlu0 %6867
      %v6869 = vsel %vm3820, %v3812, 0.0
      %6870 = vadd.xlane.f32.xlu0 %v6869
      %v6871 = vpop.xlane.xlu0 %6870
      %v6872 = vsel %vm3820, %v3813, 0.0
      %6873 = vadd.xlane.f32.xlu0 %v6872
      %v6874 = vpop.xlane.xlu0 %6873
      %v6875 = vsel %vm3820, %v3814, 0.0
      %6876 = vadd.xlane.f32.xlu0 %v6875
      %v6877 = vpop.xlane.xlu0 %6876
      %v6878 = vsel %vm3820, %v3815, 0.0
      %6879 = vadd.xlane.f32.xlu0 %v6878
      %v6880 = vpop.xlane.xlu0 %6879
      %v6881 = vsel %vm3820, %v3816, 0.0
      %6882 = vadd.xlane.f32.xlu0 %v6881
      %v6883 = vpop.xlane.xlu0 %6882
      %v6884 = vsel %vm3820, %v3817, 0.0
      %6885 = vadd.xlane.f32.xlu0 %v6884
      %v6886 = vpop.xlane.xlu0 %6885
      %v6887 = vsel %vm3820, %v3818, 0.0
      %6888 = vadd.xlane.f32.xlu0 %v6887
      %v6889 = vpop.xlane.xlu0 %6888
      %v6890 = vsel %vm3820, %v3819, 0.0
      %6891 = vadd.xlane.f32.xlu0 %v6890
      %v6892 = vpop.xlane.xlu0 %6891
      %v7917 = vlaneseq
      %v7918 = vand.u32 %v7917, 127
      %v7919 = vperm.slane %v3823, %v7918
      %v7920 = vadd.s32 %v7918, 4294967288
      %v7921 = vperm.slane %v3826, %v7920
      %vm7922 = vcmask 130112
      %v7923 = vsel %vm7922, %v7921, %v7919
      %v7924 = vperm.slane %v3829, %v7918
      %v7925 = vperm.slane %v3832, %v7920
      %v7926 = vsel %vm7922, %v7925, %v7924
      %v7927 = vperm.slane %v3835, %v7918
      %v7928 = vperm.slane %v3838, %v7920
      %v7929 = vsel %vm7922, %v7928, %v7927
      %v7930 = vperm.slane %v3841, %v7918
      %v7931 = vperm.slane %v3844, %v7920
      %v7932 = vsel %vm7922, %v7931, %v7930
      %v7933 = vperm.slane %v3847, %v7918
      %v7934 = vperm.slane %v3850, %v7920
      %v7935 = vsel %vm7922, %v7934, %v7933
      %v7936 = vperm.slane %v3853, %v7918
      %v7937 = vperm.slane %v3856, %v7920
      %v7938 = vsel %vm7922, %v7937, %v7936
      %v7939 = vperm.slane %v3859, %v7918
      %v7940 = vperm.slane %v3862, %v7920
      %v7941 = vsel %vm7922, %v7940, %v7939
      %v7942 = vperm.slane %v3865, %v7918
      %v7943 = vperm.slane %v3868, %v7920
      %v7944 = vsel %vm7922, %v7943, %v7942
      %v7945 = vperm.slane %v3871, %v7918
      %v7946 = vperm.slane %v3874, %v7920
      %v7947 = vsel %vm7922, %v7946, %v7945
      %v7948 = vperm.slane %v3877, %v7918
      %v7949 = vperm.slane %v3880, %v7920
      %v7950 = vsel %vm7922, %v7949, %v7948
      %v7951 = vperm.slane %v3883, %v7918
      %v7952 = vperm.slane %v3886, %v7920
      %v7953 = vsel %vm7922, %v7952, %v7951
      %v7954 = vperm.slane %v3889, %v7918
      %v7955 = vperm.slane %v3892, %v7920
      %v7956 = vsel %vm7922, %v7955, %v7954
      %v7957 = vperm.slane %v3895, %v7918
      %v7958 = vperm.slane %v3898, %v7920
      %v7959 = vsel %vm7922, %v7958, %v7957
      %v7960 = vperm.slane %v3901, %v7918
      %v7961 = vperm.slane %v3904, %v7920
      %v7962 = vsel %vm7922, %v7961, %v7960
      %v7963 = vperm.slane %v3907, %v7918
      %v7964 = vperm.slane %v3910, %v7920
      %v7965 = vsel %vm7922, %v7964, %v7963
      %v7966 = vperm.slane %v3913, %v7918
      %v7967 = vperm.slane %v3916, %v7920
      %v7968 = vsel %vm7922, %v7967, %v7966
      %v7969 = vperm.slane %v3919, %v7918
      %v7970 = vperm.slane %v3922, %v7920
      %v7971 = vsel %vm7922, %v7970, %v7969
      %v7972 = vperm.slane %v3925, %v7918
      %v7973 = vperm.slane %v3928, %v7920
      %v7974 = vsel %vm7922, %v7973, %v7972
      %v7975 = vperm.slane %v3931, %v7918
      %v7976 = vperm.slane %v3934, %v7920
      %v7977 = vsel %vm7922, %v7976, %v7975
      %v7978 = vperm.slane %v3937, %v7918
      %v7979 = vperm.slane %v3940, %v7920
      %v7980 = vsel %vm7922, %v7979, %v7978
      %v7981 = vperm.slane %v3943, %v7918
      %v7982 = vperm.slane %v3946, %v7920
      %v7983 = vsel %vm7922, %v7982, %v7981
      %v7984 = vperm.slane %v3949, %v7918
      %v7985 = vperm.slane %v3952, %v7920
      %v7986 = vsel %vm7922, %v7985, %v7984
      %v7987 = vperm.slane %v3955, %v7918
      %v7988 = vperm.slane %v3958, %v7920
      %v7989 = vsel %vm7922, %v7988, %v7987
      %v7990 = vperm.slane %v3961, %v7918
      %v7991 = vperm.slane %v3964, %v7920
      %v7992 = vsel %vm7922, %v7991, %v7990
      %v7993 = vperm.slane %v3967, %v7918
      %v7994 = vperm.slane %v3970, %v7920
      %v7995 = vsel %vm7922, %v7994, %v7993
      %v7996 = vperm.slane %v3973, %v7918
      %v7997 = vperm.slane %v3976, %v7920
      %v7998 = vsel %vm7922, %v7997, %v7996
      %v7999 = vperm.slane %v3979, %v7918
      %v8000 = vperm.slane %v3982, %v7920
      %v8001 = vsel %vm7922, %v8000, %v7999
      %v8002 = vperm.slane %v3985, %v7918
      %v8003 = vperm.slane %v3988, %v7920
      %v8004 = vsel %vm7922, %v8003, %v8002
      %v8005 = vperm.slane %v3991, %v7918
      %v8006 = vperm.slane %v3994, %v7920
      %v8007 = vsel %vm7922, %v8006, %v8005
      %v8008 = vperm.slane %v3997, %v7918
      %v8009 = vperm.slane %v4000, %v7920
      %v8010 = vsel %vm7922, %v8009, %v8008
      %v8011 = vperm.slane %v4003, %v7918
      %v8012 = vperm.slane %v4006, %v7920
      %v8013 = vsel %vm7922, %v8012, %v8011
      %v8014 = vperm.slane %v4009, %v7918
      %v8015 = vperm.slane %v4012, %v7920
      %v8016 = vsel %vm7922, %v8015, %v8014
      %v8017 = vperm.slane %v4015, %v7918
      %v8018 = vperm.slane %v4018, %v7920
      %v8019 = vsel %vm7922, %v8018, %v8017
      %v8020 = vperm.slane %v4021, %v7918
      %v8021 = vperm.slane %v4024, %v7920
      %v8022 = vsel %vm7922, %v8021, %v8020
      %v8023 = vperm.slane %v4027, %v7918
      %v8024 = vperm.slane %v4030, %v7920
      %v8025 = vsel %vm7922, %v8024, %v8023
      %v8026 = vperm.slane %v4033, %v7918
      %v8027 = vperm.slane %v4036, %v7920
      %v8028 = vsel %vm7922, %v8027, %v8026
      %v8029 = vperm.slane %v4039, %v7918
      %v8030 = vperm.slane %v4042, %v7920
      %v8031 = vsel %vm7922, %v8030, %v8029
      %v8032 = vperm.slane %v4045, %v7918
      %v8033 = vperm.slane %v4048, %v7920
      %v8034 = vsel %vm7922, %v8033, %v8032
      %v8035 = vperm.slane %v4051, %v7918
      %v8036 = vperm.slane %v4054, %v7920
      %v8037 = vsel %vm7922, %v8036, %v8035
      %v8038 = vperm.slane %v4057, %v7918
      %v8039 = vperm.slane %v4060, %v7920
      %v8040 = vsel %vm7922, %v8039, %v8038
      %v8041 = vperm.slane %v4063, %v7918
      %v8042 = vperm.slane %v4066, %v7920
      %v8043 = vsel %vm7922, %v8042, %v8041
      %v8044 = vperm.slane %v4069, %v7918
      %v8045 = vperm.slane %v4072, %v7920
      %v8046 = vsel %vm7922, %v8045, %v8044
      %v8047 = vperm.slane %v4075, %v7918
      %v8048 = vperm.slane %v4078, %v7920
      %v8049 = vsel %vm7922, %v8048, %v8047
      %v8050 = vperm.slane %v4081, %v7918
      %v8051 = vperm.slane %v4084, %v7920
      %v8052 = vsel %vm7922, %v8051, %v8050
      %v8053 = vperm.slane %v4087, %v7918
      %v8054 = vperm.slane %v4090, %v7920
      %v8055 = vsel %vm7922, %v8054, %v8053
      %v8056 = vperm.slane %v4093, %v7918
      %v8057 = vperm.slane %v4096, %v7920
      %v8058 = vsel %vm7922, %v8057, %v8056
      %v8059 = vperm.slane %v4099, %v7918
      %v8060 = vperm.slane %v4102, %v7920
      %v8061 = vsel %vm7922, %v8060, %v8059
      %v8062 = vperm.slane %v4105, %v7918
      %v8063 = vperm.slane %v4108, %v7920
      %v8064 = vsel %vm7922, %v8063, %v8062
      %v8065 = vperm.slane %v4111, %v7918
      %v8066 = vperm.slane %v4114, %v7920
      %v8067 = vsel %vm7922, %v8066, %v8065
      %v8068 = vperm.slane %v4117, %v7918
      %v8069 = vperm.slane %v4120, %v7920
      %v8070 = vsel %vm7922, %v8069, %v8068
      %v8071 = vperm.slane %v4123, %v7918
      %v8072 = vperm.slane %v4126, %v7920
      %v8073 = vsel %vm7922, %v8072, %v8071
      %v8074 = vperm.slane %v4129, %v7918
      %v8075 = vperm.slane %v4132, %v7920
      %v8076 = vsel %vm7922, %v8075, %v8074
      %v8077 = vperm.slane %v4135, %v7918
      %v8078 = vperm.slane %v4138, %v7920
      %v8079 = vsel %vm7922, %v8078, %v8077
      %v8080 = vperm.slane %v4141, %v7918
      %v8081 = vperm.slane %v4144, %v7920
      %v8082 = vsel %vm7922, %v8081, %v8080
      %v8083 = vperm.slane %v4147, %v7918
      %v8084 = vperm.slane %v4150, %v7920
      %v8085 = vsel %vm7922, %v8084, %v8083
      %v8086 = vperm.slane %v4153, %v7918
      %v8087 = vperm.slane %v4156, %v7920
      %v8088 = vsel %vm7922, %v8087, %v8086
      %v8089 = vperm.slane %v4159, %v7918
      %v8090 = vperm.slane %v4162, %v7920
      %v8091 = vsel %vm7922, %v8090, %v8089
      %v8092 = vperm.slane %v4165, %v7918
      %v8093 = vperm.slane %v4168, %v7920
      %v8094 = vsel %vm7922, %v8093, %v8092
      %v8095 = vperm.slane %v4171, %v7918
      %v8096 = vperm.slane %v4174, %v7920
      %v8097 = vsel %vm7922, %v8096, %v8095
      %v8098 = vperm.slane %v4177, %v7918
      %v8099 = vperm.slane %v4180, %v7920
      %v8100 = vsel %vm7922, %v8099, %v8098
      %v8101 = vperm.slane %v4183, %v7918
      %v8102 = vperm.slane %v4186, %v7920
      %v8103 = vsel %vm7922, %v8102, %v8101
      %v8104 = vperm.slane %v4189, %v7918
      %v8105 = vperm.slane %v4192, %v7920
      %v8106 = vsel %vm7922, %v8105, %v8104
      %v8107 = vperm.slane %v4195, %v7918
      %v8108 = vperm.slane %v4198, %v7920
      %v8109 = vsel %vm7922, %v8108, %v8107
      %v8110 = vperm.slane %v4201, %v7918
      %v8111 = vperm.slane %v4204, %v7920
      %v8112 = vsel %vm7922, %v8111, %v8110
      %v8113 = vperm.slane %v4207, %v7918
      %v8114 = vperm.slane %v4210, %v7920
      %v8115 = vsel %vm7922, %v8114, %v8113
      %v8116 = vperm.slane %v4213, %v7918
      %v8117 = vperm.slane %v4216, %v7920
      %v8118 = vsel %vm7922, %v8117, %v8116
      %v8119 = vperm.slane %v4219, %v7918
      %v8120 = vperm.slane %v4222, %v7920
      %v8121 = vsel %vm7922, %v8120, %v8119
      %v8122 = vperm.slane %v4225, %v7918
      %v8123 = vperm.slane %v4228, %v7920
      %v8124 = vsel %vm7922, %v8123, %v8122
      %v8125 = vperm.slane %v4231, %v7918
      %v8126 = vperm.slane %v4234, %v7920
      %v8127 = vsel %vm7922, %v8126, %v8125
      %v8128 = vperm.slane %v4237, %v7918
      %v8129 = vperm.slane %v4240, %v7920
      %v8130 = vsel %vm7922, %v8129, %v8128
      %v8131 = vperm.slane %v4243, %v7918
      %v8132 = vperm.slane %v4246, %v7920
      %v8133 = vsel %vm7922, %v8132, %v8131
      %v8134 = vperm.slane %v4249, %v7918
      %v8135 = vperm.slane %v4252, %v7920
      %v8136 = vsel %vm7922, %v8135, %v8134
      %v8137 = vperm.slane %v4255, %v7918
      %v8138 = vperm.slane %v4258, %v7920
      %v8139 = vsel %vm7922, %v8138, %v8137
      %v8140 = vperm.slane %v4261, %v7918
      %v8141 = vperm.slane %v4264, %v7920
      %v8142 = vsel %vm7922, %v8141, %v8140
      %v8143 = vperm.slane %v4267, %v7918
      %v8144 = vperm.slane %v4270, %v7920
      %v8145 = vsel %vm7922, %v8144, %v8143
      %v8146 = vperm.slane %v4273, %v7918
      %v8147 = vperm.slane %v4276, %v7920
      %v8148 = vsel %vm7922, %v8147, %v8146
      %v8149 = vperm.slane %v4279, %v7918
      %v8150 = vperm.slane %v4282, %v7920
      %v8151 = vsel %vm7922, %v8150, %v8149
      %v8152 = vperm.slane %v4285, %v7918
      %v8153 = vperm.slane %v4288, %v7920
      %v8154 = vsel %vm7922, %v8153, %v8152
      %v8155 = vperm.slane %v4291, %v7918
      %v8156 = vperm.slane %v4294, %v7920
      %v8157 = vsel %vm7922, %v8156, %v8155
      %v8158 = vperm.slane %v4297, %v7918
      %v8159 = vperm.slane %v4300, %v7920
      %v8160 = vsel %vm7922, %v8159, %v8158
      %v8161 = vperm.slane %v4303, %v7918
      %v8162 = vperm.slane %v4306, %v7920
      %v8163 = vsel %vm7922, %v8162, %v8161
      %v8164 = vperm.slane %v4309, %v7918
      %v8165 = vperm.slane %v4312, %v7920
      %v8166 = vsel %vm7922, %v8165, %v8164
      %v8167 = vperm.slane %v4315, %v7918
      %v8168 = vperm.slane %v4318, %v7920
      %v8169 = vsel %vm7922, %v8168, %v8167
      %v8170 = vperm.slane %v4321, %v7918
      %v8171 = vperm.slane %v4324, %v7920
      %v8172 = vsel %vm7922, %v8171, %v8170
      %v8173 = vperm.slane %v4327, %v7918
      %v8174 = vperm.slane %v4330, %v7920
      %v8175 = vsel %vm7922, %v8174, %v8173
      %v8176 = vperm.slane %v4333, %v7918
      %v8177 = vperm.slane %v4336, %v7920
      %v8178 = vsel %vm7922, %v8177, %v8176
      %v8179 = vperm.slane %v4339, %v7918
      %v8180 = vperm.slane %v4342, %v7920
      %v8181 = vsel %vm7922, %v8180, %v8179
      %v8182 = vperm.slane %v4345, %v7918
      %v8183 = vperm.slane %v4348, %v7920
      %v8184 = vsel %vm7922, %v8183, %v8182
      %v8185 = vperm.slane %v4351, %v7918
      %v8186 = vperm.slane %v4354, %v7920
      %v8187 = vsel %vm7922, %v8186, %v8185
      %v8188 = vperm.slane %v4357, %v7918
      %v8189 = vperm.slane %v4360, %v7920
      %v8190 = vsel %vm7922, %v8189, %v8188
      %v8191 = vperm.slane %v4363, %v7918
      %v8192 = vperm.slane %v4366, %v7920
      %v8193 = vsel %vm7922, %v8192, %v8191
      %v8194 = vperm.slane %v4369, %v7918
      %v8195 = vperm.slane %v4372, %v7920
      %v8196 = vsel %vm7922, %v8195, %v8194
      %v8197 = vperm.slane %v4375, %v7918
      %v8198 = vperm.slane %v4378, %v7920
      %v8199 = vsel %vm7922, %v8198, %v8197
      %v8200 = vperm.slane %v4381, %v7918
      %v8201 = vperm.slane %v4384, %v7920
      %v8202 = vsel %vm7922, %v8201, %v8200
      %v8203 = vperm.slane %v4387, %v7918
      %v8204 = vperm.slane %v4390, %v7920
      %v8205 = vsel %vm7922, %v8204, %v8203
      %v8206 = vperm.slane %v4393, %v7918
      %v8207 = vperm.slane %v4396, %v7920
      %v8208 = vsel %vm7922, %v8207, %v8206
      %v8209 = vperm.slane %v4399, %v7918
      %v8210 = vperm.slane %v4402, %v7920
      %v8211 = vsel %vm7922, %v8210, %v8209
      %v8212 = vperm.slane %v4405, %v7918
      %v8213 = vperm.slane %v4408, %v7920
      %v8214 = vsel %vm7922, %v8213, %v8212
      %v8215 = vperm.slane %v4411, %v7918
      %v8216 = vperm.slane %v4414, %v7920
      %v8217 = vsel %vm7922, %v8216, %v8215
      %v8218 = vperm.slane %v4417, %v7918
      %v8219 = vperm.slane %v4420, %v7920
      %v8220 = vsel %vm7922, %v8219, %v8218
      %v8221 = vperm.slane %v4423, %v7918
      %v8222 = vperm.slane %v4426, %v7920
      %v8223 = vsel %vm7922, %v8222, %v8221
      %v8224 = vperm.slane %v4429, %v7918
      %v8225 = vperm.slane %v4432, %v7920
      %v8226 = vsel %vm7922, %v8225, %v8224
      %v8227 = vperm.slane %v4435, %v7918
      %v8228 = vperm.slane %v4438, %v7920
      %v8229 = vsel %vm7922, %v8228, %v8227
      %v8230 = vperm.slane %v4441, %v7918
      %v8231 = vperm.slane %v4444, %v7920
      %v8232 = vsel %vm7922, %v8231, %v8230
      %v8233 = vperm.slane %v4447, %v7918
      %v8234 = vperm.slane %v4450, %v7920
      %v8235 = vsel %vm7922, %v8234, %v8233
      %v8236 = vperm.slane %v4453, %v7918
      %v8237 = vperm.slane %v4456, %v7920
      %v8238 = vsel %vm7922, %v8237, %v8236
      %v8239 = vperm.slane %v4459, %v7918
      %v8240 = vperm.slane %v4462, %v7920
      %v8241 = vsel %vm7922, %v8240, %v8239
      %v8242 = vperm.slane %v4465, %v7918
      %v8243 = vperm.slane %v4468, %v7920
      %v8244 = vsel %vm7922, %v8243, %v8242
      %v8245 = vperm.slane %v4471, %v7918
      %v8246 = vperm.slane %v4474, %v7920
      %v8247 = vsel %vm7922, %v8246, %v8245
      %v8248 = vperm.slane %v4477, %v7918
      %v8249 = vperm.slane %v4480, %v7920
      %v8250 = vsel %vm7922, %v8249, %v8248
      %v8251 = vperm.slane %v4483, %v7918
      %v8252 = vperm.slane %v4486, %v7920
      %v8253 = vsel %vm7922, %v8252, %v8251
      %v8254 = vperm.slane %v4489, %v7918
      %v8255 = vperm.slane %v4492, %v7920
      %v8256 = vsel %vm7922, %v8255, %v8254
      %v8257 = vperm.slane %v4495, %v7918
      %v8258 = vperm.slane %v4498, %v7920
      %v8259 = vsel %vm7922, %v8258, %v8257
      %v8260 = vperm.slane %v4501, %v7918
      %v8261 = vperm.slane %v4504, %v7920
      %v8262 = vsel %vm7922, %v8261, %v8260
      %v8263 = vperm.slane %v4507, %v7918
      %v8264 = vperm.slane %v4510, %v7920
      %v8265 = vsel %vm7922, %v8264, %v8263
      %v8266 = vperm.slane %v4513, %v7918
      %v8267 = vperm.slane %v4516, %v7920
      %v8268 = vsel %vm7922, %v8267, %v8266
      %v8269 = vperm.slane %v4519, %v7918
      %v8270 = vperm.slane %v4522, %v7920
      %v8271 = vsel %vm7922, %v8270, %v8269
      %v8272 = vperm.slane %v4525, %v7918
      %v8273 = vperm.slane %v4528, %v7920
      %v8274 = vsel %vm7922, %v8273, %v8272
      %v8275 = vperm.slane %v4531, %v7918
      %v8276 = vperm.slane %v4534, %v7920
      %v8277 = vsel %vm7922, %v8276, %v8275
      %v8278 = vperm.slane %v4537, %v7918
      %v8279 = vperm.slane %v4540, %v7920
      %v8280 = vsel %vm7922, %v8279, %v8278
      %v8281 = vperm.slane %v4543, %v7918
      %v8282 = vperm.slane %v4546, %v7920
      %v8283 = vsel %vm7922, %v8282, %v8281
      %v8284 = vperm.slane %v4549, %v7918
      %v8285 = vperm.slane %v4552, %v7920
      %v8286 = vsel %vm7922, %v8285, %v8284
      %v8287 = vperm.slane %v4555, %v7918
      %v8288 = vperm.slane %v4558, %v7920
      %v8289 = vsel %vm7922, %v8288, %v8287
      %v8290 = vperm.slane %v4561, %v7918
      %v8291 = vperm.slane %v4564, %v7920
      %v8292 = vsel %vm7922, %v8291, %v8290
      %v8293 = vperm.slane %v4567, %v7918
      %v8294 = vperm.slane %v4570, %v7920
      %v8295 = vsel %vm7922, %v8294, %v8293
      %v8296 = vperm.slane %v4573, %v7918
      %v8297 = vperm.slane %v4576, %v7920
      %v8298 = vsel %vm7922, %v8297, %v8296
      %v8299 = vperm.slane %v4579, %v7918
      %v8300 = vperm.slane %v4582, %v7920
      %v8301 = vsel %vm7922, %v8300, %v8299
      %v8302 = vperm.slane %v4585, %v7918
      %v8303 = vperm.slane %v4588, %v7920
      %v8304 = vsel %vm7922, %v8303, %v8302
      %v8305 = vperm.slane %v4591, %v7918
      %v8306 = vperm.slane %v4594, %v7920
      %v8307 = vsel %vm7922, %v8306, %v8305
      %v8308 = vperm.slane %v4597, %v7918
      %v8309 = vperm.slane %v4600, %v7920
      %v8310 = vsel %vm7922, %v8309, %v8308
      %v8311 = vperm.slane %v4603, %v7918
      %v8312 = vperm.slane %v4606, %v7920
      %v8313 = vsel %vm7922, %v8312, %v8311
      %v8314 = vperm.slane %v4609, %v7918
      %v8315 = vperm.slane %v4612, %v7920
      %v8316 = vsel %vm7922, %v8315, %v8314
      %v8317 = vperm.slane %v4615, %v7918
      %v8318 = vperm.slane %v4618, %v7920
      %v8319 = vsel %vm7922, %v8318, %v8317
      %v8320 = vperm.slane %v4621, %v7918
      %v8321 = vperm.slane %v4624, %v7920
      %v8322 = vsel %vm7922, %v8321, %v8320
      %v8323 = vperm.slane %v4627, %v7918
      %v8324 = vperm.slane %v4630, %v7920
      %v8325 = vsel %vm7922, %v8324, %v8323
      %v8326 = vperm.slane %v4633, %v7918
      %v8327 = vperm.slane %v4636, %v7920
      %v8328 = vsel %vm7922, %v8327, %v8326
      %v8329 = vperm.slane %v4639, %v7918
      %v8330 = vperm.slane %v4642, %v7920
      %v8331 = vsel %vm7922, %v8330, %v8329
      %v8332 = vperm.slane %v4645, %v7918
      %v8333 = vperm.slane %v4648, %v7920
      %v8334 = vsel %vm7922, %v8333, %v8332
      %v8335 = vperm.slane %v4651, %v7918
      %v8336 = vperm.slane %v4654, %v7920
      %v8337 = vsel %vm7922, %v8336, %v8335
      %v8338 = vperm.slane %v4657, %v7918
      %v8339 = vperm.slane %v4660, %v7920
      %v8340 = vsel %vm7922, %v8339, %v8338
      %v8341 = vperm.slane %v4663, %v7918
      %v8342 = vperm.slane %v4666, %v7920
      %v8343 = vsel %vm7922, %v8342, %v8341
      %v8344 = vperm.slane %v4669, %v7918
      %v8345 = vperm.slane %v4672, %v7920
      %v8346 = vsel %vm7922, %v8345, %v8344
      %v8347 = vperm.slane %v4675, %v7918
      %v8348 = vperm.slane %v4678, %v7920
      %v8349 = vsel %vm7922, %v8348, %v8347
      %v8350 = vperm.slane %v4681, %v7918
      %v8351 = vperm.slane %v4684, %v7920
      %v8352 = vsel %vm7922, %v8351, %v8350
      %v8353 = vperm.slane %v4687, %v7918
      %v8354 = vperm.slane %v4690, %v7920
      %v8355 = vsel %vm7922, %v8354, %v8353
      %v8356 = vperm.slane %v4693, %v7918
      %v8357 = vperm.slane %v4696, %v7920
      %v8358 = vsel %vm7922, %v8357, %v8356
      %v8359 = vperm.slane %v4699, %v7918
      %v8360 = vperm.slane %v4702, %v7920
      %v8361 = vsel %vm7922, %v8360, %v8359
      %v8362 = vperm.slane %v4705, %v7918
      %v8363 = vperm.slane %v4708, %v7920
      %v8364 = vsel %vm7922, %v8363, %v8362
      %v8365 = vperm.slane %v4711, %v7918
      %v8366 = vperm.slane %v4714, %v7920
      %v8367 = vsel %vm7922, %v8366, %v8365
      %v8368 = vperm.slane %v4717, %v7918
      %v8369 = vperm.slane %v4720, %v7920
      %v8370 = vsel %vm7922, %v8369, %v8368
      %v8371 = vperm.slane %v4723, %v7918
      %v8372 = vperm.slane %v4726, %v7920
      %v8373 = vsel %vm7922, %v8372, %v8371
      %v8374 = vperm.slane %v4729, %v7918
      %v8375 = vperm.slane %v4732, %v7920
      %v8376 = vsel %vm7922, %v8375, %v8374
      %v8377 = vperm.slane %v4735, %v7918
      %v8378 = vperm.slane %v4738, %v7920
      %v8379 = vsel %vm7922, %v8378, %v8377
      %v8380 = vperm.slane %v4741, %v7918
      %v8381 = vperm.slane %v4744, %v7920
      %v8382 = vsel %vm7922, %v8381, %v8380
      %v8383 = vperm.slane %v4747, %v7918
      %v8384 = vperm.slane %v4750, %v7920
      %v8385 = vsel %vm7922, %v8384, %v8383
      %v8386 = vperm.slane %v4753, %v7918
      %v8387 = vperm.slane %v4756, %v7920
      %v8388 = vsel %vm7922, %v8387, %v8386
      %v8389 = vperm.slane %v4759, %v7918
      %v8390 = vperm.slane %v4762, %v7920
      %v8391 = vsel %vm7922, %v8390, %v8389
      %v8392 = vperm.slane %v4765, %v7918
      %v8393 = vperm.slane %v4768, %v7920
      %v8394 = vsel %vm7922, %v8393, %v8392
      %v8395 = vperm.slane %v4771, %v7918
      %v8396 = vperm.slane %v4774, %v7920
      %v8397 = vsel %vm7922, %v8396, %v8395
      %v8398 = vperm.slane %v4777, %v7918
      %v8399 = vperm.slane %v4780, %v7920
      %v8400 = vsel %vm7922, %v8399, %v8398
      %v8401 = vperm.slane %v4783, %v7918
      %v8402 = vperm.slane %v4786, %v7920
      %v8403 = vsel %vm7922, %v8402, %v8401
      %v8404 = vperm.slane %v4789, %v7918
      %v8405 = vperm.slane %v4792, %v7920
      %v8406 = vsel %vm7922, %v8405, %v8404
      %v8407 = vperm.slane %v4795, %v7918
      %v8408 = vperm.slane %v4798, %v7920
      %v8409 = vsel %vm7922, %v8408, %v8407
      %v8410 = vperm.slane %v4801, %v7918
      %v8411 = vperm.slane %v4804, %v7920
      %v8412 = vsel %vm7922, %v8411, %v8410
      %v8413 = vperm.slane %v4807, %v7918
      %v8414 = vperm.slane %v4810, %v7920
      %v8415 = vsel %vm7922, %v8414, %v8413
      %v8416 = vperm.slane %v4813, %v7918
      %v8417 = vperm.slane %v4816, %v7920
      %v8418 = vsel %vm7922, %v8417, %v8416
      %v8419 = vperm.slane %v4819, %v7918
      %v8420 = vperm.slane %v4822, %v7920
      %v8421 = vsel %vm7922, %v8420, %v8419
      %v8422 = vperm.slane %v4825, %v7918
      %v8423 = vperm.slane %v4828, %v7920
      %v8424 = vsel %vm7922, %v8423, %v8422
      %v8425 = vperm.slane %v4831, %v7918
      %v8426 = vperm.slane %v4834, %v7920
      %v8427 = vsel %vm7922, %v8426, %v8425
      %v8428 = vperm.slane %v4837, %v7918
      %v8429 = vperm.slane %v4840, %v7920
      %v8430 = vsel %vm7922, %v8429, %v8428
      %v8431 = vperm.slane %v4843, %v7918
      %v8432 = vperm.slane %v4846, %v7920
      %v8433 = vsel %vm7922, %v8432, %v8431
      %v8434 = vperm.slane %v4849, %v7918
      %v8435 = vperm.slane %v4852, %v7920
      %v8436 = vsel %vm7922, %v8435, %v8434
      %v8437 = vperm.slane %v4855, %v7918
      %v8438 = vperm.slane %v4858, %v7920
      %v8439 = vsel %vm7922, %v8438, %v8437
      %v8440 = vperm.slane %v4861, %v7918
      %v8441 = vperm.slane %v4864, %v7920
      %v8442 = vsel %vm7922, %v8441, %v8440
      %v8443 = vperm.slane %v4867, %v7918
      %v8444 = vperm.slane %v4870, %v7920
      %v8445 = vsel %vm7922, %v8444, %v8443
      %v8446 = vperm.slane %v4873, %v7918
      %v8447 = vperm.slane %v4876, %v7920
      %v8448 = vsel %vm7922, %v8447, %v8446
      %v8449 = vperm.slane %v4879, %v7918
      %v8450 = vperm.slane %v4882, %v7920
      %v8451 = vsel %vm7922, %v8450, %v8449
      %v8452 = vperm.slane %v4885, %v7918
      %v8453 = vperm.slane %v4888, %v7920
      %v8454 = vsel %vm7922, %v8453, %v8452
      %v8455 = vperm.slane %v4891, %v7918
      %v8456 = vperm.slane %v4894, %v7920
      %v8457 = vsel %vm7922, %v8456, %v8455
      %v8458 = vperm.slane %v4897, %v7918
      %v8459 = vperm.slane %v4900, %v7920
      %v8460 = vsel %vm7922, %v8459, %v8458
      %v8461 = vperm.slane %v4903, %v7918
      %v8462 = vperm.slane %v4906, %v7920
      %v8463 = vsel %vm7922, %v8462, %v8461
      %v8464 = vperm.slane %v4909, %v7918
      %v8465 = vperm.slane %v4912, %v7920
      %v8466 = vsel %vm7922, %v8465, %v8464
      %v8467 = vperm.slane %v4915, %v7918
      %v8468 = vperm.slane %v4918, %v7920
      %v8469 = vsel %vm7922, %v8468, %v8467
      %v8470 = vperm.slane %v4921, %v7918
      %v8471 = vperm.slane %v4924, %v7920
      %v8472 = vsel %vm7922, %v8471, %v8470
      %v8473 = vperm.slane %v4927, %v7918
      %v8474 = vperm.slane %v4930, %v7920
      %v8475 = vsel %vm7922, %v8474, %v8473
      %v8476 = vperm.slane %v4933, %v7918
      %v8477 = vperm.slane %v4936, %v7920
      %v8478 = vsel %vm7922, %v8477, %v8476
      %v8479 = vperm.slane %v4939, %v7918
      %v8480 = vperm.slane %v4942, %v7920
      %v8481 = vsel %vm7922, %v8480, %v8479
      %v8482 = vperm.slane %v4945, %v7918
      %v8483 = vperm.slane %v4948, %v7920
      %v8484 = vsel %vm7922, %v8483, %v8482
      %v8485 = vperm.slane %v4951, %v7918
      %v8486 = vperm.slane %v4954, %v7920
      %v8487 = vsel %vm7922, %v8486, %v8485
      %v8488 = vperm.slane %v4957, %v7918
      %v8489 = vperm.slane %v4960, %v7920
      %v8490 = vsel %vm7922, %v8489, %v8488
      %v8491 = vperm.slane %v4963, %v7918
      %v8492 = vperm.slane %v4966, %v7920
      %v8493 = vsel %vm7922, %v8492, %v8491
      %v8494 = vperm.slane %v4969, %v7918
      %v8495 = vperm.slane %v4972, %v7920
      %v8496 = vsel %vm7922, %v8495, %v8494
      %v8497 = vperm.slane %v4975, %v7918
      %v8498 = vperm.slane %v4978, %v7920
      %v8499 = vsel %vm7922, %v8498, %v8497
      %v8500 = vperm.slane %v4981, %v7918
      %v8501 = vperm.slane %v4984, %v7920
      %v8502 = vsel %vm7922, %v8501, %v8500
      %v8503 = vperm.slane %v4987, %v7918
      %v8504 = vperm.slane %v4990, %v7920
      %v8505 = vsel %vm7922, %v8504, %v8503
      %v8506 = vperm.slane %v4993, %v7918
      %v8507 = vperm.slane %v4996, %v7920
      %v8508 = vsel %vm7922, %v8507, %v8506
      %v8509 = vperm.slane %v4999, %v7918
      %v8510 = vperm.slane %v5002, %v7920
      %v8511 = vsel %vm7922, %v8510, %v8509
      %v8512 = vperm.slane %v5005, %v7918
      %v8513 = vperm.slane %v5008, %v7920
      %v8514 = vsel %vm7922, %v8513, %v8512
      %v8515 = vperm.slane %v5011, %v7918
      %v8516 = vperm.slane %v5014, %v7920
      %v8517 = vsel %vm7922, %v8516, %v8515
      %v8518 = vperm.slane %v5017, %v7918
      %v8519 = vperm.slane %v5020, %v7920
      %v8520 = vsel %vm7922, %v8519, %v8518
      %v8521 = vperm.slane %v5023, %v7918
      %v8522 = vperm.slane %v5026, %v7920
      %v8523 = vsel %vm7922, %v8522, %v8521
      %v8524 = vperm.slane %v5029, %v7918
      %v8525 = vperm.slane %v5032, %v7920
      %v8526 = vsel %vm7922, %v8525, %v8524
      %v8527 = vperm.slane %v5035, %v7918
      %v8528 = vperm.slane %v5038, %v7920
      %v8529 = vsel %vm7922, %v8528, %v8527
      %v8530 = vperm.slane %v5041, %v7918
      %v8531 = vperm.slane %v5044, %v7920
      %v8532 = vsel %vm7922, %v8531, %v8530
      %v8533 = vperm.slane %v5047, %v7918
      %v8534 = vperm.slane %v5050, %v7920
      %v8535 = vsel %vm7922, %v8534, %v8533
      %v8536 = vperm.slane %v5053, %v7918
      %v8537 = vperm.slane %v5056, %v7920
      %v8538 = vsel %vm7922, %v8537, %v8536
      %v8539 = vperm.slane %v5059, %v7918
      %v8540 = vperm.slane %v5062, %v7920
      %v8541 = vsel %vm7922, %v8540, %v8539
      %v8542 = vperm.slane %v5065, %v7918
      %v8543 = vperm.slane %v5068, %v7920
      %v8544 = vsel %vm7922, %v8543, %v8542
      %v8545 = vperm.slane %v5071, %v7918
      %v8546 = vperm.slane %v5074, %v7920
      %v8547 = vsel %vm7922, %v8546, %v8545
      %v8548 = vperm.slane %v5077, %v7918
      %v8549 = vperm.slane %v5080, %v7920
      %v8550 = vsel %vm7922, %v8549, %v8548
      %v8551 = vperm.slane %v5083, %v7918
      %v8552 = vperm.slane %v5086, %v7920
      %v8553 = vsel %vm7922, %v8552, %v8551
      %v8554 = vperm.slane %v5089, %v7918
      %v8555 = vperm.slane %v5092, %v7920
      %v8556 = vsel %vm7922, %v8555, %v8554
      %v8557 = vperm.slane %v5095, %v7918
      %v8558 = vperm.slane %v5098, %v7920
      %v8559 = vsel %vm7922, %v8558, %v8557
      %v8560 = vperm.slane %v5101, %v7918
      %v8561 = vperm.slane %v5104, %v7920
      %v8562 = vsel %vm7922, %v8561, %v8560
      %v8563 = vperm.slane %v5107, %v7918
      %v8564 = vperm.slane %v5110, %v7920
      %v8565 = vsel %vm7922, %v8564, %v8563
      %v8566 = vperm.slane %v5113, %v7918
      %v8567 = vperm.slane %v5116, %v7920
      %v8568 = vsel %vm7922, %v8567, %v8566
      %v8569 = vperm.slane %v5119, %v7918
      %v8570 = vperm.slane %v5122, %v7920
      %v8571 = vsel %vm7922, %v8570, %v8569
      %v8572 = vperm.slane %v5125, %v7918
      %v8573 = vperm.slane %v5128, %v7920
      %v8574 = vsel %vm7922, %v8573, %v8572
      %v8575 = vperm.slane %v5131, %v7918
      %v8576 = vperm.slane %v5134, %v7920
      %v8577 = vsel %vm7922, %v8576, %v8575
      %v8578 = vperm.slane %v5137, %v7918
      %v8579 = vperm.slane %v5140, %v7920
      %v8580 = vsel %vm7922, %v8579, %v8578
      %v8581 = vperm.slane %v5143, %v7918
      %v8582 = vperm.slane %v5146, %v7920
      %v8583 = vsel %vm7922, %v8582, %v8581
      %v8584 = vperm.slane %v5149, %v7918
      %v8585 = vperm.slane %v5152, %v7920
      %v8586 = vsel %vm7922, %v8585, %v8584
      %v8587 = vperm.slane %v5155, %v7918
      %v8588 = vperm.slane %v5158, %v7920
      %v8589 = vsel %vm7922, %v8588, %v8587
      %v8590 = vperm.slane %v5161, %v7918
      %v8591 = vperm.slane %v5164, %v7920
      %v8592 = vsel %vm7922, %v8591, %v8590
      %v8593 = vperm.slane %v5167, %v7918
      %v8594 = vperm.slane %v5170, %v7920
      %v8595 = vsel %vm7922, %v8594, %v8593
      %v8596 = vperm.slane %v5173, %v7918
      %v8597 = vperm.slane %v5176, %v7920
      %v8598 = vsel %vm7922, %v8597, %v8596
      %v8599 = vperm.slane %v5179, %v7918
      %v8600 = vperm.slane %v5182, %v7920
      %v8601 = vsel %vm7922, %v8600, %v8599
      %v8602 = vperm.slane %v5185, %v7918
      %v8603 = vperm.slane %v5188, %v7920
      %v8604 = vsel %vm7922, %v8603, %v8602
      %v8605 = vperm.slane %v5191, %v7918
      %v8606 = vperm.slane %v5194, %v7920
      %v8607 = vsel %vm7922, %v8606, %v8605
      %v8608 = vperm.slane %v5197, %v7918
      %v8609 = vperm.slane %v5200, %v7920
      %v8610 = vsel %vm7922, %v8609, %v8608
      %v8611 = vperm.slane %v5203, %v7918
      %v8612 = vperm.slane %v5206, %v7920
      %v8613 = vsel %vm7922, %v8612, %v8611
      %v8614 = vperm.slane %v5209, %v7918
      %v8615 = vperm.slane %v5212, %v7920
      %v8616 = vsel %vm7922, %v8615, %v8614
      %v8617 = vperm.slane %v5215, %v7918
      %v8618 = vperm.slane %v5218, %v7920
      %v8619 = vsel %vm7922, %v8618, %v8617
      %v8620 = vperm.slane %v5221, %v7918
      %v8621 = vperm.slane %v5224, %v7920
      %v8622 = vsel %vm7922, %v8621, %v8620
      %v8623 = vperm.slane %v5227, %v7918
      %v8624 = vperm.slane %v5230, %v7920
      %v8625 = vsel %vm7922, %v8624, %v8623
      %v8626 = vperm.slane %v5233, %v7918
      %v8627 = vperm.slane %v5236, %v7920
      %v8628 = vsel %vm7922, %v8627, %v8626
      %v8629 = vperm.slane %v5239, %v7918
      %v8630 = vperm.slane %v5242, %v7920
      %v8631 = vsel %vm7922, %v8630, %v8629
      %v8632 = vperm.slane %v5245, %v7918
      %v8633 = vperm.slane %v5248, %v7920
      %v8634 = vsel %vm7922, %v8633, %v8632
      %v8635 = vperm.slane %v5251, %v7918
      %v8636 = vperm.slane %v5254, %v7920
      %v8637 = vsel %vm7922, %v8636, %v8635
      %v8638 = vperm.slane %v5257, %v7918
      %v8639 = vperm.slane %v5260, %v7920
      %v8640 = vsel %vm7922, %v8639, %v8638
      %v8641 = vperm.slane %v5263, %v7918
      %v8642 = vperm.slane %v5266, %v7920
      %v8643 = vsel %vm7922, %v8642, %v8641
      %v8644 = vperm.slane %v5269, %v7918
      %v8645 = vperm.slane %v5272, %v7920
      %v8646 = vsel %vm7922, %v8645, %v8644
      %v8647 = vperm.slane %v5275, %v7918
      %v8648 = vperm.slane %v5278, %v7920
      %v8649 = vsel %vm7922, %v8648, %v8647
      %v8650 = vperm.slane %v5281, %v7918
      %v8651 = vperm.slane %v5284, %v7920
      %v8652 = vsel %vm7922, %v8651, %v8650
      %v8653 = vperm.slane %v5287, %v7918
      %v8654 = vperm.slane %v5290, %v7920
      %v8655 = vsel %vm7922, %v8654, %v8653
      %v8656 = vperm.slane %v5293, %v7918
      %v8657 = vperm.slane %v5296, %v7920
      %v8658 = vsel %vm7922, %v8657, %v8656
      %v8659 = vperm.slane %v5299, %v7918
      %v8660 = vperm.slane %v5302, %v7920
      %v8661 = vsel %vm7922, %v8660, %v8659
      %v8662 = vperm.slane %v5305, %v7918
      %v8663 = vperm.slane %v5308, %v7920
      %v8664 = vsel %vm7922, %v8663, %v8662
      %v8665 = vperm.slane %v5311, %v7918
      %v8666 = vperm.slane %v5314, %v7920
      %v8667 = vsel %vm7922, %v8666, %v8665
      %v8668 = vperm.slane %v5317, %v7918
      %v8669 = vperm.slane %v5320, %v7920
      %v8670 = vsel %vm7922, %v8669, %v8668
      %v8671 = vperm.slane %v5323, %v7918
      %v8672 = vperm.slane %v5326, %v7920
      %v8673 = vsel %vm7922, %v8672, %v8671
      %v8674 = vperm.slane %v5329, %v7918
      %v8675 = vperm.slane %v5332, %v7920
      %v8676 = vsel %vm7922, %v8675, %v8674
      %v8677 = vperm.slane %v5335, %v7918
      %v8678 = vperm.slane %v5338, %v7920
      %v8679 = vsel %vm7922, %v8678, %v8677
      %v8680 = vperm.slane %v5341, %v7918
      %v8681 = vperm.slane %v5344, %v7920
      %v8682 = vsel %vm7922, %v8681, %v8680
      %v8683 = vperm.slane %v5347, %v7918
      %v8684 = vperm.slane %v5350, %v7920
      %v8685 = vsel %vm7922, %v8684, %v8683
      %v8686 = vperm.slane %v5353, %v7918
      %v8687 = vperm.slane %v5356, %v7920
      %v8688 = vsel %vm7922, %v8687, %v8686
      %v8689 = vperm.slane %v5359, %v7918
      %v8690 = vperm.slane %v5362, %v7920
      %v8691 = vsel %vm7922, %v8690, %v8689
      %v8692 = vperm.slane %v5365, %v7918
      %v8693 = vperm.slane %v5368, %v7920
      %v8694 = vsel %vm7922, %v8693, %v8692
      %v8695 = vperm.slane %v5371, %v7918
      %v8696 = vperm.slane %v5374, %v7920
      %v8697 = vsel %vm7922, %v8696, %v8695
      %v8698 = vperm.slane %v5377, %v7918
      %v8699 = vperm.slane %v5380, %v7920
      %v8700 = vsel %vm7922, %v8699, %v8698
      %v8701 = vperm.slane %v5383, %v7918
      %v8702 = vperm.slane %v5386, %v7920
      %v8703 = vsel %vm7922, %v8702, %v8701
      %v8704 = vperm.slane %v5389, %v7918
      %v8705 = vperm.slane %v5392, %v7920
      %v8706 = vsel %vm7922, %v8705, %v8704
      %v8707 = vperm.slane %v5395, %v7918
      %v8708 = vperm.slane %v5398, %v7920
      %v8709 = vsel %vm7922, %v8708, %v8707
      %v8710 = vperm.slane %v5401, %v7918
      %v8711 = vperm.slane %v5404, %v7920
      %v8712 = vsel %vm7922, %v8711, %v8710
      %v8713 = vperm.slane %v5407, %v7918
      %v8714 = vperm.slane %v5410, %v7920
      %v8715 = vsel %vm7922, %v8714, %v8713
      %v8716 = vperm.slane %v5413, %v7918
      %v8717 = vperm.slane %v5416, %v7920
      %v8718 = vsel %vm7922, %v8717, %v8716
      %v8719 = vperm.slane %v5419, %v7918
      %v8720 = vperm.slane %v5422, %v7920
      %v8721 = vsel %vm7922, %v8720, %v8719
      %v8722 = vperm.slane %v5425, %v7918
      %v8723 = vperm.slane %v5428, %v7920
      %v8724 = vsel %vm7922, %v8723, %v8722
      %v8725 = vperm.slane %v5431, %v7918
      %v8726 = vperm.slane %v5434, %v7920
      %v8727 = vsel %vm7922, %v8726, %v8725
      %v8728 = vperm.slane %v5437, %v7918
      %v8729 = vperm.slane %v5440, %v7920
      %v8730 = vsel %vm7922, %v8729, %v8728
      %v8731 = vperm.slane %v5443, %v7918
      %v8732 = vperm.slane %v5446, %v7920
      %v8733 = vsel %vm7922, %v8732, %v8731
      %v8734 = vperm.slane %v5449, %v7918
      %v8735 = vperm.slane %v5452, %v7920
      %v8736 = vsel %vm7922, %v8735, %v8734
      %v8737 = vperm.slane %v5455, %v7918
      %v8738 = vperm.slane %v5458, %v7920
      %v8739 = vsel %vm7922, %v8738, %v8737
      %v8740 = vperm.slane %v5461, %v7918
      %v8741 = vperm.slane %v5464, %v7920
      %v8742 = vsel %vm7922, %v8741, %v8740
      %v8743 = vperm.slane %v5467, %v7918
      %v8744 = vperm.slane %v5470, %v7920
      %v8745 = vsel %vm7922, %v8744, %v8743
      %v8746 = vperm.slane %v5473, %v7918
      %v8747 = vperm.slane %v5476, %v7920
      %v8748 = vsel %vm7922, %v8747, %v8746
      %v8749 = vperm.slane %v5479, %v7918
      %v8750 = vperm.slane %v5482, %v7920
      %v8751 = vsel %vm7922, %v8750, %v8749
      %v8752 = vperm.slane %v5485, %v7918
      %v8753 = vperm.slane %v5488, %v7920
      %v8754 = vsel %vm7922, %v8753, %v8752
      %v8755 = vperm.slane %v5491, %v7918
      %v8756 = vperm.slane %v5494, %v7920
      %v8757 = vsel %vm7922, %v8756, %v8755
      %v8758 = vperm.slane %v5497, %v7918
      %v8759 = vperm.slane %v5500, %v7920
      %v8760 = vsel %vm7922, %v8759, %v8758
      %v8761 = vperm.slane %v5503, %v7918
      %v8762 = vperm.slane %v5506, %v7920
      %v8763 = vsel %vm7922, %v8762, %v8761
      %v8764 = vperm.slane %v5509, %v7918
      %v8765 = vperm.slane %v5512, %v7920
      %v8766 = vsel %vm7922, %v8765, %v8764
      %v8767 = vperm.slane %v5515, %v7918
      %v8768 = vperm.slane %v5518, %v7920
      %v8769 = vsel %vm7922, %v8768, %v8767
      %v8770 = vperm.slane %v5521, %v7918
      %v8771 = vperm.slane %v5524, %v7920
      %v8772 = vsel %vm7922, %v8771, %v8770
      %v8773 = vperm.slane %v5527, %v7918
      %v8774 = vperm.slane %v5530, %v7920
      %v8775 = vsel %vm7922, %v8774, %v8773
      %v8776 = vperm.slane %v5533, %v7918
      %v8777 = vperm.slane %v5536, %v7920
      %v8778 = vsel %vm7922, %v8777, %v8776
      %v8779 = vperm.slane %v5539, %v7918
      %v8780 = vperm.slane %v5542, %v7920
      %v8781 = vsel %vm7922, %v8780, %v8779
      %v8782 = vperm.slane %v5545, %v7918
      %v8783 = vperm.slane %v5548, %v7920
      %v8784 = vsel %vm7922, %v8783, %v8782
      %v8785 = vperm.slane %v5551, %v7918
      %v8786 = vperm.slane %v5554, %v7920
      %v8787 = vsel %vm7922, %v8786, %v8785
      %v8788 = vperm.slane %v5557, %v7918
      %v8789 = vperm.slane %v5560, %v7920
      %v8790 = vsel %vm7922, %v8789, %v8788
      %v8791 = vperm.slane %v5563, %v7918
      %v8792 = vperm.slane %v5566, %v7920
      %v8793 = vsel %vm7922, %v8792, %v8791
      %v8794 = vperm.slane %v5569, %v7918
      %v8795 = vperm.slane %v5572, %v7920
      %v8796 = vsel %vm7922, %v8795, %v8794
      %v8797 = vperm.slane %v5575, %v7918
      %v8798 = vperm.slane %v5578, %v7920
      %v8799 = vsel %vm7922, %v8798, %v8797
      %v8800 = vperm.slane %v5581, %v7918
      %v8801 = vperm.slane %v5584, %v7920
      %v8802 = vsel %vm7922, %v8801, %v8800
      %v8803 = vperm.slane %v5587, %v7918
      %v8804 = vperm.slane %v5590, %v7920
      %v8805 = vsel %vm7922, %v8804, %v8803
      %v8806 = vperm.slane %v5593, %v7918
      %v8807 = vperm.slane %v5596, %v7920
      %v8808 = vsel %vm7922, %v8807, %v8806
      %v8809 = vperm.slane %v5599, %v7918
      %v8810 = vperm.slane %v5602, %v7920
      %v8811 = vsel %vm7922, %v8810, %v8809
      %v8812 = vperm.slane %v5605, %v7918
      %v8813 = vperm.slane %v5608, %v7920
      %v8814 = vsel %vm7922, %v8813, %v8812
      %v8815 = vperm.slane %v5611, %v7918
      %v8816 = vperm.slane %v5614, %v7920
      %v8817 = vsel %vm7922, %v8816, %v8815
      %v8818 = vperm.slane %v5617, %v7918
      %v8819 = vperm.slane %v5620, %v7920
      %v8820 = vsel %vm7922, %v8819, %v8818
      %v8821 = vperm.slane %v5623, %v7918
      %v8822 = vperm.slane %v5626, %v7920
      %v8823 = vsel %vm7922, %v8822, %v8821
      %v8824 = vperm.slane %v5629, %v7918
      %v8825 = vperm.slane %v5632, %v7920
      %v8826 = vsel %vm7922, %v8825, %v8824
      %v8827 = vperm.slane %v5635, %v7918
      %v8828 = vperm.slane %v5638, %v7920
      %v8829 = vsel %vm7922, %v8828, %v8827
      %v8830 = vperm.slane %v5641, %v7918
      %v8831 = vperm.slane %v5644, %v7920
      %v8832 = vsel %vm7922, %v8831, %v8830
      %v8833 = vperm.slane %v5647, %v7918
      %v8834 = vperm.slane %v5650, %v7920
      %v8835 = vsel %vm7922, %v8834, %v8833
      %v8836 = vperm.slane %v5653, %v7918
      %v8837 = vperm.slane %v5656, %v7920
      %v8838 = vsel %vm7922, %v8837, %v8836
      %v8839 = vperm.slane %v5659, %v7918
      %v8840 = vperm.slane %v5662, %v7920
      %v8841 = vsel %vm7922, %v8840, %v8839
      %v8842 = vperm.slane %v5665, %v7918
      %v8843 = vperm.slane %v5668, %v7920
      %v8844 = vsel %vm7922, %v8843, %v8842
      %v8845 = vperm.slane %v5671, %v7918
      %v8846 = vperm.slane %v5674, %v7920
      %v8847 = vsel %vm7922, %v8846, %v8845
      %v8848 = vperm.slane %v5677, %v7918
      %v8849 = vperm.slane %v5680, %v7920
      %v8850 = vsel %vm7922, %v8849, %v8848
      %v8851 = vperm.slane %v5683, %v7918
      %v8852 = vperm.slane %v5686, %v7920
      %v8853 = vsel %vm7922, %v8852, %v8851
      %v8854 = vperm.slane %v5689, %v7918
      %v8855 = vperm.slane %v5692, %v7920
      %v8856 = vsel %vm7922, %v8855, %v8854
      %v8857 = vperm.slane %v5695, %v7918
      %v8858 = vperm.slane %v5698, %v7920
      %v8859 = vsel %vm7922, %v8858, %v8857
      %v8860 = vperm.slane %v5701, %v7918
      %v8861 = vperm.slane %v5704, %v7920
      %v8862 = vsel %vm7922, %v8861, %v8860
      %v8863 = vperm.slane %v5707, %v7918
      %v8864 = vperm.slane %v5710, %v7920
      %v8865 = vsel %vm7922, %v8864, %v8863
      %v8866 = vperm.slane %v5713, %v7918
      %v8867 = vperm.slane %v5716, %v7920
      %v8868 = vsel %vm7922, %v8867, %v8866
      %v8869 = vperm.slane %v5719, %v7918
      %v8870 = vperm.slane %v5722, %v7920
      %v8871 = vsel %vm7922, %v8870, %v8869
      %v8872 = vperm.slane %v5725, %v7918
      %v8873 = vperm.slane %v5728, %v7920
      %v8874 = vsel %vm7922, %v8873, %v8872
      %v8875 = vperm.slane %v5731, %v7918
      %v8876 = vperm.slane %v5734, %v7920
      %v8877 = vsel %vm7922, %v8876, %v8875
      %v8878 = vperm.slane %v5737, %v7918
      %v8879 = vperm.slane %v5740, %v7920
      %v8880 = vsel %vm7922, %v8879, %v8878
      %v8881 = vperm.slane %v5743, %v7918
      %v8882 = vperm.slane %v5746, %v7920
      %v8883 = vsel %vm7922, %v8882, %v8881
      %v8884 = vperm.slane %v5749, %v7918
      %v8885 = vperm.slane %v5752, %v7920
      %v8886 = vsel %vm7922, %v8885, %v8884
      %v8887 = vperm.slane %v5755, %v7918
      %v8888 = vperm.slane %v5758, %v7920
      %v8889 = vsel %vm7922, %v8888, %v8887
      %v8890 = vperm.slane %v5761, %v7918
      %v8891 = vperm.slane %v5764, %v7920
      %v8892 = vsel %vm7922, %v8891, %v8890
      %v8893 = vperm.slane %v5767, %v7918
      %v8894 = vperm.slane %v5770, %v7920
      %v8895 = vsel %vm7922, %v8894, %v8893
      %v8896 = vperm.slane %v5773, %v7918
      %v8897 = vperm.slane %v5776, %v7920
      %v8898 = vsel %vm7922, %v8897, %v8896
      %v8899 = vperm.slane %v5779, %v7918
      %v8900 = vperm.slane %v5782, %v7920
      %v8901 = vsel %vm7922, %v8900, %v8899
      %v8902 = vperm.slane %v5785, %v7918
      %v8903 = vperm.slane %v5788, %v7920
      %v8904 = vsel %vm7922, %v8903, %v8902
      %v8905 = vperm.slane %v5791, %v7918
      %v8906 = vperm.slane %v5794, %v7920
      %v8907 = vsel %vm7922, %v8906, %v8905
      %v8908 = vperm.slane %v5797, %v7918
      %v8909 = vperm.slane %v5800, %v7920
      %v8910 = vsel %vm7922, %v8909, %v8908
      %v8911 = vperm.slane %v5803, %v7918
      %v8912 = vperm.slane %v5806, %v7920
      %v8913 = vsel %vm7922, %v8912, %v8911
      %v8914 = vperm.slane %v5809, %v7918
      %v8915 = vperm.slane %v5812, %v7920
      %v8916 = vsel %vm7922, %v8915, %v8914
      %v8917 = vperm.slane %v5815, %v7918
      %v8918 = vperm.slane %v5818, %v7920
      %v8919 = vsel %vm7922, %v8918, %v8917
      %v8920 = vperm.slane %v5821, %v7918
      %v8921 = vperm.slane %v5824, %v7920
      %v8922 = vsel %vm7922, %v8921, %v8920
      %v8923 = vperm.slane %v5827, %v7918
      %v8924 = vperm.slane %v5830, %v7920
      %v8925 = vsel %vm7922, %v8924, %v8923
      %v8926 = vperm.slane %v5833, %v7918
      %v8927 = vperm.slane %v5836, %v7920
      %v8928 = vsel %vm7922, %v8927, %v8926
      %v8929 = vperm.slane %v5839, %v7918
      %v8930 = vperm.slane %v5842, %v7920
      %v8931 = vsel %vm7922, %v8930, %v8929
      %v8932 = vperm.slane %v5845, %v7918
      %v8933 = vperm.slane %v5848, %v7920
      %v8934 = vsel %vm7922, %v8933, %v8932
      %v8935 = vperm.slane %v5851, %v7918
      %v8936 = vperm.slane %v5854, %v7920
      %v8937 = vsel %vm7922, %v8936, %v8935
      %v8938 = vperm.slane %v5857, %v7918
      %v8939 = vperm.slane %v5860, %v7920
      %v8940 = vsel %vm7922, %v8939, %v8938
      %v8941 = vperm.slane %v5863, %v7918
      %v8942 = vperm.slane %v5866, %v7920
      %v8943 = vsel %vm7922, %v8942, %v8941
      %v8944 = vperm.slane %v5869, %v7918
      %v8945 = vperm.slane %v5872, %v7920
      %v8946 = vsel %vm7922, %v8945, %v8944
      %v8947 = vperm.slane %v5875, %v7918
      %v8948 = vperm.slane %v5878, %v7920
      %v8949 = vsel %vm7922, %v8948, %v8947
      %v8950 = vperm.slane %v5881, %v7918
      %v8951 = vperm.slane %v5884, %v7920
      %v8952 = vsel %vm7922, %v8951, %v8950
      %v8953 = vperm.slane %v5887, %v7918
      %v8954 = vperm.slane %v5890, %v7920
      %v8955 = vsel %vm7922, %v8954, %v8953
      %v8956 = vperm.slane %v5893, %v7918
      %v8957 = vperm.slane %v5896, %v7920
      %v8958 = vsel %vm7922, %v8957, %v8956
      %v8959 = vperm.slane %v5899, %v7918
      %v8960 = vperm.slane %v5902, %v7920
      %v8961 = vsel %vm7922, %v8960, %v8959
      %v8962 = vperm.slane %v5905, %v7918
      %v8963 = vperm.slane %v5908, %v7920
      %v8964 = vsel %vm7922, %v8963, %v8962
      %v8965 = vperm.slane %v5911, %v7918
      %v8966 = vperm.slane %v5914, %v7920
      %v8967 = vsel %vm7922, %v8966, %v8965
      %v8968 = vperm.slane %v5917, %v7918
      %v8969 = vperm.slane %v5920, %v7920
      %v8970 = vsel %vm7922, %v8969, %v8968
      %v8971 = vperm.slane %v5923, %v7918
      %v8972 = vperm.slane %v5926, %v7920
      %v8973 = vsel %vm7922, %v8972, %v8971
      %v8974 = vperm.slane %v5929, %v7918
      %v8975 = vperm.slane %v5932, %v7920
      %v8976 = vsel %vm7922, %v8975, %v8974
      %v8977 = vperm.slane %v5935, %v7918
      %v8978 = vperm.slane %v5938, %v7920
      %v8979 = vsel %vm7922, %v8978, %v8977
      %v8980 = vperm.slane %v5941, %v7918
      %v8981 = vperm.slane %v5944, %v7920
      %v8982 = vsel %vm7922, %v8981, %v8980
      %v8983 = vperm.slane %v5947, %v7918
      %v8984 = vperm.slane %v5950, %v7920
      %v8985 = vsel %vm7922, %v8984, %v8983
      %v8986 = vperm.slane %v5953, %v7918
      %v8987 = vperm.slane %v5956, %v7920
      %v8988 = vsel %vm7922, %v8987, %v8986
      %v8989 = vperm.slane %v5959, %v7918
      %v8990 = vperm.slane %v5962, %v7920
      %v8991 = vsel %vm7922, %v8990, %v8989
      %v8992 = vperm.slane %v5965, %v7918
      %v8993 = vperm.slane %v5968, %v7920
      %v8994 = vsel %vm7922, %v8993, %v8992
      %v8995 = vperm.slane %v5971, %v7918
      %v8996 = vperm.slane %v5974, %v7920
      %v8997 = vsel %vm7922, %v8996, %v8995
      %v8998 = vperm.slane %v5977, %v7918
      %v8999 = vperm.slane %v5980, %v7920
      %v9000 = vsel %vm7922, %v8999, %v8998
      %v9001 = vperm.slane %v5983, %v7918
      %v9002 = vperm.slane %v5986, %v7920
      %v9003 = vsel %vm7922, %v9002, %v9001
      %v9004 = vperm.slane %v5989, %v7918
      %v9005 = vperm.slane %v5992, %v7920
      %v9006 = vsel %vm7922, %v9005, %v9004
      %v9007 = vperm.slane %v5995, %v7918
      %v9008 = vperm.slane %v5998, %v7920
      %v9009 = vsel %vm7922, %v9008, %v9007
      %v9010 = vperm.slane %v6001, %v7918
      %v9011 = vperm.slane %v6004, %v7920
      %v9012 = vsel %vm7922, %v9011, %v9010
      %v9013 = vperm.slane %v6007, %v7918
      %v9014 = vperm.slane %v6010, %v7920
      %v9015 = vsel %vm7922, %v9014, %v9013
      %v9016 = vperm.slane %v6013, %v7918
      %v9017 = vperm.slane %v6016, %v7920
      %v9018 = vsel %vm7922, %v9017, %v9016
      %v9019 = vperm.slane %v6019, %v7918
      %v9020 = vperm.slane %v6022, %v7920
      %v9021 = vsel %vm7922, %v9020, %v9019
      %v9022 = vperm.slane %v6025, %v7918
      %v9023 = vperm.slane %v6028, %v7920
      %v9024 = vsel %vm7922, %v9023, %v9022
      %v9025 = vperm.slane %v6031, %v7918
      %v9026 = vperm.slane %v6034, %v7920
      %v9027 = vsel %vm7922, %v9026, %v9025
      %v9028 = vperm.slane %v6037, %v7918
      %v9029 = vperm.slane %v6040, %v7920
      %v9030 = vsel %vm7922, %v9029, %v9028
      %v9031 = vperm.slane %v6043, %v7918
      %v9032 = vperm.slane %v6046, %v7920
      %v9033 = vsel %vm7922, %v9032, %v9031
      %v9034 = vperm.slane %v6049, %v7918
      %v9035 = vperm.slane %v6052, %v7920
      %v9036 = vsel %vm7922, %v9035, %v9034
      %v9037 = vperm.slane %v6055, %v7918
      %v9038 = vperm.slane %v6058, %v7920
      %v9039 = vsel %vm7922, %v9038, %v9037
      %v9040 = vperm.slane %v6061, %v7918
      %v9041 = vperm.slane %v6064, %v7920
      %v9042 = vsel %vm7922, %v9041, %v9040
      %v9043 = vperm.slane %v6067, %v7918
      %v9044 = vperm.slane %v6070, %v7920
      %v9045 = vsel %vm7922, %v9044, %v9043
      %v9046 = vperm.slane %v6073, %v7918
      %v9047 = vperm.slane %v6076, %v7920
      %v9048 = vsel %vm7922, %v9047, %v9046
      %v9049 = vperm.slane %v6079, %v7918
      %v9050 = vperm.slane %v6082, %v7920
      %v9051 = vsel %vm7922, %v9050, %v9049
      %v9052 = vperm.slane %v6085, %v7918
      %v9053 = vperm.slane %v6088, %v7920
      %v9054 = vsel %vm7922, %v9053, %v9052
      %v9055 = vperm.slane %v6091, %v7918
      %v9056 = vperm.slane %v6094, %v7920
      %v9057 = vsel %vm7922, %v9056, %v9055
      %v9058 = vperm.slane %v6097, %v7918
      %v9059 = vperm.slane %v6100, %v7920
      %v9060 = vsel %vm7922, %v9059, %v9058
      %v9061 = vperm.slane %v6103, %v7918
      %v9062 = vperm.slane %v6106, %v7920
      %v9063 = vsel %vm7922, %v9062, %v9061
      %v9064 = vperm.slane %v6109, %v7918
      %v9065 = vperm.slane %v6112, %v7920
      %v9066 = vsel %vm7922, %v9065, %v9064
      %v9067 = vperm.slane %v6115, %v7918
      %v9068 = vperm.slane %v6118, %v7920
      %v9069 = vsel %vm7922, %v9068, %v9067
      %v9070 = vperm.slane %v6121, %v7918
      %v9071 = vperm.slane %v6124, %v7920
      %v9072 = vsel %vm7922, %v9071, %v9070
      %v9073 = vperm.slane %v6127, %v7918
      %v9074 = vperm.slane %v6130, %v7920
      %v9075 = vsel %vm7922, %v9074, %v9073
      %v9076 = vperm.slane %v6133, %v7918
      %v9077 = vperm.slane %v6136, %v7920
      %v9078 = vsel %vm7922, %v9077, %v9076
      %v9079 = vperm.slane %v6139, %v7918
      %v9080 = vperm.slane %v6142, %v7920
      %v9081 = vsel %vm7922, %v9080, %v9079
      %v9082 = vperm.slane %v6145, %v7918
      %v9083 = vperm.slane %v6148, %v7920
      %v9084 = vsel %vm7922, %v9083, %v9082
      %v9085 = vperm.slane %v6151, %v7918
      %v9086 = vperm.slane %v6154, %v7920
      %v9087 = vsel %vm7922, %v9086, %v9085
      %v9088 = vperm.slane %v6157, %v7918
      %v9089 = vperm.slane %v6160, %v7920
      %v9090 = vsel %vm7922, %v9089, %v9088
      %v9091 = vperm.slane %v6163, %v7918
      %v9092 = vperm.slane %v6166, %v7920
      %v9093 = vsel %vm7922, %v9092, %v9091
      %v9094 = vperm.slane %v6169, %v7918
      %v9095 = vperm.slane %v6172, %v7920
      %v9096 = vsel %vm7922, %v9095, %v9094
      %v9097 = vperm.slane %v6175, %v7918
      %v9098 = vperm.slane %v6178, %v7920
      %v9099 = vsel %vm7922, %v9098, %v9097
      %v9100 = vperm.slane %v6181, %v7918
      %v9101 = vperm.slane %v6184, %v7920
      %v9102 = vsel %vm7922, %v9101, %v9100
      %v9103 = vperm.slane %v6187, %v7918
      %v9104 = vperm.slane %v6190, %v7920
      %v9105 = vsel %vm7922, %v9104, %v9103
      %v9106 = vperm.slane %v6193, %v7918
      %v9107 = vperm.slane %v6196, %v7920
      %v9108 = vsel %vm7922, %v9107, %v9106
      %v9109 = vperm.slane %v6199, %v7918
      %v9110 = vperm.slane %v6202, %v7920
      %v9111 = vsel %vm7922, %v9110, %v9109
      %v9112 = vperm.slane %v6205, %v7918
      %v9113 = vperm.slane %v6208, %v7920
      %v9114 = vsel %vm7922, %v9113, %v9112
      %v9115 = vperm.slane %v6211, %v7918
      %v9116 = vperm.slane %v6214, %v7920
      %v9117 = vsel %vm7922, %v9116, %v9115
      %v9118 = vperm.slane %v6217, %v7918
      %v9119 = vperm.slane %v6220, %v7920
      %v9120 = vsel %vm7922, %v9119, %v9118
      %v9121 = vperm.slane %v6223, %v7918
      %v9122 = vperm.slane %v6226, %v7920
      %v9123 = vsel %vm7922, %v9122, %v9121
      %v9124 = vperm.slane %v6229, %v7918
      %v9125 = vperm.slane %v6232, %v7920
      %v9126 = vsel %vm7922, %v9125, %v9124
      %v9127 = vperm.slane %v6235, %v7918
      %v9128 = vperm.slane %v6238, %v7920
      %v9129 = vsel %vm7922, %v9128, %v9127
      %v9130 = vperm.slane %v6241, %v7918
      %v9131 = vperm.slane %v6244, %v7920
      %v9132 = vsel %vm7922, %v9131, %v9130
      %v9133 = vperm.slane %v6247, %v7918
      %v9134 = vperm.slane %v6250, %v7920
      %v9135 = vsel %vm7922, %v9134, %v9133
      %v9136 = vperm.slane %v6253, %v7918
      %v9137 = vperm.slane %v6256, %v7920
      %v9138 = vsel %vm7922, %v9137, %v9136
      %v9139 = vperm.slane %v6259, %v7918
      %v9140 = vperm.slane %v6262, %v7920
      %v9141 = vsel %vm7922, %v9140, %v9139
      %v9142 = vperm.slane %v6265, %v7918
      %v9143 = vperm.slane %v6268, %v7920
      %v9144 = vsel %vm7922, %v9143, %v9142
      %v9145 = vperm.slane %v6271, %v7918
      %v9146 = vperm.slane %v6274, %v7920
      %v9147 = vsel %vm7922, %v9146, %v9145
      %v9148 = vperm.slane %v6277, %v7918
      %v9149 = vperm.slane %v6280, %v7920
      %v9150 = vsel %vm7922, %v9149, %v9148
      %v9151 = vperm.slane %v6283, %v7918
      %v9152 = vperm.slane %v6286, %v7920
      %v9153 = vsel %vm7922, %v9152, %v9151
      %v9154 = vperm.slane %v6289, %v7918
      %v9155 = vperm.slane %v6292, %v7920
      %v9156 = vsel %vm7922, %v9155, %v9154
      %v9157 = vperm.slane %v6295, %v7918
      %v9158 = vperm.slane %v6298, %v7920
      %v9159 = vsel %vm7922, %v9158, %v9157
      %v9160 = vperm.slane %v6301, %v7918
      %v9161 = vperm.slane %v6304, %v7920
      %v9162 = vsel %vm7922, %v9161, %v9160
      %v9163 = vperm.slane %v6307, %v7918
      %v9164 = vperm.slane %v6310, %v7920
      %v9165 = vsel %vm7922, %v9164, %v9163
      %v9166 = vperm.slane %v6313, %v7918
      %v9167 = vperm.slane %v6316, %v7920
      %v9168 = vsel %vm7922, %v9167, %v9166
      %v9169 = vperm.slane %v6319, %v7918
      %v9170 = vperm.slane %v6322, %v7920
      %v9171 = vsel %vm7922, %v9170, %v9169
      %v9172 = vperm.slane %v6325, %v7918
      %v9173 = vperm.slane %v6328, %v7920
      %v9174 = vsel %vm7922, %v9173, %v9172
      %v9175 = vperm.slane %v6331, %v7918
      %v9176 = vperm.slane %v6334, %v7920
      %v9177 = vsel %vm7922, %v9176, %v9175
      %v9178 = vperm.slane %v6337, %v7918
      %v9179 = vperm.slane %v6340, %v7920
      %v9180 = vsel %vm7922, %v9179, %v9178
      %v9181 = vperm.slane %v6343, %v7918
      %v9182 = vperm.slane %v6346, %v7920
      %v9183 = vsel %vm7922, %v9182, %v9181
      %v9184 = vperm.slane %v6349, %v7918
      %v9185 = vperm.slane %v6352, %v7920
      %v9186 = vsel %vm7922, %v9185, %v9184
      %v9187 = vperm.slane %v6355, %v7918
      %v9188 = vperm.slane %v6358, %v7920
      %v9189 = vsel %vm7922, %v9188, %v9187
      %v9190 = vperm.slane %v6361, %v7918
      %v9191 = vperm.slane %v6364, %v7920
      %v9192 = vsel %vm7922, %v9191, %v9190
      %v9193 = vperm.slane %v6367, %v7918
      %v9194 = vperm.slane %v6370, %v7920
      %v9195 = vsel %vm7922, %v9194, %v9193
      %v9196 = vperm.slane %v6373, %v7918
      %v9197 = vperm.slane %v6376, %v7920
      %v9198 = vsel %vm7922, %v9197, %v9196
      %v9199 = vperm.slane %v6379, %v7918
      %v9200 = vperm.slane %v6382, %v7920
      %v9201 = vsel %vm7922, %v9200, %v9199
      %v9202 = vperm.slane %v6385, %v7918
      %v9203 = vperm.slane %v6388, %v7920
      %v9204 = vsel %vm7922, %v9203, %v9202
      %v9205 = vperm.slane %v6391, %v7918
      %v9206 = vperm.slane %v6394, %v7920
      %v9207 = vsel %vm7922, %v9206, %v9205
      %v9208 = vperm.slane %v6397, %v7918
      %v9209 = vperm.slane %v6400, %v7920
      %v9210 = vsel %vm7922, %v9209, %v9208
      %v9211 = vperm.slane %v6403, %v7918
      %v9212 = vperm.slane %v6406, %v7920
      %v9213 = vsel %vm7922, %v9212, %v9211
      %v9214 = vperm.slane %v6409, %v7918
      %v9215 = vperm.slane %v6412, %v7920
      %v9216 = vsel %vm7922, %v9215, %v9214
      %v9217 = vperm.slane %v6415, %v7918
      %v9218 = vperm.slane %v6418, %v7920
      %v9219 = vsel %vm7922, %v9218, %v9217
      %v9220 = vperm.slane %v6421, %v7918
      %v9221 = vperm.slane %v6424, %v7920
      %v9222 = vsel %vm7922, %v9221, %v9220
      %v9223 = vperm.slane %v6427, %v7918
      %v9224 = vperm.slane %v6430, %v7920
      %v9225 = vsel %vm7922, %v9224, %v9223
      %v9226 = vperm.slane %v6433, %v7918
      %v9227 = vperm.slane %v6436, %v7920
      %v9228 = vsel %vm7922, %v9227, %v9226
      %v9229 = vperm.slane %v6439, %v7918
      %v9230 = vperm.slane %v6442, %v7920
      %v9231 = vsel %vm7922, %v9230, %v9229
      %v9232 = vperm.slane %v6445, %v7918
      %v9233 = vperm.slane %v6448, %v7920
      %v9234 = vsel %vm7922, %v9233, %v9232
      %v9235 = vperm.slane %v6451, %v7918
      %v9236 = vperm.slane %v6454, %v7920
      %v9237 = vsel %vm7922, %v9236, %v9235
      %v9238 = vperm.slane %v6457, %v7918
      %v9239 = vperm.slane %v6460, %v7920
      %v9240 = vsel %vm7922, %v9239, %v9238
      %v9241 = vperm.slane %v6463, %v7918
      %v9242 = vperm.slane %v6466, %v7920
      %v9243 = vsel %vm7922, %v9242, %v9241
      %v9244 = vperm.slane %v6469, %v7918
      %v9245 = vperm.slane %v6472, %v7920
      %v9246 = vsel %vm7922, %v9245, %v9244
      %v9247 = vperm.slane %v6475, %v7918
      %v9248 = vperm.slane %v6478, %v7920
      %v9249 = vsel %vm7922, %v9248, %v9247
      %v9250 = vperm.slane %v6481, %v7918
      %v9251 = vperm.slane %v6484, %v7920
      %v9252 = vsel %vm7922, %v9251, %v9250
      %v9253 = vperm.slane %v6487, %v7918
      %v9254 = vperm.slane %v6490, %v7920
      %v9255 = vsel %vm7922, %v9254, %v9253
      %v9256 = vperm.slane %v6493, %v7918
      %v9257 = vperm.slane %v6496, %v7920
      %v9258 = vsel %vm7922, %v9257, %v9256
      %v9259 = vperm.slane %v6499, %v7918
      %v9260 = vperm.slane %v6502, %v7920
      %v9261 = vsel %vm7922, %v9260, %v9259
      %v9262 = vperm.slane %v6505, %v7918
      %v9263 = vperm.slane %v6508, %v7920
      %v9264 = vsel %vm7922, %v9263, %v9262
      %v9265 = vperm.slane %v6511, %v7918
      %v9266 = vperm.slane %v6514, %v7920
      %v9267 = vsel %vm7922, %v9266, %v9265
      %v9268 = vperm.slane %v6517, %v7918
      %v9269 = vperm.slane %v6520, %v7920
      %v9270 = vsel %vm7922, %v9269, %v9268
      %v9271 = vperm.slane %v6523, %v7918
      %v9272 = vperm.slane %v6526, %v7920
      %v9273 = vsel %vm7922, %v9272, %v9271
      %v9274 = vperm.slane %v6529, %v7918
      %v9275 = vperm.slane %v6532, %v7920
      %v9276 = vsel %vm7922, %v9275, %v9274
      %v9277 = vperm.slane %v6535, %v7918
      %v9278 = vperm.slane %v6538, %v7920
      %v9279 = vsel %vm7922, %v9278, %v9277
      %v9280 = vperm.slane %v6541, %v7918
      %v9281 = vperm.slane %v6544, %v7920
      %v9282 = vsel %vm7922, %v9281, %v9280
      %v9283 = vperm.slane %v6547, %v7918
      %v9284 = vperm.slane %v6550, %v7920
      %v9285 = vsel %vm7922, %v9284, %v9283
      %v9286 = vperm.slane %v6553, %v7918
      %v9287 = vperm.slane %v6556, %v7920
      %v9288 = vsel %vm7922, %v9287, %v9286
      %v9289 = vperm.slane %v6559, %v7918
      %v9290 = vperm.slane %v6562, %v7920
      %v9291 = vsel %vm7922, %v9290, %v9289
      %v9292 = vperm.slane %v6565, %v7918
      %v9293 = vperm.slane %v6568, %v7920
      %v9294 = vsel %vm7922, %v9293, %v9292
      %v9295 = vperm.slane %v6571, %v7918
      %v9296 = vperm.slane %v6574, %v7920
      %v9297 = vsel %vm7922, %v9296, %v9295
      %v9298 = vperm.slane %v6577, %v7918
      %v9299 = vperm.slane %v6580, %v7920
      %v9300 = vsel %vm7922, %v9299, %v9298
      %v9301 = vperm.slane %v6583, %v7918
      %v9302 = vperm.slane %v6586, %v7920
      %v9303 = vsel %vm7922, %v9302, %v9301
      %v9304 = vperm.slane %v6589, %v7918
      %v9305 = vperm.slane %v6592, %v7920
      %v9306 = vsel %vm7922, %v9305, %v9304
      %v9307 = vperm.slane %v6595, %v7918
      %v9308 = vperm.slane %v6598, %v7920
      %v9309 = vsel %vm7922, %v9308, %v9307
      %v9310 = vperm.slane %v6601, %v7918
      %v9311 = vperm.slane %v6604, %v7920
      %v9312 = vsel %vm7922, %v9311, %v9310
      %v9313 = vperm.slane %v6607, %v7918
      %v9314 = vperm.slane %v6610, %v7920
      %v9315 = vsel %vm7922, %v9314, %v9313
      %v9316 = vperm.slane %v6613, %v7918
      %v9317 = vperm.slane %v6616, %v7920
      %v9318 = vsel %vm7922, %v9317, %v9316
      %v9319 = vperm.slane %v6619, %v7918
      %v9320 = vperm.slane %v6622, %v7920
      %v9321 = vsel %vm7922, %v9320, %v9319
      %v9322 = vperm.slane %v6625, %v7918
      %v9323 = vperm.slane %v6628, %v7920
      %v9324 = vsel %vm7922, %v9323, %v9322
      %v9325 = vperm.slane %v6631, %v7918
      %v9326 = vperm.slane %v6634, %v7920
      %v9327 = vsel %vm7922, %v9326, %v9325
      %v9328 = vperm.slane %v6637, %v7918
      %v9329 = vperm.slane %v6640, %v7920
      %v9330 = vsel %vm7922, %v9329, %v9328
      %v9331 = vperm.slane %v6643, %v7918
      %v9332 = vperm.slane %v6646, %v7920
      %v9333 = vsel %vm7922, %v9332, %v9331
      %v9334 = vperm.slane %v6649, %v7918
      %v9335 = vperm.slane %v6652, %v7920
      %v9336 = vsel %vm7922, %v9335, %v9334
      %v9337 = vperm.slane %v6655, %v7918
      %v9338 = vperm.slane %v6658, %v7920
      %v9339 = vsel %vm7922, %v9338, %v9337
      %v9340 = vperm.slane %v6661, %v7918
      %v9341 = vperm.slane %v6664, %v7920
      %v9342 = vsel %vm7922, %v9341, %v9340
      %v9343 = vperm.slane %v6667, %v7918
      %v9344 = vperm.slane %v6670, %v7920
      %v9345 = vsel %vm7922, %v9344, %v9343
      %v9346 = vperm.slane %v6673, %v7918
      %v9347 = vperm.slane %v6676, %v7920
      %v9348 = vsel %vm7922, %v9347, %v9346
      %v9349 = vperm.slane %v6679, %v7918
      %v9350 = vperm.slane %v6682, %v7920
      %v9351 = vsel %vm7922, %v9350, %v9349
      %v9352 = vperm.slane %v6685, %v7918
      %v9353 = vperm.slane %v6688, %v7920
      %v9354 = vsel %vm7922, %v9353, %v9352
      %v9355 = vperm.slane %v6691, %v7918
      %v9356 = vperm.slane %v6694, %v7920
      %v9357 = vsel %vm7922, %v9356, %v9355
      %v9358 = vperm.slane %v6697, %v7918
      %v9359 = vperm.slane %v6700, %v7920
      %v9360 = vsel %vm7922, %v9359, %v9358
      %v9361 = vperm.slane %v6703, %v7918
      %v9362 = vperm.slane %v6706, %v7920
      %v9363 = vsel %vm7922, %v9362, %v9361
      %v9364 = vperm.slane %v6709, %v7918
      %v9365 = vperm.slane %v6712, %v7920
      %v9366 = vsel %vm7922, %v9365, %v9364
      %v9367 = vperm.slane %v6715, %v7918
      %v9368 = vperm.slane %v6718, %v7920
      %v9369 = vsel %vm7922, %v9368, %v9367
      %v9370 = vperm.slane %v6721, %v7918
      %v9371 = vperm.slane %v6724, %v7920
      %v9372 = vsel %vm7922, %v9371, %v9370
      %v9373 = vperm.slane %v6727, %v7918
      %v9374 = vperm.slane %v6730, %v7920
      %v9375 = vsel %vm7922, %v9374, %v9373
      %v9376 = vperm.slane %v6733, %v7918
      %v9377 = vperm.slane %v6736, %v7920
      %v9378 = vsel %vm7922, %v9377, %v9376
      %v9379 = vperm.slane %v6739, %v7918
      %v9380 = vperm.slane %v6742, %v7920
      %v9381 = vsel %vm7922, %v9380, %v9379
      %v9382 = vperm.slane %v6745, %v7918
      %v9383 = vperm.slane %v6748, %v7920
      %v9384 = vsel %vm7922, %v9383, %v9382
      %v9385 = vperm.slane %v6751, %v7918
      %v9386 = vperm.slane %v6754, %v7920
      %v9387 = vsel %vm7922, %v9386, %v9385
      %v9388 = vperm.slane %v6757, %v7918
      %v9389 = vperm.slane %v6760, %v7920
      %v9390 = vsel %vm7922, %v9389, %v9388
      %v9391 = vperm.slane %v6763, %v7918
      %v9392 = vperm.slane %v6766, %v7920
      %v9393 = vsel %vm7922, %v9392, %v9391
      %v9394 = vperm.slane %v6769, %v7918
      %v9395 = vperm.slane %v6772, %v7920
      %v9396 = vsel %vm7922, %v9395, %v9394
      %v9397 = vperm.slane %v6775, %v7918
      %v9398 = vperm.slane %v6778, %v7920
      %v9399 = vsel %vm7922, %v9398, %v9397
      %v9400 = vperm.slane %v6781, %v7918
      %v9401 = vperm.slane %v6784, %v7920
      %v9402 = vsel %vm7922, %v9401, %v9400
      %v9403 = vperm.slane %v6787, %v7918
      %v9404 = vperm.slane %v6790, %v7920
      %v9405 = vsel %vm7922, %v9404, %v9403
      %v9406 = vperm.slane %v6793, %v7918
      %v9407 = vperm.slane %v6796, %v7920
      %v9408 = vsel %vm7922, %v9407, %v9406
      %v9409 = vperm.slane %v6799, %v7918
      %v9410 = vperm.slane %v6802, %v7920
      %v9411 = vsel %vm7922, %v9410, %v9409
      %v9412 = vperm.slane %v6805, %v7918
      %v9413 = vperm.slane %v6808, %v7920
      %v9414 = vsel %vm7922, %v9413, %v9412
      %v9415 = vperm.slane %v6811, %v7918
      %v9416 = vperm.slane %v6814, %v7920
      %v9417 = vsel %vm7922, %v9416, %v9415
      %v9418 = vperm.slane %v6817, %v7918
      %v9419 = vperm.slane %v6820, %v7920
      %v9420 = vsel %vm7922, %v9419, %v9418
      %v9421 = vperm.slane %v6823, %v7918
      %v9422 = vperm.slane %v6826, %v7920
      %v9423 = vsel %vm7922, %v9422, %v9421
      %v9424 = vperm.slane %v6829, %v7918
      %v9425 = vperm.slane %v6832, %v7920
      %v9426 = vsel %vm7922, %v9425, %v9424
      %v9427 = vperm.slane %v6835, %v7918
      %v9428 = vperm.slane %v6838, %v7920
      %v9429 = vsel %vm7922, %v9428, %v9427
      %v9430 = vperm.slane %v6841, %v7918
      %v9431 = vperm.slane %v6844, %v7920
      %v9432 = vsel %vm7922, %v9431, %v9430
      %v9433 = vperm.slane %v6847, %v7918
      %v9434 = vperm.slane %v6850, %v7920
      %v9435 = vsel %vm7922, %v9434, %v9433
      %v9436 = vperm.slane %v6853, %v7918
      %v9437 = vperm.slane %v6856, %v7920
      %v9438 = vsel %vm7922, %v9437, %v9436
      %v9439 = vperm.slane %v6859, %v7918
      %v9440 = vperm.slane %v6862, %v7920
      %v9441 = vsel %vm7922, %v9440, %v9439
      %v9442 = vperm.slane %v6865, %v7918
      %v9443 = vperm.slane %v6868, %v7920
      %v9444 = vsel %vm7922, %v9443, %v9442
      %v9445 = vperm.slane %v6871, %v7918
      %v9446 = vperm.slane %v6874, %v7920
      %v9447 = vsel %vm7922, %v9446, %v9445
      %v9448 = vperm.slane %v6877, %v7918
      %v9449 = vperm.slane %v6880, %v7920
      %v9450 = vsel %vm7922, %v9449, %v9448
      %v9451 = vperm.slane %v6883, %v7918
      %v9452 = vperm.slane %v6886, %v7920
      %v9453 = vsel %vm7922, %v9452, %v9451
      %v9454 = vperm.slane %v6889, %v7918
      %v9455 = vperm.slane %v6892, %v7920
      %v9456 = vsel %vm7922, %v9455, %v9454
      %vm9457 = vcmask 1041409
      %v9458 = vsel %vm9457, %v7926, %v7923
      %vm9459 = vcmask 1042434
      %v9460 = vsel %vm9459, %v7929, %v9458
      %vm9461 = vcmask 1043459
      %v9462 = vsel %vm9461, %v7932, %v9460
      %vm9463 = vcmask 1044484
      %v9464 = vsel %vm9463, %v7935, %v9462
      %vm9465 = vcmask 1045509
      %v9466 = vsel %vm9465, %v7938, %v9464
      %vm9467 = vcmask 1046534
      %v9468 = vsel %vm9467, %v7941, %v9466
      %vm9469 = vcmask 1047559
      %v9470 = vsel %vm9469, %v7944, %v9468
      %v9471 = vsel %vm9457, %v7950, %v7947
      %v9472 = vsel %vm9459, %v7953, %v9471
      %v9473 = vsel %vm9461, %v7956, %v9472
      %v9474 = vsel %vm9463, %v7959, %v9473
      %v9475 = vsel %vm9465, %v7962, %v9474
      %v9476 = vsel %vm9467, %v7965, %v9475
      %v9477 = vsel %vm9469, %v7968, %v9476
      %v9478 = vsel %vm9457, %v7974, %v7971
      %v9479 = vsel %vm9459, %v7977, %v9478
      %v9480 = vsel %vm9461, %v7980, %v9479
      %v9481 = vsel %vm9463, %v7983, %v9480
      %v9482 = vsel %vm9465, %v7986, %v9481
      %v9483 = vsel %vm9467, %v7989, %v9482
      %v9484 = vsel %vm9469, %v7992, %v9483
      %v9485 = vsel %vm9457, %v7998, %v7995
      %v9486 = vsel %vm9459, %v8001, %v9485
      %v9487 = vsel %vm9461, %v8004, %v9486
      %v9488 = vsel %vm9463, %v8007, %v9487
      %v9489 = vsel %vm9465, %v8010, %v9488
      %v9490 = vsel %vm9467, %v8013, %v9489
      %v9491 = vsel %vm9469, %v8016, %v9490
      %v9492 = vsel %vm9457, %v8022, %v8019
      %v9493 = vsel %vm9459, %v8025, %v9492
      %v9494 = vsel %vm9461, %v8028, %v9493
      %v9495 = vsel %vm9463, %v8031, %v9494
      %v9496 = vsel %vm9465, %v8034, %v9495
      %v9497 = vsel %vm9467, %v8037, %v9496
      %v9498 = vsel %vm9469, %v8040, %v9497
      %v9499 = vsel %vm9457, %v8046, %v8043
      %v9500 = vsel %vm9459, %v8049, %v9499
      %v9501 = vsel %vm9461, %v8052, %v9500
      %v9502 = vsel %vm9463, %v8055, %v9501
      %v9503 = vsel %vm9465, %v8058, %v9502
      %v9504 = vsel %vm9467, %v8061, %v9503
      %v9505 = vsel %vm9469, %v8064, %v9504
      %v9506 = vsel %vm9457, %v8070, %v8067
      %v9507 = vsel %vm9459, %v8073, %v9506
      %v9508 = vsel %vm9461, %v8076, %v9507
      %v9509 = vsel %vm9463, %v8079, %v9508
      %v9510 = vsel %vm9465, %v8082, %v9509
      %v9511 = vsel %vm9467, %v8085, %v9510
      %v9512 = vsel %vm9469, %v8088, %v9511
      %v9513 = vsel %vm9457, %v8094, %v8091
      %v9514 = vsel %vm9459, %v8097, %v9513
      %v9515 = vsel %vm9461, %v8100, %v9514
      %v9516 = vsel %vm9463, %v8103, %v9515
      %v9517 = vsel %vm9465, %v8106, %v9516
      %v9518 = vsel %vm9467, %v8109, %v9517
      %v9519 = vsel %vm9469, %v8112, %v9518
      %v9520 = vsel %vm9457, %v8118, %v8115
      %v9521 = vsel %vm9459, %v8121, %v9520
      %v9522 = vsel %vm9461, %v8124, %v9521
      %v9523 = vsel %vm9463, %v8127, %v9522
      %v9524 = vsel %vm9465, %v8130, %v9523
      %v9525 = vsel %vm9467, %v8133, %v9524
      %v9526 = vsel %vm9469, %v8136, %v9525
      %v9527 = vsel %vm9457, %v8142, %v8139
      %v9528 = vsel %vm9459, %v8145, %v9527
      %v9529 = vsel %vm9461, %v8148, %v9528
      %v9530 = vsel %vm9463, %v8151, %v9529
      %v9531 = vsel %vm9465, %v8154, %v9530
      %v9532 = vsel %vm9467, %v8157, %v9531
      %v9533 = vsel %vm9469, %v8160, %v9532
      %v9534 = vsel %vm9457, %v8166, %v8163
      %v9535 = vsel %vm9459, %v8169, %v9534
      %v9536 = vsel %vm9461, %v8172, %v9535
      %v9537 = vsel %vm9463, %v8175, %v9536
      %v9538 = vsel %vm9465, %v8178, %v9537
      %v9539 = vsel %vm9467, %v8181, %v9538
      %v9540 = vsel %vm9469, %v8184, %v9539
      %v9541 = vsel %vm9457, %v8190, %v8187
      %v9542 = vsel %vm9459, %v8193, %v9541
      %v9543 = vsel %vm9461, %v8196, %v9542
      %v9544 = vsel %vm9463, %v8199, %v9543
      %v9545 = vsel %vm9465, %v8202, %v9544
      %v9546 = vsel %vm9467, %v8205, %v9545
      %v9547 = vsel %vm9469, %v8208, %v9546
      %v9548 = vsel %vm9457, %v8214, %v8211
      %v9549 = vsel %vm9459, %v8217, %v9548
      %v9550 = vsel %vm9461, %v8220, %v9549
      %v9551 = vsel %vm9463, %v8223, %v9550
      %v9552 = vsel %vm9465, %v8226, %v9551
      %v9553 = vsel %vm9467, %v8229, %v9552
      %v9554 = vsel %vm9469, %v8232, %v9553
      %v9555 = vsel %vm9457, %v8238, %v8235
      %v9556 = vsel %vm9459, %v8241, %v9555
      %v9557 = vsel %vm9461, %v8244, %v9556
      %v9558 = vsel %vm9463, %v8247, %v9557
      %v9559 = vsel %vm9465, %v8250, %v9558
      %v9560 = vsel %vm9467, %v8253, %v9559
      %v9561 = vsel %vm9469, %v8256, %v9560
      %v9562 = vsel %vm9457, %v8262, %v8259
      %v9563 = vsel %vm9459, %v8265, %v9562
      %v9564 = vsel %vm9461, %v8268, %v9563
      %v9565 = vsel %vm9463, %v8271, %v9564
      %v9566 = vsel %vm9465, %v8274, %v9565
      %v9567 = vsel %vm9467, %v8277, %v9566
      %v9568 = vsel %vm9469, %v8280, %v9567
      %v9569 = vsel %vm9457, %v8286, %v8283
      %v9570 = vsel %vm9459, %v8289, %v9569
      %v9571 = vsel %vm9461, %v8292, %v9570
      %v9572 = vsel %vm9463, %v8295, %v9571
      %v9573 = vsel %vm9465, %v8298, %v9572
      %v9574 = vsel %vm9467, %v8301, %v9573
      %v9575 = vsel %vm9469, %v8304, %v9574
      %v9576 = vsel %vm9457, %v8310, %v8307
      %v9577 = vsel %vm9459, %v8313, %v9576
      %v9578 = vsel %vm9461, %v8316, %v9577
      %v9579 = vsel %vm9463, %v8319, %v9578
      %v9580 = vsel %vm9465, %v8322, %v9579
      %v9581 = vsel %vm9467, %v8325, %v9580
      %v9582 = vsel %vm9469, %v8328, %v9581
      %v9583 = vsel %vm9457, %v8334, %v8331
      %v9584 = vsel %vm9459, %v8337, %v9583
      %v9585 = vsel %vm9461, %v8340, %v9584
      %v9586 = vsel %vm9463, %v8343, %v9585
      %v9587 = vsel %vm9465, %v8346, %v9586
      %v9588 = vsel %vm9467, %v8349, %v9587
      %v9589 = vsel %vm9469, %v8352, %v9588
      %v9590 = vsel %vm9457, %v8358, %v8355
      %v9591 = vsel %vm9459, %v8361, %v9590
      %v9592 = vsel %vm9461, %v8364, %v9591
      %v9593 = vsel %vm9463, %v8367, %v9592
      %v9594 = vsel %vm9465, %v8370, %v9593
      %v9595 = vsel %vm9467, %v8373, %v9594
      %v9596 = vsel %vm9469, %v8376, %v9595
      %v9597 = vsel %vm9457, %v8382, %v8379
      %v9598 = vsel %vm9459, %v8385, %v9597
      %v9599 = vsel %vm9461, %v8388, %v9598
      %v9600 = vsel %vm9463, %v8391, %v9599
      %v9601 = vsel %vm9465, %v8394, %v9600
      %v9602 = vsel %vm9467, %v8397, %v9601
      %v9603 = vsel %vm9469, %v8400, %v9602
      %v9604 = vsel %vm9457, %v8406, %v8403
      %v9605 = vsel %vm9459, %v8409, %v9604
      %v9606 = vsel %vm9461, %v8412, %v9605
      %v9607 = vsel %vm9463, %v8415, %v9606
      %v9608 = vsel %vm9465, %v8418, %v9607
      %v9609 = vsel %vm9467, %v8421, %v9608
      %v9610 = vsel %vm9469, %v8424, %v9609
      %v9611 = vsel %vm9457, %v8430, %v8427
      %v9612 = vsel %vm9459, %v8433, %v9611
      %v9613 = vsel %vm9461, %v8436, %v9612
      %v9614 = vsel %vm9463, %v8439, %v9613
      %v9615 = vsel %vm9465, %v8442, %v9614
      %v9616 = vsel %vm9467, %v8445, %v9615
      %v9617 = vsel %vm9469, %v8448, %v9616
      %v9618 = vsel %vm9457, %v8454, %v8451
      %v9619 = vsel %vm9459, %v8457, %v9618
      %v9620 = vsel %vm9461, %v8460, %v9619
      %v9621 = vsel %vm9463, %v8463, %v9620
      %v9622 = vsel %vm9465, %v8466, %v9621
      %v9623 = vsel %vm9467, %v8469, %v9622
      %v9624 = vsel %vm9469, %v8472, %v9623
      %v9625 = vsel %vm9457, %v8478, %v8475
      %v9626 = vsel %vm9459, %v8481, %v9625
      %v9627 = vsel %vm9461, %v8484, %v9626
      %v9628 = vsel %vm9463, %v8487, %v9627
      %v9629 = vsel %vm9465, %v8490, %v9628
      %v9630 = vsel %vm9467, %v8493, %v9629
      %v9631 = vsel %vm9469, %v8496, %v9630
      %v9632 = vsel %vm9457, %v8502, %v8499
      %v9633 = vsel %vm9459, %v8505, %v9632
      %v9634 = vsel %vm9461, %v8508, %v9633
      %v9635 = vsel %vm9463, %v8511, %v9634
      %v9636 = vsel %vm9465, %v8514, %v9635
      %v9637 = vsel %vm9467, %v8517, %v9636
      %v9638 = vsel %vm9469, %v8520, %v9637
      %v9639 = vsel %vm9457, %v8526, %v8523
      %v9640 = vsel %vm9459, %v8529, %v9639
      %v9641 = vsel %vm9461, %v8532, %v9640
      %v9642 = vsel %vm9463, %v8535, %v9641
      %v9643 = vsel %vm9465, %v8538, %v9642
      %v9644 = vsel %vm9467, %v8541, %v9643
      %v9645 = vsel %vm9469, %v8544, %v9644
      %v9646 = vsel %vm9457, %v8550, %v8547
      %v9647 = vsel %vm9459, %v8553, %v9646
      %v9648 = vsel %vm9461, %v8556, %v9647
      %v9649 = vsel %vm9463, %v8559, %v9648
      %v9650 = vsel %vm9465, %v8562, %v9649
      %v9651 = vsel %vm9467, %v8565, %v9650
      %v9652 = vsel %vm9469, %v8568, %v9651
      %v9653 = vsel %vm9457, %v8574, %v8571
      %v9654 = vsel %vm9459, %v8577, %v9653
      %v9655 = vsel %vm9461, %v8580, %v9654
      %v9656 = vsel %vm9463, %v8583, %v9655
      %v9657 = vsel %vm9465, %v8586, %v9656
      %v9658 = vsel %vm9467, %v8589, %v9657
      %v9659 = vsel %vm9469, %v8592, %v9658
      %v9660 = vsel %vm9457, %v8598, %v8595
      %v9661 = vsel %vm9459, %v8601, %v9660
      %v9662 = vsel %vm9461, %v8604, %v9661
      %v9663 = vsel %vm9463, %v8607, %v9662
      %v9664 = vsel %vm9465, %v8610, %v9663
      %v9665 = vsel %vm9467, %v8613, %v9664
      %v9666 = vsel %vm9469, %v8616, %v9665
      %v9667 = vsel %vm9457, %v8622, %v8619
      %v9668 = vsel %vm9459, %v8625, %v9667
      %v9669 = vsel %vm9461, %v8628, %v9668
      %v9670 = vsel %vm9463, %v8631, %v9669
      %v9671 = vsel %vm9465, %v8634, %v9670
      %v9672 = vsel %vm9467, %v8637, %v9671
      %v9673 = vsel %vm9469, %v8640, %v9672
      %v9674 = vsel %vm9457, %v8646, %v8643
      %v9675 = vsel %vm9459, %v8649, %v9674
      %v9676 = vsel %vm9461, %v8652, %v9675
      %v9677 = vsel %vm9463, %v8655, %v9676
      %v9678 = vsel %vm9465, %v8658, %v9677
      %v9679 = vsel %vm9467, %v8661, %v9678
      %v9680 = vsel %vm9469, %v8664, %v9679
      %v9681 = vsel %vm9457, %v8670, %v8667
      %v9682 = vsel %vm9459, %v8673, %v9681
      %v9683 = vsel %vm9461, %v8676, %v9682
      %v9684 = vsel %vm9463, %v8679, %v9683
      %v9685 = vsel %vm9465, %v8682, %v9684
      %v9686 = vsel %vm9467, %v8685, %v9685
      %v9687 = vsel %vm9469, %v8688, %v9686
      %v9688 = vsel %vm9457, %v8694, %v8691
      %v9689 = vsel %vm9459, %v8697, %v9688
      %v9690 = vsel %vm9461, %v8700, %v9689
      %v9691 = vsel %vm9463, %v8703, %v9690
      %v9692 = vsel %vm9465, %v8706, %v9691
      %v9693 = vsel %vm9467, %v8709, %v9692
      %v9694 = vsel %vm9469, %v8712, %v9693
      %v9695 = vsel %vm9457, %v8718, %v8715
      %v9696 = vsel %vm9459, %v8721, %v9695
      %v9697 = vsel %vm9461, %v8724, %v9696
      %v9698 = vsel %vm9463, %v8727, %v9697
      %v9699 = vsel %vm9465, %v8730, %v9698
      %v9700 = vsel %vm9467, %v8733, %v9699
      %v9701 = vsel %vm9469, %v8736, %v9700
      %v9702 = vsel %vm9457, %v8742, %v8739
      %v9703 = vsel %vm9459, %v8745, %v9702
      %v9704 = vsel %vm9461, %v8748, %v9703
      %v9705 = vsel %vm9463, %v8751, %v9704
      %v9706 = vsel %vm9465, %v8754, %v9705
      %v9707 = vsel %vm9467, %v8757, %v9706
      %v9708 = vsel %vm9469, %v8760, %v9707
      %v9709 = vsel %vm9457, %v8766, %v8763
      %v9710 = vsel %vm9459, %v8769, %v9709
      %v9711 = vsel %vm9461, %v8772, %v9710
      %v9712 = vsel %vm9463, %v8775, %v9711
      %v9713 = vsel %vm9465, %v8778, %v9712
      %v9714 = vsel %vm9467, %v8781, %v9713
      %v9715 = vsel %vm9469, %v8784, %v9714
      %v9716 = vsel %vm9457, %v8790, %v8787
      %v9717 = vsel %vm9459, %v8793, %v9716
      %v9718 = vsel %vm9461, %v8796, %v9717
      %v9719 = vsel %vm9463, %v8799, %v9718
      %v9720 = vsel %vm9465, %v8802, %v9719
      %v9721 = vsel %vm9467, %v8805, %v9720
      %v9722 = vsel %vm9469, %v8808, %v9721
      %v9723 = vsel %vm9457, %v8814, %v8811
      %v9724 = vsel %vm9459, %v8817, %v9723
      %v9725 = vsel %vm9461, %v8820, %v9724
      %v9726 = vsel %vm9463, %v8823, %v9725
      %v9727 = vsel %vm9465, %v8826, %v9726
      %v9728 = vsel %vm9467, %v8829, %v9727
      %v9729 = vsel %vm9469, %v8832, %v9728
      %v9730 = vsel %vm9457, %v8838, %v8835
      %v9731 = vsel %vm9459, %v8841, %v9730
      %v9732 = vsel %vm9461, %v8844, %v9731
      %v9733 = vsel %vm9463, %v8847, %v9732
      %v9734 = vsel %vm9465, %v8850, %v9733
      %v9735 = vsel %vm9467, %v8853, %v9734
      %v9736 = vsel %vm9469, %v8856, %v9735
      %v9737 = vsel %vm9457, %v8862, %v8859
      %v9738 = vsel %vm9459, %v8865, %v9737
      %v9739 = vsel %vm9461, %v8868, %v9738
      %v9740 = vsel %vm9463, %v8871, %v9739
      %v9741 = vsel %vm9465, %v8874, %v9740
      %v9742 = vsel %vm9467, %v8877, %v9741
      %v9743 = vsel %vm9469, %v8880, %v9742
      %v9744 = vsel %vm9457, %v8886, %v8883
      %v9745 = vsel %vm9459, %v8889, %v9744
      %v9746 = vsel %vm9461, %v8892, %v9745
      %v9747 = vsel %vm9463, %v8895, %v9746
      %v9748 = vsel %vm9465, %v8898, %v9747
      %v9749 = vsel %vm9467, %v8901, %v9748
      %v9750 = vsel %vm9469, %v8904, %v9749
      %v9751 = vsel %vm9457, %v8910, %v8907
      %v9752 = vsel %vm9459, %v8913, %v9751
      %v9753 = vsel %vm9461, %v8916, %v9752
      %v9754 = vsel %vm9463, %v8919, %v9753
      %v9755 = vsel %vm9465, %v8922, %v9754
      %v9756 = vsel %vm9467, %v8925, %v9755
      %v9757 = vsel %vm9469, %v8928, %v9756
      %v9758 = vsel %vm9457, %v8934, %v8931
      %v9759 = vsel %vm9459, %v8937, %v9758
      %v9760 = vsel %vm9461, %v8940, %v9759
      %v9761 = vsel %vm9463, %v8943, %v9760
      %v9762 = vsel %vm9465, %v8946, %v9761
      %v9763 = vsel %vm9467, %v8949, %v9762
      %v9764 = vsel %vm9469, %v8952, %v9763
      %v9765 = vsel %vm9457, %v8958, %v8955
      %v9766 = vsel %vm9459, %v8961, %v9765
      %v9767 = vsel %vm9461, %v8964, %v9766
      %v9768 = vsel %vm9463, %v8967, %v9767
      %v9769 = vsel %vm9465, %v8970, %v9768
      %v9770 = vsel %vm9467, %v8973, %v9769
      %v9771 = vsel %vm9469, %v8976, %v9770
      %v9772 = vsel %vm9457, %v8982, %v8979
      %v9773 = vsel %vm9459, %v8985, %v9772
      %v9774 = vsel %vm9461, %v8988, %v9773
      %v9775 = vsel %vm9463, %v8991, %v9774
      %v9776 = vsel %vm9465, %v8994, %v9775
      %v9777 = vsel %vm9467, %v8997, %v9776
      %v9778 = vsel %vm9469, %v9000, %v9777
      %v9779 = vsel %vm9457, %v9006, %v9003
      %v9780 = vsel %vm9459, %v9009, %v9779
      %v9781 = vsel %vm9461, %v9012, %v9780
      %v9782 = vsel %vm9463, %v9015, %v9781
      %v9783 = vsel %vm9465, %v9018, %v9782
      %v9784 = vsel %vm9467, %v9021, %v9783
      %v9785 = vsel %vm9469, %v9024, %v9784
      %v9786 = vsel %vm9457, %v9030, %v9027
      %v9787 = vsel %vm9459, %v9033, %v9786
      %v9788 = vsel %vm9461, %v9036, %v9787
      %v9789 = vsel %vm9463, %v9039, %v9788
      %v9790 = vsel %vm9465, %v9042, %v9789
      %v9791 = vsel %vm9467, %v9045, %v9790
      %v9792 = vsel %vm9469, %v9048, %v9791
      %v9793 = vsel %vm9457, %v9054, %v9051
      %v9794 = vsel %vm9459, %v9057, %v9793
      %v9795 = vsel %vm9461, %v9060, %v9794
      %v9796 = vsel %vm9463, %v9063, %v9795
      %v9797 = vsel %vm9465, %v9066, %v9796
      %v9798 = vsel %vm9467, %v9069, %v9797
      %v9799 = vsel %vm9469, %v9072, %v9798
      %v9800 = vsel %vm9457, %v9078, %v9075
      %v9801 = vsel %vm9459, %v9081, %v9800
      %v9802 = vsel %vm9461, %v9084, %v9801
      %v9803 = vsel %vm9463, %v9087, %v9802
      %v9804 = vsel %vm9465, %v9090, %v9803
      %v9805 = vsel %vm9467, %v9093, %v9804
      %v9806 = vsel %vm9469, %v9096, %v9805
      %v9807 = vsel %vm9457, %v9102, %v9099
      %v9808 = vsel %vm9459, %v9105, %v9807
      %v9809 = vsel %vm9461, %v9108, %v9808
      %v9810 = vsel %vm9463, %v9111, %v9809
      %v9811 = vsel %vm9465, %v9114, %v9810
      %v9812 = vsel %vm9467, %v9117, %v9811
      %v9813 = vsel %vm9469, %v9120, %v9812
      %v9814 = vsel %vm9457, %v9126, %v9123
      %v9815 = vsel %vm9459, %v9129, %v9814
      %v9816 = vsel %vm9461, %v9132, %v9815
      %v9817 = vsel %vm9463, %v9135, %v9816
      %v9818 = vsel %vm9465, %v9138, %v9817
      %v9819 = vsel %vm9467, %v9141, %v9818
      %v9820 = vsel %vm9469, %v9144, %v9819
      %v9821 = vsel %vm9457, %v9150, %v9147
      %v9822 = vsel %vm9459, %v9153, %v9821
      %v9823 = vsel %vm9461, %v9156, %v9822
      %v9824 = vsel %vm9463, %v9159, %v9823
      %v9825 = vsel %vm9465, %v9162, %v9824
      %v9826 = vsel %vm9467, %v9165, %v9825
      %v9827 = vsel %vm9469, %v9168, %v9826
      %v9828 = vsel %vm9457, %v9174, %v9171
      %v9829 = vsel %vm9459, %v9177, %v9828
      %v9830 = vsel %vm9461, %v9180, %v9829
      %v9831 = vsel %vm9463, %v9183, %v9830
      %v9832 = vsel %vm9465, %v9186, %v9831
      %v9833 = vsel %vm9467, %v9189, %v9832
      %v9834 = vsel %vm9469, %v9192, %v9833
      %v9835 = vsel %vm9457, %v9198, %v9195
      %v9836 = vsel %vm9459, %v9201, %v9835
      %v9837 = vsel %vm9461, %v9204, %v9836
      %v9838 = vsel %vm9463, %v9207, %v9837
      %v9839 = vsel %vm9465, %v9210, %v9838
      %v9840 = vsel %vm9467, %v9213, %v9839
      %v9841 = vsel %vm9469, %v9216, %v9840
      %v9842 = vsel %vm9457, %v9222, %v9219
      %v9843 = vsel %vm9459, %v9225, %v9842
      %v9844 = vsel %vm9461, %v9228, %v9843
      %v9845 = vsel %vm9463, %v9231, %v9844
      %v9846 = vsel %vm9465, %v9234, %v9845
      %v9847 = vsel %vm9467, %v9237, %v9846
      %v9848 = vsel %vm9469, %v9240, %v9847
      %v9849 = vsel %vm9457, %v9246, %v9243
      %v9850 = vsel %vm9459, %v9249, %v9849
      %v9851 = vsel %vm9461, %v9252, %v9850
      %v9852 = vsel %vm9463, %v9255, %v9851
      %v9853 = vsel %vm9465, %v9258, %v9852
      %v9854 = vsel %vm9467, %v9261, %v9853
      %v9855 = vsel %vm9469, %v9264, %v9854
      %v9856 = vsel %vm9457, %v9270, %v9267
      %v9857 = vsel %vm9459, %v9273, %v9856
      %v9858 = vsel %vm9461, %v9276, %v9857
      %v9859 = vsel %vm9463, %v9279, %v9858
      %v9860 = vsel %vm9465, %v9282, %v9859
      %v9861 = vsel %vm9467, %v9285, %v9860
      %v9862 = vsel %vm9469, %v9288, %v9861
      %v9863 = vsel %vm9457, %v9294, %v9291
      %v9864 = vsel %vm9459, %v9297, %v9863
      %v9865 = vsel %vm9461, %v9300, %v9864
      %v9866 = vsel %vm9463, %v9303, %v9865
      %v9867 = vsel %vm9465, %v9306, %v9866
      %v9868 = vsel %vm9467, %v9309, %v9867
      %v9869 = vsel %vm9469, %v9312, %v9868
      %v9870 = vsel %vm9457, %v9318, %v9315
      %v9871 = vsel %vm9459, %v9321, %v9870
      %v9872 = vsel %vm9461, %v9324, %v9871
      %v9873 = vsel %vm9463, %v9327, %v9872
      %v9874 = vsel %vm9465, %v9330, %v9873
      %v9875 = vsel %vm9467, %v9333, %v9874
      %v9876 = vsel %vm9469, %v9336, %v9875
      %v9877 = vsel %vm9457, %v9342, %v9339
      %v9878 = vsel %vm9459, %v9345, %v9877
      %v9879 = vsel %vm9461, %v9348, %v9878
      %v9880 = vsel %vm9463, %v9351, %v9879
      %v9881 = vsel %vm9465, %v9354, %v9880
      %v9882 = vsel %vm9467, %v9357, %v9881
      %v9883 = vsel %vm9469, %v9360, %v9882
      %v9884 = vsel %vm9457, %v9366, %v9363
      %v9885 = vsel %vm9459, %v9369, %v9884
      %v9886 = vsel %vm9461, %v9372, %v9885
      %v9887 = vsel %vm9463, %v9375, %v9886
      %v9888 = vsel %vm9465, %v9378, %v9887
      %v9889 = vsel %vm9467, %v9381, %v9888
      %v9890 = vsel %vm9469, %v9384, %v9889
      %v9891 = vsel %vm9457, %v9390, %v9387
      %v9892 = vsel %vm9459, %v9393, %v9891
      %v9893 = vsel %vm9461, %v9396, %v9892
      %v9894 = vsel %vm9463, %v9399, %v9893
      %v9895 = vsel %vm9465, %v9402, %v9894
      %v9896 = vsel %vm9467, %v9405, %v9895
      %v9897 = vsel %vm9469, %v9408, %v9896
      %v9898 = vsel %vm9457, %v9414, %v9411
      %v9899 = vsel %vm9459, %v9417, %v9898
      %v9900 = vsel %vm9461, %v9420, %v9899
      %v9901 = vsel %vm9463, %v9423, %v9900
      %v9902 = vsel %vm9465, %v9426, %v9901
      %v9903 = vsel %vm9467, %v9429, %v9902
      %v9904 = vsel %vm9469, %v9432, %v9903
      %v9905 = vsel %vm9457, %v9438, %v9435
      %v9906 = vsel %vm9459, %v9441, %v9905
      %v9907 = vsel %vm9461, %v9444, %v9906
      %v9908 = vsel %vm9463, %v9447, %v9907
      %v9909 = vsel %vm9465, %v9450, %v9908
      %v9910 = vsel %vm9467, %v9453, %v9909
      %v9911 = vsel %vm9469, %v9456, %v9910
      %vm9976 = vcmask 130048
      %9977 = vst.msk [vmem:[%s170] sm:$0xff] %vm9976, %v9470
      %9978 = vst.msk [vmem:[%s170 + $0x8] sm:$0xff] %vm9976, %v9477
      %9979 = vst.msk [vmem:[%s170 + $0x10] sm:$0xff] %vm9976, %v9484
      %9980 = vst.msk [vmem:[%s170 + $0x18] sm:$0xff] %vm9976, %v9491
      %9981 = vst.msk [vmem:[%s170 + $0x20] sm:$0xff] %vm9976, %v9498
      %9982 = vst.msk [vmem:[%s170 + $0x28] sm:$0xff] %vm9976, %v9505
      %9983 = vst.msk [vmem:[%s170 + $0x30] sm:$0xff] %vm9976, %v9512
      %9984 = vst.msk [vmem:[%s170 + $0x38] sm:$0xff] %vm9976, %v9519
      %9985 = vst.msk [vmem:[%s170 + $0x40] sm:$0xff] %vm9976, %v9526
      %9986 = vst.msk [vmem:[%s170 + $0x48] sm:$0xff] %vm9976, %v9533
      %9987 = vst.msk [vmem:[%s170 + $0x50] sm:$0xff] %vm9976, %v9540
      %9988 = vst.msk [vmem:[%s170 + $0x58] sm:$0xff] %vm9976, %v9547
      %9989 = vst.msk [vmem:[%s170 + $0x60] sm:$0xff] %vm9976, %v9554
      %9990 = vst.msk [vmem:[%s170 + $0x68] sm:$0xff] %vm9976, %v9561
      %9991 = vst.msk [vmem:[%s170 + $0x70] sm:$0xff] %vm9976, %v9568
      %9992 = vst.msk [vmem:[%s170 + $0x78] sm:$0xff] %vm9976, %v9575
      %9993 = vst.msk [vmem:[%s170 + $0x80] sm:$0xff] %vm9976, %v9582
      %9994 = vst.msk [vmem:[%s170 + $0x88] sm:$0xff] %vm9976, %v9589
      %9995 = vst.msk [vmem:[%s170 + $0x90] sm:$0xff] %vm9976, %v9596
      %9996 = vst.msk [vmem:[%s170 + $0x98] sm:$0xff] %vm9976, %v9603
      %9997 = vst.msk [vmem:[%s170 + $0xa0] sm:$0xff] %vm9976, %v9610
      %9998 = vst.msk [vmem:[%s170 + $0xa8] sm:$0xff] %vm9976, %v9617
      %9999 = vst.msk [vmem:[%s170 + $0xb0] sm:$0xff] %vm9976, %v9624
      %10000 = vst.msk [vmem:[%s170 + $0xb8] sm:$0xff] %vm9976, %v9631
      %10001 = vst.msk [vmem:[%s170 + $0xc0] sm:$0xff] %vm9976, %v9638
      %10002 = vst.msk [vmem:[%s170 + $0xc8] sm:$0xff] %vm9976, %v9645
      %10003 = vst.msk [vmem:[%s170 + $0xd0] sm:$0xff] %vm9976, %v9652
      %10004 = vst.msk [vmem:[%s170 + $0xd8] sm:$0xff] %vm9976, %v9659
      %10005 = vst.msk [vmem:[%s170 + $0xe0] sm:$0xff] %vm9976, %v9666
      %10006 = vst.msk [vmem:[%s170 + $0xe8] sm:$0xff] %vm9976, %v9673
      %10007 = vst.msk [vmem:[%s170 + $0xf0] sm:$0xff] %vm9976, %v9680
      %10008 = vst.msk [vmem:[%s170 + $0xf8] sm:$0xff] %vm9976, %v9687
      %10009 = vst.msk [vmem:[%s170 + $0x100] sm:$0xff] %vm9976, %v9694
      %10010 = vst.msk [vmem:[%s170 + $0x108] sm:$0xff] %vm9976, %v9701
      %10011 = vst.msk [vmem:[%s170 + $0x110] sm:$0xff] %vm9976, %v9708
      %10012 = vst.msk [vmem:[%s170 + $0x118] sm:$0xff] %vm9976, %v9715
      %10013 = vst.msk [vmem:[%s170 + $0x120] sm:$0xff] %vm9976, %v9722
      %10014 = vst.msk [vmem:[%s170 + $0x128] sm:$0xff] %vm9976, %v9729
      %10015 = vst.msk [vmem:[%s170 + $0x130] sm:$0xff] %vm9976, %v9736
      %10016 = vst.msk [vmem:[%s170 + $0x138] sm:$0xff] %vm9976, %v9743
      %10017 = vst.msk [vmem:[%s170 + $0x140] sm:$0xff] %vm9976, %v9750
      %10018 = vst.msk [vmem:[%s170 + $0x148] sm:$0xff] %vm9976, %v9757
      %10019 = vst.msk [vmem:[%s170 + $0x150] sm:$0xff] %vm9976, %v9764
      %10020 = vst.msk [vmem:[%s170 + $0x158] sm:$0xff] %vm9976, %v9771
      %10021 = vst.msk [vmem:[%s170 + $0x160] sm:$0xff] %vm9976, %v9778
      %10022 = vst.msk [vmem:[%s170 + $0x168] sm:$0xff] %vm9976, %v9785
      %10023 = vst.msk [vmem:[%s170 + $0x170] sm:$0xff] %vm9976, %v9792
      %10024 = vst.msk [vmem:[%s170 + $0x178] sm:$0xff] %vm9976, %v9799
      %10025 = vst.msk [vmem:[%s170 + $0x180] sm:$0xff] %vm9976, %v9806
      %10026 = vst.msk [vmem:[%s170 + $0x188] sm:$0xff] %vm9976, %v9813
      %10027 = vst.msk [vmem:[%s170 + $0x190] sm:$0xff] %vm9976, %v9820
      %10028 = vst.msk [vmem:[%s170 + $0x198] sm:$0xff] %vm9976, %v9827
      %10029 = vst.msk [vmem:[%s170 + $0x1a0] sm:$0xff] %vm9976, %v9834
      %10030 = vst.msk [vmem:[%s170 + $0x1a8] sm:$0xff] %vm9976, %v9841
      %10031 = vst.msk [vmem:[%s170 + $0x1b0] sm:$0xff] %vm9976, %v9848
      %10032 = vst.msk [vmem:[%s170 + $0x1b8] sm:$0xff] %vm9976, %v9855
      %10033 = vst.msk [vmem:[%s170 + $0x1c0] sm:$0xff] %vm9976, %v9862
      %10034 = vst.msk [vmem:[%s170 + $0x1c8] sm:$0xff] %vm9976, %v9869
      %10035 = vst.msk [vmem:[%s170 + $0x1d0] sm:$0xff] %vm9976, %v9876
      %10036 = vst.msk [vmem:[%s170 + $0x1d8] sm:$0xff] %vm9976, %v9883
      %10037 = vst.msk [vmem:[%s170 + $0x1e0] sm:$0xff] %vm9976, %v9890
      %10038 = vst.msk [vmem:[%s170 + $0x1e8] sm:$0xff] %vm9976, %v9897
      %10039 = vst.msk [vmem:[%s170 + $0x1f0] sm:$0xff] %vm9976, %v9904
      %10040 = vst.msk [vmem:[%s170 + $0x1f8] sm:$0xff] %vm9976, %v9911
      %s10041 = smul.u32 64, %s13
      %p10042 = scmp.lt.s32.totalorder %s10041, 127
      %s10043 = scalar_select %p10042, %s10041, 127
      %s10044 = smul.addr %s10043, 8
      %s10045 = scalar_lea.vmem %s2, %s10044
      // Predicated region
      $region29: #{tpu_custom_call.1} parent=27 // pred_check
        %p10046 = pneg %p83
      $region30: #{tpu_custom_call.1} parent=27 // pred_check_branch
        %10048 = sbr.rel (%p10046) target = $region32
      $region31: #{tpu_custom_call.1} parent=27 // pred_region
        %s10049 = smul.u32 64, %s13
      $region32: #{tpu_custom_call.1} parent=27 // pred_fallthru
        _
    $region28: #{tpu_custom_call.1} parent=5 // pred_fallthru
      _
    %p10050 = scmp.le.s32.totalorder 2, %s8
    // Predicated region
    $region33: #{tpu_custom_call.1} parent=5 // pred_check
      %p10051 = pneg %p10050
    $region34: #{tpu_custom_call.1} parent=5 // pred_check_branch
      %10053 = sbr.rel (%p10051) target = $region36
    $region35: #{tpu_custom_call.1} parent=5 // pred_region
      %s10054 = ssub.s32 %s8, 2
      // Predicated region
      $region37: #{tpu_custom_call.1} parent=35 // pred_check
        %p10055 = pneg %p89
      $region38: #{tpu_custom_call.1} parent=35 // pred_check_branch
        %10057 = sbr.rel (%p10055) target = $region40
      $region39: #{tpu_custom_call.1} parent=35 // pred_region
        %s10058 = smul.u32 64, %s14
        %p10059 = scmp.lt.s32.totalorder %s10058, 127
        %s10060 = scalar_select %p10059, %s10058, 127
        %s10061 = smul.addr %s10060, 8
        %s10062 = scalar_lea.vmem %s2, %s10061
      $region40: #{tpu_custom_call.1} parent=35 // pred_fallthru
        _
    $region36: #{tpu_custom_call.1} parent=5 // pred_fallthru
      _
  $region6: #{tpu_custom_call.1} parent=0 // loop_footer
    %s12 = sadd.s32 1, %s8
  $region7: #{tpu_custom_call.1} parent=0 // loop_footer_branch
    %7 = sbr.rel target = $region3
  $region8: #{tpu_custom_call.1} parent=0 // loop_exit
    _

</llo_original>
